<compile_context>
chip_gen: v5e
topology: v5e:2x2
jax: 0.10.0
libtpu: 0.0.40
codegen_flags: <defaults>
</compile_context>

<pallas_src>
import jax
import jax.numpy as jnp
from jax.experimental import pallas as pl
from jax.experimental.pallas import tpu as pltpu


def se_kernel(v_ref, w1_ref, b1_ref, x_ref, w2_ref, o_ref, gated_ref):
    # conv2d87 (1x1) as a channel matvec + sigmoid + gating multiply, computed
    # exactly once (grid is sequential / "arbitrary", so step 0 runs first and
    # initializes the scratch for all later steps).
    @pl.when(pl.program_id(0) == 0)
    def _():
        v_bf = v_ref[...].astype(jnp.bfloat16)
        s = jnp.dot(w1_ref[...], v_bf, preferred_element_type=jnp.float32) + b1_ref[...]
        gate = 1.0 / (1.0 + jnp.exp(-s))                    # exact sigmoid [Cmid, 1]
        # x277 = sigmoid(x275) * x271 : per-channel (sublane) gate, lane-broadcast
        gated_ref[...] = (x_ref[...] * gate).astype(jnp.bfloat16)   # [Cmid, HW]

    # conv2d88 (1x1, no bias): out tile = w2_tile @ gated (contract over Cmid)
    o_ref[...] = jnp.dot(
        w2_ref[...], gated_ref[...], preferred_element_type=jnp.float32
    ).astype(o_ref.dtype)


def prepare_weights(w1, b1, w2):
    """One-time weight prep (hoist reshape + bf16 cast out of the per-call path;
    weights are static at inference).
    w1: [Cmid, Cin, 1, 1], b1: [Cmid], w2: [Cmid, Cmid, 1, 1]."""
    Cmid, Cin = w1.shape[0], w1.shape[1]
    w1_2d = w1.reshape(Cmid, Cin).astype(jnp.bfloat16)   # [Cmid, Cin]
    b1_2d = b1.reshape(Cmid, 1).astype(jnp.float32)      # [Cmid, 1]
    w2_2d = w2.reshape(Cmid, Cmid).astype(jnp.bfloat16)  # [Cmid, Cmid]
    return w1_2d, b1_2d, w2_2d


def se_block(x274, x271, w1_2d, b1_2d, w2_2d, *, tm=176):
    """Pallas implementation of M.forward.

    x274: [1, Cin, 1, 1] f32, x271: [1, Cmid, H, W] f32,
    w1_2d/b1_2d/w2_2d: outputs of prepare_weights.
    returns: [1, Cmid, H, W] f32.
    """
    N, Cmid, H, W = x271.shape
    Cin = x274.shape[1]
    assert N == 1, "kernel written for N=1 (as in the reference module)"
    HW = H * W
    # bf16 sublane packing is 16 rows per vreg -> w2 tile rows must be 16-aligned
    assert Cmid % tm == 0 and tm % 16 == 0, "tile must be 16-aligned and divide Cmid"

    # Pure free reshapes (contiguous views) — no transposes.
    v = x274.reshape(Cin, 1)       # [Cin, 1]
    x2d = x271.reshape(Cmid, HW)   # [Cmid, HW]

    grid = (Cmid // tm,)           # (7,) for Cmid=1232, tm=176

    # Advisory cost hint so XLA can overlap this µs-scale call with neighbours.
    flops = 2 * Cmid * Cmid * HW + 2 * Cmid * Cin
    bytes_accessed = (
        v.size * 4 + w1_2d.size * 2 + b1_2d.size * 4
        + x2d.size * 4 + w2_2d.size * 2 + Cmid * HW * 4
    )
    cost = pl.CostEstimate(
        flops=flops, transcendentals=Cmid, bytes_accessed=bytes_accessed
    )

    out2d = pl.pallas_call(
        se_kernel,
        out_shape=jax.ShapeDtypeStruct((Cmid, HW), x271.dtype),
        grid=grid,
        in_specs=[
            pl.BlockSpec((Cin, 1), lambda j: (0, 0)),       # v    (resident)
            pl.BlockSpec((Cmid, Cin), lambda j: (0, 0)),    # w1   (resident)
            pl.BlockSpec((Cmid, 1), lambda j: (0, 0)),      # b1   (resident)
            pl.BlockSpec((Cmid, HW), lambda j: (0, 0)),     # x2d  (resident)
            pl.BlockSpec((tm, Cmid), lambda j: (j, 0)),     # w2   (pipelined tile)
        ],
        out_specs=pl.BlockSpec((tm, HW), lambda j: (j, 0)),
        scratch_shapes=[pltpu.VMEM((Cmid, HW), jnp.bfloat16)],  # gated activation
        compiler_params=pltpu.CompilerParams(
            # "arbitrary": grid runs sequentially on one core, so the step-0
            # scratch init is guaranteed to precede every consumer step.
            dimension_semantics=("arbitrary",),
        ),
        cost_estimate=cost,
    )(v, w1_2d, b1_2d, x2d, w2_2d)

    return out2d.reshape(N, Cmid, H, W)   # free reshape back to NCHW


def _reference(x274, x271, w1, b1, w2):
    # plain-JAX f32 reference for the 1x1-conv / sigmoid / mul / 1x1-conv chain
    Cmid, Cin = w1.shape[0], w1.shape[1]
    s = jax.nn.sigmoid(w1.reshape(Cmid, Cin) @ x274.reshape(Cin) + b1)  # [Cmid]
    gated = x271 * s.reshape(1, Cmid, 1, 1)
    out = jnp.einsum("oc,nchw->nohw", w2.reshape(Cmid, Cmid), gated)
    return out


if __name__ == "__main__":
    key = jax.random.PRNGKey(0)
    k1, k2, k3, k4, k5 = jax.random.split(key, 5)

    Cin, Cmid, H, W = 308, 1232, 14, 14

    # deterministic synthetic parameters (shapes from M.__init__)
    w1 = jax.random.normal(k1, (Cmid, Cin, 1, 1), jnp.float32) * 0.05
    b1 = jax.random.normal(k2, (Cmid,), jnp.float32) * 0.05
    w2 = jax.random.normal(k3, (Cmid, Cmid, 1, 1), jnp.float32) * 0.02

    # inputs matching the module's forward signature
    x274 = jax.random.normal(k4, (1, Cin, 1, 1), jnp.float32)
    x271 = jax.random.normal(k5, (1, Cmid, H, W), jnp.float32)

    # weight prep done once (amortized across inference calls)
    w1_2d, b1_2d, w2_2d = prepare_weights(w1, b1, w2)

    out = se_block(x274, x271, w1_2d, b1_2d, w2_2d)
    out = jax.block_until_ready(out)

    ref = _reference(x274, x271, w1, b1, w2)
    assert out.shape == (1, Cmid, H, W)
    # bf16 matmul operands with f32 accumulation -> tolerance loosened vs pure f32
    assert jnp.allclose(out, ref, atol=2e-2, rtol=2e-2)

    print("KERNEL_OK")
</pallas_src>

<mosaic_0001>
module attributes {stable_mosaic.version = 11 : i64} {
  func.func @se_kernel(%arg0: i32, %arg1: memref<308x1xf32, #tpu.memory_space<vmem>>, %arg2: memref<1232x308xbf16, #tpu.memory_space<vmem>>, %arg3: memref<1232x1xf32, #tpu.memory_space<vmem>>, %arg4: memref<1232x196xf32, #tpu.memory_space<vmem>>, %arg5: memref<176x1232xbf16, #tpu.memory_space<vmem>>, %arg6: memref<176x196xf32, #tpu.memory_space<vmem>>, %arg7: memref<1232x196xbf16, #tpu.memory_space<vmem>>) attributes {dimension_semantics = [#tpu.dimension_semantics<arbitrary>], iteration_bounds = array<i64: 7>, scalar_prefetch = 0 : i64, scratch_operands = 1 : i64, tpu.core_type = #tpu.core_type<tc>, window_params = [{pipeline_mode = #tpu.pipeline_mode<synchronous>, transform_indices = @transform_0, window_bounds = array<i64: 308, 1>}, {pipeline_mode = #tpu.pipeline_mode<synchronous>, transform_indices = @transform_1, window_bounds = array<i64: 1232, 308>}, {pipeline_mode = #tpu.pipeline_mode<synchronous>, transform_indices = @transform_2, window_bounds = array<i64: 1232, 1>}, {pipeline_mode = #tpu.pipeline_mode<synchronous>, transform_indices = @transform_3, window_bounds = array<i64: 1232, 196>}, {transform_indices = @transform_4, window_bounds = array<i64: 176, 1232>}, {transform_indices = @transform_5, window_bounds = array<i64: 176, 196>}]} {
    %c0_i32 = arith.constant 0 : i32
    %0 = arith.cmpi eq, %arg0, %c0_i32 : i32
    %1 = arith.extui %0 : i1 to i32
    %c0_i32_0 = arith.constant 0 : i32
    %2 = arith.cmpi ne, %1, %c0_i32_0 : i32
    scf.if %2 {
      %c0_6 = arith.constant 0 : index
      %c0_7 = arith.constant 0 : index
      %7 = vector.load %arg1[%c0_6, %c0_7] : memref<308x1xf32, #tpu.memory_space<vmem>>, vector<308x1xf32>
      %8 = arith.truncf %7 : vector<308x1xf32> to vector<308x1xbf16>
      %c0_8 = arith.constant 0 : index
      %c0_9 = arith.constant 0 : index
      %9 = vector.load %arg2[%c0_8, %c0_9] : memref<1232x308xbf16, #tpu.memory_space<vmem>>, vector<1232x308xbf16>
      %cst_10 = arith.constant dense<0.000000e+00> : vector<1232x1xf32>
      %10 = tpu.matmul %9, %8, %cst_10 {dimension_numbers = #tpu.dot_dimension_numbers<[1], [0], [0], [1], [0, 0, 1, 1], [], []>} : vector<1232x308xbf16>, vector<308x1xbf16>, vector<1232x1xf32> -> vector<1232x1xf32>
      %c0_11 = arith.constant 0 : index
      %c0_12 = arith.constant 0 : index
      %11 = vector.load %arg3[%c0_11, %c0_12] : memref<1232x1xf32, #tpu.memory_space<vmem>>, vector<1232x1xf32>
      %12 = arith.addf %10, %11 : vector<1232x1xf32>
      %cst_13 = arith.constant 0.000000e+00 : f32
      %13 = vector.broadcast %cst_13 : f32 to vector<1232x1xf32>
      %14 = arith.subf %13, %12 : vector<1232x1xf32>
      %15 = math.exp %14 : vector<1232x1xf32>
      %cst_14 = arith.constant 1.000000e+00 : f32
      %16 = vector.broadcast %cst_14 : f32 to vector<1232x1xf32>
      %17 = arith.addf %16, %15 : vector<1232x1xf32>
      %cst_15 = arith.constant 1.000000e+00 : f32
      %18 = vector.broadcast %cst_15 : f32 to vector<1232x1xf32>
      %19 = arith.divf %18, %17 : vector<1232x1xf32>
      %c0_16 = arith.constant 0 : index
      %c0_17 = arith.constant 0 : index
      %20 = vector.load %arg4[%c0_16, %c0_17] : memref<1232x196xf32, #tpu.memory_space<vmem>>, vector<1232x196xf32>
      %21 = vector.broadcast %19 : vector<1232x1xf32> to vector<1232x196xf32>
      %22 = arith.mulf %20, %21 : vector<1232x196xf32>
      %23 = arith.truncf %22 : vector<1232x196xf32> to vector<1232x196xbf16>
      %c0_18 = arith.constant 0 : index
      %c0_19 = arith.constant 0 : index
      %24 = vector.load %arg7[%c0_18, %c0_19] : memref<1232x196xbf16, #tpu.memory_space<vmem>>, vector<1232x196xbf16>
      tpu.vector_store %arg7[%c0_18, %c0_19], %23 {strides = array<i32>} : memref<1232x196xbf16, #tpu.memory_space<vmem>>, vector<1232x196xbf16>,
    } else {
    }
    %c0 = arith.constant 0 : index
    %c0_1 = arith.constant 0 : index
    %3 = vector.load %arg5[%c0, %c0_1] : memref<176x1232xbf16, #tpu.memory_space<vmem>>, vector<176x1232xbf16>
    %c0_2 = arith.constant 0 : index
    %c0_3 = arith.constant 0 : index
    %4 = vector.load %arg7[%c0_2, %c0_3] : memref<1232x196xbf16, #tpu.memory_space<vmem>>, vector<1232x196xbf16>
    %cst = arith.constant dense<0.000000e+00> : vector<176x196xf32>
    %5 = tpu.matmul %3, %4, %cst {dimension_numbers = #tpu.dot_dimension_numbers<[1], [0], [0], [1], [0, 0, 1, 1], [], []>} : vector<176x1232xbf16>, vector<1232x196xbf16>, vector<176x196xf32> -> vector<176x196xf32>
    %c0_4 = arith.constant 0 : index
    %c0_5 = arith.constant 0 : index
    %6 = vector.load %arg6[%c0_4, %c0_5] : memref<176x196xf32, #tpu.memory_space<vmem>>, vector<176x196xf32>
    tpu.vector_store %arg6[%c0_4, %c0_5], %5 {strides = array<i32>} : memref<176x196xf32, #tpu.memory_space<vmem>>, vector<176x196xf32>,
    return
  }
  func.func @transform_0(%arg0: i32) -> (i32, i32) {
    %c0_i32 = arith.constant 0 : i32
    %c0_i32_0 = arith.constant 0 : i32
    %c0_i32_1 = arith.constant 0 : i32
    return %c0_i32, %c0_i32_0 : i32, i32
  }
  func.func @transform_1(%arg0: i32) -> (i32, i32) {
    %c0_i32 = arith.constant 0 : i32
    %c0_i32_0 = arith.constant 0 : i32
    %c0_i32_1 = arith.constant 0 : i32
    return %c0_i32, %c0_i32_0 : i32, i32
  }
  func.func @transform_2(%arg0: i32) -> (i32, i32) {
    %c0_i32 = arith.constant 0 : i32
    %c0_i32_0 = arith.constant 0 : i32
    %c0_i32_1 = arith.constant 0 : i32
    return %c0_i32, %c0_i32_0 : i32, i32
  }
  func.func @transform_3(%arg0: i32) -> (i32, i32) {
    %c0_i32 = arith.constant 0 : i32
    %c0_i32_0 = arith.constant 0 : i32
    %c0_i32_1 = arith.constant 0 : i32
    return %c0_i32, %c0_i32_0 : i32, i32
  }
  func.func @transform_4(%arg0: i32) -> (i32, i32) {
    %c0_i32 = arith.constant 0 : i32
    %c0_i32_0 = arith.constant 0 : i32
    return %arg0, %c0_i32 : i32, i32
  }
  func.func @transform_5(%arg0: i32) -> (i32, i32) {
    %c0_i32 = arith.constant 0 : i32
    %c0_i32_0 = arith.constant 0 : i32
    return %arg0, %c0_i32 : i32, i32
  }
}

</mosaic_0001>

<llo_original>
// kernel: tpu_custom_call.1
$region0: #{tpu_custom_call.1}
  #allocation0 [shape = 'u32[]', space=smem, size = 0x4, offset = 0x4, fixed_abs, tag = 'smem constant byte address 0x4 - core index']
  #allocation1 [shape = 'u32[72,128]{1,0:T(1,128)}', space=vmem, size = 0x9000, scoped, tag = 'internal scratch']
  #allocation2 [shape = 'bf16[1232,196]{1,0:T(8,128)(2,1)}', space=vmem, size = 0x9a000, scoped, tag = 'scratch operand']
  %s0 = inlined_call_operand.vmem [shape: f32[308,1], index: 0, kind: input, shape index: {}]
  %s1 = inlined_call_operand.vmem [shape: bf16[1232,308], index: 1, kind: input, shape index: {}]
  %s2 = inlined_call_operand.vmem [shape: f32[1232,1], index: 2, kind: input, shape index: {}]
  %s3 = inlined_call_operand.vmem [shape: f32[1232,196], index: 3, kind: input, shape index: {}]
  %s4 = inlined_call_operand.vmem [shape: bf16[1232,1232], index: 4, kind: input, shape index: {}]
  %s5 = inlined_call_operand.vmem [shape: f32[1232,196], index: 5, kind: output, shape index: {}]
  %s6 = sld [smem:[#allocation0]]
  $region57: #{tpu_custom_call.1} parent=0
    _
  %s8 = ssub.s32 1, %s6
  %s9 = scalar_select 0, %s8, %s6
  loop: start=0, step=1, limit=9
  $region2: #{tpu_custom_call.1} parent=0 // loop_pre_header
    _
  $region3: #{tpu_custom_call.1} parent=0 // loop_header
    %s11 = sphi 0, %s15
    %p12 = scmp.ge.s32.totalorder %s11, 9
    %s19 = sphi 0, %s19
    %s21 = sphi 0, %s19
    %s22 = sphi 0, %s21
    %s36 = sphi 0, %s22
    %s40 = sphi 0, %s40
    %s42 = sphi 0, %s40
    %s43 = sphi 0, %s42
    %s57 = sphi 0, %s43
    %s61 = sphi 0, %s61
    %s63 = sphi 0, %s61
    %s64 = sphi 0, %s63
    %s78 = sphi 0, %s64
    %s82 = sphi 0, %s82
    %s84 = sphi 0, %s82
    %s85 = sphi 0, %s84
    %s99 = sphi 0, %s85
    %s105 = sphi 0, %s107
    %s108 = sphi 0, %s105
    %s109 = sphi 0, %s108
    %s125 = sphi 0, %s109
    %s131 = sphi 0, %s133
    %s134 = sphi 0, %s131
    %s135 = sphi 0, %s134
    %s151 = sphi 0, %s135
  $region4: #{tpu_custom_call.1} parent=0 // loop_header_branch
    %14 = sbr.rel (%p12) target = $region8
  $region5: #{tpu_custom_call.1} parent=0 // loop_body
    %s16 = ssub.s32 %s11, 1
    %s17 = ssub.s32 %s11, 2
    %s18 = sadd.s32 %s11, 1
    %s20 = sadd.s32 %s19, 1
    %p23 = scmp.eq.s32.totalorder %s11, 6
    %p24 = scmp.ne.s32.totalorder %s19, %s21
    %p25 = scmp.eq.s32.totalorder %s11, 0
    %p26 = por %p24, %p25
    %p27 = scmp.ne.s32.totalorder %s19, %s21
    %p28 = scmp.eq.s32.totalorder %s16, 6
    %p29 = por %p27, %p28
    %p30 = scmp.ne.s32.totalorder %s21, %s22
    %p31 = scmp.eq.s32.totalorder %s16, 0
    %p32 = por %p30, %p31
    %p33 = scmp.ne.s32.totalorder %s21, %s22
    %p34 = scmp.eq.s32.totalorder %s17, 6
    %p35 = por %p33, %p34
    %p37 = scmp.ne.s32.totalorder %s22, %s36
    %p38 = scmp.eq.s32.totalorder %s17, 0
    %p39 = por %p37, %p38
    %s41 = sadd.s32 %s40, 1
    %p44 = scmp.eq.s32.totalorder %s11, 6
    %p45 = scmp.ne.s32.totalorder %s40, %s42
    %p46 = scmp.eq.s32.totalorder %s11, 0
    %p47 = por %p45, %p46
    %p48 = scmp.ne.s32.totalorder %s40, %s42
    %p49 = scmp.eq.s32.totalorder %s16, 6
    %p50 = por %p48, %p49
    %p51 = scmp.ne.s32.totalorder %s42, %s43
    %p52 = scmp.eq.s32.totalorder %s16, 0
    %p53 = por %p51, %p52
    %p54 = scmp.ne.s32.totalorder %s42, %s43
    %p55 = scmp.eq.s32.totalorder %s17, 6
    %p56 = por %p54, %p55
    %p58 = scmp.ne.s32.totalorder %s43, %s57
    %p59 = scmp.eq.s32.totalorder %s17, 0
    %p60 = por %p58, %p59
    %s62 = sadd.s32 %s61, 1
    %p65 = scmp.eq.s32.totalorder %s11, 6
    %p66 = scmp.ne.s32.totalorder %s61, %s63
    %p67 = scmp.eq.s32.totalorder %s11, 0
    %p68 = por %p66, %p67
    %p69 = scmp.ne.s32.totalorder %s61, %s63
    %p70 = scmp.eq.s32.totalorder %s16, 6
    %p71 = por %p69, %p70
    %p72 = scmp.ne.s32.totalorder %s63, %s64
    %p73 = scmp.eq.s32.totalorder %s16, 0
    %p74 = por %p72, %p73
    %p75 = scmp.ne.s32.totalorder %s63, %s64
    %p76 = scmp.eq.s32.totalorder %s17, 6
    %p77 = por %p75, %p76
    %p79 = scmp.ne.s32.totalorder %s64, %s78
    %p80 = scmp.eq.s32.totalorder %s17, 0
    %p81 = por %p79, %p80
    %s83 = sadd.s32 %s82, 1
    %p86 = scmp.eq.s32.totalorder %s11, 6
    %p87 = scmp.ne.s32.totalorder %s82, %s84
    %p88 = scmp.eq.s32.totalorder %s11, 0
    %p89 = por %p87, %p88
    %p90 = scmp.ne.s32.totalorder %s82, %s84
    %p91 = scmp.eq.s32.totalorder %s16, 6
    %p92 = por %p90, %p91
    %p93 = scmp.ne.s32.totalorder %s84, %s85
    %p94 = scmp.eq.s32.totalorder %s16, 0
    %p95 = por %p93, %p94
    %p96 = scmp.ne.s32.totalorder %s84, %s85
    %p97 = scmp.eq.s32.totalorder %s17, 6
    %p98 = por %p96, %p97
    %p100 = scmp.ne.s32.totalorder %s85, %s99
    %p101 = scmp.eq.s32.totalorder %s17, 0
    %p102 = por %p100, %p101
    %s103 = ssub.s32 %s11, %s18
    %p104 = scmp.eq.s32.totalorder %s103, 0
    %s106 = sadd.s32 %s105, 1
    %s107 = scalar_select %p104, %s105, %s106
    %p110 = pneg %p104
    %p111 = scmp.eq.s32.totalorder %s11, 6
    %p112 = por %p110, %p111
    %p113 = scmp.ne.s32.totalorder %s105, %s108
    %p114 = scmp.eq.s32.totalorder %s11, 0
    %p115 = por %p113, %p114
    %p116 = scmp.ne.s32.totalorder %s105, %s108
    %p117 = scmp.eq.s32.totalorder %s16, 6
    %p118 = por %p116, %p117
    %p119 = scmp.ne.s32.totalorder %s108, %s109
    %p120 = scmp.eq.s32.totalorder %s16, 0
    %p121 = por %p119, %p120
    %p122 = scmp.ne.s32.totalorder %s108, %s109
    %p123 = scmp.eq.s32.totalorder %s17, 6
    %p124 = por %p122, %p123
    %p126 = scmp.ne.s32.totalorder %s109, %s125
    %p127 = scmp.eq.s32.totalorder %s17, 0
    %p128 = por %p126, %p127
    %s129 = ssub.s32 %s11, %s18
    %p130 = scmp.eq.s32.totalorder %s129, 0
    %s132 = sadd.s32 %s131, 1
    %s133 = scalar_select %p130, %s131, %s132
    %p136 = pneg %p130
    %p137 = scmp.eq.s32.totalorder %s11, 6
    %p138 = por %p136, %p137
    %p139 = scmp.ne.s32.totalorder %s131, %s134
    %p140 = scmp.eq.s32.totalorder %s11, 0
    %p141 = por %p139, %p140
    %p142 = scmp.ne.s32.totalorder %s131, %s134
    %p143 = scmp.eq.s32.totalorder %s16, 6
    %p144 = por %p142, %p143
    %p145 = scmp.ne.s32.totalorder %s134, %s135
    %p146 = scmp.eq.s32.totalorder %s16, 0
    %p147 = por %p145, %p146
    %p148 = scmp.ne.s32.totalorder %s134, %s135
    %p149 = scmp.eq.s32.totalorder %s17, 6
    %p150 = por %p148, %p149
    %p152 = scmp.ne.s32.totalorder %s135, %s151
    %p153 = scmp.eq.s32.totalorder %s17, 0
    %p154 = por %p152, %p153
    %p155 = scmp.le.s32.totalorder 1, %s11
    %p156 = scmp.lt.s32.totalorder %s11, 8
    %p157 = pnand %p155, %p156
    %p158 = pneg %p157
    // Predicated region
    $region9: #{tpu_custom_call.1} parent=5 // pred_check
      _
    $region10: #{tpu_custom_call.1} parent=5 // pred_check_branch
      %160 = sbr.rel (%p157) target = $region12
    $region11: #{tpu_custom_call.1} parent=5 // pred_region
      %s161 = ssub.s32 %s11, 1
      // Predicated region
      $region13: #{tpu_custom_call.1} parent=11 // pred_check
        %p162 = pneg %p32
      $region14: #{tpu_custom_call.1} parent=11 // pred_check_branch
        %164 = sbr.rel (%p162) target = $region16
      $region15: #{tpu_custom_call.1} parent=11 // pred_region
        _
      $region16: #{tpu_custom_call.1} parent=11 // pred_fallthru
        _
      // Predicated region
      $region17: #{tpu_custom_call.1} parent=11 // pred_check
        %p165 = pneg %p53
      $region18: #{tpu_custom_call.1} parent=11 // pred_check_branch
        %167 = sbr.rel (%p165) target = $region20
      $region19: #{tpu_custom_call.1} parent=11 // pred_region
        _
      $region20: #{tpu_custom_call.1} parent=11 // pred_fallthru
        _
      // Predicated region
      $region21: #{tpu_custom_call.1} parent=11 // pred_check
        %p168 = pneg %p74
      $region22: #{tpu_custom_call.1} parent=11 // pred_check_branch
        %170 = sbr.rel (%p168) target = $region24
      $region23: #{tpu_custom_call.1} parent=11 // pred_region
        _
      $region24: #{tpu_custom_call.1} parent=11 // pred_fallthru
        _
      // Predicated region
      $region25: #{tpu_custom_call.1} parent=11 // pred_check
        %p171 = pneg %p95
      $region26: #{tpu_custom_call.1} parent=11 // pred_check_branch
        %173 = sbr.rel (%p171) target = $region28
      $region27: #{tpu_custom_call.1} parent=11 // pred_region
        _
      $region28: #{tpu_custom_call.1} parent=11 // pred_fallthru
        _
    $region12: #{tpu_custom_call.1} parent=5 // pred_fallthru
      _
    %p174 = scmp.lt.s32.totalorder %s11, 7
    // Predicated region
    $region29: #{tpu_custom_call.1} parent=5 // pred_check
      %p175 = pneg %p174
    $region30: #{tpu_custom_call.1} parent=5 // pred_check_branch
      %177 = sbr.rel (%p175) target = $region32
    $region31: #{tpu_custom_call.1} parent=5 // pred_region
      // Predicated region
      $region33: #{tpu_custom_call.1} parent=31 // pred_check
        %p178 = pneg %p115
      $region34: #{tpu_custom_call.1} parent=31 // pred_check_branch
        %180 = sbr.rel (%p178) target = $region36
      $region35: #{tpu_custom_call.1} parent=31 // pred_region
        %s181 = smul.u32 22, %s11
        %p182 = scmp.lt.s32.totalorder %s181, 153
        %s183 = scalar_select %p182, %s181, 153
        %s184 = smul.addr %s183, 10
        %s185 = smul.addr %s184, 4
        %s186 = scalar_lea.vmem %s4, %s185
        %s187 = smul.u32 22, %s11
      $region36: #{tpu_custom_call.1} parent=31 // pred_fallthru
        _
    $region32: #{tpu_custom_call.1} parent=5 // pred_fallthru
      _
    %p188 = scmp.le.s32.totalorder 1, %s11
    %p189 = scmp.lt.s32.totalorder %s11, 8
    %p190 = pnand %p188, %p189
    %p191 = pneg %p190
    // Predicated region
    $region37: #{tpu_custom_call.1} parent=5 // pred_check
      _
    $region38: #{tpu_custom_call.1} parent=5 // pred_check_branch
      %193 = sbr.rel (%p190) target = $region40
    $region39: #{tpu_custom_call.1} parent=5 // pred_region
      %s194 = ssub.s32 %s11, 1
      %p195 = pneg %p32
      %p196 = pneg %p29
      %p197 = pneg %p53
      %p198 = pneg %p50
      %p199 = pneg %p74
      %p200 = pneg %p71
      %p201 = pneg %p95
      %p202 = pneg %p92
      %s203 = smul.u32 22, %s16
      %p204 = scmp.lt.s32.totalorder %s203, 153
      %s205 = scalar_select %p204, %s203, 153
      %s206 = smul.addr %s205, 10
      %s207 = smul.addr %s206, 4
      %s208 = scalar_lea.vmem %s4, %s207
      %p209 = pneg %p121
      %p210 = pneg %p118
      %p211 = pneg %p147
      %p212 = pneg %p144
      %s213 = smul.u32 22, %s16
      %p214 = scmp.lt.s32.totalorder %s213, 153
      %s215 = scalar_select %p214, %s213, 153
      %s216 = smul.addr %s215, 2
      %s217 = smul.addr %s216, 8
      %s218 = scalar_lea.vmem %s5, %s217
      %s219 = smul.u32 22, %s16
      %p220 = scmp.lt.s32.totalorder %s219, 153
      %s221 = scalar_select %p220, %s219, 153
      %s222 = smul.addr %s221, 10
      %s223 = smul.addr %s222, 4
      %s224 = scalar_lea.vmem %s4, %s223
      %s225 = smul.u32 22, %s16
      %s226 = smul.u32 22, %s16
      %p227 = scmp.lt.s32.totalorder %s226, 153
      %s228 = scalar_select %p227, %s226, 153
      %s229 = smul.addr %s228, 2
      %s230 = smul.addr %s229, 8
      %s231 = scalar_lea.vmem %s5, %s230
      %s232 = smul.u32 22, %s16
      %p234 = scmp.eq.s32.totalorder %s16, 0
      // Predicated region
      $region41: #{tpu_custom_call.1} parent=39 // pred_check
        %p235 = pneg %p234
      $region42: #{tpu_custom_call.1} parent=39 // pred_check_branch
        %237 = sbr.rel (%p235) target = $region44
      $region43: #{tpu_custom_call.1} parent=39 // pred_region
        %v238 = vld [vmem:[%s0] sm:$0xff]
        %v239 = vld [vmem:[%s0 + $0x8] sm:$0xff]
        %v240 = vld [vmem:[%s0 + $0x10] sm:$0xff]
        %v241 = vld [vmem:[%s0 + $0x18] sm:$0xff]
        %v242 = vld [vmem:[%s0 + $0x20] sm:$0xff]
        %v243 = vld [vmem:[%s0 + $0x28] sm:$0xff]
        %v244 = vld [vmem:[%s0 + $0x30] sm:$0xff]
        %v245 = vld [vmem:[%s0 + $0x38] sm:$0xff]
        %v246 = vld [vmem:[%s0 + $0x40] sm:$0xff]
        %v247 = vld [vmem:[%s0 + $0x48] sm:$0xff]
        %v248 = vld [vmem:[%s0 + $0x50] sm:$0xff]
        %v249 = vld [vmem:[%s0 + $0x58] sm:$0xff]
        %v250 = vld [vmem:[%s0 + $0x60] sm:$0xff]
        %v251 = vld [vmem:[%s0 + $0x68] sm:$0xff]
        %v252 = vld [vmem:[%s0 + $0x70] sm:$0xff]
        %v253 = vld [vmem:[%s0 + $0x78] sm:$0xff]
        %v254 = vld [vmem:[%s0 + $0x80] sm:$0xff]
        %v255 = vld [vmem:[%s0 + $0x88] sm:$0xff]
        %v256 = vld [vmem:[%s0 + $0x90] sm:$0xff]
        %v257 = vld [vmem:[%s0 + $0x98] sm:$0xff]
        %v258 = vld [vmem:[%s0 + $0xa0] sm:$0xff]
        %v259 = vld [vmem:[%s0 + $0xa8] sm:$0xff]
        %v260 = vld [vmem:[%s0 + $0xb0] sm:$0xff]
        %v261 = vld [vmem:[%s0 + $0xb8] sm:$0xff]
        %v262 = vld [vmem:[%s0 + $0xc0] sm:$0xff]
        %v263 = vld [vmem:[%s0 + $0xc8] sm:$0xff]
        %v264 = vld [vmem:[%s0 + $0xd0] sm:$0xff]
        %v265 = vld [vmem:[%s0 + $0xd8] sm:$0xff]
        %v266 = vld [vmem:[%s0 + $0xe0] sm:$0xff]
        %v267 = vld [vmem:[%s0 + $0xe8] sm:$0xff]
        %v268 = vld [vmem:[%s0 + $0xf0] sm:$0xff]
        %v269 = vld [vmem:[%s0 + $0xf8] sm:$0xff]
        %v270 = vld [vmem:[%s0 + $0x100] sm:$0xff]
        %v271 = vld [vmem:[%s0 + $0x108] sm:$0xff]
        %v272 = vld [vmem:[%s0 + $0x110] sm:$0xff]
        %v273 = vld [vmem:[%s0 + $0x118] sm:$0xff]
        %v274 = vld [vmem:[%s0 + $0x120] sm:$0xff]
        %v275 = vld [vmem:[%s0 + $0x128] sm:$0xff]
        %v276 = vld [vmem:[%s0 + $0x130] sm:$0xf]
        %v277 = vpack.c.bf16 %v239, %v238
        %v278 = vpack.c.bf16 %v241, %v240
        %v279 = vpack.c.bf16 %v243, %v242
        %v280 = vpack.c.bf16 %v245, %v244
        %v281 = vpack.c.bf16 %v247, %v246
        %v282 = vpack.c.bf16 %v249, %v248
        %v283 = vpack.c.bf16 %v251, %v250
        %v284 = vpack.c.bf16 %v253, %v252
        %v285 = vpack.c.bf16 %v255, %v254
        %v286 = vpack.c.bf16 %v257, %v256
        %v287 = vpack.c.bf16 %v259, %v258
        %v288 = vpack.c.bf16 %v261, %v260
        %v289 = vpack.c.bf16 %v263, %v262
        %v290 = vpack.c.bf16 %v265, %v264
        %v291 = vpack.c.bf16 %v267, %v266
        %v292 = vpack.c.bf16 %v269, %v268
        %v293 = vpack.c.bf16 %v271, %v270
        %v294 = vpack.c.bf16 %v273, %v272
        %v295 = vpack.c.bf16 %v275, %v274
        %v296 = vpack.c.bf16 %v276, %v276
        %v297 = vld [vmem:[%s1] sm:$0xff]
        %v298 = vld [vmem:[%s1 + $0x8] sm:$0xf]
        %v299 = vld [vmem:[%s1 + $0xc] sm:$0xff]
        %v300 = vld [vmem:[%s1 + $0x14] sm:$0xf]
        %v301 = vld [vmem:[%s1 + $0x18] sm:$0xff]
        %v302 = vld [vmem:[%s1 + $0x20] sm:$0xf]
        %v303 = vld [vmem:[%s1 + $0x24] sm:$0xff]
        %v304 = vld [vmem:[%s1 + $0x2c] sm:$0xf]
        %v305 = vld [vmem:[%s1 + $0x30] sm:$0xff]
        %v306 = vld [vmem:[%s1 + $0x38] sm:$0xf]
        %v307 = vld [vmem:[%s1 + $0x3c] sm:$0xff]
        %v308 = vld [vmem:[%s1 + $0x44] sm:$0xf]
        %v309 = vld [vmem:[%s1 + $0x48] sm:$0xff]
        %v310 = vld [vmem:[%s1 + $0x50] sm:$0xf]
        %v311 = vld [vmem:[%s1 + $0x54] sm:$0xff]
        %v312 = vld [vmem:[%s1 + $0x5c] sm:$0xf]
        %v313 = vld [vmem:[%s1 + $0x60] sm:$0xff]
        %v314 = vld [vmem:[%s1 + $0x68] sm:$0xf]
        %v315 = vld [vmem:[%s1 + $0x6c] sm:$0xff]
        %v316 = vld [vmem:[%s1 + $0x74] sm:$0xf]
        %v317 = vld [vmem:[%s1 + $0x78] sm:$0xff]
        %v318 = vld [vmem:[%s1 + $0x80] sm:$0xf]
        %v319 = vld [vmem:[%s1 + $0x84] sm:$0xff]
        %v320 = vld [vmem:[%s1 + $0x8c] sm:$0xf]
        %v321 = vld [vmem:[%s1 + $0x90] sm:$0xff]
        %v322 = vld [vmem:[%s1 + $0x98] sm:$0xf]
        %v323 = vld [vmem:[%s1 + $0x9c] sm:$0xff]
        %v324 = vld [vmem:[%s1 + $0xa4] sm:$0xf]
        %v325 = vld [vmem:[%s1 + $0xa8] sm:$0xff]
        %v326 = vld [vmem:[%s1 + $0xb0] sm:$0xf]
        %v327 = vld [vmem:[%s1 + $0xb4] sm:$0xff]
        %v328 = vld [vmem:[%s1 + $0xbc] sm:$0xf]
        %v329 = vld [vmem:[%s1 + $0xc0] sm:$0xff]
        %v330 = vld [vmem:[%s1 + $0xc8] sm:$0xf]
        %v331 = vld [vmem:[%s1 + $0xcc] sm:$0xff]
        %v332 = vld [vmem:[%s1 + $0xd4] sm:$0xf]
        %v333 = vld [vmem:[%s1 + $0xd8] sm:$0xff]
        %v334 = vld [vmem:[%s1 + $0xe0] sm:$0xf]
        %v335 = vld [vmem:[%s1 + $0xe4] sm:$0xff]
        %v336 = vld [vmem:[%s1 + $0xec] sm:$0xf]
        %v337 = vld [vmem:[%s1 + $0xf0] sm:$0xff]
        %v338 = vld [vmem:[%s1 + $0xf8] sm:$0xf]
        %v339 = vld [vmem:[%s1 + $0xfc] sm:$0xff]
        %v340 = vld [vmem:[%s1 + $0x104] sm:$0xf]
        %v341 = vld [vmem:[%s1 + $0x108] sm:$0xff]
        %v342 = vld [vmem:[%s1 + $0x110] sm:$0xf]
        %v343 = vld [vmem:[%s1 + $0x114] sm:$0xff]
        %v344 = vld [vmem:[%s1 + $0x11c] sm:$0xf]
        %v345 = vld [vmem:[%s1 + $0x120] sm:$0xff]
        %v346 = vld [vmem:[%s1 + $0x128] sm:$0xf]
        %v347 = vld [vmem:[%s1 + $0x12c] sm:$0xff]
        %v348 = vld [vmem:[%s1 + $0x134] sm:$0xf]
        %v349 = vld [vmem:[%s1 + $0x138] sm:$0xff]
        %v350 = vld [vmem:[%s1 + $0x140] sm:$0xf]
        %v351 = vld [vmem:[%s1 + $0x144] sm:$0xff]
        %v352 = vld [vmem:[%s1 + $0x14c] sm:$0xf]
        %v353 = vld [vmem:[%s1 + $0x150] sm:$0xff]
        %v354 = vld [vmem:[%s1 + $0x158] sm:$0xf]
        %v355 = vld [vmem:[%s1 + $0x15c] sm:$0xff]
        %v356 = vld [vmem:[%s1 + $0x164] sm:$0xf]
        %v357 = vld [vmem:[%s1 + $0x168] sm:$0xff]
        %v358 = vld [vmem:[%s1 + $0x170] sm:$0xf]
        %v359 = vld [vmem:[%s1 + $0x174] sm:$0xff]
        %v360 = vld [vmem:[%s1 + $0x17c] sm:$0xf]
        %v361 = vld [vmem:[%s1 + $0x180] sm:$0xff]
        %v362 = vld [vmem:[%s1 + $0x188] sm:$0xf]
        %v363 = vld [vmem:[%s1 + $0x18c] sm:$0xff]
        %v364 = vld [vmem:[%s1 + $0x194] sm:$0xf]
        %v365 = vld [vmem:[%s1 + $0x198] sm:$0xff]
        %v366 = vld [vmem:[%s1 + $0x1a0] sm:$0xf]
        %v367 = vld [vmem:[%s1 + $0x1a4] sm:$0xff]
        %v368 = vld [vmem:[%s1 + $0x1ac] sm:$0xf]
        %v369 = vld [vmem:[%s1 + $0x1b0] sm:$0xff]
        %v370 = vld [vmem:[%s1 + $0x1b8] sm:$0xf]
        %v371 = vld [vmem:[%s1 + $0x1bc] sm:$0xff]
        %v372 = vld [vmem:[%s1 + $0x1c4] sm:$0xf]
        %v373 = vld [vmem:[%s1 + $0x1c8] sm:$0xff]
        %v374 = vld [vmem:[%s1 + $0x1d0] sm:$0xf]
        %v375 = vld [vmem:[%s1 + $0x1d4] sm:$0xff]
        %v376 = vld [vmem:[%s1 + $0x1dc] sm:$0xf]
        %v377 = vld [vmem:[%s1 + $0x1e0] sm:$0xff]
        %v378 = vld [vmem:[%s1 + $0x1e8] sm:$0xf]
        %v379 = vld [vmem:[%s1 + $0x1ec] sm:$0xff]
        %v380 = vld [vmem:[%s1 + $0x1f4] sm:$0xf]
        %v381 = vld [vmem:[%s1 + $0x1f8] sm:$0xff]
        %v382 = vld [vmem:[%s1 + $0x200] sm:$0xf]
        %v383 = vld [vmem:[%s1 + $0x204] sm:$0xff]
        %v384 = vld [vmem:[%s1 + $0x20c] sm:$0xf]
        %v385 = vld [vmem:[%s1 + $0x210] sm:$0xff]
        %v386 = vld [vmem:[%s1 + $0x218] sm:$0xf]
        %v387 = vld [vmem:[%s1 + $0x21c] sm:$0xff]
        %v388 = vld [vmem:[%s1 + $0x224] sm:$0xf]
        %v389 = vld [vmem:[%s1 + $0x228] sm:$0xff]
        %v390 = vld [vmem:[%s1 + $0x230] sm:$0xf]
        %v391 = vld [vmem:[%s1 + $0x234] sm:$0xff]
        %v392 = vld [vmem:[%s1 + $0x23c] sm:$0xf]
        %v393 = vld [vmem:[%s1 + $0x240] sm:$0xff]
        %v394 = vld [vmem:[%s1 + $0x248] sm:$0xf]
        %v395 = vld [vmem:[%s1 + $0x24c] sm:$0xff]
        %v396 = vld [vmem:[%s1 + $0x254] sm:$0xf]
        %v397 = vld [vmem:[%s1 + $0x258] sm:$0xff]
        %v398 = vld [vmem:[%s1 + $0x260] sm:$0xf]
        %v399 = vld [vmem:[%s1 + $0x264] sm:$0xff]
        %v400 = vld [vmem:[%s1 + $0x26c] sm:$0xf]
        %v401 = vld [vmem:[%s1 + $0x270] sm:$0xff]
        %v402 = vld [vmem:[%s1 + $0x278] sm:$0xf]
        %v403 = vld [vmem:[%s1 + $0x27c] sm:$0xff]
        %v404 = vld [vmem:[%s1 + $0x284] sm:$0xf]
        %v405 = vld [vmem:[%s1 + $0x288] sm:$0xff]
        %v406 = vld [vmem:[%s1 + $0x290] sm:$0xf]
        %v407 = vld [vmem:[%s1 + $0x294] sm:$0xff]
        %v408 = vld [vmem:[%s1 + $0x29c] sm:$0xf]
        %v409 = vld [vmem:[%s1 + $0x2a0] sm:$0xff]
        %v410 = vld [vmem:[%s1 + $0x2a8] sm:$0xf]
        %v411 = vld [vmem:[%s1 + $0x2ac] sm:$0xff]
        %v412 = vld [vmem:[%s1 + $0x2b4] sm:$0xf]
        %v413 = vld [vmem:[%s1 + $0x2b8] sm:$0xff]
        %v414 = vld [vmem:[%s1 + $0x2c0] sm:$0xf]
        %v415 = vld [vmem:[%s1 + $0x2c4] sm:$0xff]
        %v416 = vld [vmem:[%s1 + $0x2cc] sm:$0xf]
        %v417 = vld [vmem:[%s1 + $0x2d0] sm:$0xff]
        %v418 = vld [vmem:[%s1 + $0x2d8] sm:$0xf]
        %v419 = vld [vmem:[%s1 + $0x2dc] sm:$0xff]
        %v420 = vld [vmem:[%s1 + $0x2e4] sm:$0xf]
        %v421 = vld [vmem:[%s1 + $0x2e8] sm:$0xff]
        %v422 = vld [vmem:[%s1 + $0x2f0] sm:$0xf]
        %v423 = vld [vmem:[%s1 + $0x2f4] sm:$0xff]
        %v424 = vld [vmem:[%s1 + $0x2fc] sm:$0xf]
        %v425 = vld [vmem:[%s1 + $0x300] sm:$0xff]
        %v426 = vld [vmem:[%s1 + $0x308] sm:$0xf]
        %v427 = vld [vmem:[%s1 + $0x30c] sm:$0xff]
        %v428 = vld [vmem:[%s1 + $0x314] sm:$0xf]
        %v429 = vld [vmem:[%s1 + $0x318] sm:$0xff]
        %v430 = vld [vmem:[%s1 + $0x320] sm:$0xf]
        %v431 = vld [vmem:[%s1 + $0x324] sm:$0xff]
        %v432 = vld [vmem:[%s1 + $0x32c] sm:$0xf]
        %v433 = vld [vmem:[%s1 + $0x330] sm:$0xff]
        %v434 = vld [vmem:[%s1 + $0x338] sm:$0xf]
        %v435 = vld [vmem:[%s1 + $0x33c] sm:$0xff]
        %v436 = vld [vmem:[%s1 + $0x344] sm:$0xf]
        %v437 = vld [vmem:[%s1 + $0x348] sm:$0xff]
        %v438 = vld [vmem:[%s1 + $0x350] sm:$0xf]
        %v439 = vld [vmem:[%s1 + $0x354] sm:$0xff]
        %v440 = vld [vmem:[%s1 + $0x35c] sm:$0xf]
        %v441 = vld [vmem:[%s1 + $0x360] sm:$0xff]
        %v442 = vld [vmem:[%s1 + $0x368] sm:$0xf]
        %v443 = vld [vmem:[%s1 + $0x36c] sm:$0xff]
        %v444 = vld [vmem:[%s1 + $0x374] sm:$0xf]
        %v445 = vld [vmem:[%s1 + $0x378] sm:$0xff]
        %v446 = vld [vmem:[%s1 + $0x380] sm:$0xf]
        %v447 = vld [vmem:[%s1 + $0x384] sm:$0xff]
        %v448 = vld [vmem:[%s1 + $0x38c] sm:$0xf]
        %v449 = vld [vmem:[%s1 + $0x390] sm:$0xff]
        %v450 = vld [vmem:[%s1 + $0x398] sm:$0xf]
        %v451 = vld [vmem:[%s1 + $0x39c] sm:$0xff]
        %v452 = vld [vmem:[%s1 + $0x3a4] sm:$0xf]
        %v453 = vld [vmem:[%s1 + $0x3a8] sm:$0xff]
        %v454 = vld [vmem:[%s1 + $0x3b0] sm:$0xf]
        %v455 = vld [vmem:[%s1 + $0x3b4] sm:$0xff]
        %v456 = vld [vmem:[%s1 + $0x3bc] sm:$0xf]
        %v457 = vld [vmem:[%s1 + $0x3c0] sm:$0xff]
        %v458 = vld [vmem:[%s1 + $0x3c8] sm:$0xf]
        %v459 = vld [vmem:[%s1 + $0x3cc] sm:$0xff]
        %v460 = vld [vmem:[%s1 + $0x3d4] sm:$0xf]
        %v461 = vld [vmem:[%s1 + $0x3d8] sm:$0xff]
        %v462 = vld [vmem:[%s1 + $0x3e0] sm:$0xf]
        %v463 = vld [vmem:[%s1 + $0x3e4] sm:$0xff]
        %v464 = vld [vmem:[%s1 + $0x3ec] sm:$0xf]
        %v465 = vld [vmem:[%s1 + $0x3f0] sm:$0xff]
        %v466 = vld [vmem:[%s1 + $0x3f8] sm:$0xf]
        %v467 = vld [vmem:[%s1 + $0x3fc] sm:$0xff]
        %v468 = vld [vmem:[%s1 + $0x404] sm:$0xf]
        %v469 = vld [vmem:[%s1 + $0x408] sm:$0xff]
        %v470 = vld [vmem:[%s1 + $0x410] sm:$0xf]
        %v471 = vld [vmem:[%s1 + $0x414] sm:$0xff]
        %v472 = vld [vmem:[%s1 + $0x41c] sm:$0xf]
        %v473 = vld [vmem:[%s1 + $0x420] sm:$0xff]
        %v474 = vld [vmem:[%s1 + $0x428] sm:$0xf]
        %v475 = vld [vmem:[%s1 + $0x42c] sm:$0xff]
        %v476 = vld [vmem:[%s1 + $0x434] sm:$0xf]
        %v477 = vld [vmem:[%s1 + $0x438] sm:$0xff]
        %v478 = vld [vmem:[%s1 + $0x440] sm:$0xf]
        %v479 = vld [vmem:[%s1 + $0x444] sm:$0xff]
        %v480 = vld [vmem:[%s1 + $0x44c] sm:$0xf]
        %v481 = vld [vmem:[%s1 + $0x450] sm:$0xff]
        %v482 = vld [vmem:[%s1 + $0x458] sm:$0xf]
        %v483 = vld [vmem:[%s1 + $0x45c] sm:$0xff]
        %v484 = vld [vmem:[%s1 + $0x464] sm:$0xf]
        %v485 = vld [vmem:[%s1 + $0x468] sm:$0xff]
        %v486 = vld [vmem:[%s1 + $0x470] sm:$0xf]
        %v487 = vld [vmem:[%s1 + $0x474] sm:$0xff]
        %v488 = vld [vmem:[%s1 + $0x47c] sm:$0xf]
        %v489 = vld [vmem:[%s1 + $0x480] sm:$0xff]
        %v490 = vld [vmem:[%s1 + $0x488] sm:$0xf]
        %v491 = vld [vmem:[%s1 + $0x48c] sm:$0xff]
        %v492 = vld [vmem:[%s1 + $0x494] sm:$0xf]
        %v493 = vld [vmem:[%s1 + $0x498] sm:$0xff]
        %v494 = vld [vmem:[%s1 + $0x4a0] sm:$0xf]
        %v495 = vld [vmem:[%s1 + $0x4a4] sm:$0xff]
        %v496 = vld [vmem:[%s1 + $0x4ac] sm:$0xf]
        %v497 = vld [vmem:[%s1 + $0x4b0] sm:$0xff]
        %v498 = vld [vmem:[%s1 + $0x4b8] sm:$0xf]
        %v499 = vld [vmem:[%s1 + $0x4bc] sm:$0xff]
        %v500 = vld [vmem:[%s1 + $0x4c4] sm:$0xf]
        %v501 = vld [vmem:[%s1 + $0x4c8] sm:$0xff]
        %v502 = vld [vmem:[%s1 + $0x4d0] sm:$0xf]
        %v503 = vld [vmem:[%s1 + $0x4d4] sm:$0xff]
        %v504 = vld [vmem:[%s1 + $0x4dc] sm:$0xf]
        %v505 = vld [vmem:[%s1 + $0x4e0] sm:$0xff]
        %v506 = vld [vmem:[%s1 + $0x4e8] sm:$0xf]
        %v507 = vld [vmem:[%s1 + $0x4ec] sm:$0xff]
        %v508 = vld [vmem:[%s1 + $0x4f4] sm:$0xf]
        %v509 = vld [vmem:[%s1 + $0x4f8] sm:$0xff]
        %v510 = vld [vmem:[%s1 + $0x500] sm:$0xf]
        %v511 = vld [vmem:[%s1 + $0x504] sm:$0xff]
        %v512 = vld [vmem:[%s1 + $0x50c] sm:$0xf]
        %v513 = vld [vmem:[%s1 + $0x510] sm:$0xff]
        %v514 = vld [vmem:[%s1 + $0x518] sm:$0xf]
        %v515 = vld [vmem:[%s1 + $0x51c] sm:$0xff]
        %v516 = vld [vmem:[%s1 + $0x524] sm:$0xf]
        %v517 = vld [vmem:[%s1 + $0x528] sm:$0xff]
        %v518 = vld [vmem:[%s1 + $0x530] sm:$0xf]
        %v519 = vld [vmem:[%s1 + $0x534] sm:$0xff]
        %v520 = vld [vmem:[%s1 + $0x53c] sm:$0xf]
        %v521 = vld [vmem:[%s1 + $0x540] sm:$0xff]
        %v522 = vld [vmem:[%s1 + $0x548] sm:$0xf]
        %v523 = vld [vmem:[%s1 + $0x54c] sm:$0xff]
        %v524 = vld [vmem:[%s1 + $0x554] sm:$0xf]
        %v525 = vld [vmem:[%s1 + $0x558] sm:$0xff]
        %v526 = vld [vmem:[%s1 + $0x560] sm:$0xf]
        %v527 = vld [vmem:[%s1 + $0x564] sm:$0xff]
        %v528 = vld [vmem:[%s1 + $0x56c] sm:$0xf]
        %v529 = vld [vmem:[%s1 + $0x570] sm:$0xff]
        %v530 = vld [vmem:[%s1 + $0x578] sm:$0xf]
        %v531 = vld [vmem:[%s1 + $0x57c] sm:$0xff]
        %v532 = vld [vmem:[%s1 + $0x584] sm:$0xf]
        %v533 = vld [vmem:[%s1 + $0x588] sm:$0xff]
        %v534 = vld [vmem:[%s1 + $0x590] sm:$0xf]
        %v535 = vld [vmem:[%s1 + $0x594] sm:$0xff]
        %v536 = vld [vmem:[%s1 + $0x59c] sm:$0xf]
        %v537 = vld [vmem:[%s1 + $0x5a0] sm:$0xff]
        %v538 = vld [vmem:[%s1 + $0x5a8] sm:$0xf]
        %v539 = vld [vmem:[%s1 + $0x5ac] sm:$0xff]
        %v540 = vld [vmem:[%s1 + $0x5b4] sm:$0xf]
        %v541 = vld [vmem:[%s1 + $0x5b8] sm:$0xff]
        %v542 = vld [vmem:[%s1 + $0x5c0] sm:$0xf]
        %v543 = vld [vmem:[%s1 + $0x5c4] sm:$0xff]
        %v544 = vld [vmem:[%s1 + $0x5cc] sm:$0xf]
        %v545 = vld [vmem:[%s1 + $0x5d0] sm:$0xff]
        %v546 = vld [vmem:[%s1 + $0x5d8] sm:$0xf]
        %v547 = vld [vmem:[%s1 + $0x5dc] sm:$0xff]
        %v548 = vld [vmem:[%s1 + $0x5e4] sm:$0xf]
        %v549 = vld [vmem:[%s1 + $0x5e8] sm:$0xff]
        %v550 = vld [vmem:[%s1 + $0x5f0] sm:$0xf]
        %v551 = vld [vmem:[%s1 + $0x5f4] sm:$0xff]
        %v552 = vld [vmem:[%s1 + $0x5fc] sm:$0xf]
        %v553 = vld [vmem:[%s1 + $0x600] sm:$0xff]
        %v554 = vld [vmem:[%s1 + $0x608] sm:$0xf]
        %v555 = vld [vmem:[%s1 + $0x60c] sm:$0xff]
        %v556 = vld [vmem:[%s1 + $0x614] sm:$0xf]
        %v557 = vld [vmem:[%s1 + $0x618] sm:$0xff]
        %v558 = vld [vmem:[%s1 + $0x620] sm:$0xf]
        %v559 = vld [vmem:[%s1 + $0x624] sm:$0xff]
        %v560 = vld [vmem:[%s1 + $0x62c] sm:$0xf]
        %v561 = vld [vmem:[%s1 + $0x630] sm:$0xff]
        %v562 = vld [vmem:[%s1 + $0x638] sm:$0xf]
        %v563 = vld [vmem:[%s1 + $0x63c] sm:$0xff]
        %v564 = vld [vmem:[%s1 + $0x644] sm:$0xf]
        %v565 = vld [vmem:[%s1 + $0x648] sm:$0xff]
        %v566 = vld [vmem:[%s1 + $0x650] sm:$0xf]
        %v567 = vld [vmem:[%s1 + $0x654] sm:$0xff]
        %v568 = vld [vmem:[%s1 + $0x65c] sm:$0xf]
        %v569 = vld [vmem:[%s1 + $0x660] sm:$0xff]
        %v570 = vld [vmem:[%s1 + $0x668] sm:$0xf]
        %v571 = vld [vmem:[%s1 + $0x66c] sm:$0xff]
        %v572 = vld [vmem:[%s1 + $0x674] sm:$0xf]
        %v573 = vld [vmem:[%s1 + $0x678] sm:$0xff]
        %v574 = vld [vmem:[%s1 + $0x680] sm:$0xf]
        %v575 = vld [vmem:[%s1 + $0x684] sm:$0xff]
        %v576 = vld [vmem:[%s1 + $0x68c] sm:$0xf]
        %v577 = vld [vmem:[%s1 + $0x690] sm:$0xff]
        %v578 = vld [vmem:[%s1 + $0x698] sm:$0xf]
        %v579 = vld [vmem:[%s1 + $0x69c] sm:$0xff]
        %v580 = vld [vmem:[%s1 + $0x6a4] sm:$0xf]
        %v581 = vld [vmem:[%s1 + $0x6a8] sm:$0xff]
        %v582 = vld [vmem:[%s1 + $0x6b0] sm:$0xf]
        %v583 = vld [vmem:[%s1 + $0x6b4] sm:$0xff]
        %v584 = vld [vmem:[%s1 + $0x6bc] sm:$0xf]
        %v585 = vld [vmem:[%s1 + $0x6c0] sm:$0xff]
        %v586 = vld [vmem:[%s1 + $0x6c8] sm:$0xf]
        %v587 = vld [vmem:[%s1 + $0x6cc] sm:$0xff]
        %v588 = vld [vmem:[%s1 + $0x6d4] sm:$0xf]
        %v589 = vld [vmem:[%s1 + $0x6d8] sm:$0xff]
        %v590 = vld [vmem:[%s1 + $0x6e0] sm:$0xf]
        %v591 = vld [vmem:[%s1 + $0x6e4] sm:$0xff]
        %v592 = vld [vmem:[%s1 + $0x6ec] sm:$0xf]
        %v593 = vld [vmem:[%s1 + $0x6f0] sm:$0xff]
        %v594 = vld [vmem:[%s1 + $0x6f8] sm:$0xf]
        %v595 = vld [vmem:[%s1 + $0x6fc] sm:$0xff]
        %v596 = vld [vmem:[%s1 + $0x704] sm:$0xf]
        %v597 = vld [vmem:[%s1 + $0x708] sm:$0xff]
        %v598 = vld [vmem:[%s1 + $0x710] sm:$0xf]
        %v599 = vld [vmem:[%s1 + $0x714] sm:$0xff]
        %v600 = vld [vmem:[%s1 + $0x71c] sm:$0xf]
        %v601 = vld [vmem:[%s1 + $0x720] sm:$0xff]
        %v602 = vld [vmem:[%s1 + $0x728] sm:$0xf]
        %v603 = vld [vmem:[%s1 + $0x72c] sm:$0xff]
        %v604 = vld [vmem:[%s1 + $0x734] sm:$0xf]
        %v605 = vld [vmem:[%s2] sm:$0xff]
        %v606 = vld [vmem:[%s2 + $0x8] sm:$0xff]
        %v607 = vld [vmem:[%s2 + $0x10] sm:$0xff]
        %v608 = vld [vmem:[%s2 + $0x18] sm:$0xff]
        %v609 = vld [vmem:[%s2 + $0x20] sm:$0xff]
        %v610 = vld [vmem:[%s2 + $0x28] sm:$0xff]
        %v611 = vld [vmem:[%s2 + $0x30] sm:$0xff]
        %v612 = vld [vmem:[%s2 + $0x38] sm:$0xff]
        %v613 = vld [vmem:[%s2 + $0x40] sm:$0xff]
        %v614 = vld [vmem:[%s2 + $0x48] sm:$0xff]
        %v615 = vld [vmem:[%s2 + $0x50] sm:$0xff]
        %v616 = vld [vmem:[%s2 + $0x58] sm:$0xff]
        %v617 = vld [vmem:[%s2 + $0x60] sm:$0xff]
        %v618 = vld [vmem:[%s2 + $0x68] sm:$0xff]
        %v619 = vld [vmem:[%s2 + $0x70] sm:$0xff]
        %v620 = vld [vmem:[%s2 + $0x78] sm:$0xff]
        %v621 = vld [vmem:[%s2 + $0x80] sm:$0xff]
        %v622 = vld [vmem:[%s2 + $0x88] sm:$0xff]
        %v623 = vld [vmem:[%s2 + $0x90] sm:$0xff]
        %v624 = vld [vmem:[%s2 + $0x98] sm:$0xff]
        %v625 = vld [vmem:[%s2 + $0xa0] sm:$0xff]
        %v626 = vld [vmem:[%s2 + $0xa8] sm:$0xff]
        %v627 = vld [vmem:[%s2 + $0xb0] sm:$0xff]
        %v628 = vld [vmem:[%s2 + $0xb8] sm:$0xff]
        %v629 = vld [vmem:[%s2 + $0xc0] sm:$0xff]
        %v630 = vld [vmem:[%s2 + $0xc8] sm:$0xff]
        %v631 = vld [vmem:[%s2 + $0xd0] sm:$0xff]
        %v632 = vld [vmem:[%s2 + $0xd8] sm:$0xff]
        %v633 = vld [vmem:[%s2 + $0xe0] sm:$0xff]
        %v634 = vld [vmem:[%s2 + $0xe8] sm:$0xff]
        %v635 = vld [vmem:[%s2 + $0xf0] sm:$0xff]
        %v636 = vld [vmem:[%s2 + $0xf8] sm:$0xff]
        %v637 = vld [vmem:[%s2 + $0x100] sm:$0xff]
        %v638 = vld [vmem:[%s2 + $0x108] sm:$0xff]
        %v639 = vld [vmem:[%s2 + $0x110] sm:$0xff]
        %v640 = vld [vmem:[%s2 + $0x118] sm:$0xff]
        %v641 = vld [vmem:[%s2 + $0x120] sm:$0xff]
        %v642 = vld [vmem:[%s2 + $0x128] sm:$0xff]
        %v643 = vld [vmem:[%s2 + $0x130] sm:$0xff]
        %v644 = vld [vmem:[%s2 + $0x138] sm:$0xff]
        %v645 = vld [vmem:[%s2 + $0x140] sm:$0xff]
        %v646 = vld [vmem:[%s2 + $0x148] sm:$0xff]
        %v647 = vld [vmem:[%s2 + $0x150] sm:$0xff]
        %v648 = vld [vmem:[%s2 + $0x158] sm:$0xff]
        %v649 = vld [vmem:[%s2 + $0x160] sm:$0xff]
        %v650 = vld [vmem:[%s2 + $0x168] sm:$0xff]
        %v651 = vld [vmem:[%s2 + $0x170] sm:$0xff]
        %v652 = vld [vmem:[%s2 + $0x178] sm:$0xff]
        %v653 = vld [vmem:[%s2 + $0x180] sm:$0xff]
        %v654 = vld [vmem:[%s2 + $0x188] sm:$0xff]
        %v655 = vld [vmem:[%s2 + $0x190] sm:$0xff]
        %v656 = vld [vmem:[%s2 + $0x198] sm:$0xff]
        %v657 = vld [vmem:[%s2 + $0x1a0] sm:$0xff]
        %v658 = vld [vmem:[%s2 + $0x1a8] sm:$0xff]
        %v659 = vld [vmem:[%s2 + $0x1b0] sm:$0xff]
        %v660 = vld [vmem:[%s2 + $0x1b8] sm:$0xff]
        %v661 = vld [vmem:[%s2 + $0x1c0] sm:$0xff]
        %v662 = vld [vmem:[%s2 + $0x1c8] sm:$0xff]
        %v663 = vld [vmem:[%s2 + $0x1d0] sm:$0xff]
        %v664 = vld [vmem:[%s2 + $0x1d8] sm:$0xff]
        %v665 = vld [vmem:[%s2 + $0x1e0] sm:$0xff]
        %v666 = vld [vmem:[%s2 + $0x1e8] sm:$0xff]
        %v667 = vld [vmem:[%s2 + $0x1f0] sm:$0xff]
        %v668 = vld [vmem:[%s2 + $0x1f8] sm:$0xff]
        %v669 = vld [vmem:[%s2 + $0x200] sm:$0xff]
        %v670 = vld [vmem:[%s2 + $0x208] sm:$0xff]
        %v671 = vld [vmem:[%s2 + $0x210] sm:$0xff]
        %v672 = vld [vmem:[%s2 + $0x218] sm:$0xff]
        %v673 = vld [vmem:[%s2 + $0x220] sm:$0xff]
        %v674 = vld [vmem:[%s2 + $0x228] sm:$0xff]
        %v675 = vld [vmem:[%s2 + $0x230] sm:$0xff]
        %v676 = vld [vmem:[%s2 + $0x238] sm:$0xff]
        %v677 = vld [vmem:[%s2 + $0x240] sm:$0xff]
        %v678 = vld [vmem:[%s2 + $0x248] sm:$0xff]
        %v679 = vld [vmem:[%s2 + $0x250] sm:$0xff]
        %v680 = vld [vmem:[%s2 + $0x258] sm:$0xff]
        %v681 = vld [vmem:[%s2 + $0x260] sm:$0xff]
        %v682 = vld [vmem:[%s2 + $0x268] sm:$0xff]
        %v683 = vld [vmem:[%s2 + $0x270] sm:$0xff]
        %v684 = vld [vmem:[%s2 + $0x278] sm:$0xff]
        %v685 = vld [vmem:[%s2 + $0x280] sm:$0xff]
        %v686 = vld [vmem:[%s2 + $0x288] sm:$0xff]
        %v687 = vld [vmem:[%s2 + $0x290] sm:$0xff]
        %v688 = vld [vmem:[%s2 + $0x298] sm:$0xff]
        %v689 = vld [vmem:[%s2 + $0x2a0] sm:$0xff]
        %v690 = vld [vmem:[%s2 + $0x2a8] sm:$0xff]
        %v691 = vld [vmem:[%s2 + $0x2b0] sm:$0xff]
        %v692 = vld [vmem:[%s2 + $0x2b8] sm:$0xff]
        %v693 = vld [vmem:[%s2 + $0x2c0] sm:$0xff]
        %v694 = vld [vmem:[%s2 + $0x2c8] sm:$0xff]
        %v695 = vld [vmem:[%s2 + $0x2d0] sm:$0xff]
        %v696 = vld [vmem:[%s2 + $0x2d8] sm:$0xff]
        %v697 = vld [vmem:[%s2 + $0x2e0] sm:$0xff]
        %v698 = vld [vmem:[%s2 + $0x2e8] sm:$0xff]
        %v699 = vld [vmem:[%s2 + $0x2f0] sm:$0xff]
        %v700 = vld [vmem:[%s2 + $0x2f8] sm:$0xff]
        %v701 = vld [vmem:[%s2 + $0x300] sm:$0xff]
        %v702 = vld [vmem:[%s2 + $0x308] sm:$0xff]
        %v703 = vld [vmem:[%s2 + $0x310] sm:$0xff]
        %v704 = vld [vmem:[%s2 + $0x318] sm:$0xff]
        %v705 = vld [vmem:[%s2 + $0x320] sm:$0xff]
        %v706 = vld [vmem:[%s2 + $0x328] sm:$0xff]
        %v707 = vld [vmem:[%s2 + $0x330] sm:$0xff]
        %v708 = vld [vmem:[%s2 + $0x338] sm:$0xff]
        %v709 = vld [vmem:[%s2 + $0x340] sm:$0xff]
        %v710 = vld [vmem:[%s2 + $0x348] sm:$0xff]
        %v711 = vld [vmem:[%s2 + $0x350] sm:$0xff]
        %v712 = vld [vmem:[%s2 + $0x358] sm:$0xff]
        %v713 = vld [vmem:[%s2 + $0x360] sm:$0xff]
        %v714 = vld [vmem:[%s2 + $0x368] sm:$0xff]
        %v715 = vld [vmem:[%s2 + $0x370] sm:$0xff]
        %v716 = vld [vmem:[%s2 + $0x378] sm:$0xff]
        %v717 = vld [vmem:[%s2 + $0x380] sm:$0xff]
        %v718 = vld [vmem:[%s2 + $0x388] sm:$0xff]
        %v719 = vld [vmem:[%s2 + $0x390] sm:$0xff]
        %v720 = vld [vmem:[%s2 + $0x398] sm:$0xff]
        %v721 = vld [vmem:[%s2 + $0x3a0] sm:$0xff]
        %v722 = vld [vmem:[%s2 + $0x3a8] sm:$0xff]
        %v723 = vld [vmem:[%s2 + $0x3b0] sm:$0xff]
        %v724 = vld [vmem:[%s2 + $0x3b8] sm:$0xff]
        %v725 = vld [vmem:[%s2 + $0x3c0] sm:$0xff]
        %v726 = vld [vmem:[%s2 + $0x3c8] sm:$0xff]
        %v727 = vld [vmem:[%s2 + $0x3d0] sm:$0xff]
        %v728 = vld [vmem:[%s2 + $0x3d8] sm:$0xff]
        %v729 = vld [vmem:[%s2 + $0x3e0] sm:$0xff]
        %v730 = vld [vmem:[%s2 + $0x3e8] sm:$0xff]
        %v731 = vld [vmem:[%s2 + $0x3f0] sm:$0xff]
        %v732 = vld [vmem:[%s2 + $0x3f8] sm:$0xff]
        %v733 = vld [vmem:[%s2 + $0x400] sm:$0xff]
        %v734 = vld [vmem:[%s2 + $0x408] sm:$0xff]
        %v735 = vld [vmem:[%s2 + $0x410] sm:$0xff]
        %v736 = vld [vmem:[%s2 + $0x418] sm:$0xff]
        %v737 = vld [vmem:[%s2 + $0x420] sm:$0xff]
        %v738 = vld [vmem:[%s2 + $0x428] sm:$0xff]
        %v739 = vld [vmem:[%s2 + $0x430] sm:$0xff]
        %v740 = vld [vmem:[%s2 + $0x438] sm:$0xff]
        %v741 = vld [vmem:[%s2 + $0x440] sm:$0xff]
        %v742 = vld [vmem:[%s2 + $0x448] sm:$0xff]
        %v743 = vld [vmem:[%s2 + $0x450] sm:$0xff]
        %v744 = vld [vmem:[%s2 + $0x458] sm:$0xff]
        %v745 = vld [vmem:[%s2 + $0x460] sm:$0xff]
        %v746 = vld [vmem:[%s2 + $0x468] sm:$0xff]
        %v747 = vld [vmem:[%s2 + $0x470] sm:$0xff]
        %v748 = vld [vmem:[%s2 + $0x478] sm:$0xff]
        %v749 = vld [vmem:[%s2 + $0x480] sm:$0xff]
        %v750 = vld [vmem:[%s2 + $0x488] sm:$0xff]
        %v751 = vld [vmem:[%s2 + $0x490] sm:$0xff]
        %v752 = vld [vmem:[%s2 + $0x498] sm:$0xff]
        %v753 = vld [vmem:[%s2 + $0x4a0] sm:$0xff]
        %v754 = vld [vmem:[%s2 + $0x4a8] sm:$0xff]
        %v755 = vld [vmem:[%s2 + $0x4b0] sm:$0xff]
        %v756 = vld [vmem:[%s2 + $0x4b8] sm:$0xff]
        %v757 = vld [vmem:[%s2 + $0x4c0] sm:$0xff]
        %v758 = vld [vmem:[%s2 + $0x4c8] sm:$0xff]
        %v1067 = vunpack.c.l.b16 %v297
        %v1068 = vunpack.c.h.b16 %v297
        %v1069 = vunpack.c.l.b16 %v298
        %v1070 = vunpack.c.l.b16 %v299
        %v1071 = vunpack.c.h.b16 %v299
        %v1072 = vunpack.c.l.b16 %v300
        %v1073 = vunpack.c.l.b16 %v301
        %v1074 = vunpack.c.h.b16 %v301
        %v1075 = vunpack.c.l.b16 %v302
        %v1076 = vunpack.c.l.b16 %v303
        %v1077 = vunpack.c.h.b16 %v303
        %v1078 = vunpack.c.l.b16 %v304
        %v1079 = vunpack.c.l.b16 %v305
        %v1080 = vunpack.c.h.b16 %v305
        %v1081 = vunpack.c.l.b16 %v306
        %v1082 = vunpack.c.l.b16 %v307
        %v1083 = vunpack.c.h.b16 %v307
        %v1084 = vunpack.c.l.b16 %v308
        %v1085 = vunpack.c.l.b16 %v309
        %v1086 = vunpack.c.h.b16 %v309
        %v1087 = vunpack.c.l.b16 %v310
        %v1088 = vunpack.c.l.b16 %v311
        %v1089 = vunpack.c.h.b16 %v311
        %v1090 = vunpack.c.l.b16 %v312
        %v1091 = vunpack.c.l.b16 %v313
        %v1092 = vunpack.c.h.b16 %v313
        %v1093 = vunpack.c.l.b16 %v314
        %v1094 = vunpack.c.l.b16 %v315
        %v1095 = vunpack.c.h.b16 %v315
        %v1096 = vunpack.c.l.b16 %v316
        %v1097 = vunpack.c.l.b16 %v317
        %v1098 = vunpack.c.h.b16 %v317
        %v1099 = vunpack.c.l.b16 %v318
        %v1100 = vunpack.c.l.b16 %v319
        %v1101 = vunpack.c.h.b16 %v319
        %v1102 = vunpack.c.l.b16 %v320
        %v1103 = vunpack.c.l.b16 %v321
        %v1104 = vunpack.c.h.b16 %v321
        %v1105 = vunpack.c.l.b16 %v322
        %v1106 = vunpack.c.l.b16 %v323
        %v1107 = vunpack.c.h.b16 %v323
        %v1108 = vunpack.c.l.b16 %v324
        %v1109 = vunpack.c.l.b16 %v325
        %v1110 = vunpack.c.h.b16 %v325
        %v1111 = vunpack.c.l.b16 %v326
        %v1112 = vunpack.c.l.b16 %v327
        %v1113 = vunpack.c.h.b16 %v327
        %v1114 = vunpack.c.l.b16 %v328
        %v1115 = vunpack.c.l.b16 %v329
        %v1116 = vunpack.c.h.b16 %v329
        %v1117 = vunpack.c.l.b16 %v330
        %v1118 = vunpack.c.l.b16 %v331
        %v1119 = vunpack.c.h.b16 %v331
        %v1120 = vunpack.c.l.b16 %v332
        %v1121 = vunpack.c.l.b16 %v333
        %v1122 = vunpack.c.h.b16 %v333
        %v1123 = vunpack.c.l.b16 %v334
        %v1124 = vunpack.c.l.b16 %v335
        %v1125 = vunpack.c.h.b16 %v335
        %v1126 = vunpack.c.l.b16 %v336
        %v1127 = vunpack.c.l.b16 %v337
        %v1128 = vunpack.c.h.b16 %v337
        %v1129 = vunpack.c.l.b16 %v338
        %v1130 = vunpack.c.l.b16 %v339
        %v1131 = vunpack.c.h.b16 %v339
        %v1132 = vunpack.c.l.b16 %v340
        %v1133 = vunpack.c.l.b16 %v341
        %v1134 = vunpack.c.h.b16 %v341
        %v1135 = vunpack.c.l.b16 %v342
        %v1136 = vunpack.c.l.b16 %v343
        %v1137 = vunpack.c.h.b16 %v343
        %v1138 = vunpack.c.l.b16 %v344
        %v1139 = vunpack.c.l.b16 %v345
        %v1140 = vunpack.c.h.b16 %v345
        %v1141 = vunpack.c.l.b16 %v346
        %v1142 = vunpack.c.l.b16 %v347
        %v1143 = vunpack.c.h.b16 %v347
        %v1144 = vunpack.c.l.b16 %v348
        %v1145 = vunpack.c.l.b16 %v349
        %v1146 = vunpack.c.h.b16 %v349
        %v1147 = vunpack.c.l.b16 %v350
        %v1148 = vunpack.c.l.b16 %v351
        %v1149 = vunpack.c.h.b16 %v351
        %v1150 = vunpack.c.l.b16 %v352
        %v1151 = vunpack.c.l.b16 %v353
        %v1152 = vunpack.c.h.b16 %v353
        %v1153 = vunpack.c.l.b16 %v354
        %v1154 = vunpack.c.l.b16 %v355
        %v1155 = vunpack.c.h.b16 %v355
        %v1156 = vunpack.c.l.b16 %v356
        %v1157 = vunpack.c.l.b16 %v357
        %v1158 = vunpack.c.h.b16 %v357
        %v1159 = vunpack.c.l.b16 %v358
        %v1160 = vunpack.c.l.b16 %v359
        %v1161 = vunpack.c.h.b16 %v359
        %v1162 = vunpack.c.l.b16 %v360
        %v1163 = vunpack.c.l.b16 %v361
        %v1164 = vunpack.c.h.b16 %v361
        %v1165 = vunpack.c.l.b16 %v362
        %v1166 = vunpack.c.l.b16 %v363
        %v1167 = vunpack.c.h.b16 %v363
        %v1168 = vunpack.c.l.b16 %v364
        %v1169 = vunpack.c.l.b16 %v365
        %v1170 = vunpack.c.h.b16 %v365
        %v1171 = vunpack.c.l.b16 %v366
        %v1172 = vunpack.c.l.b16 %v367
        %v1173 = vunpack.c.h.b16 %v367
        %v1174 = vunpack.c.l.b16 %v368
        %v1175 = vunpack.c.l.b16 %v369
        %v1176 = vunpack.c.h.b16 %v369
        %v1177 = vunpack.c.l.b16 %v370
        %v1178 = vunpack.c.l.b16 %v371
        %v1179 = vunpack.c.h.b16 %v371
        %v1180 = vunpack.c.l.b16 %v372
        %v1181 = vunpack.c.l.b16 %v373
        %v1182 = vunpack.c.h.b16 %v373
        %v1183 = vunpack.c.l.b16 %v374
        %v1184 = vunpack.c.l.b16 %v375
        %v1185 = vunpack.c.h.b16 %v375
        %v1186 = vunpack.c.l.b16 %v376
        %v1187 = vunpack.c.l.b16 %v377
        %v1188 = vunpack.c.h.b16 %v377
        %v1189 = vunpack.c.l.b16 %v378
        %v1190 = vunpack.c.l.b16 %v379
        %v1191 = vunpack.c.h.b16 %v379
        %v1192 = vunpack.c.l.b16 %v380
        %v1193 = vunpack.c.l.b16 %v381
        %v1194 = vunpack.c.h.b16 %v381
        %v1195 = vunpack.c.l.b16 %v382
        %v1196 = vunpack.c.l.b16 %v383
        %v1197 = vunpack.c.h.b16 %v383
        %v1198 = vunpack.c.l.b16 %v384
        %v1199 = vunpack.c.l.b16 %v385
        %v1200 = vunpack.c.h.b16 %v385
        %v1201 = vunpack.c.l.b16 %v386
        %v1202 = vunpack.c.l.b16 %v387
        %v1203 = vunpack.c.h.b16 %v387
        %v1204 = vunpack.c.l.b16 %v388
        %v1205 = vunpack.c.l.b16 %v389
        %v1206 = vunpack.c.h.b16 %v389
        %v1207 = vunpack.c.l.b16 %v390
        %v1208 = vunpack.c.l.b16 %v391
        %v1209 = vunpack.c.h.b16 %v391
        %v1210 = vunpack.c.l.b16 %v392
        %v1211 = vunpack.c.l.b16 %v393
        %v1212 = vunpack.c.h.b16 %v393
        %v1213 = vunpack.c.l.b16 %v394
        %v1214 = vunpack.c.l.b16 %v395
        %v1215 = vunpack.c.h.b16 %v395
        %v1216 = vunpack.c.l.b16 %v396
        %v1217 = vunpack.c.l.b16 %v397
        %v1218 = vunpack.c.h.b16 %v397
        %v1219 = vunpack.c.l.b16 %v398
        %v1220 = vunpack.c.l.b16 %v399
        %v1221 = vunpack.c.h.b16 %v399
        %v1222 = vunpack.c.l.b16 %v400
        %v1223 = vunpack.c.l.b16 %v401
        %v1224 = vunpack.c.h.b16 %v401
        %v1225 = vunpack.c.l.b16 %v402
        %v1226 = vunpack.c.l.b16 %v403
        %v1227 = vunpack.c.h.b16 %v403
        %v1228 = vunpack.c.l.b16 %v404
        %v1229 = vunpack.c.l.b16 %v405
        %v1230 = vunpack.c.h.b16 %v405
        %v1231 = vunpack.c.l.b16 %v406
        %v1232 = vunpack.c.l.b16 %v407
        %v1233 = vunpack.c.h.b16 %v407
        %v1234 = vunpack.c.l.b16 %v408
        %v1235 = vunpack.c.l.b16 %v409
        %v1236 = vunpack.c.h.b16 %v409
        %v1237 = vunpack.c.l.b16 %v410
        %v1238 = vunpack.c.l.b16 %v411
        %v1239 = vunpack.c.h.b16 %v411
        %v1240 = vunpack.c.l.b16 %v412
        %v1241 = vunpack.c.l.b16 %v413
        %v1242 = vunpack.c.h.b16 %v413
        %v1243 = vunpack.c.l.b16 %v414
        %v1244 = vunpack.c.l.b16 %v415
        %v1245 = vunpack.c.h.b16 %v415
        %v1246 = vunpack.c.l.b16 %v416
        %v1247 = vunpack.c.l.b16 %v417
        %v1248 = vunpack.c.h.b16 %v417
        %v1249 = vunpack.c.l.b16 %v418
        %v1250 = vunpack.c.l.b16 %v419
        %v1251 = vunpack.c.h.b16 %v419
        %v1252 = vunpack.c.l.b16 %v420
        %v1253 = vunpack.c.l.b16 %v421
        %v1254 = vunpack.c.h.b16 %v421
        %v1255 = vunpack.c.l.b16 %v422
        %v1256 = vunpack.c.l.b16 %v423
        %v1257 = vunpack.c.h.b16 %v423
        %v1258 = vunpack.c.l.b16 %v424
        %v1259 = vunpack.c.l.b16 %v425
        %v1260 = vunpack.c.h.b16 %v425
        %v1261 = vunpack.c.l.b16 %v426
        %v1262 = vunpack.c.l.b16 %v427
        %v1263 = vunpack.c.h.b16 %v427
        %v1264 = vunpack.c.l.b16 %v428
        %v1265 = vunpack.c.l.b16 %v429
        %v1266 = vunpack.c.h.b16 %v429
        %v1267 = vunpack.c.l.b16 %v430
        %v1268 = vunpack.c.l.b16 %v431
        %v1269 = vunpack.c.h.b16 %v431
        %v1270 = vunpack.c.l.b16 %v432
        %v1271 = vunpack.c.l.b16 %v433
        %v1272 = vunpack.c.h.b16 %v433
        %v1273 = vunpack.c.l.b16 %v434
        %v1274 = vunpack.c.l.b16 %v435
        %v1275 = vunpack.c.h.b16 %v435
        %v1276 = vunpack.c.l.b16 %v436
        %v1277 = vunpack.c.l.b16 %v437
        %v1278 = vunpack.c.h.b16 %v437
        %v1279 = vunpack.c.l.b16 %v438
        %v1280 = vunpack.c.l.b16 %v439
        %v1281 = vunpack.c.h.b16 %v439
        %v1282 = vunpack.c.l.b16 %v440
        %v1283 = vunpack.c.l.b16 %v441
        %v1284 = vunpack.c.h.b16 %v441
        %v1285 = vunpack.c.l.b16 %v442
        %v1286 = vunpack.c.l.b16 %v443
        %v1287 = vunpack.c.h.b16 %v443
        %v1288 = vunpack.c.l.b16 %v444
        %v1289 = vunpack.c.l.b16 %v445
        %v1290 = vunpack.c.h.b16 %v445
        %v1291 = vunpack.c.l.b16 %v446
        %v1292 = vunpack.c.l.b16 %v447
        %v1293 = vunpack.c.h.b16 %v447
        %v1294 = vunpack.c.l.b16 %v448
        %v1295 = vunpack.c.l.b16 %v449
        %v1296 = vunpack.c.h.b16 %v449
        %v1297 = vunpack.c.l.b16 %v450
        %v1298 = vunpack.c.l.b16 %v451
        %v1299 = vunpack.c.h.b16 %v451
        %v1300 = vunpack.c.l.b16 %v452
        %v1301 = vunpack.c.l.b16 %v453
        %v1302 = vunpack.c.h.b16 %v453
        %v1303 = vunpack.c.l.b16 %v454
        %v1304 = vunpack.c.l.b16 %v455
        %v1305 = vunpack.c.h.b16 %v455
        %v1306 = vunpack.c.l.b16 %v456
        %v1307 = vunpack.c.l.b16 %v457
        %v1308 = vunpack.c.h.b16 %v457
        %v1309 = vunpack.c.l.b16 %v458
        %v1310 = vunpack.c.l.b16 %v459
        %v1311 = vunpack.c.h.b16 %v459
        %v1312 = vunpack.c.l.b16 %v460
        %v1313 = vunpack.c.l.b16 %v461
        %v1314 = vunpack.c.h.b16 %v461
        %v1315 = vunpack.c.l.b16 %v462
        %v1316 = vunpack.c.l.b16 %v463
        %v1317 = vunpack.c.h.b16 %v463
        %v1318 = vunpack.c.l.b16 %v464
        %v1319 = vunpack.c.l.b16 %v465
        %v1320 = vunpack.c.h.b16 %v465
        %v1321 = vunpack.c.l.b16 %v466
        %v1322 = vunpack.c.l.b16 %v467
        %v1323 = vunpack.c.h.b16 %v467
        %v1324 = vunpack.c.l.b16 %v468
        %v1325 = vunpack.c.l.b16 %v469
        %v1326 = vunpack.c.h.b16 %v469
        %v1327 = vunpack.c.l.b16 %v470
        %v1328 = vunpack.c.l.b16 %v471
        %v1329 = vunpack.c.h.b16 %v471
        %v1330 = vunpack.c.l.b16 %v472
        %v1331 = vunpack.c.l.b16 %v473
        %v1332 = vunpack.c.h.b16 %v473
        %v1333 = vunpack.c.l.b16 %v474
        %v1334 = vunpack.c.l.b16 %v475
        %v1335 = vunpack.c.h.b16 %v475
        %v1336 = vunpack.c.l.b16 %v476
        %v1337 = vunpack.c.l.b16 %v477
        %v1338 = vunpack.c.h.b16 %v477
        %v1339 = vunpack.c.l.b16 %v478
        %v1340 = vunpack.c.l.b16 %v479
        %v1341 = vunpack.c.h.b16 %v479
        %v1342 = vunpack.c.l.b16 %v480
        %v1343 = vunpack.c.l.b16 %v481
        %v1344 = vunpack.c.h.b16 %v481
        %v1345 = vunpack.c.l.b16 %v482
        %v1346 = vunpack.c.l.b16 %v483
        %v1347 = vunpack.c.h.b16 %v483
        %v1348 = vunpack.c.l.b16 %v484
        %v1349 = vunpack.c.l.b16 %v485
        %v1350 = vunpack.c.h.b16 %v485
        %v1351 = vunpack.c.l.b16 %v486
        %v1352 = vunpack.c.l.b16 %v487
        %v1353 = vunpack.c.h.b16 %v487
        %v1354 = vunpack.c.l.b16 %v488
        %v1355 = vunpack.c.l.b16 %v489
        %v1356 = vunpack.c.h.b16 %v489
        %v1357 = vunpack.c.l.b16 %v490
        %v1358 = vunpack.c.l.b16 %v491
        %v1359 = vunpack.c.h.b16 %v491
        %v1360 = vunpack.c.l.b16 %v492
        %v1361 = vunpack.c.l.b16 %v493
        %v1362 = vunpack.c.h.b16 %v493
        %v1363 = vunpack.c.l.b16 %v494
        %v1364 = vunpack.c.l.b16 %v495
        %v1365 = vunpack.c.h.b16 %v495
        %v1366 = vunpack.c.l.b16 %v496
        %v1367 = vunpack.c.l.b16 %v497
        %v1368 = vunpack.c.h.b16 %v497
        %v1369 = vunpack.c.l.b16 %v498
        %v1370 = vunpack.c.l.b16 %v499
        %v1371 = vunpack.c.h.b16 %v499
        %v1372 = vunpack.c.l.b16 %v500
        %v1373 = vunpack.c.l.b16 %v501
        %v1374 = vunpack.c.h.b16 %v501
        %v1375 = vunpack.c.l.b16 %v502
        %v1376 = vunpack.c.l.b16 %v503
        %v1377 = vunpack.c.h.b16 %v503
        %v1378 = vunpack.c.l.b16 %v504
        %v1379 = vunpack.c.l.b16 %v505
        %v1380 = vunpack.c.h.b16 %v505
        %v1381 = vunpack.c.l.b16 %v506
        %v1382 = vunpack.c.l.b16 %v507
        %v1383 = vunpack.c.h.b16 %v507
        %v1384 = vunpack.c.l.b16 %v508
        %v1385 = vunpack.c.l.b16 %v509
        %v1386 = vunpack.c.h.b16 %v509
        %v1387 = vunpack.c.l.b16 %v510
        %v1388 = vunpack.c.l.b16 %v511
        %v1389 = vunpack.c.h.b16 %v511
        %v1390 = vunpack.c.l.b16 %v512
        %v1391 = vunpack.c.l.b16 %v513
        %v1392 = vunpack.c.h.b16 %v513
        %v1393 = vunpack.c.l.b16 %v514
        %v1394 = vunpack.c.l.b16 %v515
        %v1395 = vunpack.c.h.b16 %v515
        %v1396 = vunpack.c.l.b16 %v516
        %v1397 = vunpack.c.l.b16 %v517
        %v1398 = vunpack.c.h.b16 %v517
        %v1399 = vunpack.c.l.b16 %v518
        %v1400 = vunpack.c.l.b16 %v519
        %v1401 = vunpack.c.h.b16 %v519
        %v1402 = vunpack.c.l.b16 %v520
        %v1403 = vunpack.c.l.b16 %v521
        %v1404 = vunpack.c.h.b16 %v521
        %v1405 = vunpack.c.l.b16 %v522
        %v1406 = vunpack.c.l.b16 %v523
        %v1407 = vunpack.c.h.b16 %v523
        %v1408 = vunpack.c.l.b16 %v524
        %v1409 = vunpack.c.l.b16 %v525
        %v1410 = vunpack.c.h.b16 %v525
        %v1411 = vunpack.c.l.b16 %v526
        %v1412 = vunpack.c.l.b16 %v527
        %v1413 = vunpack.c.h.b16 %v527
        %v1414 = vunpack.c.l.b16 %v528
        %v1415 = vunpack.c.l.b16 %v529
        %v1416 = vunpack.c.h.b16 %v529
        %v1417 = vunpack.c.l.b16 %v530
        %v1418 = vunpack.c.l.b16 %v531
        %v1419 = vunpack.c.h.b16 %v531
        %v1420 = vunpack.c.l.b16 %v532
        %v1421 = vunpack.c.l.b16 %v533
        %v1422 = vunpack.c.h.b16 %v533
        %v1423 = vunpack.c.l.b16 %v534
        %v1424 = vunpack.c.l.b16 %v535
        %v1425 = vunpack.c.h.b16 %v535
        %v1426 = vunpack.c.l.b16 %v536
        %v1427 = vunpack.c.l.b16 %v537
        %v1428 = vunpack.c.h.b16 %v537
        %v1429 = vunpack.c.l.b16 %v538
        %v1430 = vunpack.c.l.b16 %v539
        %v1431 = vunpack.c.h.b16 %v539
        %v1432 = vunpack.c.l.b16 %v540
        %v1433 = vunpack.c.l.b16 %v541
        %v1434 = vunpack.c.h.b16 %v541
        %v1435 = vunpack.c.l.b16 %v542
        %v1436 = vunpack.c.l.b16 %v543
        %v1437 = vunpack.c.h.b16 %v543
        %v1438 = vunpack.c.l.b16 %v544
        %v1439 = vunpack.c.l.b16 %v545
        %v1440 = vunpack.c.h.b16 %v545
        %v1441 = vunpack.c.l.b16 %v546
        %v1442 = vunpack.c.l.b16 %v547
        %v1443 = vunpack.c.h.b16 %v547
        %v1444 = vunpack.c.l.b16 %v548
        %v1445 = vunpack.c.l.b16 %v549
        %v1446 = vunpack.c.h.b16 %v549
        %v1447 = vunpack.c.l.b16 %v550
        %v1448 = vunpack.c.l.b16 %v551
        %v1449 = vunpack.c.h.b16 %v551
        %v1450 = vunpack.c.l.b16 %v552
        %v1451 = vunpack.c.l.b16 %v553
        %v1452 = vunpack.c.h.b16 %v553
        %v1453 = vunpack.c.l.b16 %v554
        %v1454 = vunpack.c.l.b16 %v555
        %v1455 = vunpack.c.h.b16 %v555
        %v1456 = vunpack.c.l.b16 %v556
        %v1457 = vunpack.c.l.b16 %v557
        %v1458 = vunpack.c.h.b16 %v557
        %v1459 = vunpack.c.l.b16 %v558
        %v1460 = vunpack.c.l.b16 %v559
        %v1461 = vunpack.c.h.b16 %v559
        %v1462 = vunpack.c.l.b16 %v560
        %v1463 = vunpack.c.l.b16 %v561
        %v1464 = vunpack.c.h.b16 %v561
        %v1465 = vunpack.c.l.b16 %v562
        %v1466 = vunpack.c.l.b16 %v563
        %v1467 = vunpack.c.h.b16 %v563
        %v1468 = vunpack.c.l.b16 %v564
        %v1469 = vunpack.c.l.b16 %v565
        %v1470 = vunpack.c.h.b16 %v565
        %v1471 = vunpack.c.l.b16 %v566
        %v1472 = vunpack.c.l.b16 %v567
        %v1473 = vunpack.c.h.b16 %v567
        %v1474 = vunpack.c.l.b16 %v568
        %v1475 = vunpack.c.l.b16 %v569
        %v1476 = vunpack.c.h.b16 %v569
        %v1477 = vunpack.c.l.b16 %v570
        %v1478 = vunpack.c.l.b16 %v571
        %v1479 = vunpack.c.h.b16 %v571
        %v1480 = vunpack.c.l.b16 %v572
        %v1481 = vunpack.c.l.b16 %v573
        %v1482 = vunpack.c.h.b16 %v573
        %v1483 = vunpack.c.l.b16 %v574
        %v1484 = vunpack.c.l.b16 %v575
        %v1485 = vunpack.c.h.b16 %v575
        %v1486 = vunpack.c.l.b16 %v576
        %v1487 = vunpack.c.l.b16 %v577
        %v1488 = vunpack.c.h.b16 %v577
        %v1489 = vunpack.c.l.b16 %v578
        %v1490 = vunpack.c.l.b16 %v579
        %v1491 = vunpack.c.h.b16 %v579
        %v1492 = vunpack.c.l.b16 %v580
        %v1493 = vunpack.c.l.b16 %v581
        %v1494 = vunpack.c.h.b16 %v581
        %v1495 = vunpack.c.l.b16 %v582
        %v1496 = vunpack.c.l.b16 %v583
        %v1497 = vunpack.c.h.b16 %v583
        %v1498 = vunpack.c.l.b16 %v584
        %v1499 = vunpack.c.l.b16 %v585
        %v1500 = vunpack.c.h.b16 %v585
        %v1501 = vunpack.c.l.b16 %v586
        %v1502 = vunpack.c.l.b16 %v587
        %v1503 = vunpack.c.h.b16 %v587
        %v1504 = vunpack.c.l.b16 %v588
        %v1505 = vunpack.c.l.b16 %v589
        %v1506 = vunpack.c.h.b16 %v589
        %v1507 = vunpack.c.l.b16 %v590
        %v1508 = vunpack.c.l.b16 %v591
        %v1509 = vunpack.c.h.b16 %v591
        %v1510 = vunpack.c.l.b16 %v592
        %v1511 = vunpack.c.l.b16 %v593
        %v1512 = vunpack.c.h.b16 %v593
        %v1513 = vunpack.c.l.b16 %v594
        %v1514 = vunpack.c.l.b16 %v595
        %v1515 = vunpack.c.h.b16 %v595
        %v1516 = vunpack.c.l.b16 %v596
        %v1517 = vunpack.c.l.b16 %v597
        %v1518 = vunpack.c.h.b16 %v597
        %v1519 = vunpack.c.l.b16 %v598
        %v1520 = vunpack.c.l.b16 %v599
        %v1521 = vunpack.c.h.b16 %v599
        %v1522 = vunpack.c.l.b16 %v600
        %v1523 = vunpack.c.l.b16 %v601
        %v1524 = vunpack.c.h.b16 %v601
        %v1525 = vunpack.c.l.b16 %v602
        %v1526 = vunpack.c.l.b16 %v603
        %v1527 = vunpack.c.h.b16 %v603
        %v1528 = vunpack.c.l.b16 %v604
        %v1529 = vpack.c.b16 %v1070, %v1067
        %v1530 = vpack.c.b16 %v1071, %v1068
        %v1531 = vpack.c.b16 %v1072, %v1069
        %v1532 = vpack.c.b16 %v1076, %v1073
        %v1533 = vpack.c.b16 %v1077, %v1074
        %v1534 = vpack.c.b16 %v1078, %v1075
        %v1535 = vpack.c.b16 %v1082, %v1079
        %v1536 = vpack.c.b16 %v1083, %v1080
        %v1537 = vpack.c.b16 %v1084, %v1081
        %v1538 = vpack.c.b16 %v1088, %v1085
        %v1539 = vpack.c.b16 %v1089, %v1086
        %v1540 = vpack.c.b16 %v1090, %v1087
        %v1541 = vpack.c.b16 %v1094, %v1091
        %v1542 = vpack.c.b16 %v1095, %v1092
        %v1543 = vpack.c.b16 %v1096, %v1093
        %v1544 = vpack.c.b16 %v1100, %v1097
        %v1545 = vpack.c.b16 %v1101, %v1098
        %v1546 = vpack.c.b16 %v1102, %v1099
        %v1547 = vpack.c.b16 %v1106, %v1103
        %v1548 = vpack.c.b16 %v1107, %v1104
        %v1549 = vpack.c.b16 %v1108, %v1105
        %v1550 = vpack.c.b16 %v1112, %v1109
        %v1551 = vpack.c.b16 %v1113, %v1110
        %v1552 = vpack.c.b16 %v1114, %v1111
        %v1553 = vpack.c.b16 %v1118, %v1115
        %v1554 = vpack.c.b16 %v1119, %v1116
        %v1555 = vpack.c.b16 %v1120, %v1117
        %v1556 = vpack.c.b16 %v1124, %v1121
        %v1557 = vpack.c.b16 %v1125, %v1122
        %v1558 = vpack.c.b16 %v1126, %v1123
        %v1559 = vpack.c.b16 %v1130, %v1127
        %v1560 = vpack.c.b16 %v1131, %v1128
        %v1561 = vpack.c.b16 %v1132, %v1129
        %v1562 = vpack.c.b16 %v1136, %v1133
        %v1563 = vpack.c.b16 %v1137, %v1134
        %v1564 = vpack.c.b16 %v1138, %v1135
        %v1565 = vpack.c.b16 %v1142, %v1139
        %v1566 = vpack.c.b16 %v1143, %v1140
        %v1567 = vpack.c.b16 %v1144, %v1141
        %v1568 = vpack.c.b16 %v1148, %v1145
        %v1569 = vpack.c.b16 %v1149, %v1146
        %v1570 = vpack.c.b16 %v1150, %v1147
        %v1571 = vpack.c.b16 %v1154, %v1151
        %v1572 = vpack.c.b16 %v1155, %v1152
        %v1573 = vpack.c.b16 %v1156, %v1153
        %v1574 = vpack.c.b16 %v1160, %v1157
        %v1575 = vpack.c.b16 %v1161, %v1158
        %v1576 = vpack.c.b16 %v1162, %v1159
        %v1577 = vpack.c.b16 %v1166, %v1163
        %v1578 = vpack.c.b16 %v1167, %v1164
        %v1579 = vpack.c.b16 %v1168, %v1165
        %v1580 = vpack.c.b16 %v1172, %v1169
        %v1581 = vpack.c.b16 %v1173, %v1170
        %v1582 = vpack.c.b16 %v1174, %v1171
        %v1583 = vpack.c.b16 %v1178, %v1175
        %v1584 = vpack.c.b16 %v1179, %v1176
        %v1585 = vpack.c.b16 %v1180, %v1177
        %v1586 = vpack.c.b16 %v1184, %v1181
        %v1587 = vpack.c.b16 %v1185, %v1182
        %v1588 = vpack.c.b16 %v1186, %v1183
        %v1589 = vpack.c.b16 %v1190, %v1187
        %v1590 = vpack.c.b16 %v1191, %v1188
        %v1591 = vpack.c.b16 %v1192, %v1189
        %v1592 = vpack.c.b16 %v1196, %v1193
        %v1593 = vpack.c.b16 %v1197, %v1194
        %v1594 = vpack.c.b16 %v1198, %v1195
        %v1595 = vpack.c.b16 %v1202, %v1199
        %v1596 = vpack.c.b16 %v1203, %v1200
        %v1597 = vpack.c.b16 %v1204, %v1201
        %v1598 = vpack.c.b16 %v1208, %v1205
        %v1599 = vpack.c.b16 %v1209, %v1206
        %v1600 = vpack.c.b16 %v1210, %v1207
        %v1601 = vpack.c.b16 %v1214, %v1211
        %v1602 = vpack.c.b16 %v1215, %v1212
        %v1603 = vpack.c.b16 %v1216, %v1213
        %v1604 = vpack.c.b16 %v1220, %v1217
        %v1605 = vpack.c.b16 %v1221, %v1218
        %v1606 = vpack.c.b16 %v1222, %v1219
        %v1607 = vpack.c.b16 %v1226, %v1223
        %v1608 = vpack.c.b16 %v1227, %v1224
        %v1609 = vpack.c.b16 %v1228, %v1225
        %v1610 = vpack.c.b16 %v1232, %v1229
        %v1611 = vpack.c.b16 %v1233, %v1230
        %v1612 = vpack.c.b16 %v1234, %v1231
        %v1613 = vpack.c.b16 %v1238, %v1235
        %v1614 = vpack.c.b16 %v1239, %v1236
        %v1615 = vpack.c.b16 %v1240, %v1237
        %v1616 = vpack.c.b16 %v1244, %v1241
        %v1617 = vpack.c.b16 %v1245, %v1242
        %v1618 = vpack.c.b16 %v1246, %v1243
        %v1619 = vpack.c.b16 %v1250, %v1247
        %v1620 = vpack.c.b16 %v1251, %v1248
        %v1621 = vpack.c.b16 %v1252, %v1249
        %v1622 = vpack.c.b16 %v1256, %v1253
        %v1623 = vpack.c.b16 %v1257, %v1254
        %v1624 = vpack.c.b16 %v1258, %v1255
        %v1625 = vpack.c.b16 %v1262, %v1259
        %v1626 = vpack.c.b16 %v1263, %v1260
        %v1627 = vpack.c.b16 %v1264, %v1261
        %v1628 = vpack.c.b16 %v1268, %v1265
        %v1629 = vpack.c.b16 %v1269, %v1266
        %v1630 = vpack.c.b16 %v1270, %v1267
        %v1631 = vpack.c.b16 %v1274, %v1271
        %v1632 = vpack.c.b16 %v1275, %v1272
        %v1633 = vpack.c.b16 %v1276, %v1273
        %v1634 = vpack.c.b16 %v1280, %v1277
        %v1635 = vpack.c.b16 %v1281, %v1278
        %v1636 = vpack.c.b16 %v1282, %v1279
        %v1637 = vpack.c.b16 %v1286, %v1283
        %v1638 = vpack.c.b16 %v1287, %v1284
        %v1639 = vpack.c.b16 %v1288, %v1285
        %v1640 = vpack.c.b16 %v1292, %v1289
        %v1641 = vpack.c.b16 %v1293, %v1290
        %v1642 = vpack.c.b16 %v1294, %v1291
        %v1643 = vpack.c.b16 %v1298, %v1295
        %v1644 = vpack.c.b16 %v1299, %v1296
        %v1645 = vpack.c.b16 %v1300, %v1297
        %v1646 = vpack.c.b16 %v1304, %v1301
        %v1647 = vpack.c.b16 %v1305, %v1302
        %v1648 = vpack.c.b16 %v1306, %v1303
        %v1649 = vpack.c.b16 %v1310, %v1307
        %v1650 = vpack.c.b16 %v1311, %v1308
        %v1651 = vpack.c.b16 %v1312, %v1309
        %v1652 = vpack.c.b16 %v1316, %v1313
        %v1653 = vpack.c.b16 %v1317, %v1314
        %v1654 = vpack.c.b16 %v1318, %v1315
        %v1655 = vpack.c.b16 %v1322, %v1319
        %v1656 = vpack.c.b16 %v1323, %v1320
        %v1657 = vpack.c.b16 %v1324, %v1321
        %v1658 = vpack.c.b16 %v1328, %v1325
        %v1659 = vpack.c.b16 %v1329, %v1326
        %v1660 = vpack.c.b16 %v1330, %v1327
        %v1661 = vpack.c.b16 %v1334, %v1331
        %v1662 = vpack.c.b16 %v1335, %v1332
        %v1663 = vpack.c.b16 %v1336, %v1333
        %v1664 = vpack.c.b16 %v1340, %v1337
        %v1665 = vpack.c.b16 %v1341, %v1338
        %v1666 = vpack.c.b16 %v1342, %v1339
        %v1667 = vpack.c.b16 %v1346, %v1343
        %v1668 = vpack.c.b16 %v1347, %v1344
        %v1669 = vpack.c.b16 %v1348, %v1345
        %v1670 = vpack.c.b16 %v1352, %v1349
        %v1671 = vpack.c.b16 %v1353, %v1350
        %v1672 = vpack.c.b16 %v1354, %v1351
        %v1673 = vpack.c.b16 %v1358, %v1355
        %v1674 = vpack.c.b16 %v1359, %v1356
        %v1675 = vpack.c.b16 %v1360, %v1357
        %v1676 = vpack.c.b16 %v1364, %v1361
        %v1677 = vpack.c.b16 %v1365, %v1362
        %v1678 = vpack.c.b16 %v1366, %v1363
        %v1679 = vpack.c.b16 %v1370, %v1367
        %v1680 = vpack.c.b16 %v1371, %v1368
        %v1681 = vpack.c.b16 %v1372, %v1369
        %v1682 = vpack.c.b16 %v1376, %v1373
        %v1683 = vpack.c.b16 %v1377, %v1374
        %v1684 = vpack.c.b16 %v1378, %v1375
        %v1685 = vpack.c.b16 %v1382, %v1379
        %v1686 = vpack.c.b16 %v1383, %v1380
        %v1687 = vpack.c.b16 %v1384, %v1381
        %v1688 = vpack.c.b16 %v1388, %v1385
        %v1689 = vpack.c.b16 %v1389, %v1386
        %v1690 = vpack.c.b16 %v1390, %v1387
        %v1691 = vpack.c.b16 %v1394, %v1391
        %v1692 = vpack.c.b16 %v1395, %v1392
        %v1693 = vpack.c.b16 %v1396, %v1393
        %v1694 = vpack.c.b16 %v1400, %v1397
        %v1695 = vpack.c.b16 %v1401, %v1398
        %v1696 = vpack.c.b16 %v1402, %v1399
        %v1697 = vpack.c.b16 %v1406, %v1403
        %v1698 = vpack.c.b16 %v1407, %v1404
        %v1699 = vpack.c.b16 %v1408, %v1405
        %v1700 = vpack.c.b16 %v1412, %v1409
        %v1701 = vpack.c.b16 %v1413, %v1410
        %v1702 = vpack.c.b16 %v1414, %v1411
        %v1703 = vpack.c.b16 %v1418, %v1415
        %v1704 = vpack.c.b16 %v1419, %v1416
        %v1705 = vpack.c.b16 %v1420, %v1417
        %v1706 = vpack.c.b16 %v1424, %v1421
        %v1707 = vpack.c.b16 %v1425, %v1422
        %v1708 = vpack.c.b16 %v1426, %v1423
        %v1709 = vpack.c.b16 %v1430, %v1427
        %v1710 = vpack.c.b16 %v1431, %v1428
        %v1711 = vpack.c.b16 %v1432, %v1429
        %v1712 = vpack.c.b16 %v1436, %v1433
        %v1713 = vpack.c.b16 %v1437, %v1434
        %v1714 = vpack.c.b16 %v1438, %v1435
        %v1715 = vpack.c.b16 %v1442, %v1439
        %v1716 = vpack.c.b16 %v1443, %v1440
        %v1717 = vpack.c.b16 %v1444, %v1441
        %v1718 = vpack.c.b16 %v1448, %v1445
        %v1719 = vpack.c.b16 %v1449, %v1446
        %v1720 = vpack.c.b16 %v1450, %v1447
        %v1721 = vpack.c.b16 %v1454, %v1451
        %v1722 = vpack.c.b16 %v1455, %v1452
        %v1723 = vpack.c.b16 %v1456, %v1453
        %v1724 = vpack.c.b16 %v1460, %v1457
        %v1725 = vpack.c.b16 %v1461, %v1458
        %v1726 = vpack.c.b16 %v1462, %v1459
        %v1727 = vpack.c.b16 %v1466, %v1463
        %v1728 = vpack.c.b16 %v1467, %v1464
        %v1729 = vpack.c.b16 %v1468, %v1465
        %v1730 = vpack.c.b16 %v1472, %v1469
        %v1731 = vpack.c.b16 %v1473, %v1470
        %v1732 = vpack.c.b16 %v1474, %v1471
        %v1733 = vpack.c.b16 %v1478, %v1475
        %v1734 = vpack.c.b16 %v1479, %v1476
        %v1735 = vpack.c.b16 %v1480, %v1477
        %v1736 = vpack.c.b16 %v1484, %v1481
        %v1737 = vpack.c.b16 %v1485, %v1482
        %v1738 = vpack.c.b16 %v1486, %v1483
        %v1739 = vpack.c.b16 %v1490, %v1487
        %v1740 = vpack.c.b16 %v1491, %v1488
        %v1741 = vpack.c.b16 %v1492, %v1489
        %v1742 = vpack.c.b16 %v1496, %v1493
        %v1743 = vpack.c.b16 %v1497, %v1494
        %v1744 = vpack.c.b16 %v1498, %v1495
        %v1745 = vpack.c.b16 %v1502, %v1499
        %v1746 = vpack.c.b16 %v1503, %v1500
        %v1747 = vpack.c.b16 %v1504, %v1501
        %v1748 = vpack.c.b16 %v1508, %v1505
        %v1749 = vpack.c.b16 %v1509, %v1506
        %v1750 = vpack.c.b16 %v1510, %v1507
        %v1751 = vpack.c.b16 %v1514, %v1511
        %v1752 = vpack.c.b16 %v1515, %v1512
        %v1753 = vpack.c.b16 %v1516, %v1513
        %v1754 = vpack.c.b16 %v1520, %v1517
        %v1755 = vpack.c.b16 %v1521, %v1518
        %v1756 = vpack.c.b16 %v1522, %v1519
        %v1757 = vpack.c.b16 %v1526, %v1523
        %v1758 = vpack.c.b16 %v1527, %v1524
        %v1759 = vpack.c.b16 %v1528, %v1525
        %vm1914 = vcmask 424960
        %v1916 = vsel %vm1914, %v1531, 0
        %v1919 = vsel %vm1914, %v1534, 0
        %v1922 = vsel %vm1914, %v1537, 0
        %v1925 = vsel %vm1914, %v1540, 0
        %v1928 = vsel %vm1914, %v1543, 0
        %v1931 = vsel %vm1914, %v1546, 0
        %v1934 = vsel %vm1914, %v1549, 0
        %v1937 = vsel %vm1914, %v1552, 0
        %v1940 = vsel %vm1914, %v1555, 0
        %v1943 = vsel %vm1914, %v1558, 0
        %v1946 = vsel %vm1914, %v1561, 0
        %v1949 = vsel %vm1914, %v1564, 0
        %v1952 = vsel %vm1914, %v1567, 0
        %v1955 = vsel %vm1914, %v1570, 0
        %v1958 = vsel %vm1914, %v1573, 0
        %v1961 = vsel %vm1914, %v1576, 0
        %v1964 = vsel %vm1914, %v1579, 0
        %v1967 = vsel %vm1914, %v1582, 0
        %v1970 = vsel %vm1914, %v1585, 0
        %v1973 = vsel %vm1914, %v1588, 0
        %v1976 = vsel %vm1914, %v1591, 0
        %v1979 = vsel %vm1914, %v1594, 0
        %v1982 = vsel %vm1914, %v1597, 0
        %v1985 = vsel %vm1914, %v1600, 0
        %v1988 = vsel %vm1914, %v1603, 0
        %v1991 = vsel %vm1914, %v1606, 0
        %v1994 = vsel %vm1914, %v1609, 0
        %v1997 = vsel %vm1914, %v1612, 0
        %v2000 = vsel %vm1914, %v1615, 0
        %v2003 = vsel %vm1914, %v1618, 0
        %v2006 = vsel %vm1914, %v1621, 0
        %v2009 = vsel %vm1914, %v1624, 0
        %v2012 = vsel %vm1914, %v1627, 0
        %v2015 = vsel %vm1914, %v1630, 0
        %v2018 = vsel %vm1914, %v1633, 0
        %v2021 = vsel %vm1914, %v1636, 0
        %v2024 = vsel %vm1914, %v1639, 0
        %v2027 = vsel %vm1914, %v1642, 0
        %v2030 = vsel %vm1914, %v1645, 0
        %v2033 = vsel %vm1914, %v1648, 0
        %v2036 = vsel %vm1914, %v1651, 0
        %v2039 = vsel %vm1914, %v1654, 0
        %v2042 = vsel %vm1914, %v1657, 0
        %v2045 = vsel %vm1914, %v1660, 0
        %v2048 = vsel %vm1914, %v1663, 0
        %v2051 = vsel %vm1914, %v1666, 0
        %v2054 = vsel %vm1914, %v1669, 0
        %v2057 = vsel %vm1914, %v1672, 0
        %v2060 = vsel %vm1914, %v1675, 0
        %v2063 = vsel %vm1914, %v1678, 0
        %v2066 = vsel %vm1914, %v1681, 0
        %v2069 = vsel %vm1914, %v1684, 0
        %v2072 = vsel %vm1914, %v1687, 0
        %v2075 = vsel %vm1914, %v1690, 0
        %v2078 = vsel %vm1914, %v1693, 0
        %v2081 = vsel %vm1914, %v1696, 0
        %v2084 = vsel %vm1914, %v1699, 0
        %v2087 = vsel %vm1914, %v1702, 0
        %v2090 = vsel %vm1914, %v1705, 0
        %v2093 = vsel %vm1914, %v1708, 0
        %v2096 = vsel %vm1914, %v1711, 0
        %v2099 = vsel %vm1914, %v1714, 0
        %v2102 = vsel %vm1914, %v1717, 0
        %v2105 = vsel %vm1914, %v1720, 0
        %v2108 = vsel %vm1914, %v1723, 0
        %v2111 = vsel %vm1914, %v1726, 0
        %v2114 = vsel %vm1914, %v1729, 0
        %v2117 = vsel %vm1914, %v1732, 0
        %v2120 = vsel %vm1914, %v1735, 0
        %v2123 = vsel %vm1914, %v1738, 0
        %v2126 = vsel %vm1914, %v1741, 0
        %v2129 = vsel %vm1914, %v1744, 0
        %v2132 = vsel %vm1914, %v1747, 0
        %v2135 = vsel %vm1914, %v1750, 0
        %v2138 = vsel %vm1914, %v1753, 0
        %v2141 = vsel %vm1914, %v1756, 0
        %v2144 = vsel %vm1914, %v1759, 0
        %vm2146 = vcmask 1041408
        %v2148 = vsel %vm2146, %v296, 0
        %2150 = vmatpush.bf16.msra.mxu0 %v284
        %2151 = vmatpush.bf16.msra.mxu0 %v283
        %2152 = vmatpush.bf16.msra.mxu0 %v282
        %2153 = vmatpush.bf16.msra.mxu0 %v281
        %2154 = vmatpush.bf16.msra.mxu0 %v280
        %2155 = vmatpush.bf16.msra.mxu0 %v279
        %2156 = vmatpush.bf16.msra.mxu0 %v278
        %2157 = vmatpush.bf16.msra.mxu0 %v277
        %2158 = vmatmul.bf16.gmra.mxu0 %v1529
        %v2159 = vpop.f32.mrf.mxu0
        %v2160 = vadd.f32 %v605, %v2159
        %v2161 = vpop.f32.mrf.mxu0
        %v2162 = vadd.f32 %v606, %v2161
        %2163 = vmatmul.bf16.gmra.mxu0 %v1532
        %v2164 = vpop.f32.mrf.mxu0
        %v2165 = vadd.f32 %v607, %v2164
        %v2166 = vpop.f32.mrf.mxu0
        %v2167 = vadd.f32 %v608, %v2166
        %2168 = vmatmul.bf16.gmra.mxu0 %v1535
        %v2169 = vpop.f32.mrf.mxu0
        %v2170 = vadd.f32 %v609, %v2169
        %v2171 = vpop.f32.mrf.mxu0
        %v2172 = vadd.f32 %v610, %v2171
        %2173 = vmatmul.bf16.gmra.mxu0 %v1538
        %v2174 = vpop.f32.mrf.mxu0
        %v2175 = vadd.f32 %v611, %v2174
        %v2176 = vpop.f32.mrf.mxu0
        %v2177 = vadd.f32 %v612, %v2176
        %2178 = vmatmul.bf16.gmra.mxu0 %v1541
        %v2179 = vpop.f32.mrf.mxu0
        %v2180 = vadd.f32 %v613, %v2179
        %v2181 = vpop.f32.mrf.mxu0
        %v2182 = vadd.f32 %v614, %v2181
        %2183 = vmatmul.bf16.gmra.mxu0 %v1544
        %v2184 = vpop.f32.mrf.mxu0
        %v2185 = vadd.f32 %v615, %v2184
        %v2186 = vpop.f32.mrf.mxu0
        %v2187 = vadd.f32 %v616, %v2186
        %2188 = vmatmul.bf16.gmra.mxu0 %v1547
        %v2189 = vpop.f32.mrf.mxu0
        %v2190 = vadd.f32 %v617, %v2189
        %v2191 = vpop.f32.mrf.mxu0
        %v2192 = vadd.f32 %v618, %v2191
        %2193 = vmatmul.bf16.gmra.mxu0 %v1550
        %v2194 = vpop.f32.mrf.mxu0
        %v2195 = vadd.f32 %v619, %v2194
        %v2196 = vpop.f32.mrf.mxu0
        %v2197 = vadd.f32 %v620, %v2196
        %2198 = vmatmul.bf16.gmra.mxu0 %v1553
        %v2199 = vpop.f32.mrf.mxu0
        %v2200 = vadd.f32 %v621, %v2199
        %v2201 = vpop.f32.mrf.mxu0
        %v2202 = vadd.f32 %v622, %v2201
        %2203 = vmatmul.bf16.gmra.mxu0 %v1556
        %v2204 = vpop.f32.mrf.mxu0
        %v2205 = vadd.f32 %v623, %v2204
        %v2206 = vpop.f32.mrf.mxu0
        %v2207 = vadd.f32 %v624, %v2206
        %2208 = vmatmul.bf16.gmra.mxu0 %v1559
        %v2209 = vpop.f32.mrf.mxu0
        %v2210 = vadd.f32 %v625, %v2209
        %v2211 = vpop.f32.mrf.mxu0
        %v2212 = vadd.f32 %v626, %v2211
        %2213 = vmatmul.bf16.gmra.mxu0 %v1562
        %v2214 = vpop.f32.mrf.mxu0
        %v2215 = vadd.f32 %v627, %v2214
        %v2216 = vpop.f32.mrf.mxu0
        %v2217 = vadd.f32 %v628, %v2216
        %2218 = vmatmul.bf16.gmra.mxu0 %v1565
        %v2219 = vpop.f32.mrf.mxu0
        %v2220 = vadd.f32 %v629, %v2219
        %v2221 = vpop.f32.mrf.mxu0
        %v2222 = vadd.f32 %v630, %v2221
        %2223 = vmatmul.bf16.gmra.mxu0 %v1568
        %v2224 = vpop.f32.mrf.mxu0
        %v2225 = vadd.f32 %v631, %v2224
        %v2226 = vpop.f32.mrf.mxu0
        %v2227 = vadd.f32 %v632, %v2226
        %2228 = vmatmul.bf16.gmra.mxu0 %v1571
        %v2229 = vpop.f32.mrf.mxu0
        %v2230 = vadd.f32 %v633, %v2229
        %v2231 = vpop.f32.mrf.mxu0
        %v2232 = vadd.f32 %v634, %v2231
        %2233 = vmatmul.bf16.gmra.mxu0 %v1574
        %v2234 = vpop.f32.mrf.mxu0
        %v2235 = vadd.f32 %v635, %v2234
        %v2236 = vpop.f32.mrf.mxu0
        %v2237 = vadd.f32 %v636, %v2236
        %2238 = vmatmul.bf16.gmra.mxu0 %v1577
        %v2239 = vpop.f32.mrf.mxu0
        %v2240 = vadd.f32 %v637, %v2239
        %v2241 = vpop.f32.mrf.mxu0
        %v2242 = vadd.f32 %v638, %v2241
        %2243 = vmatmul.bf16.gmra.mxu0 %v1580
        %v2244 = vpop.f32.mrf.mxu0
        %v2245 = vadd.f32 %v639, %v2244
        %v2246 = vpop.f32.mrf.mxu0
        %v2247 = vadd.f32 %v640, %v2246
        %2248 = vmatmul.bf16.gmra.mxu0 %v1583
        %v2249 = vpop.f32.mrf.mxu0
        %v2250 = vadd.f32 %v641, %v2249
        %v2251 = vpop.f32.mrf.mxu0
        %v2252 = vadd.f32 %v642, %v2251
        %2253 = vmatmul.bf16.gmra.mxu0 %v1586
        %v2254 = vpop.f32.mrf.mxu0
        %v2255 = vadd.f32 %v643, %v2254
        %v2256 = vpop.f32.mrf.mxu0
        %v2257 = vadd.f32 %v644, %v2256
        %2258 = vmatmul.bf16.gmra.mxu0 %v1589
        %v2259 = vpop.f32.mrf.mxu0
        %v2260 = vadd.f32 %v645, %v2259
        %v2261 = vpop.f32.mrf.mxu0
        %v2262 = vadd.f32 %v646, %v2261
        %2263 = vmatmul.bf16.gmra.mxu0 %v1592
        %v2264 = vpop.f32.mrf.mxu0
        %v2265 = vadd.f32 %v647, %v2264
        %v2266 = vpop.f32.mrf.mxu0
        %v2267 = vadd.f32 %v648, %v2266
        %2268 = vmatmul.bf16.gmra.mxu0 %v1595
        %v2269 = vpop.f32.mrf.mxu0
        %v2270 = vadd.f32 %v649, %v2269
        %v2271 = vpop.f32.mrf.mxu0
        %v2272 = vadd.f32 %v650, %v2271
        %2273 = vmatmul.bf16.gmra.mxu0 %v1598
        %v2274 = vpop.f32.mrf.mxu0
        %v2275 = vadd.f32 %v651, %v2274
        %v2276 = vpop.f32.mrf.mxu0
        %v2277 = vadd.f32 %v652, %v2276
        %2278 = vmatmul.bf16.gmra.mxu0 %v1601
        %v2279 = vpop.f32.mrf.mxu0
        %v2280 = vadd.f32 %v653, %v2279
        %v2281 = vpop.f32.mrf.mxu0
        %v2282 = vadd.f32 %v654, %v2281
        %2283 = vmatmul.bf16.gmra.mxu0 %v1604
        %v2284 = vpop.f32.mrf.mxu0
        %v2285 = vadd.f32 %v655, %v2284
        %v2286 = vpop.f32.mrf.mxu0
        %v2287 = vadd.f32 %v656, %v2286
        %2288 = vmatmul.bf16.gmra.mxu0 %v1607
        %v2289 = vpop.f32.mrf.mxu0
        %v2290 = vadd.f32 %v657, %v2289
        %v2291 = vpop.f32.mrf.mxu0
        %v2292 = vadd.f32 %v658, %v2291
        %2293 = vmatmul.bf16.gmra.mxu0 %v1610
        %v2294 = vpop.f32.mrf.mxu0
        %v2295 = vadd.f32 %v659, %v2294
        %v2296 = vpop.f32.mrf.mxu0
        %v2297 = vadd.f32 %v660, %v2296
        %2298 = vmatmul.bf16.gmra.mxu0 %v1613
        %v2299 = vpop.f32.mrf.mxu0
        %v2300 = vadd.f32 %v661, %v2299
        %v2301 = vpop.f32.mrf.mxu0
        %v2302 = vadd.f32 %v662, %v2301
        %2303 = vmatmul.bf16.gmra.mxu0 %v1616
        %v2304 = vpop.f32.mrf.mxu0
        %v2305 = vadd.f32 %v663, %v2304
        %v2306 = vpop.f32.mrf.mxu0
        %v2307 = vadd.f32 %v664, %v2306
        %2308 = vmatmul.bf16.gmra.mxu0 %v1619
        %v2309 = vpop.f32.mrf.mxu0
        %v2310 = vadd.f32 %v665, %v2309
        %v2311 = vpop.f32.mrf.mxu0
        %v2312 = vadd.f32 %v666, %v2311
        %2313 = vmatmul.bf16.gmra.mxu0 %v1622
        %v2314 = vpop.f32.mrf.mxu0
        %v2315 = vadd.f32 %v667, %v2314
        %v2316 = vpop.f32.mrf.mxu0
        %v2317 = vadd.f32 %v668, %v2316
        %2318 = vmatmul.bf16.gmra.mxu0 %v1625
        %v2319 = vpop.f32.mrf.mxu0
        %v2320 = vadd.f32 %v669, %v2319
        %v2321 = vpop.f32.mrf.mxu0
        %v2322 = vadd.f32 %v670, %v2321
        %2323 = vmatmul.bf16.gmra.mxu0 %v1628
        %v2324 = vpop.f32.mrf.mxu0
        %v2325 = vadd.f32 %v671, %v2324
        %v2326 = vpop.f32.mrf.mxu0
        %v2327 = vadd.f32 %v672, %v2326
        %2328 = vmatmul.bf16.gmra.mxu0 %v1631
        %v2329 = vpop.f32.mrf.mxu0
        %v2330 = vadd.f32 %v673, %v2329
        %v2331 = vpop.f32.mrf.mxu0
        %v2332 = vadd.f32 %v674, %v2331
        %2333 = vmatmul.bf16.gmra.mxu0 %v1634
        %v2334 = vpop.f32.mrf.mxu0
        %v2335 = vadd.f32 %v675, %v2334
        %v2336 = vpop.f32.mrf.mxu0
        %v2337 = vadd.f32 %v676, %v2336
        %2338 = vmatmul.bf16.gmra.mxu0 %v1637
        %v2339 = vpop.f32.mrf.mxu0
        %v2340 = vadd.f32 %v677, %v2339
        %v2341 = vpop.f32.mrf.mxu0
        %v2342 = vadd.f32 %v678, %v2341
        %2343 = vmatmul.bf16.gmra.mxu0 %v1640
        %v2344 = vpop.f32.mrf.mxu0
        %v2345 = vadd.f32 %v679, %v2344
        %v2346 = vpop.f32.mrf.mxu0
        %v2347 = vadd.f32 %v680, %v2346
        %2348 = vmatmul.bf16.gmra.mxu0 %v1643
        %v2349 = vpop.f32.mrf.mxu0
        %v2350 = vadd.f32 %v681, %v2349
        %v2351 = vpop.f32.mrf.mxu0
        %v2352 = vadd.f32 %v682, %v2351
        %2353 = vmatmul.bf16.gmra.mxu0 %v1646
        %v2354 = vpop.f32.mrf.mxu0
        %v2355 = vadd.f32 %v683, %v2354
        %v2356 = vpop.f32.mrf.mxu0
        %v2357 = vadd.f32 %v684, %v2356
        %2358 = vmatmul.bf16.gmra.mxu0 %v1649
        %v2359 = vpop.f32.mrf.mxu0
        %v2360 = vadd.f32 %v685, %v2359
        %v2361 = vpop.f32.mrf.mxu0
        %v2362 = vadd.f32 %v686, %v2361
        %2363 = vmatmul.bf16.gmra.mxu0 %v1652
        %v2364 = vpop.f32.mrf.mxu0
        %v2365 = vadd.f32 %v687, %v2364
        %v2366 = vpop.f32.mrf.mxu0
        %v2367 = vadd.f32 %v688, %v2366
        %2368 = vmatmul.bf16.gmra.mxu0 %v1655
        %v2369 = vpop.f32.mrf.mxu0
        %v2370 = vadd.f32 %v689, %v2369
        %v2371 = vpop.f32.mrf.mxu0
        %v2372 = vadd.f32 %v690, %v2371
        %2373 = vmatmul.bf16.gmra.mxu0 %v1658
        %v2374 = vpop.f32.mrf.mxu0
        %v2375 = vadd.f32 %v691, %v2374
        %v2376 = vpop.f32.mrf.mxu0
        %v2377 = vadd.f32 %v692, %v2376
        %2378 = vmatmul.bf16.gmra.mxu0 %v1661
        %v2379 = vpop.f32.mrf.mxu0
        %v2380 = vadd.f32 %v693, %v2379
        %v2381 = vpop.f32.mrf.mxu0
        %v2382 = vadd.f32 %v694, %v2381
        %2383 = vmatmul.bf16.gmra.mxu0 %v1664
        %v2384 = vpop.f32.mrf.mxu0
        %v2385 = vadd.f32 %v695, %v2384
        %v2386 = vpop.f32.mrf.mxu0
        %v2387 = vadd.f32 %v696, %v2386
        %2388 = vmatmul.bf16.gmra.mxu0 %v1667
        %v2389 = vpop.f32.mrf.mxu0
        %v2390 = vadd.f32 %v697, %v2389
        %v2391 = vpop.f32.mrf.mxu0
        %v2392 = vadd.f32 %v698, %v2391
        %2393 = vmatmul.bf16.gmra.mxu0 %v1670
        %v2394 = vpop.f32.mrf.mxu0
        %v2395 = vadd.f32 %v699, %v2394
        %v2396 = vpop.f32.mrf.mxu0
        %v2397 = vadd.f32 %v700, %v2396
        %2398 = vmatmul.bf16.gmra.mxu0 %v1673
        %v2399 = vpop.f32.mrf.mxu0
        %v2400 = vadd.f32 %v701, %v2399
        %v2401 = vpop.f32.mrf.mxu0
        %v2402 = vadd.f32 %v702, %v2401
        %2403 = vmatmul.bf16.gmra.mxu0 %v1676
        %v2404 = vpop.f32.mrf.mxu0
        %v2405 = vadd.f32 %v703, %v2404
        %v2406 = vpop.f32.mrf.mxu0
        %v2407 = vadd.f32 %v704, %v2406
        %2408 = vmatmul.bf16.gmra.mxu0 %v1679
        %v2409 = vpop.f32.mrf.mxu0
        %v2410 = vadd.f32 %v705, %v2409
        %v2411 = vpop.f32.mrf.mxu0
        %v2412 = vadd.f32 %v706, %v2411
        %2413 = vmatmul.bf16.gmra.mxu0 %v1682
        %v2414 = vpop.f32.mrf.mxu0
        %v2415 = vadd.f32 %v707, %v2414
        %v2416 = vpop.f32.mrf.mxu0
        %v2417 = vadd.f32 %v708, %v2416
        %2418 = vmatmul.bf16.gmra.mxu0 %v1685
        %v2419 = vpop.f32.mrf.mxu0
        %v2420 = vadd.f32 %v709, %v2419
        %v2421 = vpop.f32.mrf.mxu0
        %v2422 = vadd.f32 %v710, %v2421
        %2423 = vmatmul.bf16.gmra.mxu0 %v1688
        %v2424 = vpop.f32.mrf.mxu0
        %v2425 = vadd.f32 %v711, %v2424
        %v2426 = vpop.f32.mrf.mxu0
        %v2427 = vadd.f32 %v712, %v2426
        %2428 = vmatmul.bf16.gmra.mxu0 %v1691
        %v2429 = vpop.f32.mrf.mxu0
        %v2430 = vadd.f32 %v713, %v2429
        %v2431 = vpop.f32.mrf.mxu0
        %v2432 = vadd.f32 %v714, %v2431
        %2433 = vmatmul.bf16.gmra.mxu0 %v1694
        %v2434 = vpop.f32.mrf.mxu0
        %v2435 = vadd.f32 %v715, %v2434
        %v2436 = vpop.f32.mrf.mxu0
        %v2437 = vadd.f32 %v716, %v2436
        %2438 = vmatmul.bf16.gmra.mxu0 %v1697
        %v2439 = vpop.f32.mrf.mxu0
        %v2440 = vadd.f32 %v717, %v2439
        %v2441 = vpop.f32.mrf.mxu0
        %v2442 = vadd.f32 %v718, %v2441
        %2443 = vmatmul.bf16.gmra.mxu0 %v1700
        %v2444 = vpop.f32.mrf.mxu0
        %v2445 = vadd.f32 %v719, %v2444
        %v2446 = vpop.f32.mrf.mxu0
        %v2447 = vadd.f32 %v720, %v2446
        %2448 = vmatmul.bf16.gmra.mxu0 %v1703
        %v2449 = vpop.f32.mrf.mxu0
        %v2450 = vadd.f32 %v721, %v2449
        %v2451 = vpop.f32.mrf.mxu0
        %v2452 = vadd.f32 %v722, %v2451
        %2453 = vmatmul.bf16.gmra.mxu0 %v1706
        %v2454 = vpop.f32.mrf.mxu0
        %v2455 = vadd.f32 %v723, %v2454
        %v2456 = vpop.f32.mrf.mxu0
        %v2457 = vadd.f32 %v724, %v2456
        %2458 = vmatmul.bf16.gmra.mxu0 %v1709
        %v2459 = vpop.f32.mrf.mxu0
        %v2460 = vadd.f32 %v725, %v2459
        %v2461 = vpop.f32.mrf.mxu0
        %v2462 = vadd.f32 %v726, %v2461
        %2463 = vmatmul.bf16.gmra.mxu0 %v1712
        %v2464 = vpop.f32.mrf.mxu0
        %v2465 = vadd.f32 %v727, %v2464
        %v2466 = vpop.f32.mrf.mxu0
        %v2467 = vadd.f32 %v728, %v2466
        %2468 = vmatmul.bf16.gmra.mxu0 %v1715
        %v2469 = vpop.f32.mrf.mxu0
        %v2470 = vadd.f32 %v729, %v2469
        %v2471 = vpop.f32.mrf.mxu0
        %v2472 = vadd.f32 %v730, %v2471
        %2473 = vmatmul.bf16.gmra.mxu0 %v1718
        %v2474 = vpop.f32.mrf.mxu0
        %v2475 = vadd.f32 %v731, %v2474
        %v2476 = vpop.f32.mrf.mxu0
        %v2477 = vadd.f32 %v732, %v2476
        %2478 = vmatmul.bf16.gmra.mxu0 %v1721
        %v2479 = vpop.f32.mrf.mxu0
        %v2480 = vadd.f32 %v733, %v2479
        %v2481 = vpop.f32.mrf.mxu0
        %v2482 = vadd.f32 %v734, %v2481
        %2483 = vmatmul.bf16.gmra.mxu0 %v1724
        %v2484 = vpop.f32.mrf.mxu0
        %v2485 = vadd.f32 %v735, %v2484
        %v2486 = vpop.f32.mrf.mxu0
        %v2487 = vadd.f32 %v736, %v2486
        %2488 = vmatmul.bf16.gmra.mxu0 %v1727
        %v2489 = vpop.f32.mrf.mxu0
        %v2490 = vadd.f32 %v737, %v2489
        %v2491 = vpop.f32.mrf.mxu0
        %v2492 = vadd.f32 %v738, %v2491
        %2493 = vmatmul.bf16.gmra.mxu0 %v1730
        %v2494 = vpop.f32.mrf.mxu0
        %v2495 = vadd.f32 %v739, %v2494
        %v2496 = vpop.f32.mrf.mxu0
        %v2497 = vadd.f32 %v740, %v2496
        %2498 = vmatmul.bf16.gmra.mxu0 %v1733
        %v2499 = vpop.f32.mrf.mxu0
        %v2500 = vadd.f32 %v741, %v2499
        %v2501 = vpop.f32.mrf.mxu0
        %v2502 = vadd.f32 %v742, %v2501
        %2503 = vmatmul.bf16.gmra.mxu0 %v1736
        %v2504 = vpop.f32.mrf.mxu0
        %v2505 = vadd.f32 %v743, %v2504
        %v2506 = vpop.f32.mrf.mxu0
        %v2507 = vadd.f32 %v744, %v2506
        %2508 = vmatmul.bf16.gmra.mxu0 %v1739
        %v2509 = vpop.f32.mrf.mxu0
        %v2510 = vadd.f32 %v745, %v2509
        %v2511 = vpop.f32.mrf.mxu0
        %v2512 = vadd.f32 %v746, %v2511
        %2513 = vmatmul.bf16.gmra.mxu0 %v1742
        %v2514 = vpop.f32.mrf.mxu0
        %v2515 = vadd.f32 %v747, %v2514
        %v2516 = vpop.f32.mrf.mxu0
        %v2517 = vadd.f32 %v748, %v2516
        %2518 = vmatmul.bf16.gmra.mxu0 %v1745
        %v2519 = vpop.f32.mrf.mxu0
        %v2520 = vadd.f32 %v749, %v2519
        %v2521 = vpop.f32.mrf.mxu0
        %v2522 = vadd.f32 %v750, %v2521
        %2523 = vmatmul.bf16.gmra.mxu0 %v1748
        %v2524 = vpop.f32.mrf.mxu0
        %v2525 = vadd.f32 %v751, %v2524
        %v2526 = vpop.f32.mrf.mxu0
        %v2527 = vadd.f32 %v752, %v2526
        %2528 = vmatmul.bf16.gmra.mxu0 %v1751
        %v2529 = vpop.f32.mrf.mxu0
        %v2530 = vadd.f32 %v753, %v2529
        %v2531 = vpop.f32.mrf.mxu0
        %v2532 = vadd.f32 %v754, %v2531
        %2533 = vmatmul.bf16.gmra.mxu0 %v1754
        %v2534 = vpop.f32.mrf.mxu0
        %v2535 = vadd.f32 %v755, %v2534
        %v2536 = vpop.f32.mrf.mxu0
        %v2537 = vadd.f32 %v756, %v2536
        %2538 = vmatmul.bf16.gmra.mxu0 %v1757
        %v2539 = vpop.f32.mrf.mxu0
        %v2540 = vadd.f32 %v757, %v2539
        %v2541 = vpop.f32.mrf.mxu0
        %v2542 = vadd.f32 %v758, %v2541
        %2543 = vdwg.mxu0
        %2544 = vmatpush.bf16.msra.mxu0 %v292
        %2545 = vmatpush.bf16.msra.mxu0 %v291
        %2546 = vmatpush.bf16.msra.mxu0 %v290
        %2547 = vmatpush.bf16.msra.mxu0 %v289
        %2548 = vmatpush.bf16.msra.mxu0 %v288
        %2549 = vmatpush.bf16.msra.mxu0 %v287
        %2550 = vmatpush.bf16.msra.mxu0 %v286
        %2551 = vmatpush.bf16.msra.mxu0 %v285
        %2552 = vmatmul.bf16.gmra.mxu0 %v1530
        %v2553 = vpop.f32.mrf.mxu0
        %v2554 = vadd.f32 %v2160, %v2553
        %v2555 = vpop.f32.mrf.mxu0
        %v2556 = vadd.f32 %v2162, %v2555
        %2557 = vmatmul.bf16.gmra.mxu0 %v1533
        %v2558 = vpop.f32.mrf.mxu0
        %v2559 = vadd.f32 %v2165, %v2558
        %v2560 = vpop.f32.mrf.mxu0
        %v2561 = vadd.f32 %v2167, %v2560
        %2562 = vmatmul.bf16.gmra.mxu0 %v1536
        %v2563 = vpop.f32.mrf.mxu0
        %v2564 = vadd.f32 %v2170, %v2563
        %v2565 = vpop.f32.mrf.mxu0
        %v2566 = vadd.f32 %v2172, %v2565
        %2567 = vmatmul.bf16.gmra.mxu0 %v1539
        %v2568 = vpop.f32.mrf.mxu0
        %v2569 = vadd.f32 %v2175, %v2568
        %v2570 = vpop.f32.mrf.mxu0
        %v2571 = vadd.f32 %v2177, %v2570
        %2572 = vmatmul.bf16.gmra.mxu0 %v1542
        %v2573 = vpop.f32.mrf.mxu0
        %v2574 = vadd.f32 %v2180, %v2573
        %v2575 = vpop.f32.mrf.mxu0
        %v2576 = vadd.f32 %v2182, %v2575
        %2577 = vmatmul.bf16.gmra.mxu0 %v1545
        %v2578 = vpop.f32.mrf.mxu0
        %v2579 = vadd.f32 %v2185, %v2578
        %v2580 = vpop.f32.mrf.mxu0
        %v2581 = vadd.f32 %v2187, %v2580
        %2582 = vmatmul.bf16.gmra.mxu0 %v1548
        %v2583 = vpop.f32.mrf.mxu0
        %v2584 = vadd.f32 %v2190, %v2583
        %v2585 = vpop.f32.mrf.mxu0
        %v2586 = vadd.f32 %v2192, %v2585
        %2587 = vmatmul.bf16.gmra.mxu0 %v1551
        %v2588 = vpop.f32.mrf.mxu0
        %v2589 = vadd.f32 %v2195, %v2588
        %v2590 = vpop.f32.mrf.mxu0
        %v2591 = vadd.f32 %v2197, %v2590
        %2592 = vmatmul.bf16.gmra.mxu0 %v1554
        %v2593 = vpop.f32.mrf.mxu0
        %v2594 = vadd.f32 %v2200, %v2593
        %v2595 = vpop.f32.mrf.mxu0
        %v2596 = vadd.f32 %v2202, %v2595
        %2597 = vmatmul.bf16.gmra.mxu0 %v1557
        %v2598 = vpop.f32.mrf.mxu0
        %v2599 = vadd.f32 %v2205, %v2598
        %v2600 = vpop.f32.mrf.mxu0
        %v2601 = vadd.f32 %v2207, %v2600
        %2602 = vmatmul.bf16.gmra.mxu0 %v1560
        %v2603 = vpop.f32.mrf.mxu0
        %v2604 = vadd.f32 %v2210, %v2603
        %v2605 = vpop.f32.mrf.mxu0
        %v2606 = vadd.f32 %v2212, %v2605
        %2607 = vmatmul.bf16.gmra.mxu0 %v1563
        %v2608 = vpop.f32.mrf.mxu0
        %v2609 = vadd.f32 %v2215, %v2608
        %v2610 = vpop.f32.mrf.mxu0
        %v2611 = vadd.f32 %v2217, %v2610
        %2612 = vmatmul.bf16.gmra.mxu0 %v1566
        %v2613 = vpop.f32.mrf.mxu0
        %v2614 = vadd.f32 %v2220, %v2613
        %v2615 = vpop.f32.mrf.mxu0
        %v2616 = vadd.f32 %v2222, %v2615
        %2617 = vmatmul.bf16.gmra.mxu0 %v1569
        %v2618 = vpop.f32.mrf.mxu0
        %v2619 = vadd.f32 %v2225, %v2618
        %v2620 = vpop.f32.mrf.mxu0
        %v2621 = vadd.f32 %v2227, %v2620
        %2622 = vmatmul.bf16.gmra.mxu0 %v1572
        %v2623 = vpop.f32.mrf.mxu0
        %v2624 = vadd.f32 %v2230, %v2623
        %v2625 = vpop.f32.mrf.mxu0
        %v2626 = vadd.f32 %v2232, %v2625
        %2627 = vmatmul.bf16.gmra.mxu0 %v1575
        %v2628 = vpop.f32.mrf.mxu0
        %v2629 = vadd.f32 %v2235, %v2628
        %v2630 = vpop.f32.mrf.mxu0
        %v2631 = vadd.f32 %v2237, %v2630
        %2632 = vmatmul.bf16.gmra.mxu0 %v1578
        %v2633 = vpop.f32.mrf.mxu0
        %v2634 = vadd.f32 %v2240, %v2633
        %v2635 = vpop.f32.mrf.mxu0
        %v2636 = vadd.f32 %v2242, %v2635
        %2637 = vmatmul.bf16.gmra.mxu0 %v1581
        %v2638 = vpop.f32.mrf.mxu0
        %v2639 = vadd.f32 %v2245, %v2638
        %v2640 = vpop.f32.mrf.mxu0
        %v2641 = vadd.f32 %v2247, %v2640
        %2642 = vmatmul.bf16.gmra.mxu0 %v1584
        %v2643 = vpop.f32.mrf.mxu0
        %v2644 = vadd.f32 %v2250, %v2643
        %v2645 = vpop.f32.mrf.mxu0
        %v2646 = vadd.f32 %v2252, %v2645
        %2647 = vmatmul.bf16.gmra.mxu0 %v1587
        %v2648 = vpop.f32.mrf.mxu0
        %v2649 = vadd.f32 %v2255, %v2648
        %v2650 = vpop.f32.mrf.mxu0
        %v2651 = vadd.f32 %v2257, %v2650
        %2652 = vmatmul.bf16.gmra.mxu0 %v1590
        %v2653 = vpop.f32.mrf.mxu0
        %v2654 = vadd.f32 %v2260, %v2653
        %v2655 = vpop.f32.mrf.mxu0
        %v2656 = vadd.f32 %v2262, %v2655
        %2657 = vmatmul.bf16.gmra.mxu0 %v1593
        %v2658 = vpop.f32.mrf.mxu0
        %v2659 = vadd.f32 %v2265, %v2658
        %v2660 = vpop.f32.mrf.mxu0
        %v2661 = vadd.f32 %v2267, %v2660
        %2662 = vmatmul.bf16.gmra.mxu0 %v1596
        %v2663 = vpop.f32.mrf.mxu0
        %v2664 = vadd.f32 %v2270, %v2663
        %v2665 = vpop.f32.mrf.mxu0
        %v2666 = vadd.f32 %v2272, %v2665
        %2667 = vmatmul.bf16.gmra.mxu0 %v1599
        %v2668 = vpop.f32.mrf.mxu0
        %v2669 = vadd.f32 %v2275, %v2668
        %v2670 = vpop.f32.mrf.mxu0
        %v2671 = vadd.f32 %v2277, %v2670
        %2672 = vmatmul.bf16.gmra.mxu0 %v1602
        %v2673 = vpop.f32.mrf.mxu0
        %v2674 = vadd.f32 %v2280, %v2673
        %v2675 = vpop.f32.mrf.mxu0
        %v2676 = vadd.f32 %v2282, %v2675
        %2677 = vmatmul.bf16.gmra.mxu0 %v1605
        %v2678 = vpop.f32.mrf.mxu0
        %v2679 = vadd.f32 %v2285, %v2678
        %v2680 = vpop.f32.mrf.mxu0
        %v2681 = vadd.f32 %v2287, %v2680
        %2682 = vmatmul.bf16.gmra.mxu0 %v1608
        %v2683 = vpop.f32.mrf.mxu0
        %v2684 = vadd.f32 %v2290, %v2683
        %v2685 = vpop.f32.mrf.mxu0
        %v2686 = vadd.f32 %v2292, %v2685
        %2687 = vmatmul.bf16.gmra.mxu0 %v1611
        %v2688 = vpop.f32.mrf.mxu0
        %v2689 = vadd.f32 %v2295, %v2688
        %v2690 = vpop.f32.mrf.mxu0
        %v2691 = vadd.f32 %v2297, %v2690
        %2692 = vmatmul.bf16.gmra.mxu0 %v1614
        %v2693 = vpop.f32.mrf.mxu0
        %v2694 = vadd.f32 %v2300, %v2693
        %v2695 = vpop.f32.mrf.mxu0
        %v2696 = vadd.f32 %v2302, %v2695
        %2697 = vmatmul.bf16.gmra.mxu0 %v1617
        %v2698 = vpop.f32.mrf.mxu0
        %v2699 = vadd.f32 %v2305, %v2698
        %v2700 = vpop.f32.mrf.mxu0
        %v2701 = vadd.f32 %v2307, %v2700
        %2702 = vmatmul.bf16.gmra.mxu0 %v1620
        %v2703 = vpop.f32.mrf.mxu0
        %v2704 = vadd.f32 %v2310, %v2703
        %v2705 = vpop.f32.mrf.mxu0
        %v2706 = vadd.f32 %v2312, %v2705
        %2707 = vmatmul.bf16.gmra.mxu0 %v1623
        %v2708 = vpop.f32.mrf.mxu0
        %v2709 = vadd.f32 %v2315, %v2708
        %v2710 = vpop.f32.mrf.mxu0
        %v2711 = vadd.f32 %v2317, %v2710
        %2712 = vmatmul.bf16.gmra.mxu0 %v1626
        %v2713 = vpop.f32.mrf.mxu0
        %v2714 = vadd.f32 %v2320, %v2713
        %v2715 = vpop.f32.mrf.mxu0
        %v2716 = vadd.f32 %v2322, %v2715
        %2717 = vmatmul.bf16.gmra.mxu0 %v1629
        %v2718 = vpop.f32.mrf.mxu0
        %v2719 = vadd.f32 %v2325, %v2718
        %v2720 = vpop.f32.mrf.mxu0
        %v2721 = vadd.f32 %v2327, %v2720
        %2722 = vmatmul.bf16.gmra.mxu0 %v1632
        %v2723 = vpop.f32.mrf.mxu0
        %v2724 = vadd.f32 %v2330, %v2723
        %v2725 = vpop.f32.mrf.mxu0
        %v2726 = vadd.f32 %v2332, %v2725
        %2727 = vmatmul.bf16.gmra.mxu0 %v1635
        %v2728 = vpop.f32.mrf.mxu0
        %v2729 = vadd.f32 %v2335, %v2728
        %v2730 = vpop.f32.mrf.mxu0
        %v2731 = vadd.f32 %v2337, %v2730
        %2732 = vmatmul.bf16.gmra.mxu0 %v1638
        %v2733 = vpop.f32.mrf.mxu0
        %v2734 = vadd.f32 %v2340, %v2733
        %v2735 = vpop.f32.mrf.mxu0
        %v2736 = vadd.f32 %v2342, %v2735
        %2737 = vmatmul.bf16.gmra.mxu0 %v1641
        %v2738 = vpop.f32.mrf.mxu0
        %v2739 = vadd.f32 %v2345, %v2738
        %v2740 = vpop.f32.mrf.mxu0
        %v2741 = vadd.f32 %v2347, %v2740
        %2742 = vmatmul.bf16.gmra.mxu0 %v1644
        %v2743 = vpop.f32.mrf.mxu0
        %v2744 = vadd.f32 %v2350, %v2743
        %v2745 = vpop.f32.mrf.mxu0
        %v2746 = vadd.f32 %v2352, %v2745
        %2747 = vmatmul.bf16.gmra.mxu0 %v1647
        %v2748 = vpop.f32.mrf.mxu0
        %v2749 = vadd.f32 %v2355, %v2748
        %v2750 = vpop.f32.mrf.mxu0
        %v2751 = vadd.f32 %v2357, %v2750
        %2752 = vmatmul.bf16.gmra.mxu0 %v1650
        %v2753 = vpop.f32.mrf.mxu0
        %v2754 = vadd.f32 %v2360, %v2753
        %v2755 = vpop.f32.mrf.mxu0
        %v2756 = vadd.f32 %v2362, %v2755
        %2757 = vmatmul.bf16.gmra.mxu0 %v1653
        %v2758 = vpop.f32.mrf.mxu0
        %v2759 = vadd.f32 %v2365, %v2758
        %v2760 = vpop.f32.mrf.mxu0
        %v2761 = vadd.f32 %v2367, %v2760
        %2762 = vmatmul.bf16.gmra.mxu0 %v1656
        %v2763 = vpop.f32.mrf.mxu0
        %v2764 = vadd.f32 %v2370, %v2763
        %v2765 = vpop.f32.mrf.mxu0
        %v2766 = vadd.f32 %v2372, %v2765
        %2767 = vmatmul.bf16.gmra.mxu0 %v1659
        %v2768 = vpop.f32.mrf.mxu0
        %v2769 = vadd.f32 %v2375, %v2768
        %v2770 = vpop.f32.mrf.mxu0
        %v2771 = vadd.f32 %v2377, %v2770
        %2772 = vmatmul.bf16.gmra.mxu0 %v1662
        %v2773 = vpop.f32.mrf.mxu0
        %v2774 = vadd.f32 %v2380, %v2773
        %v2775 = vpop.f32.mrf.mxu0
        %v2776 = vadd.f32 %v2382, %v2775
        %2777 = vmatmul.bf16.gmra.mxu0 %v1665
        %v2778 = vpop.f32.mrf.mxu0
        %v2779 = vadd.f32 %v2385, %v2778
        %v2780 = vpop.f32.mrf.mxu0
        %v2781 = vadd.f32 %v2387, %v2780
        %2782 = vmatmul.bf16.gmra.mxu0 %v1668
        %v2783 = vpop.f32.mrf.mxu0
        %v2784 = vadd.f32 %v2390, %v2783
        %v2785 = vpop.f32.mrf.mxu0
        %v2786 = vadd.f32 %v2392, %v2785
        %2787 = vmatmul.bf16.gmra.mxu0 %v1671
        %v2788 = vpop.f32.mrf.mxu0
        %v2789 = vadd.f32 %v2395, %v2788
        %v2790 = vpop.f32.mrf.mxu0
        %v2791 = vadd.f32 %v2397, %v2790
        %2792 = vmatmul.bf16.gmra.mxu0 %v1674
        %v2793 = vpop.f32.mrf.mxu0
        %v2794 = vadd.f32 %v2400, %v2793
        %v2795 = vpop.f32.mrf.mxu0
        %v2796 = vadd.f32 %v2402, %v2795
        %2797 = vmatmul.bf16.gmra.mxu0 %v1677
        %v2798 = vpop.f32.mrf.mxu0
        %v2799 = vadd.f32 %v2405, %v2798
        %v2800 = vpop.f32.mrf.mxu0
        %v2801 = vadd.f32 %v2407, %v2800
        %2802 = vmatmul.bf16.gmra.mxu0 %v1680
        %v2803 = vpop.f32.mrf.mxu0
        %v2804 = vadd.f32 %v2410, %v2803
        %v2805 = vpop.f32.mrf.mxu0
        %v2806 = vadd.f32 %v2412, %v2805
        %2807 = vmatmul.bf16.gmra.mxu0 %v1683
        %v2808 = vpop.f32.mrf.mxu0
        %v2809 = vadd.f32 %v2415, %v2808
        %v2810 = vpop.f32.mrf.mxu0
        %v2811 = vadd.f32 %v2417, %v2810
        %2812 = vmatmul.bf16.gmra.mxu0 %v1686
        %v2813 = vpop.f32.mrf.mxu0
        %v2814 = vadd.f32 %v2420, %v2813
        %v2815 = vpop.f32.mrf.mxu0
        %v2816 = vadd.f32 %v2422, %v2815
        %2817 = vmatmul.bf16.gmra.mxu0 %v1689
        %v2818 = vpop.f32.mrf.mxu0
        %v2819 = vadd.f32 %v2425, %v2818
        %v2820 = vpop.f32.mrf.mxu0
        %v2821 = vadd.f32 %v2427, %v2820
        %2822 = vmatmul.bf16.gmra.mxu0 %v1692
        %v2823 = vpop.f32.mrf.mxu0
        %v2824 = vadd.f32 %v2430, %v2823
        %v2825 = vpop.f32.mrf.mxu0
        %v2826 = vadd.f32 %v2432, %v2825
        %2827 = vmatmul.bf16.gmra.mxu0 %v1695
        %v2828 = vpop.f32.mrf.mxu0
        %v2829 = vadd.f32 %v2435, %v2828
        %v2830 = vpop.f32.mrf.mxu0
        %v2831 = vadd.f32 %v2437, %v2830
        %2832 = vmatmul.bf16.gmra.mxu0 %v1698
        %v2833 = vpop.f32.mrf.mxu0
        %v2834 = vadd.f32 %v2440, %v2833
        %v2835 = vpop.f32.mrf.mxu0
        %v2836 = vadd.f32 %v2442, %v2835
        %2837 = vmatmul.bf16.gmra.mxu0 %v1701
        %v2838 = vpop.f32.mrf.mxu0
        %v2839 = vadd.f32 %v2445, %v2838
        %v2840 = vpop.f32.mrf.mxu0
        %v2841 = vadd.f32 %v2447, %v2840
        %2842 = vmatmul.bf16.gmra.mxu0 %v1704
        %v2843 = vpop.f32.mrf.mxu0
        %v2844 = vadd.f32 %v2450, %v2843
        %v2845 = vpop.f32.mrf.mxu0
        %v2846 = vadd.f32 %v2452, %v2845
        %2847 = vmatmul.bf16.gmra.mxu0 %v1707
        %v2848 = vpop.f32.mrf.mxu0
        %v2849 = vadd.f32 %v2455, %v2848
        %v2850 = vpop.f32.mrf.mxu0
        %v2851 = vadd.f32 %v2457, %v2850
        %2852 = vmatmul.bf16.gmra.mxu0 %v1710
        %v2853 = vpop.f32.mrf.mxu0
        %v2854 = vadd.f32 %v2460, %v2853
        %v2855 = vpop.f32.mrf.mxu0
        %v2856 = vadd.f32 %v2462, %v2855
        %2857 = vmatmul.bf16.gmra.mxu0 %v1713
        %v2858 = vpop.f32.mrf.mxu0
        %v2859 = vadd.f32 %v2465, %v2858
        %v2860 = vpop.f32.mrf.mxu0
        %v2861 = vadd.f32 %v2467, %v2860
        %2862 = vmatmul.bf16.gmra.mxu0 %v1716
        %v2863 = vpop.f32.mrf.mxu0
        %v2864 = vadd.f32 %v2470, %v2863
        %v2865 = vpop.f32.mrf.mxu0
        %v2866 = vadd.f32 %v2472, %v2865
        %2867 = vmatmul.bf16.gmra.mxu0 %v1719
        %v2868 = vpop.f32.mrf.mxu0
        %v2869 = vadd.f32 %v2475, %v2868
        %v2870 = vpop.f32.mrf.mxu0
        %v2871 = vadd.f32 %v2477, %v2870
        %2872 = vmatmul.bf16.gmra.mxu0 %v1722
        %v2873 = vpop.f32.mrf.mxu0
        %v2874 = vadd.f32 %v2480, %v2873
        %v2875 = vpop.f32.mrf.mxu0
        %v2876 = vadd.f32 %v2482, %v2875
        %2877 = vmatmul.bf16.gmra.mxu0 %v1725
        %v2878 = vpop.f32.mrf.mxu0
        %v2879 = vadd.f32 %v2485, %v2878
        %v2880 = vpop.f32.mrf.mxu0
        %v2881 = vadd.f32 %v2487, %v2880
        %2882 = vmatmul.bf16.gmra.mxu0 %v1728
        %v2883 = vpop.f32.mrf.mxu0
        %v2884 = vadd.f32 %v2490, %v2883
        %v2885 = vpop.f32.mrf.mxu0
        %v2886 = vadd.f32 %v2492, %v2885
        %2887 = vmatmul.bf16.gmra.mxu0 %v1731
        %v2888 = vpop.f32.mrf.mxu0
        %v2889 = vadd.f32 %v2495, %v2888
        %v2890 = vpop.f32.mrf.mxu0
        %v2891 = vadd.f32 %v2497, %v2890
        %2892 = vmatmul.bf16.gmra.mxu0 %v1734
        %v2893 = vpop.f32.mrf.mxu0
        %v2894 = vadd.f32 %v2500, %v2893
        %v2895 = vpop.f32.mrf.mxu0
        %v2896 = vadd.f32 %v2502, %v2895
        %2897 = vmatmul.bf16.gmra.mxu0 %v1737
        %v2898 = vpop.f32.mrf.mxu0
        %v2899 = vadd.f32 %v2505, %v2898
        %v2900 = vpop.f32.mrf.mxu0
        %v2901 = vadd.f32 %v2507, %v2900
        %2902 = vmatmul.bf16.gmra.mxu0 %v1740
        %v2903 = vpop.f32.mrf.mxu0
        %v2904 = vadd.f32 %v2510, %v2903
        %v2905 = vpop.f32.mrf.mxu0
        %v2906 = vadd.f32 %v2512, %v2905
        %2907 = vmatmul.bf16.gmra.mxu0 %v1743
        %v2908 = vpop.f32.mrf.mxu0
        %v2909 = vadd.f32 %v2515, %v2908
        %v2910 = vpop.f32.mrf.mxu0
        %v2911 = vadd.f32 %v2517, %v2910
        %2912 = vmatmul.bf16.gmra.mxu0 %v1746
        %v2913 = vpop.f32.mrf.mxu0
        %v2914 = vadd.f32 %v2520, %v2913
        %v2915 = vpop.f32.mrf.mxu0
        %v2916 = vadd.f32 %v2522, %v2915
        %2917 = vmatmul.bf16.gmra.mxu0 %v1749
        %v2918 = vpop.f32.mrf.mxu0
        %v2919 = vadd.f32 %v2525, %v2918
        %v2920 = vpop.f32.mrf.mxu0
        %v2921 = vadd.f32 %v2527, %v2920
        %2922 = vmatmul.bf16.gmra.mxu0 %v1752
        %v2923 = vpop.f32.mrf.mxu0
        %v2924 = vadd.f32 %v2530, %v2923
        %v2925 = vpop.f32.mrf.mxu0
        %v2926 = vadd.f32 %v2532, %v2925
        %2927 = vmatmul.bf16.gmra.mxu0 %v1755
        %v2928 = vpop.f32.mrf.mxu0
        %v2929 = vadd.f32 %v2535, %v2928
        %v2930 = vpop.f32.mrf.mxu0
        %v2931 = vadd.f32 %v2537, %v2930
        %2932 = vmatmul.bf16.gmra.mxu0 %v1758
        %v2933 = vpop.f32.mrf.mxu0
        %v2934 = vadd.f32 %v2540, %v2933
        %v2935 = vpop.f32.mrf.mxu0
        %v2936 = vadd.f32 %v2542, %v2935
        %2937 = vdwg.mxu0
        %2938 = vmatpush.bf16.msra.mxu0 0
        %2939 = vmatpush.bf16.msra.mxu0 0
        %2940 = vmatpush.bf16.msra.mxu0 0
        %2941 = vmatpush.bf16.msra.mxu0 0
        %2942 = vmatpush.bf16.msra.mxu0 %v2148
        %2943 = vmatpush.bf16.msra.mxu0 %v295
        %2944 = vmatpush.bf16.msra.mxu0 %v294
        %2945 = vmatpush.bf16.msra.mxu0 %v293
        %2946 = vmatmul.bf16.gmra.mxu0 %v1916
        %v2947 = vpop.f32.mrf.mxu0
        %v2948 = vadd.f32 %v2554, %v2947
        %v2949 = vpop.f32.mrf.mxu0
        %v2950 = vadd.f32 %v2556, %v2949
        %2951 = vmatmul.bf16.gmra.mxu0 %v1919
        %v2952 = vpop.f32.mrf.mxu0
        %v2953 = vadd.f32 %v2559, %v2952
        %v2954 = vpop.f32.mrf.mxu0
        %v2955 = vadd.f32 %v2561, %v2954
        %2956 = vmatmul.bf16.gmra.mxu0 %v1922
        %v2957 = vpop.f32.mrf.mxu0
        %v2958 = vadd.f32 %v2564, %v2957
        %v2959 = vpop.f32.mrf.mxu0
        %v2960 = vadd.f32 %v2566, %v2959
        %2961 = vmatmul.bf16.gmra.mxu0 %v1925
        %v2962 = vpop.f32.mrf.mxu0
        %v2963 = vadd.f32 %v2569, %v2962
        %v2964 = vpop.f32.mrf.mxu0
        %v2965 = vadd.f32 %v2571, %v2964
        %2966 = vmatmul.bf16.gmra.mxu0 %v1928
        %v2967 = vpop.f32.mrf.mxu0
        %v2968 = vadd.f32 %v2574, %v2967
        %v2969 = vpop.f32.mrf.mxu0
        %v2970 = vadd.f32 %v2576, %v2969
        %2971 = vmatmul.bf16.gmra.mxu0 %v1931
        %v2972 = vpop.f32.mrf.mxu0
        %v2973 = vadd.f32 %v2579, %v2972
        %v2974 = vpop.f32.mrf.mxu0
        %v2975 = vadd.f32 %v2581, %v2974
        %2976 = vmatmul.bf16.gmra.mxu0 %v1934
        %v2977 = vpop.f32.mrf.mxu0
        %v2978 = vadd.f32 %v2584, %v2977
        %v2979 = vpop.f32.mrf.mxu0
        %v2980 = vadd.f32 %v2586, %v2979
        %2981 = vmatmul.bf16.gmra.mxu0 %v1937
        %v2982 = vpop.f32.mrf.mxu0
        %v2983 = vadd.f32 %v2589, %v2982
        %v2984 = vpop.f32.mrf.mxu0
        %v2985 = vadd.f32 %v2591, %v2984
        %2986 = vmatmul.bf16.gmra.mxu0 %v1940
        %v2987 = vpop.f32.mrf.mxu0
        %v2988 = vadd.f32 %v2594, %v2987
        %v2989 = vpop.f32.mrf.mxu0
        %v2990 = vadd.f32 %v2596, %v2989
        %2991 = vmatmul.bf16.gmra.mxu0 %v1943
        %v2992 = vpop.f32.mrf.mxu0
        %v2993 = vadd.f32 %v2599, %v2992
        %v2994 = vpop.f32.mrf.mxu0
        %v2995 = vadd.f32 %v2601, %v2994
        %2996 = vmatmul.bf16.gmra.mxu0 %v1946
        %v2997 = vpop.f32.mrf.mxu0
        %v2998 = vadd.f32 %v2604, %v2997
        %v2999 = vpop.f32.mrf.mxu0
        %v3000 = vadd.f32 %v2606, %v2999
        %3001 = vmatmul.bf16.gmra.mxu0 %v1949
        %v3002 = vpop.f32.mrf.mxu0
        %v3003 = vadd.f32 %v2609, %v3002
        %v3004 = vpop.f32.mrf.mxu0
        %v3005 = vadd.f32 %v2611, %v3004
        %3006 = vmatmul.bf16.gmra.mxu0 %v1952
        %v3007 = vpop.f32.mrf.mxu0
        %v3008 = vadd.f32 %v2614, %v3007
        %v3009 = vpop.f32.mrf.mxu0
        %v3010 = vadd.f32 %v2616, %v3009
        %3011 = vmatmul.bf16.gmra.mxu0 %v1955
        %v3012 = vpop.f32.mrf.mxu0
        %v3013 = vadd.f32 %v2619, %v3012
        %v3014 = vpop.f32.mrf.mxu0
        %v3015 = vadd.f32 %v2621, %v3014
        %3016 = vmatmul.bf16.gmra.mxu0 %v1958
        %v3017 = vpop.f32.mrf.mxu0
        %v3018 = vadd.f32 %v2624, %v3017
        %v3019 = vpop.f32.mrf.mxu0
        %v3020 = vadd.f32 %v2626, %v3019
        %3021 = vmatmul.bf16.gmra.mxu0 %v1961
        %v3022 = vpop.f32.mrf.mxu0
        %v3023 = vadd.f32 %v2629, %v3022
        %v3024 = vpop.f32.mrf.mxu0
        %v3025 = vadd.f32 %v2631, %v3024
        %3026 = vmatmul.bf16.gmra.mxu0 %v1964
        %v3027 = vpop.f32.mrf.mxu0
        %v3028 = vadd.f32 %v2634, %v3027
        %v3029 = vpop.f32.mrf.mxu0
        %v3030 = vadd.f32 %v2636, %v3029
        %3031 = vmatmul.bf16.gmra.mxu0 %v1967
        %v3032 = vpop.f32.mrf.mxu0
        %v3033 = vadd.f32 %v2639, %v3032
        %v3034 = vpop.f32.mrf.mxu0
        %v3035 = vadd.f32 %v2641, %v3034
        %3036 = vmatmul.bf16.gmra.mxu0 %v1970
        %v3037 = vpop.f32.mrf.mxu0
        %v3038 = vadd.f32 %v2644, %v3037
        %v3039 = vpop.f32.mrf.mxu0
        %v3040 = vadd.f32 %v2646, %v3039
        %3041 = vmatmul.bf16.gmra.mxu0 %v1973
        %v3042 = vpop.f32.mrf.mxu0
        %v3043 = vadd.f32 %v2649, %v3042
        %v3044 = vpop.f32.mrf.mxu0
        %v3045 = vadd.f32 %v2651, %v3044
        %3046 = vmatmul.bf16.gmra.mxu0 %v1976
        %v3047 = vpop.f32.mrf.mxu0
        %v3048 = vadd.f32 %v2654, %v3047
        %v3049 = vpop.f32.mrf.mxu0
        %v3050 = vadd.f32 %v2656, %v3049
        %3051 = vmatmul.bf16.gmra.mxu0 %v1979
        %v3052 = vpop.f32.mrf.mxu0
        %v3053 = vadd.f32 %v2659, %v3052
        %v3054 = vpop.f32.mrf.mxu0
        %v3055 = vadd.f32 %v2661, %v3054
        %3056 = vmatmul.bf16.gmra.mxu0 %v1982
        %v3057 = vpop.f32.mrf.mxu0
        %v3058 = vadd.f32 %v2664, %v3057
        %v3059 = vpop.f32.mrf.mxu0
        %v3060 = vadd.f32 %v2666, %v3059
        %3061 = vmatmul.bf16.gmra.mxu0 %v1985
        %v3062 = vpop.f32.mrf.mxu0
        %v3063 = vadd.f32 %v2669, %v3062
        %v3064 = vpop.f32.mrf.mxu0
        %v3065 = vadd.f32 %v2671, %v3064
        %3066 = vmatmul.bf16.gmra.mxu0 %v1988
        %v3067 = vpop.f32.mrf.mxu0
        %v3068 = vadd.f32 %v2674, %v3067
        %v3069 = vpop.f32.mrf.mxu0
        %v3070 = vadd.f32 %v2676, %v3069
        %3071 = vmatmul.bf16.gmra.mxu0 %v1991
        %v3072 = vpop.f32.mrf.mxu0
        %v3073 = vadd.f32 %v2679, %v3072
        %v3074 = vpop.f32.mrf.mxu0
        %v3075 = vadd.f32 %v2681, %v3074
        %3076 = vmatmul.bf16.gmra.mxu0 %v1994
        %v3077 = vpop.f32.mrf.mxu0
        %v3078 = vadd.f32 %v2684, %v3077
        %v3079 = vpop.f32.mrf.mxu0
        %v3080 = vadd.f32 %v2686, %v3079
        %3081 = vmatmul.bf16.gmra.mxu0 %v1997
        %v3082 = vpop.f32.mrf.mxu0
        %v3083 = vadd.f32 %v2689, %v3082
        %v3084 = vpop.f32.mrf.mxu0
        %v3085 = vadd.f32 %v2691, %v3084
        %3086 = vmatmul.bf16.gmra.mxu0 %v2000
        %v3087 = vpop.f32.mrf.mxu0
        %v3088 = vadd.f32 %v2694, %v3087
        %v3089 = vpop.f32.mrf.mxu0
        %v3090 = vadd.f32 %v2696, %v3089
        %3091 = vmatmul.bf16.gmra.mxu0 %v2003
        %v3092 = vpop.f32.mrf.mxu0
        %v3093 = vadd.f32 %v2699, %v3092
        %v3094 = vpop.f32.mrf.mxu0
        %v3095 = vadd.f32 %v2701, %v3094
        %3096 = vmatmul.bf16.gmra.mxu0 %v2006
        %v3097 = vpop.f32.mrf.mxu0
        %v3098 = vadd.f32 %v2704, %v3097
        %v3099 = vpop.f32.mrf.mxu0
        %v3100 = vadd.f32 %v2706, %v3099
        %3101 = vmatmul.bf16.gmra.mxu0 %v2009
        %v3102 = vpop.f32.mrf.mxu0
        %v3103 = vadd.f32 %v2709, %v3102
        %v3104 = vpop.f32.mrf.mxu0
        %v3105 = vadd.f32 %v2711, %v3104
        %3106 = vmatmul.bf16.gmra.mxu0 %v2012
        %v3107 = vpop.f32.mrf.mxu0
        %v3108 = vadd.f32 %v2714, %v3107
        %v3109 = vpop.f32.mrf.mxu0
        %v3110 = vadd.f32 %v2716, %v3109
        %3111 = vmatmul.bf16.gmra.mxu0 %v2015
        %v3112 = vpop.f32.mrf.mxu0
        %v3113 = vadd.f32 %v2719, %v3112
        %v3114 = vpop.f32.mrf.mxu0
        %v3115 = vadd.f32 %v2721, %v3114
        %3116 = vmatmul.bf16.gmra.mxu0 %v2018
        %v3117 = vpop.f32.mrf.mxu0
        %v3118 = vadd.f32 %v2724, %v3117
        %v3119 = vpop.f32.mrf.mxu0
        %v3120 = vadd.f32 %v2726, %v3119
        %3121 = vmatmul.bf16.gmra.mxu0 %v2021
        %v3122 = vpop.f32.mrf.mxu0
        %v3123 = vadd.f32 %v2729, %v3122
        %v3124 = vpop.f32.mrf.mxu0
        %v3125 = vadd.f32 %v2731, %v3124
        %3126 = vmatmul.bf16.gmra.mxu0 %v2024
        %v3127 = vpop.f32.mrf.mxu0
        %v3128 = vadd.f32 %v2734, %v3127
        %v3129 = vpop.f32.mrf.mxu0
        %v3130 = vadd.f32 %v2736, %v3129
        %3131 = vmatmul.bf16.gmra.mxu0 %v2027
        %v3132 = vpop.f32.mrf.mxu0
        %v3133 = vadd.f32 %v2739, %v3132
        %v3134 = vpop.f32.mrf.mxu0
        %v3135 = vadd.f32 %v2741, %v3134
        %3136 = vmatmul.bf16.gmra.mxu0 %v2030
        %v3137 = vpop.f32.mrf.mxu0
        %v3138 = vadd.f32 %v2744, %v3137
        %v3139 = vpop.f32.mrf.mxu0
        %v3140 = vadd.f32 %v2746, %v3139
        %3141 = vmatmul.bf16.gmra.mxu0 %v2033
        %v3142 = vpop.f32.mrf.mxu0
        %v3143 = vadd.f32 %v2749, %v3142
        %v3144 = vpop.f32.mrf.mxu0
        %v3145 = vadd.f32 %v2751, %v3144
        %3146 = vmatmul.bf16.gmra.mxu0 %v2036
        %v3147 = vpop.f32.mrf.mxu0
        %v3148 = vadd.f32 %v2754, %v3147
        %v3149 = vpop.f32.mrf.mxu0
        %v3150 = vadd.f32 %v2756, %v3149
        %3151 = vmatmul.bf16.gmra.mxu0 %v2039
        %v3152 = vpop.f32.mrf.mxu0
        %v3153 = vadd.f32 %v2759, %v3152
        %v3154 = vpop.f32.mrf.mxu0
        %v3155 = vadd.f32 %v2761, %v3154
        %3156 = vmatmul.bf16.gmra.mxu0 %v2042
        %v3157 = vpop.f32.mrf.mxu0
        %v3158 = vadd.f32 %v2764, %v3157
        %v3159 = vpop.f32.mrf.mxu0
        %v3160 = vadd.f32 %v2766, %v3159
        %3161 = vmatmul.bf16.gmra.mxu0 %v2045
        %v3162 = vpop.f32.mrf.mxu0
        %v3163 = vadd.f32 %v2769, %v3162
        %v3164 = vpop.f32.mrf.mxu0
        %v3165 = vadd.f32 %v2771, %v3164
        %3166 = vmatmul.bf16.gmra.mxu0 %v2048
        %v3167 = vpop.f32.mrf.mxu0
        %v3168 = vadd.f32 %v2774, %v3167
        %v3169 = vpop.f32.mrf.mxu0
        %v3170 = vadd.f32 %v2776, %v3169
        %3171 = vmatmul.bf16.gmra.mxu0 %v2051
        %v3172 = vpop.f32.mrf.mxu0
        %v3173 = vadd.f32 %v2779, %v3172
        %v3174 = vpop.f32.mrf.mxu0
        %v3175 = vadd.f32 %v2781, %v3174
        %3176 = vmatmul.bf16.gmra.mxu0 %v2054
        %v3177 = vpop.f32.mrf.mxu0
        %v3178 = vadd.f32 %v2784, %v3177
        %v3179 = vpop.f32.mrf.mxu0
        %v3180 = vadd.f32 %v2786, %v3179
        %3181 = vmatmul.bf16.gmra.mxu0 %v2057
        %v3182 = vpop.f32.mrf.mxu0
        %v3183 = vadd.f32 %v2789, %v3182
        %v3184 = vpop.f32.mrf.mxu0
        %v3185 = vadd.f32 %v2791, %v3184
        %3186 = vmatmul.bf16.gmra.mxu0 %v2060
        %v3187 = vpop.f32.mrf.mxu0
        %v3188 = vadd.f32 %v2794, %v3187
        %v3189 = vpop.f32.mrf.mxu0
        %v3190 = vadd.f32 %v2796, %v3189
        %3191 = vmatmul.bf16.gmra.mxu0 %v2063
        %v3192 = vpop.f32.mrf.mxu0
        %v3193 = vadd.f32 %v2799, %v3192
        %v3194 = vpop.f32.mrf.mxu0
        %v3195 = vadd.f32 %v2801, %v3194
        %3196 = vmatmul.bf16.gmra.mxu0 %v2066
        %v3197 = vpop.f32.mrf.mxu0
        %v3198 = vadd.f32 %v2804, %v3197
        %v3199 = vpop.f32.mrf.mxu0
        %v3200 = vadd.f32 %v2806, %v3199
        %3201 = vmatmul.bf16.gmra.mxu0 %v2069
        %v3202 = vpop.f32.mrf.mxu0
        %v3203 = vadd.f32 %v2809, %v3202
        %v3204 = vpop.f32.mrf.mxu0
        %v3205 = vadd.f32 %v2811, %v3204
        %3206 = vmatmul.bf16.gmra.mxu0 %v2072
        %v3207 = vpop.f32.mrf.mxu0
        %v3208 = vadd.f32 %v2814, %v3207
        %v3209 = vpop.f32.mrf.mxu0
        %v3210 = vadd.f32 %v2816, %v3209
        %3211 = vmatmul.bf16.gmra.mxu0 %v2075
        %v3212 = vpop.f32.mrf.mxu0
        %v3213 = vadd.f32 %v2819, %v3212
        %v3214 = vpop.f32.mrf.mxu0
        %v3215 = vadd.f32 %v2821, %v3214
        %3216 = vmatmul.bf16.gmra.mxu0 %v2078
        %v3217 = vpop.f32.mrf.mxu0
        %v3218 = vadd.f32 %v2824, %v3217
        %v3219 = vpop.f32.mrf.mxu0
        %v3220 = vadd.f32 %v2826, %v3219
        %3221 = vmatmul.bf16.gmra.mxu0 %v2081
        %v3222 = vpop.f32.mrf.mxu0
        %v3223 = vadd.f32 %v2829, %v3222
        %v3224 = vpop.f32.mrf.mxu0
        %v3225 = vadd.f32 %v2831, %v3224
        %3226 = vmatmul.bf16.gmra.mxu0 %v2084
        %v3227 = vpop.f32.mrf.mxu0
        %v3228 = vadd.f32 %v2834, %v3227
        %v3229 = vpop.f32.mrf.mxu0
        %v3230 = vadd.f32 %v2836, %v3229
        %3231 = vmatmul.bf16.gmra.mxu0 %v2087
        %v3232 = vpop.f32.mrf.mxu0
        %v3233 = vadd.f32 %v2839, %v3232
        %v3234 = vpop.f32.mrf.mxu0
        %v3235 = vadd.f32 %v2841, %v3234
        %3236 = vmatmul.bf16.gmra.mxu0 %v2090
        %v3237 = vpop.f32.mrf.mxu0
        %v3238 = vadd.f32 %v2844, %v3237
        %v3239 = vpop.f32.mrf.mxu0
        %v3240 = vadd.f32 %v2846, %v3239
        %3241 = vmatmul.bf16.gmra.mxu0 %v2093
        %v3242 = vpop.f32.mrf.mxu0
        %v3243 = vadd.f32 %v2849, %v3242
        %v3244 = vpop.f32.mrf.mxu0
        %v3245 = vadd.f32 %v2851, %v3244
        %3246 = vmatmul.bf16.gmra.mxu0 %v2096
        %v3247 = vpop.f32.mrf.mxu0
        %v3248 = vadd.f32 %v2854, %v3247
        %v3249 = vpop.f32.mrf.mxu0
        %v3250 = vadd.f32 %v2856, %v3249
        %3251 = vmatmul.bf16.gmra.mxu0 %v2099
        %v3252 = vpop.f32.mrf.mxu0
        %v3253 = vadd.f32 %v2859, %v3252
        %v3254 = vpop.f32.mrf.mxu0
        %v3255 = vadd.f32 %v2861, %v3254
        %3256 = vmatmul.bf16.gmra.mxu0 %v2102
        %v3257 = vpop.f32.mrf.mxu0
        %v3258 = vadd.f32 %v2864, %v3257
        %v3259 = vpop.f32.mrf.mxu0
        %v3260 = vadd.f32 %v2866, %v3259
        %3261 = vmatmul.bf16.gmra.mxu0 %v2105
        %v3262 = vpop.f32.mrf.mxu0
        %v3263 = vadd.f32 %v2869, %v3262
        %v3264 = vpop.f32.mrf.mxu0
        %v3265 = vadd.f32 %v2871, %v3264
        %3266 = vmatmul.bf16.gmra.mxu0 %v2108
        %v3267 = vpop.f32.mrf.mxu0
        %v3268 = vadd.f32 %v2874, %v3267
        %v3269 = vpop.f32.mrf.mxu0
        %v3270 = vadd.f32 %v2876, %v3269
        %3271 = vmatmul.bf16.gmra.mxu0 %v2111
        %v3272 = vpop.f32.mrf.mxu0
        %v3273 = vadd.f32 %v2879, %v3272
        %v3274 = vpop.f32.mrf.mxu0
        %v3275 = vadd.f32 %v2881, %v3274
        %3276 = vmatmul.bf16.gmra.mxu0 %v2114
        %v3277 = vpop.f32.mrf.mxu0
        %v3278 = vadd.f32 %v2884, %v3277
        %v3279 = vpop.f32.mrf.mxu0
        %v3280 = vadd.f32 %v2886, %v3279
        %3281 = vmatmul.bf16.gmra.mxu0 %v2117
        %v3282 = vpop.f32.mrf.mxu0
        %v3283 = vadd.f32 %v2889, %v3282
        %v3284 = vpop.f32.mrf.mxu0
        %v3285 = vadd.f32 %v2891, %v3284
        %3286 = vmatmul.bf16.gmra.mxu0 %v2120
        %v3287 = vpop.f32.mrf.mxu0
        %v3288 = vadd.f32 %v2894, %v3287
        %v3289 = vpop.f32.mrf.mxu0
        %v3290 = vadd.f32 %v2896, %v3289
        %3291 = vmatmul.bf16.gmra.mxu0 %v2123
        %v3292 = vpop.f32.mrf.mxu0
        %v3293 = vadd.f32 %v2899, %v3292
        %v3294 = vpop.f32.mrf.mxu0
        %v3295 = vadd.f32 %v2901, %v3294
        %3296 = vmatmul.bf16.gmra.mxu0 %v2126
        %v3297 = vpop.f32.mrf.mxu0
        %v3298 = vadd.f32 %v2904, %v3297
        %v3299 = vpop.f32.mrf.mxu0
        %v3300 = vadd.f32 %v2906, %v3299
        %3301 = vmatmul.bf16.gmra.mxu0 %v2129
        %v3302 = vpop.f32.mrf.mxu0
        %v3303 = vadd.f32 %v2909, %v3302
        %v3304 = vpop.f32.mrf.mxu0
        %v3305 = vadd.f32 %v2911, %v3304
        %3306 = vmatmul.bf16.gmra.mxu0 %v2132
        %v3307 = vpop.f32.mrf.mxu0
        %v3308 = vadd.f32 %v2914, %v3307
        %v3309 = vpop.f32.mrf.mxu0
        %v3310 = vadd.f32 %v2916, %v3309
        %3311 = vmatmul.bf16.gmra.mxu0 %v2135
        %v3312 = vpop.f32.mrf.mxu0
        %v3313 = vadd.f32 %v2919, %v3312
        %v3314 = vpop.f32.mrf.mxu0
        %v3315 = vadd.f32 %v2921, %v3314
        %3316 = vmatmul.bf16.gmra.mxu0 %v2138
        %v3317 = vpop.f32.mrf.mxu0
        %v3318 = vadd.f32 %v2924, %v3317
        %v3319 = vpop.f32.mrf.mxu0
        %v3320 = vadd.f32 %v2926, %v3319
        %3321 = vmatmul.bf16.gmra.mxu0 %v2141
        %v3322 = vpop.f32.mrf.mxu0
        %v3323 = vadd.f32 %v2929, %v3322
        %v3324 = vpop.f32.mrf.mxu0
        %v3325 = vadd.f32 %v2931, %v3324
        %3326 = vmatmul.bf16.gmra.mxu0 %v2144
        %v3327 = vpop.f32.mrf.mxu0
        %v3328 = vadd.f32 %v2934, %v3327
        %v3329 = vpop.f32.mrf.mxu0
        %v3330 = vadd.f32 %v2936, %v3329
        %3331 = vdwg.mxu0
        %v3332 = vsub.f32 0.0, %v2948
        %v3333 = vsub.f32 0.0, %v2950
        %v3334 = vsub.f32 0.0, %v2953
        %v3335 = vsub.f32 0.0, %v2955
        %v3336 = vsub.f32 0.0, %v2958
        %v3337 = vsub.f32 0.0, %v2960
        %v3338 = vsub.f32 0.0, %v2963
        %v3339 = vsub.f32 0.0, %v2965
        %v3340 = vsub.f32 0.0, %v2968
        %v3341 = vsub.f32 0.0, %v2970
        %v3342 = vsub.f32 0.0, %v2973
        %v3343 = vsub.f32 0.0, %v2975
        %v3344 = vsub.f32 0.0, %v2978
        %v3345 = vsub.f32 0.0, %v2980
        %v3346 = vsub.f32 0.0, %v2983
        %v3347 = vsub.f32 0.0, %v2985
        %v3348 = vsub.f32 0.0, %v2988
        %v3349 = vsub.f32 0.0, %v2990
        %v3350 = vsub.f32 0.0, %v2993
        %v3351 = vsub.f32 0.0, %v2995
        %v3352 = vsub.f32 0.0, %v2998
        %v3353 = vsub.f32 0.0, %v3000
        %v3354 = vsub.f32 0.0, %v3003
        %v3355 = vsub.f32 0.0, %v3005
        %v3356 = vsub.f32 0.0, %v3008
        %v3357 = vsub.f32 0.0, %v3010
        %v3358 = vsub.f32 0.0, %v3013
        %v3359 = vsub.f32 0.0, %v3015
        %v3360 = vsub.f32 0.0, %v3018
        %v3361 = vsub.f32 0.0, %v3020
        %v3362 = vsub.f32 0.0, %v3023
        %v3363 = vsub.f32 0.0, %v3025
        %v3364 = vsub.f32 0.0, %v3028
        %v3365 = vsub.f32 0.0, %v3030
        %v3366 = vsub.f32 0.0, %v3033
        %v3367 = vsub.f32 0.0, %v3035
        %v3368 = vsub.f32 0.0, %v3038
        %v3369 = vsub.f32 0.0, %v3040
        %v3370 = vsub.f32 0.0, %v3043
        %v3371 = vsub.f32 0.0, %v3045
        %v3372 = vsub.f32 0.0, %v3048
        %v3373 = vsub.f32 0.0, %v3050
        %v3374 = vsub.f32 0.0, %v3053
        %v3375 = vsub.f32 0.0, %v3055
        %v3376 = vsub.f32 0.0, %v3058
        %v3377 = vsub.f32 0.0, %v3060
        %v3378 = vsub.f32 0.0, %v3063
        %v3379 = vsub.f32 0.0, %v3065
        %v3380 = vsub.f32 0.0, %v3068
        %v3381 = vsub.f32 0.0, %v3070
        %v3382 = vsub.f32 0.0, %v3073
        %v3383 = vsub.f32 0.0, %v3075
        %v3384 = vsub.f32 0.0, %v3078
        %v3385 = vsub.f32 0.0, %v3080
        %v3386 = vsub.f32 0.0, %v3083
        %v3387 = vsub.f32 0.0, %v3085
        %v3388 = vsub.f32 0.0, %v3088
        %v3389 = vsub.f32 0.0, %v3090
        %v3390 = vsub.f32 0.0, %v3093
        %v3391 = vsub.f32 0.0, %v3095
        %v3392 = vsub.f32 0.0, %v3098
        %v3393 = vsub.f32 0.0, %v3100
        %v3394 = vsub.f32 0.0, %v3103
        %v3395 = vsub.f32 0.0, %v3105
        %v3396 = vsub.f32 0.0, %v3108
        %v3397 = vsub.f32 0.0, %v3110
        %v3398 = vsub.f32 0.0, %v3113
        %v3399 = vsub.f32 0.0, %v3115
        %v3400 = vsub.f32 0.0, %v3118
        %v3401 = vsub.f32 0.0, %v3120
        %v3402 = vsub.f32 0.0, %v3123
        %v3403 = vsub.f32 0.0, %v3125
        %v3404 = vsub.f32 0.0, %v3128
        %v3405 = vsub.f32 0.0, %v3130
        %v3406 = vsub.f32 0.0, %v3133
        %v3407 = vsub.f32 0.0, %v3135
        %v3408 = vsub.f32 0.0, %v3138
        %v3409 = vsub.f32 0.0, %v3140
        %v3410 = vsub.f32 0.0, %v3143
        %v3411 = vsub.f32 0.0, %v3145
        %v3412 = vsub.f32 0.0, %v3148
        %v3413 = vsub.f32 0.0, %v3150
        %v3414 = vsub.f32 0.0, %v3153
        %v3415 = vsub.f32 0.0, %v3155
        %v3416 = vsub.f32 0.0, %v3158
        %v3417 = vsub.f32 0.0, %v3160
        %v3418 = vsub.f32 0.0, %v3163
        %v3419 = vsub.f32 0.0, %v3165
        %v3420 = vsub.f32 0.0, %v3168
        %v3421 = vsub.f32 0.0, %v3170
        %v3422 = vsub.f32 0.0, %v3173
        %v3423 = vsub.f32 0.0, %v3175
        %v3424 = vsub.f32 0.0, %v3178
        %v3425 = vsub.f32 0.0, %v3180
        %v3426 = vsub.f32 0.0, %v3183
        %v3427 = vsub.f32 0.0, %v3185
        %v3428 = vsub.f32 0.0, %v3188
        %v3429 = vsub.f32 0.0, %v3190
        %v3430 = vsub.f32 0.0, %v3193
        %v3431 = vsub.f32 0.0, %v3195
        %v3432 = vsub.f32 0.0, %v3198
        %v3433 = vsub.f32 0.0, %v3200
        %v3434 = vsub.f32 0.0, %v3203
        %v3435 = vsub.f32 0.0, %v3205
        %v3436 = vsub.f32 0.0, %v3208
        %v3437 = vsub.f32 0.0, %v3210
        %v3438 = vsub.f32 0.0, %v3213
        %v3439 = vsub.f32 0.0, %v3215
        %v3440 = vsub.f32 0.0, %v3218
        %v3441 = vsub.f32 0.0, %v3220
        %v3442 = vsub.f32 0.0, %v3223
        %v3443 = vsub.f32 0.0, %v3225
        %v3444 = vsub.f32 0.0, %v3228
        %v3445 = vsub.f32 0.0, %v3230
        %v3446 = vsub.f32 0.0, %v3233
        %v3447 = vsub.f32 0.0, %v3235
        %v3448 = vsub.f32 0.0, %v3238
        %v3449 = vsub.f32 0.0, %v3240
        %v3450 = vsub.f32 0.0, %v3243
        %v3451 = vsub.f32 0.0, %v3245
        %v3452 = vsub.f32 0.0, %v3248
        %v3453 = vsub.f32 0.0, %v3250
        %v3454 = vsub.f32 0.0, %v3253
        %v3455 = vsub.f32 0.0, %v3255
        %v3456 = vsub.f32 0.0, %v3258
        %v3457 = vsub.f32 0.0, %v3260
        %v3458 = vsub.f32 0.0, %v3263
        %v3459 = vsub.f32 0.0, %v3265
        %v3460 = vsub.f32 0.0, %v3268
        %v3461 = vsub.f32 0.0, %v3270
        %v3462 = vsub.f32 0.0, %v3273
        %v3463 = vsub.f32 0.0, %v3275
        %v3464 = vsub.f32 0.0, %v3278
        %v3465 = vsub.f32 0.0, %v3280
        %v3466 = vsub.f32 0.0, %v3283
        %v3467 = vsub.f32 0.0, %v3285
        %v3468 = vsub.f32 0.0, %v3288
        %v3469 = vsub.f32 0.0, %v3290
        %v3470 = vsub.f32 0.0, %v3293
        %v3471 = vsub.f32 0.0, %v3295
        %v3472 = vsub.f32 0.0, %v3298
        %v3473 = vsub.f32 0.0, %v3300
        %v3474 = vsub.f32 0.0, %v3303
        %v3475 = vsub.f32 0.0, %v3305
        %v3476 = vsub.f32 0.0, %v3308
        %v3477 = vsub.f32 0.0, %v3310
        %v3478 = vsub.f32 0.0, %v3313
        %v3479 = vsub.f32 0.0, %v3315
        %v3480 = vsub.f32 0.0, %v3318
        %v3481 = vsub.f32 0.0, %v3320
        %v3482 = vsub.f32 0.0, %v3323
        %v3483 = vsub.f32 0.0, %v3325
        %v3484 = vsub.f32 0.0, %v3328
        %v3485 = vsub.f32 0.0, %v3330
        %v3486 = vmul.f32 %v3332, 1.442695
        %v3487 = vpow.pop %v3486
        %v3488 = vmul.f32 %v3333, 1.442695
        %v3489 = vpow.pop %v3488
        %v3490 = vmul.f32 %v3334, 1.442695
        %v3491 = vpow.pop %v3490
        %v3492 = vmul.f32 %v3335, 1.442695
        %v3493 = vpow.pop %v3492
        %v3494 = vmul.f32 %v3336, 1.442695
        %v3495 = vpow.pop %v3494
        %v3496 = vmul.f32 %v3337, 1.442695
        %v3497 = vpow.pop %v3496
        %v3498 = vmul.f32 %v3338, 1.442695
        %v3499 = vpow.pop %v3498
        %v3500 = vmul.f32 %v3339, 1.442695
        %v3501 = vpow.pop %v3500
        %v3502 = vmul.f32 %v3340, 1.442695
        %v3503 = vpow.pop %v3502
        %v3504 = vmul.f32 %v3341, 1.442695
        %v3505 = vpow.pop %v3504
        %v3506 = vmul.f32 %v3342, 1.442695
        %v3507 = vpow.pop %v3506
        %v3508 = vmul.f32 %v3343, 1.442695
        %v3509 = vpow.pop %v3508
        %v3510 = vmul.f32 %v3344, 1.442695
        %v3511 = vpow.pop %v3510
        %v3512 = vmul.f32 %v3345, 1.442695
        %v3513 = vpow.pop %v3512
        %v3514 = vmul.f32 %v3346, 1.442695
        %v3515 = vpow.pop %v3514
        %v3516 = vmul.f32 %v3347, 1.442695
        %v3517 = vpow.pop %v3516
        %v3518 = vmul.f32 %v3348, 1.442695
        %v3519 = vpow.pop %v3518
        %v3520 = vmul.f32 %v3349, 1.442695
        %v3521 = vpow.pop %v3520
        %v3522 = vmul.f32 %v3350, 1.442695
        %v3523 = vpow.pop %v3522
        %v3524 = vmul.f32 %v3351, 1.442695
        %v3525 = vpow.pop %v3524
        %v3526 = vmul.f32 %v3352, 1.442695
        %v3527 = vpow.pop %v3526
        %v3528 = vmul.f32 %v3353, 1.442695
        %v3529 = vpow.pop %v3528
        %v3530 = vmul.f32 %v3354, 1.442695
        %v3531 = vpow.pop %v3530
        %v3532 = vmul.f32 %v3355, 1.442695
        %v3533 = vpow.pop %v3532
        %v3534 = vmul.f32 %v3356, 1.442695
        %v3535 = vpow.pop %v3534
        %v3536 = vmul.f32 %v3357, 1.442695
        %v3537 = vpow.pop %v3536
        %v3538 = vmul.f32 %v3358, 1.442695
        %v3539 = vpow.pop %v3538
        %v3540 = vmul.f32 %v3359, 1.442695
        %v3541 = vpow.pop %v3540
        %v3542 = vmul.f32 %v3360, 1.442695
        %v3543 = vpow.pop %v3542
        %v3544 = vmul.f32 %v3361, 1.442695
        %v3545 = vpow.pop %v3544
        %v3546 = vmul.f32 %v3362, 1.442695
        %v3547 = vpow.pop %v3546
        %v3548 = vmul.f32 %v3363, 1.442695
        %v3549 = vpow.pop %v3548
        %v3550 = vmul.f32 %v3364, 1.442695
        %v3551 = vpow.pop %v3550
        %v3552 = vmul.f32 %v3365, 1.442695
        %v3553 = vpow.pop %v3552
        %v3554 = vmul.f32 %v3366, 1.442695
        %v3555 = vpow.pop %v3554
        %v3556 = vmul.f32 %v3367, 1.442695
        %v3557 = vpow.pop %v3556
        %v3558 = vmul.f32 %v3368, 1.442695
        %v3559 = vpow.pop %v3558
        %v3560 = vmul.f32 %v3369, 1.442695
        %v3561 = vpow.pop %v3560
        %v3562 = vmul.f32 %v3370, 1.442695
        %v3563 = vpow.pop %v3562
        %v3564 = vmul.f32 %v3371, 1.442695
        %v3565 = vpow.pop %v3564
        %v3566 = vmul.f32 %v3372, 1.442695
        %v3567 = vpow.pop %v3566
        %v3568 = vmul.f32 %v3373, 1.442695
        %v3569 = vpow.pop %v3568
        %v3570 = vmul.f32 %v3374, 1.442695
        %v3571 = vpow.pop %v3570
        %v3572 = vmul.f32 %v3375, 1.442695
        %v3573 = vpow.pop %v3572
        %v3574 = vmul.f32 %v3376, 1.442695
        %v3575 = vpow.pop %v3574
        %v3576 = vmul.f32 %v3377, 1.442695
        %v3577 = vpow.pop %v3576
        %v3578 = vmul.f32 %v3378, 1.442695
        %v3579 = vpow.pop %v3578
        %v3580 = vmul.f32 %v3379, 1.442695
        %v3581 = vpow.pop %v3580
        %v3582 = vmul.f32 %v3380, 1.442695
        %v3583 = vpow.pop %v3582
        %v3584 = vmul.f32 %v3381, 1.442695
        %v3585 = vpow.pop %v3584
        %v3586 = vmul.f32 %v3382, 1.442695
        %v3587 = vpow.pop %v3586
        %v3588 = vmul.f32 %v3383, 1.442695
        %v3589 = vpow.pop %v3588
        %v3590 = vmul.f32 %v3384, 1.442695
        %v3591 = vpow.pop %v3590
        %v3592 = vmul.f32 %v3385, 1.442695
        %v3593 = vpow.pop %v3592
        %v3594 = vmul.f32 %v3386, 1.442695
        %v3595 = vpow.pop %v3594
        %v3596 = vmul.f32 %v3387, 1.442695
        %v3597 = vpow.pop %v3596
        %v3598 = vmul.f32 %v3388, 1.442695
        %v3599 = vpow.pop %v3598
        %v3600 = vmul.f32 %v3389, 1.442695
        %v3601 = vpow.pop %v3600
        %v3602 = vmul.f32 %v3390, 1.442695
        %v3603 = vpow.pop %v3602
        %v3604 = vmul.f32 %v3391, 1.442695
        %v3605 = vpow.pop %v3604
        %v3606 = vmul.f32 %v3392, 1.442695
        %v3607 = vpow.pop %v3606
        %v3608 = vmul.f32 %v3393, 1.442695
        %v3609 = vpow.pop %v3608
        %v3610 = vmul.f32 %v3394, 1.442695
        %v3611 = vpow.pop %v3610
        %v3612 = vmul.f32 %v3395, 1.442695
        %v3613 = vpow.pop %v3612
        %v3614 = vmul.f32 %v3396, 1.442695
        %v3615 = vpow.pop %v3614
        %v3616 = vmul.f32 %v3397, 1.442695
        %v3617 = vpow.pop %v3616
        %v3618 = vmul.f32 %v3398, 1.442695
        %v3619 = vpow.pop %v3618
        %v3620 = vmul.f32 %v3399, 1.442695
        %v3621 = vpow.pop %v3620
        %v3622 = vmul.f32 %v3400, 1.442695
        %v3623 = vpow.pop %v3622
        %v3624 = vmul.f32 %v3401, 1.442695
        %v3625 = vpow.pop %v3624
        %v3626 = vmul.f32 %v3402, 1.442695
        %v3627 = vpow.pop %v3626
        %v3628 = vmul.f32 %v3403, 1.442695
        %v3629 = vpow.pop %v3628
        %v3630 = vmul.f32 %v3404, 1.442695
        %v3631 = vpow.pop %v3630
        %v3632 = vmul.f32 %v3405, 1.442695
        %v3633 = vpow.pop %v3632
        %v3634 = vmul.f32 %v3406, 1.442695
        %v3635 = vpow.pop %v3634
        %v3636 = vmul.f32 %v3407, 1.442695
        %v3637 = vpow.pop %v3636
        %v3638 = vmul.f32 %v3408, 1.442695
        %v3639 = vpow.pop %v3638
        %v3640 = vmul.f32 %v3409, 1.442695
        %v3641 = vpow.pop %v3640
        %v3642 = vmul.f32 %v3410, 1.442695
        %v3643 = vpow.pop %v3642
        %v3644 = vmul.f32 %v3411, 1.442695
        %v3645 = vpow.pop %v3644
        %v3646 = vmul.f32 %v3412, 1.442695
        %v3647 = vpow.pop %v3646
        %v3648 = vmul.f32 %v3413, 1.442695
        %v3649 = vpow.pop %v3648
        %v3650 = vmul.f32 %v3414, 1.442695
        %v3651 = vpow.pop %v3650
        %v3652 = vmul.f32 %v3415, 1.442695
        %v3653 = vpow.pop %v3652
        %v3654 = vmul.f32 %v3416, 1.442695
        %v3655 = vpow.pop %v3654
        %v3656 = vmul.f32 %v3417, 1.442695
        %v3657 = vpow.pop %v3656
        %v3658 = vmul.f32 %v3418, 1.442695
        %v3659 = vpow.pop %v3658
        %v3660 = vmul.f32 %v3419, 1.442695
        %v3661 = vpow.pop %v3660
        %v3662 = vmul.f32 %v3420, 1.442695
        %v3663 = vpow.pop %v3662
        %v3664 = vmul.f32 %v3421, 1.442695
        %v3665 = vpow.pop %v3664
        %v3666 = vmul.f32 %v3422, 1.442695
        %v3667 = vpow.pop %v3666
        %v3668 = vmul.f32 %v3423, 1.442695
        %v3669 = vpow.pop %v3668
        %v3670 = vmul.f32 %v3424, 1.442695
        %v3671 = vpow.pop %v3670
        %v3672 = vmul.f32 %v3425, 1.442695
        %v3673 = vpow.pop %v3672
        %v3674 = vmul.f32 %v3426, 1.442695
        %v3675 = vpow.pop %v3674
        %v3676 = vmul.f32 %v3427, 1.442695
        %v3677 = vpow.pop %v3676
        %v3678 = vmul.f32 %v3428, 1.442695
        %v3679 = vpow.pop %v3678
        %v3680 = vmul.f32 %v3429, 1.442695
        %v3681 = vpow.pop %v3680
        %v3682 = vmul.f32 %v3430, 1.442695
        %v3683 = vpow.pop %v3682
        %v3684 = vmul.f32 %v3431, 1.442695
        %v3685 = vpow.pop %v3684
        %v3686 = vmul.f32 %v3432, 1.442695
        %v3687 = vpow.pop %v3686
        %v3688 = vmul.f32 %v3433, 1.442695
        %v3689 = vpow.pop %v3688
        %v3690 = vmul.f32 %v3434, 1.442695
        %v3691 = vpow.pop %v3690
        %v3692 = vmul.f32 %v3435, 1.442695
        %v3693 = vpow.pop %v3692
        %v3694 = vmul.f32 %v3436, 1.442695
        %v3695 = vpow.pop %v3694
        %v3696 = vmul.f32 %v3437, 1.442695
        %v3697 = vpow.pop %v3696
        %v3698 = vmul.f32 %v3438, 1.442695
        %v3699 = vpow.pop %v3698
        %v3700 = vmul.f32 %v3439, 1.442695
        %v3701 = vpow.pop %v3700
        %v3702 = vmul.f32 %v3440, 1.442695
        %v3703 = vpow.pop %v3702
        %v3704 = vmul.f32 %v3441, 1.442695
        %v3705 = vpow.pop %v3704
        %v3706 = vmul.f32 %v3442, 1.442695
        %v3707 = vpow.pop %v3706
        %v3708 = vmul.f32 %v3443, 1.442695
        %v3709 = vpow.pop %v3708
        %v3710 = vmul.f32 %v3444, 1.442695
        %v3711 = vpow.pop %v3710
        %v3712 = vmul.f32 %v3445, 1.442695
        %v3713 = vpow.pop %v3712
        %v3714 = vmul.f32 %v3446, 1.442695
        %v3715 = vpow.pop %v3714
        %v3716 = vmul.f32 %v3447, 1.442695
        %v3717 = vpow.pop %v3716
        %v3718 = vmul.f32 %v3448, 1.442695
        %v3719 = vpow.pop %v3718
        %v3720 = vmul.f32 %v3449, 1.442695
        %v3721 = vpow.pop %v3720
        %v3722 = vmul.f32 %v3450, 1.442695
        %v3723 = vpow.pop %v3722
        %v3724 = vmul.f32 %v3451, 1.442695
        %v3725 = vpow.pop %v3724
        %v3726 = vmul.f32 %v3452, 1.442695
        %v3727 = vpow.pop %v3726
        %v3728 = vmul.f32 %v3453, 1.442695
        %v3729 = vpow.pop %v3728
        %v3730 = vmul.f32 %v3454, 1.442695
        %v3731 = vpow.pop %v3730
        %v3732 = vmul.f32 %v3455, 1.442695
        %v3733 = vpow.pop %v3732
        %v3734 = vmul.f32 %v3456, 1.442695
        %v3735 = vpow.pop %v3734
        %v3736 = vmul.f32 %v3457, 1.442695
        %v3737 = vpow.pop %v3736
        %v3738 = vmul.f32 %v3458, 1.442695
        %v3739 = vpow.pop %v3738
        %v3740 = vmul.f32 %v3459, 1.442695
        %v3741 = vpow.pop %v3740
        %v3742 = vmul.f32 %v3460, 1.442695
        %v3743 = vpow.pop %v3742
        %v3744 = vmul.f32 %v3461, 1.442695
        %v3745 = vpow.pop %v3744
        %v3746 = vmul.f32 %v3462, 1.442695
        %v3747 = vpow.pop %v3746
        %v3748 = vmul.f32 %v3463, 1.442695
        %v3749 = vpow.pop %v3748
        %v3750 = vmul.f32 %v3464, 1.442695
        %v3751 = vpow.pop %v3750
        %v3752 = vmul.f32 %v3465, 1.442695
        %v3753 = vpow.pop %v3752
        %v3754 = vmul.f32 %v3466, 1.442695
        %v3755 = vpow.pop %v3754
        %v3756 = vmul.f32 %v3467, 1.442695
        %v3757 = vpow.pop %v3756
        %v3758 = vmul.f32 %v3468, 1.442695
        %v3759 = vpow.pop %v3758
        %v3760 = vmul.f32 %v3469, 1.442695
        %v3761 = vpow.pop %v3760
        %v3762 = vmul.f32 %v3470, 1.442695
        %v3763 = vpow.pop %v3762
        %v3764 = vmul.f32 %v3471, 1.442695
        %v3765 = vpow.pop %v3764
        %v3766 = vmul.f32 %v3472, 1.442695
        %v3767 = vpow.pop %v3766
        %v3768 = vmul.f32 %v3473, 1.442695
        %v3769 = vpow.pop %v3768
        %v3770 = vmul.f32 %v3474, 1.442695
        %v3771 = vpow.pop %v3770
        %v3772 = vmul.f32 %v3475, 1.442695
        %v3773 = vpow.pop %v3772
        %v3774 = vmul.f32 %v3476, 1.442695
        %v3775 = vpow.pop %v3774
        %v3776 = vmul.f32 %v3477, 1.442695
        %v3777 = vpow.pop %v3776
        %v3778 = vmul.f32 %v3478, 1.442695
        %v3779 = vpow.pop %v3778
        %v3780 = vmul.f32 %v3479, 1.442695
        %v3781 = vpow.pop %v3780
        %v3782 = vmul.f32 %v3480, 1.442695
        %v3783 = vpow.pop %v3782
        %v3784 = vmul.f32 %v3481, 1.442695
        %v3785 = vpow.pop %v3784
        %v3786 = vmul.f32 %v3482, 1.442695
        %v3787 = vpow.pop %v3786
        %v3788 = vmul.f32 %v3483, 1.442695
        %v3789 = vpow.pop %v3788
        %v3790 = vmul.f32 %v3484, 1.442695
        %v3791 = vpow.pop %v3790
        %v3792 = vmul.f32 %v3485, 1.442695
        %v3793 = vpow.pop %v3792
        %v3794 = vadd.f32 %v3487, 1.0
        %v3795 = vadd.f32 %v3489, 1.0
        %v3796 = vadd.f32 %v3491, 1.0
        %v3797 = vadd.f32 %v3493, 1.0
        %v3798 = vadd.f32 %v3495, 1.0
        %v3799 = vadd.f32 %v3497, 1.0
        %v3800 = vadd.f32 %v3499, 1.0
        %v3801 = vadd.f32 %v3501, 1.0
        %v3802 = vadd.f32 %v3503, 1.0
        %v3803 = vadd.f32 %v3505, 1.0
        %v3804 = vadd.f32 %v3507, 1.0
        %v3805 = vadd.f32 %v3509, 1.0
        %v3806 = vadd.f32 %v3511, 1.0
        %v3807 = vadd.f32 %v3513, 1.0
        %v3808 = vadd.f32 %v3515, 1.0
        %v3809 = vadd.f32 %v3517, 1.0
        %v3810 = vadd.f32 %v3519, 1.0
        %v3811 = vadd.f32 %v3521, 1.0
        %v3812 = vadd.f32 %v3523, 1.0
        %v3813 = vadd.f32 %v3525, 1.0
        %v3814 = vadd.f32 %v3527, 1.0
        %v3815 = vadd.f32 %v3529, 1.0
        %v3816 = vadd.f32 %v3531, 1.0
        %v3817 = vadd.f32 %v3533, 1.0
        %v3818 = vadd.f32 %v3535, 1.0
        %v3819 = vadd.f32 %v3537, 1.0
        %v3820 = vadd.f32 %v3539, 1.0
        %v3821 = vadd.f32 %v3541, 1.0
        %v3822 = vadd.f32 %v3543, 1.0
        %v3823 = vadd.f32 %v3545, 1.0
        %v3824 = vadd.f32 %v3547, 1.0
        %v3825 = vadd.f32 %v3549, 1.0
        %v3826 = vadd.f32 %v3551, 1.0
        %v3827 = vadd.f32 %v3553, 1.0
        %v3828 = vadd.f32 %v3555, 1.0
        %v3829 = vadd.f32 %v3557, 1.0
        %v3830 = vadd.f32 %v3559, 1.0
        %v3831 = vadd.f32 %v3561, 1.0
        %v3832 = vadd.f32 %v3563, 1.0
        %v3833 = vadd.f32 %v3565, 1.0
        %v3834 = vadd.f32 %v3567, 1.0
        %v3835 = vadd.f32 %v3569, 1.0
        %v3836 = vadd.f32 %v3571, 1.0
        %v3837 = vadd.f32 %v3573, 1.0
        %v3838 = vadd.f32 %v3575, 1.0
        %v3839 = vadd.f32 %v3577, 1.0
        %v3840 = vadd.f32 %v3579, 1.0
        %v3841 = vadd.f32 %v3581, 1.0
        %v3842 = vadd.f32 %v3583, 1.0
        %v3843 = vadd.f32 %v3585, 1.0
        %v3844 = vadd.f32 %v3587, 1.0
        %v3845 = vadd.f32 %v3589, 1.0
        %v3846 = vadd.f32 %v3591, 1.0
        %v3847 = vadd.f32 %v3593, 1.0
        %v3848 = vadd.f32 %v3595, 1.0
        %v3849 = vadd.f32 %v3597, 1.0
        %v3850 = vadd.f32 %v3599, 1.0
        %v3851 = vadd.f32 %v3601, 1.0
        %v3852 = vadd.f32 %v3603, 1.0
        %v3853 = vadd.f32 %v3605, 1.0
        %v3854 = vadd.f32 %v3607, 1.0
        %v3855 = vadd.f32 %v3609, 1.0
        %v3856 = vadd.f32 %v3611, 1.0
        %v3857 = vadd.f32 %v3613, 1.0
        %v3858 = vadd.f32 %v3615, 1.0
        %v3859 = vadd.f32 %v3617, 1.0
        %v3860 = vadd.f32 %v3619, 1.0
        %v3861 = vadd.f32 %v3621, 1.0
        %v3862 = vadd.f32 %v3623, 1.0
        %v3863 = vadd.f32 %v3625, 1.0
        %v3864 = vadd.f32 %v3627, 1.0
        %v3865 = vadd.f32 %v3629, 1.0
        %v3866 = vadd.f32 %v3631, 1.0
        %v3867 = vadd.f32 %v3633, 1.0
        %v3868 = vadd.f32 %v3635, 1.0
        %v3869 = vadd.f32 %v3637, 1.0
        %v3870 = vadd.f32 %v3639, 1.0
        %v3871 = vadd.f32 %v3641, 1.0
        %v3872 = vadd.f32 %v3643, 1.0
        %v3873 = vadd.f32 %v3645, 1.0
        %v3874 = vadd.f32 %v3647, 1.0
        %v3875 = vadd.f32 %v3649, 1.0
        %v3876 = vadd.f32 %v3651, 1.0
        %v3877 = vadd.f32 %v3653, 1.0
        %v3878 = vadd.f32 %v3655, 1.0
        %v3879 = vadd.f32 %v3657, 1.0
        %v3880 = vadd.f32 %v3659, 1.0
        %v3881 = vadd.f32 %v3661, 1.0
        %v3882 = vadd.f32 %v3663, 1.0
        %v3883 = vadd.f32 %v3665, 1.0
        %v3884 = vadd.f32 %v3667, 1.0
        %v3885 = vadd.f32 %v3669, 1.0
        %v3886 = vadd.f32 %v3671, 1.0
        %v3887 = vadd.f32 %v3673, 1.0
        %v3888 = vadd.f32 %v3675, 1.0
        %v3889 = vadd.f32 %v3677, 1.0
        %v3890 = vadd.f32 %v3679, 1.0
        %v3891 = vadd.f32 %v3681, 1.0
        %v3892 = vadd.f32 %v3683, 1.0
        %v3893 = vadd.f32 %v3685, 1.0
        %v3894 = vadd.f32 %v3687, 1.0
        %v3895 = vadd.f32 %v3689, 1.0
        %v3896 = vadd.f32 %v3691, 1.0
        %v3897 = vadd.f32 %v3693, 1.0
        %v3898 = vadd.f32 %v3695, 1.0
        %v3899 = vadd.f32 %v3697, 1.0
        %v3900 = vadd.f32 %v3699, 1.0
        %v3901 = vadd.f32 %v3701, 1.0
        %v3902 = vadd.f32 %v3703, 1.0
        %v3903 = vadd.f32 %v3705, 1.0
        %v3904 = vadd.f32 %v3707, 1.0
        %v3905 = vadd.f32 %v3709, 1.0
        %v3906 = vadd.f32 %v3711, 1.0
        %v3907 = vadd.f32 %v3713, 1.0
        %v3908 = vadd.f32 %v3715, 1.0
        %v3909 = vadd.f32 %v3717, 1.0
        %v3910 = vadd.f32 %v3719, 1.0
        %v3911 = vadd.f32 %v3721, 1.0
        %v3912 = vadd.f32 %v3723, 1.0
        %v3913 = vadd.f32 %v3725, 1.0
        %v3914 = vadd.f32 %v3727, 1.0
        %v3915 = vadd.f32 %v3729, 1.0
        %v3916 = vadd.f32 %v3731, 1.0
        %v3917 = vadd.f32 %v3733, 1.0
        %v3918 = vadd.f32 %v3735, 1.0
        %v3919 = vadd.f32 %v3737, 1.0
        %v3920 = vadd.f32 %v3739, 1.0
        %v3921 = vadd.f32 %v3741, 1.0
        %v3922 = vadd.f32 %v3743, 1.0
        %v3923 = vadd.f32 %v3745, 1.0
        %v3924 = vadd.f32 %v3747, 1.0
        %v3925 = vadd.f32 %v3749, 1.0
        %v3926 = vadd.f32 %v3751, 1.0
        %v3927 = vadd.f32 %v3753, 1.0
        %v3928 = vadd.f32 %v3755, 1.0
        %v3929 = vadd.f32 %v3757, 1.0
        %v3930 = vadd.f32 %v3759, 1.0
        %v3931 = vadd.f32 %v3761, 1.0
        %v3932 = vadd.f32 %v3763, 1.0
        %v3933 = vadd.f32 %v3765, 1.0
        %v3934 = vadd.f32 %v3767, 1.0
        %v3935 = vadd.f32 %v3769, 1.0
        %v3936 = vadd.f32 %v3771, 1.0
        %v3937 = vadd.f32 %v3773, 1.0
        %v3938 = vadd.f32 %v3775, 1.0
        %v3939 = vadd.f32 %v3777, 1.0
        %v3940 = vadd.f32 %v3779, 1.0
        %v3941 = vadd.f32 %v3781, 1.0
        %v3942 = vadd.f32 %v3783, 1.0
        %v3943 = vadd.f32 %v3785, 1.0
        %v3944 = vadd.f32 %v3787, 1.0
        %v3945 = vadd.f32 %v3789, 1.0
        %v3946 = vadd.f32 %v3791, 1.0
        %v3947 = vadd.f32 %v3793, 1.0
        %v3948 = vrcp.pop %v3794
        %v3949 = vmul.f32 %v3794, %v3948
        %v3950 = vsub.f32 1.0, %v3949
        %v3951 = vmul.f32 %v3948, %v3950
        %v3952 = vadd.f32 %v3948, %v3951
        %vm3953 = vweird.f32 %v3794
        %vm3954 = vweird.f32 %v3948
        %vm3955 = vmor %vm3953, %vm3954
        %v3956 = vsel %vm3955, %v3948, %v3952
        %v3957 = vand.u32 2147483647, %v3794
        %vm3958 = vcmp.eq.f32.partialorder %v3957, 8.507059e+37
        %v3959 = vand.u32 %v3794, 2147483648
        %v3960 = vor.u32 1.1754944e-38, %v3959
        %v3961 = vsel %vm3958, %v3960, %v3956
        %v3962 = vmul.f32 1.0, %v3961
        %v3963 = vrcp.pop %v3795
        %v3964 = vmul.f32 %v3795, %v3963
        %v3965 = vsub.f32 1.0, %v3964
        %v3966 = vmul.f32 %v3963, %v3965
        %v3967 = vadd.f32 %v3963, %v3966
        %vm3968 = vweird.f32 %v3795
        %vm3969 = vweird.f32 %v3963
        %vm3970 = vmor %vm3968, %vm3969
        %v3971 = vsel %vm3970, %v3963, %v3967
        %v3972 = vand.u32 2147483647, %v3795
        %vm3973 = vcmp.eq.f32.partialorder %v3972, 8.507059e+37
        %v3974 = vand.u32 %v3795, 2147483648
        %v3975 = vor.u32 1.1754944e-38, %v3974
        %v3976 = vsel %vm3973, %v3975, %v3971
        %v3977 = vmul.f32 1.0, %v3976
        %v3978 = vrcp.pop %v3796
        %v3979 = vmul.f32 %v3796, %v3978
        %v3980 = vsub.f32 1.0, %v3979
        %v3981 = vmul.f32 %v3978, %v3980
        %v3982 = vadd.f32 %v3978, %v3981
        %vm3983 = vweird.f32 %v3796
        %vm3984 = vweird.f32 %v3978
        %vm3985 = vmor %vm3983, %vm3984
        %v3986 = vsel %vm3985, %v3978, %v3982
        %v3987 = vand.u32 2147483647, %v3796
        %vm3988 = vcmp.eq.f32.partialorder %v3987, 8.507059e+37
        %v3989 = vand.u32 %v3796, 2147483648
        %v3990 = vor.u32 1.1754944e-38, %v3989
        %v3991 = vsel %vm3988, %v3990, %v3986
        %v3992 = vmul.f32 1.0, %v3991
        %v3993 = vrcp.pop %v3797
        %v3994 = vmul.f32 %v3797, %v3993
        %v3995 = vsub.f32 1.0, %v3994
        %v3996 = vmul.f32 %v3993, %v3995
        %v3997 = vadd.f32 %v3993, %v3996
        %vm3998 = vweird.f32 %v3797
        %vm3999 = vweird.f32 %v3993
        %vm4000 = vmor %vm3998, %vm3999
        %v4001 = vsel %vm4000, %v3993, %v3997
        %v4002 = vand.u32 2147483647, %v3797
        %vm4003 = vcmp.eq.f32.partialorder %v4002, 8.507059e+37
        %v4004 = vand.u32 %v3797, 2147483648
        %v4005 = vor.u32 1.1754944e-38, %v4004
        %v4006 = vsel %vm4003, %v4005, %v4001
        %v4007 = vmul.f32 1.0, %v4006
        %v4008 = vrcp.pop %v3798
        %v4009 = vmul.f32 %v3798, %v4008
        %v4010 = vsub.f32 1.0, %v4009
        %v4011 = vmul.f32 %v4008, %v4010
        %v4012 = vadd.f32 %v4008, %v4011
        %vm4013 = vweird.f32 %v3798
        %vm4014 = vweird.f32 %v4008
        %vm4015 = vmor %vm4013, %vm4014
        %v4016 = vsel %vm4015, %v4008, %v4012
        %v4017 = vand.u32 2147483647, %v3798
        %vm4018 = vcmp.eq.f32.partialorder %v4017, 8.507059e+37
        %v4019 = vand.u32 %v3798, 2147483648
        %v4020 = vor.u32 1.1754944e-38, %v4019
        %v4021 = vsel %vm4018, %v4020, %v4016
        %v4022 = vmul.f32 1.0, %v4021
        %v4023 = vrcp.pop %v3799
        %v4024 = vmul.f32 %v3799, %v4023
        %v4025 = vsub.f32 1.0, %v4024
        %v4026 = vmul.f32 %v4023, %v4025
        %v4027 = vadd.f32 %v4023, %v4026
        %vm4028 = vweird.f32 %v3799
        %vm4029 = vweird.f32 %v4023
        %vm4030 = vmor %vm4028, %vm4029
        %v4031 = vsel %vm4030, %v4023, %v4027
        %v4032 = vand.u32 2147483647, %v3799
        %vm4033 = vcmp.eq.f32.partialorder %v4032, 8.507059e+37
        %v4034 = vand.u32 %v3799, 2147483648
        %v4035 = vor.u32 1.1754944e-38, %v4034
        %v4036 = vsel %vm4033, %v4035, %v4031
        %v4037 = vmul.f32 1.0, %v4036
        %v4038 = vrcp.pop %v3800
        %v4039 = vmul.f32 %v3800, %v4038
        %v4040 = vsub.f32 1.0, %v4039
        %v4041 = vmul.f32 %v4038, %v4040
        %v4042 = vadd.f32 %v4038, %v4041
        %vm4043 = vweird.f32 %v3800
        %vm4044 = vweird.f32 %v4038
        %vm4045 = vmor %vm4043, %vm4044
        %v4046 = vsel %vm4045, %v4038, %v4042
        %v4047 = vand.u32 2147483647, %v3800
        %vm4048 = vcmp.eq.f32.partialorder %v4047, 8.507059e+37
        %v4049 = vand.u32 %v3800, 2147483648
        %v4050 = vor.u32 1.1754944e-38, %v4049
        %v4051 = vsel %vm4048, %v4050, %v4046
        %v4052 = vmul.f32 1.0, %v4051
        %v4053 = vrcp.pop %v3801
        %v4054 = vmul.f32 %v3801, %v4053
        %v4055 = vsub.f32 1.0, %v4054
        %v4056 = vmul.f32 %v4053, %v4055
        %v4057 = vadd.f32 %v4053, %v4056
        %vm4058 = vweird.f32 %v3801
        %vm4059 = vweird.f32 %v4053
        %vm4060 = vmor %vm4058, %vm4059
        %v4061 = vsel %vm4060, %v4053, %v4057
        %v4062 = vand.u32 2147483647, %v3801
        %vm4063 = vcmp.eq.f32.partialorder %v4062, 8.507059e+37
        %v4064 = vand.u32 %v3801, 2147483648
        %v4065 = vor.u32 1.1754944e-38, %v4064
        %v4066 = vsel %vm4063, %v4065, %v4061
        %v4067 = vmul.f32 1.0, %v4066
        %v4068 = vrcp.pop %v3802
        %v4069 = vmul.f32 %v3802, %v4068
        %v4070 = vsub.f32 1.0, %v4069
        %v4071 = vmul.f32 %v4068, %v4070
        %v4072 = vadd.f32 %v4068, %v4071
        %vm4073 = vweird.f32 %v3802
        %vm4074 = vweird.f32 %v4068
        %vm4075 = vmor %vm4073, %vm4074
        %v4076 = vsel %vm4075, %v4068, %v4072
        %v4077 = vand.u32 2147483647, %v3802
        %vm4078 = vcmp.eq.f32.partialorder %v4077, 8.507059e+37
        %v4079 = vand.u32 %v3802, 2147483648
        %v4080 = vor.u32 1.1754944e-38, %v4079
        %v4081 = vsel %vm4078, %v4080, %v4076
        %v4082 = vmul.f32 1.0, %v4081
        %v4083 = vrcp.pop %v3803
        %v4084 = vmul.f32 %v3803, %v4083
        %v4085 = vsub.f32 1.0, %v4084
        %v4086 = vmul.f32 %v4083, %v4085
        %v4087 = vadd.f32 %v4083, %v4086
        %vm4088 = vweird.f32 %v3803
        %vm4089 = vweird.f32 %v4083
        %vm4090 = vmor %vm4088, %vm4089
        %v4091 = vsel %vm4090, %v4083, %v4087
        %v4092 = vand.u32 2147483647, %v3803
        %vm4093 = vcmp.eq.f32.partialorder %v4092, 8.507059e+37
        %v4094 = vand.u32 %v3803, 2147483648
        %v4095 = vor.u32 1.1754944e-38, %v4094
        %v4096 = vsel %vm4093, %v4095, %v4091
        %v4097 = vmul.f32 1.0, %v4096
        %v4098 = vrcp.pop %v3804
        %v4099 = vmul.f32 %v3804, %v4098
        %v4100 = vsub.f32 1.0, %v4099
        %v4101 = vmul.f32 %v4098, %v4100
        %v4102 = vadd.f32 %v4098, %v4101
        %vm4103 = vweird.f32 %v3804
        %vm4104 = vweird.f32 %v4098
        %vm4105 = vmor %vm4103, %vm4104
        %v4106 = vsel %vm4105, %v4098, %v4102
        %v4107 = vand.u32 2147483647, %v3804
        %vm4108 = vcmp.eq.f32.partialorder %v4107, 8.507059e+37
        %v4109 = vand.u32 %v3804, 2147483648
        %v4110 = vor.u32 1.1754944e-38, %v4109
        %v4111 = vsel %vm4108, %v4110, %v4106
        %v4112 = vmul.f32 1.0, %v4111
        %v4113 = vrcp.pop %v3805
        %v4114 = vmul.f32 %v3805, %v4113
        %v4115 = vsub.f32 1.0, %v4114
        %v4116 = vmul.f32 %v4113, %v4115
        %v4117 = vadd.f32 %v4113, %v4116
        %vm4118 = vweird.f32 %v3805
        %vm4119 = vweird.f32 %v4113
        %vm4120 = vmor %vm4118, %vm4119
        %v4121 = vsel %vm4120, %v4113, %v4117
        %v4122 = vand.u32 2147483647, %v3805
        %vm4123 = vcmp.eq.f32.partialorder %v4122, 8.507059e+37
        %v4124 = vand.u32 %v3805, 2147483648
        %v4125 = vor.u32 1.1754944e-38, %v4124
        %v4126 = vsel %vm4123, %v4125, %v4121
        %v4127 = vmul.f32 1.0, %v4126
        %v4128 = vrcp.pop %v3806
        %v4129 = vmul.f32 %v3806, %v4128
        %v4130 = vsub.f32 1.0, %v4129
        %v4131 = vmul.f32 %v4128, %v4130
        %v4132 = vadd.f32 %v4128, %v4131
        %vm4133 = vweird.f32 %v3806
        %vm4134 = vweird.f32 %v4128
        %vm4135 = vmor %vm4133, %vm4134
        %v4136 = vsel %vm4135, %v4128, %v4132
        %v4137 = vand.u32 2147483647, %v3806
        %vm4138 = vcmp.eq.f32.partialorder %v4137, 8.507059e+37
        %v4139 = vand.u32 %v3806, 2147483648
        %v4140 = vor.u32 1.1754944e-38, %v4139
        %v4141 = vsel %vm4138, %v4140, %v4136
        %v4142 = vmul.f32 1.0, %v4141
        %v4143 = vrcp.pop %v3807
        %v4144 = vmul.f32 %v3807, %v4143
        %v4145 = vsub.f32 1.0, %v4144
        %v4146 = vmul.f32 %v4143, %v4145
        %v4147 = vadd.f32 %v4143, %v4146
        %vm4148 = vweird.f32 %v3807
        %vm4149 = vweird.f32 %v4143
        %vm4150 = vmor %vm4148, %vm4149
        %v4151 = vsel %vm4150, %v4143, %v4147
        %v4152 = vand.u32 2147483647, %v3807
        %vm4153 = vcmp.eq.f32.partialorder %v4152, 8.507059e+37
        %v4154 = vand.u32 %v3807, 2147483648
        %v4155 = vor.u32 1.1754944e-38, %v4154
        %v4156 = vsel %vm4153, %v4155, %v4151
        %v4157 = vmul.f32 1.0, %v4156
        %v4158 = vrcp.pop %v3808
        %v4159 = vmul.f32 %v3808, %v4158
        %v4160 = vsub.f32 1.0, %v4159
        %v4161 = vmul.f32 %v4158, %v4160
        %v4162 = vadd.f32 %v4158, %v4161
        %vm4163 = vweird.f32 %v3808
        %vm4164 = vweird.f32 %v4158
        %vm4165 = vmor %vm4163, %vm4164
        %v4166 = vsel %vm4165, %v4158, %v4162
        %v4167 = vand.u32 2147483647, %v3808
        %vm4168 = vcmp.eq.f32.partialorder %v4167, 8.507059e+37
        %v4169 = vand.u32 %v3808, 2147483648
        %v4170 = vor.u32 1.1754944e-38, %v4169
        %v4171 = vsel %vm4168, %v4170, %v4166
        %v4172 = vmul.f32 1.0, %v4171
        %v4173 = vrcp.pop %v3809
        %v4174 = vmul.f32 %v3809, %v4173
        %v4175 = vsub.f32 1.0, %v4174
        %v4176 = vmul.f32 %v4173, %v4175
        %v4177 = vadd.f32 %v4173, %v4176
        %vm4178 = vweird.f32 %v3809
        %vm4179 = vweird.f32 %v4173
        %vm4180 = vmor %vm4178, %vm4179
        %v4181 = vsel %vm4180, %v4173, %v4177
        %v4182 = vand.u32 2147483647, %v3809
        %vm4183 = vcmp.eq.f32.partialorder %v4182, 8.507059e+37
        %v4184 = vand.u32 %v3809, 2147483648
        %v4185 = vor.u32 1.1754944e-38, %v4184
        %v4186 = vsel %vm4183, %v4185, %v4181
        %v4187 = vmul.f32 1.0, %v4186
        %v4188 = vrcp.pop %v3810
        %v4189 = vmul.f32 %v3810, %v4188
        %v4190 = vsub.f32 1.0, %v4189
        %v4191 = vmul.f32 %v4188, %v4190
        %v4192 = vadd.f32 %v4188, %v4191
        %vm4193 = vweird.f32 %v3810
        %vm4194 = vweird.f32 %v4188
        %vm4195 = vmor %vm4193, %vm4194
        %v4196 = vsel %vm4195, %v4188, %v4192
        %v4197 = vand.u32 2147483647, %v3810
        %vm4198 = vcmp.eq.f32.partialorder %v4197, 8.507059e+37
        %v4199 = vand.u32 %v3810, 2147483648
        %v4200 = vor.u32 1.1754944e-38, %v4199
        %v4201 = vsel %vm4198, %v4200, %v4196
        %v4202 = vmul.f32 1.0, %v4201
        %v4203 = vrcp.pop %v3811
        %v4204 = vmul.f32 %v3811, %v4203
        %v4205 = vsub.f32 1.0, %v4204
        %v4206 = vmul.f32 %v4203, %v4205
        %v4207 = vadd.f32 %v4203, %v4206
        %vm4208 = vweird.f32 %v3811
        %vm4209 = vweird.f32 %v4203
        %vm4210 = vmor %vm4208, %vm4209
        %v4211 = vsel %vm4210, %v4203, %v4207
        %v4212 = vand.u32 2147483647, %v3811
        %vm4213 = vcmp.eq.f32.partialorder %v4212, 8.507059e+37
        %v4214 = vand.u32 %v3811, 2147483648
        %v4215 = vor.u32 1.1754944e-38, %v4214
        %v4216 = vsel %vm4213, %v4215, %v4211
        %v4217 = vmul.f32 1.0, %v4216
        %v4218 = vrcp.pop %v3812
        %v4219 = vmul.f32 %v3812, %v4218
        %v4220 = vsub.f32 1.0, %v4219
        %v4221 = vmul.f32 %v4218, %v4220
        %v4222 = vadd.f32 %v4218, %v4221
        %vm4223 = vweird.f32 %v3812
        %vm4224 = vweird.f32 %v4218
        %vm4225 = vmor %vm4223, %vm4224
        %v4226 = vsel %vm4225, %v4218, %v4222
        %v4227 = vand.u32 2147483647, %v3812
        %vm4228 = vcmp.eq.f32.partialorder %v4227, 8.507059e+37
        %v4229 = vand.u32 %v3812, 2147483648
        %v4230 = vor.u32 1.1754944e-38, %v4229
        %v4231 = vsel %vm4228, %v4230, %v4226
        %v4232 = vmul.f32 1.0, %v4231
        %v4233 = vrcp.pop %v3813
        %v4234 = vmul.f32 %v3813, %v4233
        %v4235 = vsub.f32 1.0, %v4234
        %v4236 = vmul.f32 %v4233, %v4235
        %v4237 = vadd.f32 %v4233, %v4236
        %vm4238 = vweird.f32 %v3813
        %vm4239 = vweird.f32 %v4233
        %vm4240 = vmor %vm4238, %vm4239
        %v4241 = vsel %vm4240, %v4233, %v4237
        %v4242 = vand.u32 2147483647, %v3813
        %vm4243 = vcmp.eq.f32.partialorder %v4242, 8.507059e+37
        %v4244 = vand.u32 %v3813, 2147483648
        %v4245 = vor.u32 1.1754944e-38, %v4244
        %v4246 = vsel %vm4243, %v4245, %v4241
        %v4247 = vmul.f32 1.0, %v4246
        %v4248 = vrcp.pop %v3814
        %v4249 = vmul.f32 %v3814, %v4248
        %v4250 = vsub.f32 1.0, %v4249
        %v4251 = vmul.f32 %v4248, %v4250
        %v4252 = vadd.f32 %v4248, %v4251
        %vm4253 = vweird.f32 %v3814
        %vm4254 = vweird.f32 %v4248
        %vm4255 = vmor %vm4253, %vm4254
        %v4256 = vsel %vm4255, %v4248, %v4252
        %v4257 = vand.u32 2147483647, %v3814
        %vm4258 = vcmp.eq.f32.partialorder %v4257, 8.507059e+37
        %v4259 = vand.u32 %v3814, 2147483648
        %v4260 = vor.u32 1.1754944e-38, %v4259
        %v4261 = vsel %vm4258, %v4260, %v4256
        %v4262 = vmul.f32 1.0, %v4261
        %v4263 = vrcp.pop %v3815
        %v4264 = vmul.f32 %v3815, %v4263
        %v4265 = vsub.f32 1.0, %v4264
        %v4266 = vmul.f32 %v4263, %v4265
        %v4267 = vadd.f32 %v4263, %v4266
        %vm4268 = vweird.f32 %v3815
        %vm4269 = vweird.f32 %v4263
        %vm4270 = vmor %vm4268, %vm4269
        %v4271 = vsel %vm4270, %v4263, %v4267
        %v4272 = vand.u32 2147483647, %v3815
        %vm4273 = vcmp.eq.f32.partialorder %v4272, 8.507059e+37
        %v4274 = vand.u32 %v3815, 2147483648
        %v4275 = vor.u32 1.1754944e-38, %v4274
        %v4276 = vsel %vm4273, %v4275, %v4271
        %v4277 = vmul.f32 1.0, %v4276
        %v4278 = vrcp.pop %v3816
        %v4279 = vmul.f32 %v3816, %v4278
        %v4280 = vsub.f32 1.0, %v4279
        %v4281 = vmul.f32 %v4278, %v4280
        %v4282 = vadd.f32 %v4278, %v4281
        %vm4283 = vweird.f32 %v3816
        %vm4284 = vweird.f32 %v4278
        %vm4285 = vmor %vm4283, %vm4284
        %v4286 = vsel %vm4285, %v4278, %v4282
        %v4287 = vand.u32 2147483647, %v3816
        %vm4288 = vcmp.eq.f32.partialorder %v4287, 8.507059e+37
        %v4289 = vand.u32 %v3816, 2147483648
        %v4290 = vor.u32 1.1754944e-38, %v4289
        %v4291 = vsel %vm4288, %v4290, %v4286
        %v4292 = vmul.f32 1.0, %v4291
        %v4293 = vrcp.pop %v3817
        %v4294 = vmul.f32 %v3817, %v4293
        %v4295 = vsub.f32 1.0, %v4294
        %v4296 = vmul.f32 %v4293, %v4295
        %v4297 = vadd.f32 %v4293, %v4296
        %vm4298 = vweird.f32 %v3817
        %vm4299 = vweird.f32 %v4293
        %vm4300 = vmor %vm4298, %vm4299
        %v4301 = vsel %vm4300, %v4293, %v4297
        %v4302 = vand.u32 2147483647, %v3817
        %vm4303 = vcmp.eq.f32.partialorder %v4302, 8.507059e+37
        %v4304 = vand.u32 %v3817, 2147483648
        %v4305 = vor.u32 1.1754944e-38, %v4304
        %v4306 = vsel %vm4303, %v4305, %v4301
        %v4307 = vmul.f32 1.0, %v4306
        %v4308 = vrcp.pop %v3818
        %v4309 = vmul.f32 %v3818, %v4308
        %v4310 = vsub.f32 1.0, %v4309
        %v4311 = vmul.f32 %v4308, %v4310
        %v4312 = vadd.f32 %v4308, %v4311
        %vm4313 = vweird.f32 %v3818
        %vm4314 = vweird.f32 %v4308
        %vm4315 = vmor %vm4313, %vm4314
        %v4316 = vsel %vm4315, %v4308, %v4312
        %v4317 = vand.u32 2147483647, %v3818
        %vm4318 = vcmp.eq.f32.partialorder %v4317, 8.507059e+37
        %v4319 = vand.u32 %v3818, 2147483648
        %v4320 = vor.u32 1.1754944e-38, %v4319
        %v4321 = vsel %vm4318, %v4320, %v4316
        %v4322 = vmul.f32 1.0, %v4321
        %v4323 = vrcp.pop %v3819
        %v4324 = vmul.f32 %v3819, %v4323
        %v4325 = vsub.f32 1.0, %v4324
        %v4326 = vmul.f32 %v4323, %v4325
        %v4327 = vadd.f32 %v4323, %v4326
        %vm4328 = vweird.f32 %v3819
        %vm4329 = vweird.f32 %v4323
        %vm4330 = vmor %vm4328, %vm4329
        %v4331 = vsel %vm4330, %v4323, %v4327
        %v4332 = vand.u32 2147483647, %v3819
        %vm4333 = vcmp.eq.f32.partialorder %v4332, 8.507059e+37
        %v4334 = vand.u32 %v3819, 2147483648
        %v4335 = vor.u32 1.1754944e-38, %v4334
        %v4336 = vsel %vm4333, %v4335, %v4331
        %v4337 = vmul.f32 1.0, %v4336
        %v4338 = vrcp.pop %v3820
        %v4339 = vmul.f32 %v3820, %v4338
        %v4340 = vsub.f32 1.0, %v4339
        %v4341 = vmul.f32 %v4338, %v4340
        %v4342 = vadd.f32 %v4338, %v4341
        %vm4343 = vweird.f32 %v3820
        %vm4344 = vweird.f32 %v4338
        %vm4345 = vmor %vm4343, %vm4344
        %v4346 = vsel %vm4345, %v4338, %v4342
        %v4347 = vand.u32 2147483647, %v3820
        %vm4348 = vcmp.eq.f32.partialorder %v4347, 8.507059e+37
        %v4349 = vand.u32 %v3820, 2147483648
        %v4350 = vor.u32 1.1754944e-38, %v4349
        %v4351 = vsel %vm4348, %v4350, %v4346
        %v4352 = vmul.f32 1.0, %v4351
        %v4353 = vrcp.pop %v3821
        %v4354 = vmul.f32 %v3821, %v4353
        %v4355 = vsub.f32 1.0, %v4354
        %v4356 = vmul.f32 %v4353, %v4355
        %v4357 = vadd.f32 %v4353, %v4356
        %vm4358 = vweird.f32 %v3821
        %vm4359 = vweird.f32 %v4353
        %vm4360 = vmor %vm4358, %vm4359
        %v4361 = vsel %vm4360, %v4353, %v4357
        %v4362 = vand.u32 2147483647, %v3821
        %vm4363 = vcmp.eq.f32.partialorder %v4362, 8.507059e+37
        %v4364 = vand.u32 %v3821, 2147483648
        %v4365 = vor.u32 1.1754944e-38, %v4364
        %v4366 = vsel %vm4363, %v4365, %v4361
        %v4367 = vmul.f32 1.0, %v4366
        %v4368 = vrcp.pop %v3822
        %v4369 = vmul.f32 %v3822, %v4368
        %v4370 = vsub.f32 1.0, %v4369
        %v4371 = vmul.f32 %v4368, %v4370
        %v4372 = vadd.f32 %v4368, %v4371
        %vm4373 = vweird.f32 %v3822
        %vm4374 = vweird.f32 %v4368
        %vm4375 = vmor %vm4373, %vm4374
        %v4376 = vsel %vm4375, %v4368, %v4372
        %v4377 = vand.u32 2147483647, %v3822
        %vm4378 = vcmp.eq.f32.partialorder %v4377, 8.507059e+37
        %v4379 = vand.u32 %v3822, 2147483648
        %v4380 = vor.u32 1.1754944e-38, %v4379
        %v4381 = vsel %vm4378, %v4380, %v4376
        %v4382 = vmul.f32 1.0, %v4381
        %v4383 = vrcp.pop %v3823
        %v4384 = vmul.f32 %v3823, %v4383
        %v4385 = vsub.f32 1.0, %v4384
        %v4386 = vmul.f32 %v4383, %v4385
        %v4387 = vadd.f32 %v4383, %v4386
        %vm4388 = vweird.f32 %v3823
        %vm4389 = vweird.f32 %v4383
        %vm4390 = vmor %vm4388, %vm4389
        %v4391 = vsel %vm4390, %v4383, %v4387
        %v4392 = vand.u32 2147483647, %v3823
        %vm4393 = vcmp.eq.f32.partialorder %v4392, 8.507059e+37
        %v4394 = vand.u32 %v3823, 2147483648
        %v4395 = vor.u32 1.1754944e-38, %v4394
        %v4396 = vsel %vm4393, %v4395, %v4391
        %v4397 = vmul.f32 1.0, %v4396
        %v4398 = vrcp.pop %v3824
        %v4399 = vmul.f32 %v3824, %v4398
        %v4400 = vsub.f32 1.0, %v4399
        %v4401 = vmul.f32 %v4398, %v4400
        %v4402 = vadd.f32 %v4398, %v4401
        %vm4403 = vweird.f32 %v3824
        %vm4404 = vweird.f32 %v4398
        %vm4405 = vmor %vm4403, %vm4404
        %v4406 = vsel %vm4405, %v4398, %v4402
        %v4407 = vand.u32 2147483647, %v3824
        %vm4408 = vcmp.eq.f32.partialorder %v4407, 8.507059e+37
        %v4409 = vand.u32 %v3824, 2147483648
        %v4410 = vor.u32 1.1754944e-38, %v4409
        %v4411 = vsel %vm4408, %v4410, %v4406
        %v4412 = vmul.f32 1.0, %v4411
        %v4413 = vrcp.pop %v3825
        %v4414 = vmul.f32 %v3825, %v4413
        %v4415 = vsub.f32 1.0, %v4414
        %v4416 = vmul.f32 %v4413, %v4415
        %v4417 = vadd.f32 %v4413, %v4416
        %vm4418 = vweird.f32 %v3825
        %vm4419 = vweird.f32 %v4413
        %vm4420 = vmor %vm4418, %vm4419
        %v4421 = vsel %vm4420, %v4413, %v4417
        %v4422 = vand.u32 2147483647, %v3825
        %vm4423 = vcmp.eq.f32.partialorder %v4422, 8.507059e+37
        %v4424 = vand.u32 %v3825, 2147483648
        %v4425 = vor.u32 1.1754944e-38, %v4424
        %v4426 = vsel %vm4423, %v4425, %v4421
        %v4427 = vmul.f32 1.0, %v4426
        %v4428 = vrcp.pop %v3826
        %v4429 = vmul.f32 %v3826, %v4428
        %v4430 = vsub.f32 1.0, %v4429
        %v4431 = vmul.f32 %v4428, %v4430
        %v4432 = vadd.f32 %v4428, %v4431
        %vm4433 = vweird.f32 %v3826
        %vm4434 = vweird.f32 %v4428
        %vm4435 = vmor %vm4433, %vm4434
        %v4436 = vsel %vm4435, %v4428, %v4432
        %v4437 = vand.u32 2147483647, %v3826
        %vm4438 = vcmp.eq.f32.partialorder %v4437, 8.507059e+37
        %v4439 = vand.u32 %v3826, 2147483648
        %v4440 = vor.u32 1.1754944e-38, %v4439
        %v4441 = vsel %vm4438, %v4440, %v4436
        %v4442 = vmul.f32 1.0, %v4441
        %v4443 = vrcp.pop %v3827
        %v4444 = vmul.f32 %v3827, %v4443
        %v4445 = vsub.f32 1.0, %v4444
        %v4446 = vmul.f32 %v4443, %v4445
        %v4447 = vadd.f32 %v4443, %v4446
        %vm4448 = vweird.f32 %v3827
        %vm4449 = vweird.f32 %v4443
        %vm4450 = vmor %vm4448, %vm4449
        %v4451 = vsel %vm4450, %v4443, %v4447
        %v4452 = vand.u32 2147483647, %v3827
        %vm4453 = vcmp.eq.f32.partialorder %v4452, 8.507059e+37
        %v4454 = vand.u32 %v3827, 2147483648
        %v4455 = vor.u32 1.1754944e-38, %v4454
        %v4456 = vsel %vm4453, %v4455, %v4451
        %v4457 = vmul.f32 1.0, %v4456
        %v4458 = vrcp.pop %v3828
        %v4459 = vmul.f32 %v3828, %v4458
        %v4460 = vsub.f32 1.0, %v4459
        %v4461 = vmul.f32 %v4458, %v4460
        %v4462 = vadd.f32 %v4458, %v4461
        %vm4463 = vweird.f32 %v3828
        %vm4464 = vweird.f32 %v4458
        %vm4465 = vmor %vm4463, %vm4464
        %v4466 = vsel %vm4465, %v4458, %v4462
        %v4467 = vand.u32 2147483647, %v3828
        %vm4468 = vcmp.eq.f32.partialorder %v4467, 8.507059e+37
        %v4469 = vand.u32 %v3828, 2147483648
        %v4470 = vor.u32 1.1754944e-38, %v4469
        %v4471 = vsel %vm4468, %v4470, %v4466
        %v4472 = vmul.f32 1.0, %v4471
        %v4473 = vrcp.pop %v3829
        %v4474 = vmul.f32 %v3829, %v4473
        %v4475 = vsub.f32 1.0, %v4474
        %v4476 = vmul.f32 %v4473, %v4475
        %v4477 = vadd.f32 %v4473, %v4476
        %vm4478 = vweird.f32 %v3829
        %vm4479 = vweird.f32 %v4473
        %vm4480 = vmor %vm4478, %vm4479
        %v4481 = vsel %vm4480, %v4473, %v4477
        %v4482 = vand.u32 2147483647, %v3829
        %vm4483 = vcmp.eq.f32.partialorder %v4482, 8.507059e+37
        %v4484 = vand.u32 %v3829, 2147483648
        %v4485 = vor.u32 1.1754944e-38, %v4484
        %v4486 = vsel %vm4483, %v4485, %v4481
        %v4487 = vmul.f32 1.0, %v4486
        %v4488 = vrcp.pop %v3830
        %v4489 = vmul.f32 %v3830, %v4488
        %v4490 = vsub.f32 1.0, %v4489
        %v4491 = vmul.f32 %v4488, %v4490
        %v4492 = vadd.f32 %v4488, %v4491
        %vm4493 = vweird.f32 %v3830
        %vm4494 = vweird.f32 %v4488
        %vm4495 = vmor %vm4493, %vm4494
        %v4496 = vsel %vm4495, %v4488, %v4492
        %v4497 = vand.u32 2147483647, %v3830
        %vm4498 = vcmp.eq.f32.partialorder %v4497, 8.507059e+37
        %v4499 = vand.u32 %v3830, 2147483648
        %v4500 = vor.u32 1.1754944e-38, %v4499
        %v4501 = vsel %vm4498, %v4500, %v4496
        %v4502 = vmul.f32 1.0, %v4501
        %v4503 = vrcp.pop %v3831
        %v4504 = vmul.f32 %v3831, %v4503
        %v4505 = vsub.f32 1.0, %v4504
        %v4506 = vmul.f32 %v4503, %v4505
        %v4507 = vadd.f32 %v4503, %v4506
        %vm4508 = vweird.f32 %v3831
        %vm4509 = vweird.f32 %v4503
        %vm4510 = vmor %vm4508, %vm4509
        %v4511 = vsel %vm4510, %v4503, %v4507
        %v4512 = vand.u32 2147483647, %v3831
        %vm4513 = vcmp.eq.f32.partialorder %v4512, 8.507059e+37
        %v4514 = vand.u32 %v3831, 2147483648
        %v4515 = vor.u32 1.1754944e-38, %v4514
        %v4516 = vsel %vm4513, %v4515, %v4511
        %v4517 = vmul.f32 1.0, %v4516
        %v4518 = vrcp.pop %v3832
        %v4519 = vmul.f32 %v3832, %v4518
        %v4520 = vsub.f32 1.0, %v4519
        %v4521 = vmul.f32 %v4518, %v4520
        %v4522 = vadd.f32 %v4518, %v4521
        %vm4523 = vweird.f32 %v3832
        %vm4524 = vweird.f32 %v4518
        %vm4525 = vmor %vm4523, %vm4524
        %v4526 = vsel %vm4525, %v4518, %v4522
        %v4527 = vand.u32 2147483647, %v3832
        %vm4528 = vcmp.eq.f32.partialorder %v4527, 8.507059e+37
        %v4529 = vand.u32 %v3832, 2147483648
        %v4530 = vor.u32 1.1754944e-38, %v4529
        %v4531 = vsel %vm4528, %v4530, %v4526
        %v4532 = vmul.f32 1.0, %v4531
        %v4533 = vrcp.pop %v3833
        %v4534 = vmul.f32 %v3833, %v4533
        %v4535 = vsub.f32 1.0, %v4534
        %v4536 = vmul.f32 %v4533, %v4535
        %v4537 = vadd.f32 %v4533, %v4536
        %vm4538 = vweird.f32 %v3833
        %vm4539 = vweird.f32 %v4533
        %vm4540 = vmor %vm4538, %vm4539
        %v4541 = vsel %vm4540, %v4533, %v4537
        %v4542 = vand.u32 2147483647, %v3833
        %vm4543 = vcmp.eq.f32.partialorder %v4542, 8.507059e+37
        %v4544 = vand.u32 %v3833, 2147483648
        %v4545 = vor.u32 1.1754944e-38, %v4544
        %v4546 = vsel %vm4543, %v4545, %v4541
        %v4547 = vmul.f32 1.0, %v4546
        %v4548 = vrcp.pop %v3834
        %v4549 = vmul.f32 %v3834, %v4548
        %v4550 = vsub.f32 1.0, %v4549
        %v4551 = vmul.f32 %v4548, %v4550
        %v4552 = vadd.f32 %v4548, %v4551
        %vm4553 = vweird.f32 %v3834
        %vm4554 = vweird.f32 %v4548
        %vm4555 = vmor %vm4553, %vm4554
        %v4556 = vsel %vm4555, %v4548, %v4552
        %v4557 = vand.u32 2147483647, %v3834
        %vm4558 = vcmp.eq.f32.partialorder %v4557, 8.507059e+37
        %v4559 = vand.u32 %v3834, 2147483648
        %v4560 = vor.u32 1.1754944e-38, %v4559
        %v4561 = vsel %vm4558, %v4560, %v4556
        %v4562 = vmul.f32 1.0, %v4561
        %v4563 = vrcp.pop %v3835
        %v4564 = vmul.f32 %v3835, %v4563
        %v4565 = vsub.f32 1.0, %v4564
        %v4566 = vmul.f32 %v4563, %v4565
        %v4567 = vadd.f32 %v4563, %v4566
        %vm4568 = vweird.f32 %v3835
        %vm4569 = vweird.f32 %v4563
        %vm4570 = vmor %vm4568, %vm4569
        %v4571 = vsel %vm4570, %v4563, %v4567
        %v4572 = vand.u32 2147483647, %v3835
        %vm4573 = vcmp.eq.f32.partialorder %v4572, 8.507059e+37
        %v4574 = vand.u32 %v3835, 2147483648
        %v4575 = vor.u32 1.1754944e-38, %v4574
        %v4576 = vsel %vm4573, %v4575, %v4571
        %v4577 = vmul.f32 1.0, %v4576
        %v4578 = vrcp.pop %v3836
        %v4579 = vmul.f32 %v3836, %v4578
        %v4580 = vsub.f32 1.0, %v4579
        %v4581 = vmul.f32 %v4578, %v4580
        %v4582 = vadd.f32 %v4578, %v4581
        %vm4583 = vweird.f32 %v3836
        %vm4584 = vweird.f32 %v4578
        %vm4585 = vmor %vm4583, %vm4584
        %v4586 = vsel %vm4585, %v4578, %v4582
        %v4587 = vand.u32 2147483647, %v3836
        %vm4588 = vcmp.eq.f32.partialorder %v4587, 8.507059e+37
        %v4589 = vand.u32 %v3836, 2147483648
        %v4590 = vor.u32 1.1754944e-38, %v4589
        %v4591 = vsel %vm4588, %v4590, %v4586
        %v4592 = vmul.f32 1.0, %v4591
        %v4593 = vrcp.pop %v3837
        %v4594 = vmul.f32 %v3837, %v4593
        %v4595 = vsub.f32 1.0, %v4594
        %v4596 = vmul.f32 %v4593, %v4595
        %v4597 = vadd.f32 %v4593, %v4596
        %vm4598 = vweird.f32 %v3837
        %vm4599 = vweird.f32 %v4593
        %vm4600 = vmor %vm4598, %vm4599
        %v4601 = vsel %vm4600, %v4593, %v4597
        %v4602 = vand.u32 2147483647, %v3837
        %vm4603 = vcmp.eq.f32.partialorder %v4602, 8.507059e+37
        %v4604 = vand.u32 %v3837, 2147483648
        %v4605 = vor.u32 1.1754944e-38, %v4604
        %v4606 = vsel %vm4603, %v4605, %v4601
        %v4607 = vmul.f32 1.0, %v4606
        %v4608 = vrcp.pop %v3838
        %v4609 = vmul.f32 %v3838, %v4608
        %v4610 = vsub.f32 1.0, %v4609
        %v4611 = vmul.f32 %v4608, %v4610
        %v4612 = vadd.f32 %v4608, %v4611
        %vm4613 = vweird.f32 %v3838
        %vm4614 = vweird.f32 %v4608
        %vm4615 = vmor %vm4613, %vm4614
        %v4616 = vsel %vm4615, %v4608, %v4612
        %v4617 = vand.u32 2147483647, %v3838
        %vm4618 = vcmp.eq.f32.partialorder %v4617, 8.507059e+37
        %v4619 = vand.u32 %v3838, 2147483648
        %v4620 = vor.u32 1.1754944e-38, %v4619
        %v4621 = vsel %vm4618, %v4620, %v4616
        %v4622 = vmul.f32 1.0, %v4621
        %v4623 = vrcp.pop %v3839
        %v4624 = vmul.f32 %v3839, %v4623
        %v4625 = vsub.f32 1.0, %v4624
        %v4626 = vmul.f32 %v4623, %v4625
        %v4627 = vadd.f32 %v4623, %v4626
        %vm4628 = vweird.f32 %v3839
        %vm4629 = vweird.f32 %v4623
        %vm4630 = vmor %vm4628, %vm4629
        %v4631 = vsel %vm4630, %v4623, %v4627
        %v4632 = vand.u32 2147483647, %v3839
        %vm4633 = vcmp.eq.f32.partialorder %v4632, 8.507059e+37
        %v4634 = vand.u32 %v3839, 2147483648
        %v4635 = vor.u32 1.1754944e-38, %v4634
        %v4636 = vsel %vm4633, %v4635, %v4631
        %v4637 = vmul.f32 1.0, %v4636
        %v4638 = vrcp.pop %v3840
        %v4639 = vmul.f32 %v3840, %v4638
        %v4640 = vsub.f32 1.0, %v4639
        %v4641 = vmul.f32 %v4638, %v4640
        %v4642 = vadd.f32 %v4638, %v4641
        %vm4643 = vweird.f32 %v3840
        %vm4644 = vweird.f32 %v4638
        %vm4645 = vmor %vm4643, %vm4644
        %v4646 = vsel %vm4645, %v4638, %v4642
        %v4647 = vand.u32 2147483647, %v3840
        %vm4648 = vcmp.eq.f32.partialorder %v4647, 8.507059e+37
        %v4649 = vand.u32 %v3840, 2147483648
        %v4650 = vor.u32 1.1754944e-38, %v4649
        %v4651 = vsel %vm4648, %v4650, %v4646
        %v4652 = vmul.f32 1.0, %v4651
        %v4653 = vrcp.pop %v3841
        %v4654 = vmul.f32 %v3841, %v4653
        %v4655 = vsub.f32 1.0, %v4654
        %v4656 = vmul.f32 %v4653, %v4655
        %v4657 = vadd.f32 %v4653, %v4656
        %vm4658 = vweird.f32 %v3841
        %vm4659 = vweird.f32 %v4653
        %vm4660 = vmor %vm4658, %vm4659
        %v4661 = vsel %vm4660, %v4653, %v4657
        %v4662 = vand.u32 2147483647, %v3841
        %vm4663 = vcmp.eq.f32.partialorder %v4662, 8.507059e+37
        %v4664 = vand.u32 %v3841, 2147483648
        %v4665 = vor.u32 1.1754944e-38, %v4664
        %v4666 = vsel %vm4663, %v4665, %v4661
        %v4667 = vmul.f32 1.0, %v4666
        %v4668 = vrcp.pop %v3842
        %v4669 = vmul.f32 %v3842, %v4668
        %v4670 = vsub.f32 1.0, %v4669
        %v4671 = vmul.f32 %v4668, %v4670
        %v4672 = vadd.f32 %v4668, %v4671
        %vm4673 = vweird.f32 %v3842
        %vm4674 = vweird.f32 %v4668
        %vm4675 = vmor %vm4673, %vm4674
        %v4676 = vsel %vm4675, %v4668, %v4672
        %v4677 = vand.u32 2147483647, %v3842
        %vm4678 = vcmp.eq.f32.partialorder %v4677, 8.507059e+37
        %v4679 = vand.u32 %v3842, 2147483648
        %v4680 = vor.u32 1.1754944e-38, %v4679
        %v4681 = vsel %vm4678, %v4680, %v4676
        %v4682 = vmul.f32 1.0, %v4681
        %v4683 = vrcp.pop %v3843
        %v4684 = vmul.f32 %v3843, %v4683
        %v4685 = vsub.f32 1.0, %v4684
        %v4686 = vmul.f32 %v4683, %v4685
        %v4687 = vadd.f32 %v4683, %v4686
        %vm4688 = vweird.f32 %v3843
        %vm4689 = vweird.f32 %v4683
        %vm4690 = vmor %vm4688, %vm4689
        %v4691 = vsel %vm4690, %v4683, %v4687
        %v4692 = vand.u32 2147483647, %v3843
        %vm4693 = vcmp.eq.f32.partialorder %v4692, 8.507059e+37
        %v4694 = vand.u32 %v3843, 2147483648
        %v4695 = vor.u32 1.1754944e-38, %v4694
        %v4696 = vsel %vm4693, %v4695, %v4691
        %v4697 = vmul.f32 1.0, %v4696
        %v4698 = vrcp.pop %v3844
        %v4699 = vmul.f32 %v3844, %v4698
        %v4700 = vsub.f32 1.0, %v4699
        %v4701 = vmul.f32 %v4698, %v4700
        %v4702 = vadd.f32 %v4698, %v4701
        %vm4703 = vweird.f32 %v3844
        %vm4704 = vweird.f32 %v4698
        %vm4705 = vmor %vm4703, %vm4704
        %v4706 = vsel %vm4705, %v4698, %v4702
        %v4707 = vand.u32 2147483647, %v3844
        %vm4708 = vcmp.eq.f32.partialorder %v4707, 8.507059e+37
        %v4709 = vand.u32 %v3844, 2147483648
        %v4710 = vor.u32 1.1754944e-38, %v4709
        %v4711 = vsel %vm4708, %v4710, %v4706
        %v4712 = vmul.f32 1.0, %v4711
        %v4713 = vrcp.pop %v3845
        %v4714 = vmul.f32 %v3845, %v4713
        %v4715 = vsub.f32 1.0, %v4714
        %v4716 = vmul.f32 %v4713, %v4715
        %v4717 = vadd.f32 %v4713, %v4716
        %vm4718 = vweird.f32 %v3845
        %vm4719 = vweird.f32 %v4713
        %vm4720 = vmor %vm4718, %vm4719
        %v4721 = vsel %vm4720, %v4713, %v4717
        %v4722 = vand.u32 2147483647, %v3845
        %vm4723 = vcmp.eq.f32.partialorder %v4722, 8.507059e+37
        %v4724 = vand.u32 %v3845, 2147483648
        %v4725 = vor.u32 1.1754944e-38, %v4724
        %v4726 = vsel %vm4723, %v4725, %v4721
        %v4727 = vmul.f32 1.0, %v4726
        %v4728 = vrcp.pop %v3846
        %v4729 = vmul.f32 %v3846, %v4728
        %v4730 = vsub.f32 1.0, %v4729
        %v4731 = vmul.f32 %v4728, %v4730
        %v4732 = vadd.f32 %v4728, %v4731
        %vm4733 = vweird.f32 %v3846
        %vm4734 = vweird.f32 %v4728
        %vm4735 = vmor %vm4733, %vm4734
        %v4736 = vsel %vm4735, %v4728, %v4732
        %v4737 = vand.u32 2147483647, %v3846
        %vm4738 = vcmp.eq.f32.partialorder %v4737, 8.507059e+37
        %v4739 = vand.u32 %v3846, 2147483648
        %v4740 = vor.u32 1.1754944e-38, %v4739
        %v4741 = vsel %vm4738, %v4740, %v4736
        %v4742 = vmul.f32 1.0, %v4741
        %v4743 = vrcp.pop %v3847
        %v4744 = vmul.f32 %v3847, %v4743
        %v4745 = vsub.f32 1.0, %v4744
        %v4746 = vmul.f32 %v4743, %v4745
        %v4747 = vadd.f32 %v4743, %v4746
        %vm4748 = vweird.f32 %v3847
        %vm4749 = vweird.f32 %v4743
        %vm4750 = vmor %vm4748, %vm4749
        %v4751 = vsel %vm4750, %v4743, %v4747
        %v4752 = vand.u32 2147483647, %v3847
        %vm4753 = vcmp.eq.f32.partialorder %v4752, 8.507059e+37
        %v4754 = vand.u32 %v3847, 2147483648
        %v4755 = vor.u32 1.1754944e-38, %v4754
        %v4756 = vsel %vm4753, %v4755, %v4751
        %v4757 = vmul.f32 1.0, %v4756
        %v4758 = vrcp.pop %v3848
        %v4759 = vmul.f32 %v3848, %v4758
        %v4760 = vsub.f32 1.0, %v4759
        %v4761 = vmul.f32 %v4758, %v4760
        %v4762 = vadd.f32 %v4758, %v4761
        %vm4763 = vweird.f32 %v3848
        %vm4764 = vweird.f32 %v4758
        %vm4765 = vmor %vm4763, %vm4764
        %v4766 = vsel %vm4765, %v4758, %v4762
        %v4767 = vand.u32 2147483647, %v3848
        %vm4768 = vcmp.eq.f32.partialorder %v4767, 8.507059e+37
        %v4769 = vand.u32 %v3848, 2147483648
        %v4770 = vor.u32 1.1754944e-38, %v4769
        %v4771 = vsel %vm4768, %v4770, %v4766
        %v4772 = vmul.f32 1.0, %v4771
        %v4773 = vrcp.pop %v3849
        %v4774 = vmul.f32 %v3849, %v4773
        %v4775 = vsub.f32 1.0, %v4774
        %v4776 = vmul.f32 %v4773, %v4775
        %v4777 = vadd.f32 %v4773, %v4776
        %vm4778 = vweird.f32 %v3849
        %vm4779 = vweird.f32 %v4773
        %vm4780 = vmor %vm4778, %vm4779
        %v4781 = vsel %vm4780, %v4773, %v4777
        %v4782 = vand.u32 2147483647, %v3849
        %vm4783 = vcmp.eq.f32.partialorder %v4782, 8.507059e+37
        %v4784 = vand.u32 %v3849, 2147483648
        %v4785 = vor.u32 1.1754944e-38, %v4784
        %v4786 = vsel %vm4783, %v4785, %v4781
        %v4787 = vmul.f32 1.0, %v4786
        %v4788 = vrcp.pop %v3850
        %v4789 = vmul.f32 %v3850, %v4788
        %v4790 = vsub.f32 1.0, %v4789
        %v4791 = vmul.f32 %v4788, %v4790
        %v4792 = vadd.f32 %v4788, %v4791
        %vm4793 = vweird.f32 %v3850
        %vm4794 = vweird.f32 %v4788
        %vm4795 = vmor %vm4793, %vm4794
        %v4796 = vsel %vm4795, %v4788, %v4792
        %v4797 = vand.u32 2147483647, %v3850
        %vm4798 = vcmp.eq.f32.partialorder %v4797, 8.507059e+37
        %v4799 = vand.u32 %v3850, 2147483648
        %v4800 = vor.u32 1.1754944e-38, %v4799
        %v4801 = vsel %vm4798, %v4800, %v4796
        %v4802 = vmul.f32 1.0, %v4801
        %v4803 = vrcp.pop %v3851
        %v4804 = vmul.f32 %v3851, %v4803
        %v4805 = vsub.f32 1.0, %v4804
        %v4806 = vmul.f32 %v4803, %v4805
        %v4807 = vadd.f32 %v4803, %v4806
        %vm4808 = vweird.f32 %v3851
        %vm4809 = vweird.f32 %v4803
        %vm4810 = vmor %vm4808, %vm4809
        %v4811 = vsel %vm4810, %v4803, %v4807
        %v4812 = vand.u32 2147483647, %v3851
        %vm4813 = vcmp.eq.f32.partialorder %v4812, 8.507059e+37
        %v4814 = vand.u32 %v3851, 2147483648
        %v4815 = vor.u32 1.1754944e-38, %v4814
        %v4816 = vsel %vm4813, %v4815, %v4811
        %v4817 = vmul.f32 1.0, %v4816
        %v4818 = vrcp.pop %v3852
        %v4819 = vmul.f32 %v3852, %v4818
        %v4820 = vsub.f32 1.0, %v4819
        %v4821 = vmul.f32 %v4818, %v4820
        %v4822 = vadd.f32 %v4818, %v4821
        %vm4823 = vweird.f32 %v3852
        %vm4824 = vweird.f32 %v4818
        %vm4825 = vmor %vm4823, %vm4824
        %v4826 = vsel %vm4825, %v4818, %v4822
        %v4827 = vand.u32 2147483647, %v3852
        %vm4828 = vcmp.eq.f32.partialorder %v4827, 8.507059e+37
        %v4829 = vand.u32 %v3852, 2147483648
        %v4830 = vor.u32 1.1754944e-38, %v4829
        %v4831 = vsel %vm4828, %v4830, %v4826
        %v4832 = vmul.f32 1.0, %v4831
        %v4833 = vrcp.pop %v3853
        %v4834 = vmul.f32 %v3853, %v4833
        %v4835 = vsub.f32 1.0, %v4834
        %v4836 = vmul.f32 %v4833, %v4835
        %v4837 = vadd.f32 %v4833, %v4836
        %vm4838 = vweird.f32 %v3853
        %vm4839 = vweird.f32 %v4833
        %vm4840 = vmor %vm4838, %vm4839
        %v4841 = vsel %vm4840, %v4833, %v4837
        %v4842 = vand.u32 2147483647, %v3853
        %vm4843 = vcmp.eq.f32.partialorder %v4842, 8.507059e+37
        %v4844 = vand.u32 %v3853, 2147483648
        %v4845 = vor.u32 1.1754944e-38, %v4844
        %v4846 = vsel %vm4843, %v4845, %v4841
        %v4847 = vmul.f32 1.0, %v4846
        %v4848 = vrcp.pop %v3854
        %v4849 = vmul.f32 %v3854, %v4848
        %v4850 = vsub.f32 1.0, %v4849
        %v4851 = vmul.f32 %v4848, %v4850
        %v4852 = vadd.f32 %v4848, %v4851
        %vm4853 = vweird.f32 %v3854
        %vm4854 = vweird.f32 %v4848
        %vm4855 = vmor %vm4853, %vm4854
        %v4856 = vsel %vm4855, %v4848, %v4852
        %v4857 = vand.u32 2147483647, %v3854
        %vm4858 = vcmp.eq.f32.partialorder %v4857, 8.507059e+37
        %v4859 = vand.u32 %v3854, 2147483648
        %v4860 = vor.u32 1.1754944e-38, %v4859
        %v4861 = vsel %vm4858, %v4860, %v4856
        %v4862 = vmul.f32 1.0, %v4861
        %v4863 = vrcp.pop %v3855
        %v4864 = vmul.f32 %v3855, %v4863
        %v4865 = vsub.f32 1.0, %v4864
        %v4866 = vmul.f32 %v4863, %v4865
        %v4867 = vadd.f32 %v4863, %v4866
        %vm4868 = vweird.f32 %v3855
        %vm4869 = vweird.f32 %v4863
        %vm4870 = vmor %vm4868, %vm4869
        %v4871 = vsel %vm4870, %v4863, %v4867
        %v4872 = vand.u32 2147483647, %v3855
        %vm4873 = vcmp.eq.f32.partialorder %v4872, 8.507059e+37
        %v4874 = vand.u32 %v3855, 2147483648
        %v4875 = vor.u32 1.1754944e-38, %v4874
        %v4876 = vsel %vm4873, %v4875, %v4871
        %v4877 = vmul.f32 1.0, %v4876
        %v4878 = vrcp.pop %v3856
        %v4879 = vmul.f32 %v3856, %v4878
        %v4880 = vsub.f32 1.0, %v4879
        %v4881 = vmul.f32 %v4878, %v4880
        %v4882 = vadd.f32 %v4878, %v4881
        %vm4883 = vweird.f32 %v3856
        %vm4884 = vweird.f32 %v4878
        %vm4885 = vmor %vm4883, %vm4884
        %v4886 = vsel %vm4885, %v4878, %v4882
        %v4887 = vand.u32 2147483647, %v3856
        %vm4888 = vcmp.eq.f32.partialorder %v4887, 8.507059e+37
        %v4889 = vand.u32 %v3856, 2147483648
        %v4890 = vor.u32 1.1754944e-38, %v4889
        %v4891 = vsel %vm4888, %v4890, %v4886
        %v4892 = vmul.f32 1.0, %v4891
        %v4893 = vrcp.pop %v3857
        %v4894 = vmul.f32 %v3857, %v4893
        %v4895 = vsub.f32 1.0, %v4894
        %v4896 = vmul.f32 %v4893, %v4895
        %v4897 = vadd.f32 %v4893, %v4896
        %vm4898 = vweird.f32 %v3857
        %vm4899 = vweird.f32 %v4893
        %vm4900 = vmor %vm4898, %vm4899
        %v4901 = vsel %vm4900, %v4893, %v4897
        %v4902 = vand.u32 2147483647, %v3857
        %vm4903 = vcmp.eq.f32.partialorder %v4902, 8.507059e+37
        %v4904 = vand.u32 %v3857, 2147483648
        %v4905 = vor.u32 1.1754944e-38, %v4904
        %v4906 = vsel %vm4903, %v4905, %v4901
        %v4907 = vmul.f32 1.0, %v4906
        %v4908 = vrcp.pop %v3858
        %v4909 = vmul.f32 %v3858, %v4908
        %v4910 = vsub.f32 1.0, %v4909
        %v4911 = vmul.f32 %v4908, %v4910
        %v4912 = vadd.f32 %v4908, %v4911
        %vm4913 = vweird.f32 %v3858
        %vm4914 = vweird.f32 %v4908
        %vm4915 = vmor %vm4913, %vm4914
        %v4916 = vsel %vm4915, %v4908, %v4912
        %v4917 = vand.u32 2147483647, %v3858
        %vm4918 = vcmp.eq.f32.partialorder %v4917, 8.507059e+37
        %v4919 = vand.u32 %v3858, 2147483648
        %v4920 = vor.u32 1.1754944e-38, %v4919
        %v4921 = vsel %vm4918, %v4920, %v4916
        %v4922 = vmul.f32 1.0, %v4921
        %v4923 = vrcp.pop %v3859
        %v4924 = vmul.f32 %v3859, %v4923
        %v4925 = vsub.f32 1.0, %v4924
        %v4926 = vmul.f32 %v4923, %v4925
        %v4927 = vadd.f32 %v4923, %v4926
        %vm4928 = vweird.f32 %v3859
        %vm4929 = vweird.f32 %v4923
        %vm4930 = vmor %vm4928, %vm4929
        %v4931 = vsel %vm4930, %v4923, %v4927
        %v4932 = vand.u32 2147483647, %v3859
        %vm4933 = vcmp.eq.f32.partialorder %v4932, 8.507059e+37
        %v4934 = vand.u32 %v3859, 2147483648
        %v4935 = vor.u32 1.1754944e-38, %v4934
        %v4936 = vsel %vm4933, %v4935, %v4931
        %v4937 = vmul.f32 1.0, %v4936
        %v4938 = vrcp.pop %v3860
        %v4939 = vmul.f32 %v3860, %v4938
        %v4940 = vsub.f32 1.0, %v4939
        %v4941 = vmul.f32 %v4938, %v4940
        %v4942 = vadd.f32 %v4938, %v4941
        %vm4943 = vweird.f32 %v3860
        %vm4944 = vweird.f32 %v4938
        %vm4945 = vmor %vm4943, %vm4944
        %v4946 = vsel %vm4945, %v4938, %v4942
        %v4947 = vand.u32 2147483647, %v3860
        %vm4948 = vcmp.eq.f32.partialorder %v4947, 8.507059e+37
        %v4949 = vand.u32 %v3860, 2147483648
        %v4950 = vor.u32 1.1754944e-38, %v4949
        %v4951 = vsel %vm4948, %v4950, %v4946
        %v4952 = vmul.f32 1.0, %v4951
        %v4953 = vrcp.pop %v3861
        %v4954 = vmul.f32 %v3861, %v4953
        %v4955 = vsub.f32 1.0, %v4954
        %v4956 = vmul.f32 %v4953, %v4955
        %v4957 = vadd.f32 %v4953, %v4956
        %vm4958 = vweird.f32 %v3861
        %vm4959 = vweird.f32 %v4953
        %vm4960 = vmor %vm4958, %vm4959
        %v4961 = vsel %vm4960, %v4953, %v4957
        %v4962 = vand.u32 2147483647, %v3861
        %vm4963 = vcmp.eq.f32.partialorder %v4962, 8.507059e+37
        %v4964 = vand.u32 %v3861, 2147483648
        %v4965 = vor.u32 1.1754944e-38, %v4964
        %v4966 = vsel %vm4963, %v4965, %v4961
        %v4967 = vmul.f32 1.0, %v4966
        %v4968 = vrcp.pop %v3862
        %v4969 = vmul.f32 %v3862, %v4968
        %v4970 = vsub.f32 1.0, %v4969
        %v4971 = vmul.f32 %v4968, %v4970
        %v4972 = vadd.f32 %v4968, %v4971
        %vm4973 = vweird.f32 %v3862
        %vm4974 = vweird.f32 %v4968
        %vm4975 = vmor %vm4973, %vm4974
        %v4976 = vsel %vm4975, %v4968, %v4972
        %v4977 = vand.u32 2147483647, %v3862
        %vm4978 = vcmp.eq.f32.partialorder %v4977, 8.507059e+37
        %v4979 = vand.u32 %v3862, 2147483648
        %v4980 = vor.u32 1.1754944e-38, %v4979
        %v4981 = vsel %vm4978, %v4980, %v4976
        %v4982 = vmul.f32 1.0, %v4981
        %v4983 = vrcp.pop %v3863
        %v4984 = vmul.f32 %v3863, %v4983
        %v4985 = vsub.f32 1.0, %v4984
        %v4986 = vmul.f32 %v4983, %v4985
        %v4987 = vadd.f32 %v4983, %v4986
        %vm4988 = vweird.f32 %v3863
        %vm4989 = vweird.f32 %v4983
        %vm4990 = vmor %vm4988, %vm4989
        %v4991 = vsel %vm4990, %v4983, %v4987
        %v4992 = vand.u32 2147483647, %v3863
        %vm4993 = vcmp.eq.f32.partialorder %v4992, 8.507059e+37
        %v4994 = vand.u32 %v3863, 2147483648
        %v4995 = vor.u32 1.1754944e-38, %v4994
        %v4996 = vsel %vm4993, %v4995, %v4991
        %v4997 = vmul.f32 1.0, %v4996
        %v4998 = vrcp.pop %v3864
        %v4999 = vmul.f32 %v3864, %v4998
        %v5000 = vsub.f32 1.0, %v4999
        %v5001 = vmul.f32 %v4998, %v5000
        %v5002 = vadd.f32 %v4998, %v5001
        %vm5003 = vweird.f32 %v3864
        %vm5004 = vweird.f32 %v4998
        %vm5005 = vmor %vm5003, %vm5004
        %v5006 = vsel %vm5005, %v4998, %v5002
        %v5007 = vand.u32 2147483647, %v3864
        %vm5008 = vcmp.eq.f32.partialorder %v5007, 8.507059e+37
        %v5009 = vand.u32 %v3864, 2147483648
        %v5010 = vor.u32 1.1754944e-38, %v5009
        %v5011 = vsel %vm5008, %v5010, %v5006
        %v5012 = vmul.f32 1.0, %v5011
        %v5013 = vrcp.pop %v3865
        %v5014 = vmul.f32 %v3865, %v5013
        %v5015 = vsub.f32 1.0, %v5014
        %v5016 = vmul.f32 %v5013, %v5015
        %v5017 = vadd.f32 %v5013, %v5016
        %vm5018 = vweird.f32 %v3865
        %vm5019 = vweird.f32 %v5013
        %vm5020 = vmor %vm5018, %vm5019
        %v5021 = vsel %vm5020, %v5013, %v5017
        %v5022 = vand.u32 2147483647, %v3865
        %vm5023 = vcmp.eq.f32.partialorder %v5022, 8.507059e+37
        %v5024 = vand.u32 %v3865, 2147483648
        %v5025 = vor.u32 1.1754944e-38, %v5024
        %v5026 = vsel %vm5023, %v5025, %v5021
        %v5027 = vmul.f32 1.0, %v5026
        %v5028 = vrcp.pop %v3866
        %v5029 = vmul.f32 %v3866, %v5028
        %v5030 = vsub.f32 1.0, %v5029
        %v5031 = vmul.f32 %v5028, %v5030
        %v5032 = vadd.f32 %v5028, %v5031
        %vm5033 = vweird.f32 %v3866
        %vm5034 = vweird.f32 %v5028
        %vm5035 = vmor %vm5033, %vm5034
        %v5036 = vsel %vm5035, %v5028, %v5032
        %v5037 = vand.u32 2147483647, %v3866
        %vm5038 = vcmp.eq.f32.partialorder %v5037, 8.507059e+37
        %v5039 = vand.u32 %v3866, 2147483648
        %v5040 = vor.u32 1.1754944e-38, %v5039
        %v5041 = vsel %vm5038, %v5040, %v5036
        %v5042 = vmul.f32 1.0, %v5041
        %v5043 = vrcp.pop %v3867
        %v5044 = vmul.f32 %v3867, %v5043
        %v5045 = vsub.f32 1.0, %v5044
        %v5046 = vmul.f32 %v5043, %v5045
        %v5047 = vadd.f32 %v5043, %v5046
        %vm5048 = vweird.f32 %v3867
        %vm5049 = vweird.f32 %v5043
        %vm5050 = vmor %vm5048, %vm5049
        %v5051 = vsel %vm5050, %v5043, %v5047
        %v5052 = vand.u32 2147483647, %v3867
        %vm5053 = vcmp.eq.f32.partialorder %v5052, 8.507059e+37
        %v5054 = vand.u32 %v3867, 2147483648
        %v5055 = vor.u32 1.1754944e-38, %v5054
        %v5056 = vsel %vm5053, %v5055, %v5051
        %v5057 = vmul.f32 1.0, %v5056
        %v5058 = vrcp.pop %v3868
        %v5059 = vmul.f32 %v3868, %v5058
        %v5060 = vsub.f32 1.0, %v5059
        %v5061 = vmul.f32 %v5058, %v5060
        %v5062 = vadd.f32 %v5058, %v5061
        %vm5063 = vweird.f32 %v3868
        %vm5064 = vweird.f32 %v5058
        %vm5065 = vmor %vm5063, %vm5064
        %v5066 = vsel %vm5065, %v5058, %v5062
        %v5067 = vand.u32 2147483647, %v3868
        %vm5068 = vcmp.eq.f32.partialorder %v5067, 8.507059e+37
        %v5069 = vand.u32 %v3868, 2147483648
        %v5070 = vor.u32 1.1754944e-38, %v5069
        %v5071 = vsel %vm5068, %v5070, %v5066
        %v5072 = vmul.f32 1.0, %v5071
        %v5073 = vrcp.pop %v3869
        %v5074 = vmul.f32 %v3869, %v5073
        %v5075 = vsub.f32 1.0, %v5074
        %v5076 = vmul.f32 %v5073, %v5075
        %v5077 = vadd.f32 %v5073, %v5076
        %vm5078 = vweird.f32 %v3869
        %vm5079 = vweird.f32 %v5073
        %vm5080 = vmor %vm5078, %vm5079
        %v5081 = vsel %vm5080, %v5073, %v5077
        %v5082 = vand.u32 2147483647, %v3869
        %vm5083 = vcmp.eq.f32.partialorder %v5082, 8.507059e+37
        %v5084 = vand.u32 %v3869, 2147483648
        %v5085 = vor.u32 1.1754944e-38, %v5084
        %v5086 = vsel %vm5083, %v5085, %v5081
        %v5087 = vmul.f32 1.0, %v5086
        %v5088 = vrcp.pop %v3870
        %v5089 = vmul.f32 %v3870, %v5088
        %v5090 = vsub.f32 1.0, %v5089
        %v5091 = vmul.f32 %v5088, %v5090
        %v5092 = vadd.f32 %v5088, %v5091
        %vm5093 = vweird.f32 %v3870
        %vm5094 = vweird.f32 %v5088
        %vm5095 = vmor %vm5093, %vm5094
        %v5096 = vsel %vm5095, %v5088, %v5092
        %v5097 = vand.u32 2147483647, %v3870
        %vm5098 = vcmp.eq.f32.partialorder %v5097, 8.507059e+37
        %v5099 = vand.u32 %v3870, 2147483648
        %v5100 = vor.u32 1.1754944e-38, %v5099
        %v5101 = vsel %vm5098, %v5100, %v5096
        %v5102 = vmul.f32 1.0, %v5101
        %v5103 = vrcp.pop %v3871
        %v5104 = vmul.f32 %v3871, %v5103
        %v5105 = vsub.f32 1.0, %v5104
        %v5106 = vmul.f32 %v5103, %v5105
        %v5107 = vadd.f32 %v5103, %v5106
        %vm5108 = vweird.f32 %v3871
        %vm5109 = vweird.f32 %v5103
        %vm5110 = vmor %vm5108, %vm5109
        %v5111 = vsel %vm5110, %v5103, %v5107
        %v5112 = vand.u32 2147483647, %v3871
        %vm5113 = vcmp.eq.f32.partialorder %v5112, 8.507059e+37
        %v5114 = vand.u32 %v3871, 2147483648
        %v5115 = vor.u32 1.1754944e-38, %v5114
        %v5116 = vsel %vm5113, %v5115, %v5111
        %v5117 = vmul.f32 1.0, %v5116
        %v5118 = vrcp.pop %v3872
        %v5119 = vmul.f32 %v3872, %v5118
        %v5120 = vsub.f32 1.0, %v5119
        %v5121 = vmul.f32 %v5118, %v5120
        %v5122 = vadd.f32 %v5118, %v5121
        %vm5123 = vweird.f32 %v3872
        %vm5124 = vweird.f32 %v5118
        %vm5125 = vmor %vm5123, %vm5124
        %v5126 = vsel %vm5125, %v5118, %v5122
        %v5127 = vand.u32 2147483647, %v3872
        %vm5128 = vcmp.eq.f32.partialorder %v5127, 8.507059e+37
        %v5129 = vand.u32 %v3872, 2147483648
        %v5130 = vor.u32 1.1754944e-38, %v5129
        %v5131 = vsel %vm5128, %v5130, %v5126
        %v5132 = vmul.f32 1.0, %v5131
        %v5133 = vrcp.pop %v3873
        %v5134 = vmul.f32 %v3873, %v5133
        %v5135 = vsub.f32 1.0, %v5134
        %v5136 = vmul.f32 %v5133, %v5135
        %v5137 = vadd.f32 %v5133, %v5136
        %vm5138 = vweird.f32 %v3873
        %vm5139 = vweird.f32 %v5133
        %vm5140 = vmor %vm5138, %vm5139
        %v5141 = vsel %vm5140, %v5133, %v5137
        %v5142 = vand.u32 2147483647, %v3873
        %vm5143 = vcmp.eq.f32.partialorder %v5142, 8.507059e+37
        %v5144 = vand.u32 %v3873, 2147483648
        %v5145 = vor.u32 1.1754944e-38, %v5144
        %v5146 = vsel %vm5143, %v5145, %v5141
        %v5147 = vmul.f32 1.0, %v5146
        %v5148 = vrcp.pop %v3874
        %v5149 = vmul.f32 %v3874, %v5148
        %v5150 = vsub.f32 1.0, %v5149
        %v5151 = vmul.f32 %v5148, %v5150
        %v5152 = vadd.f32 %v5148, %v5151
        %vm5153 = vweird.f32 %v3874
        %vm5154 = vweird.f32 %v5148
        %vm5155 = vmor %vm5153, %vm5154
        %v5156 = vsel %vm5155, %v5148, %v5152
        %v5157 = vand.u32 2147483647, %v3874
        %vm5158 = vcmp.eq.f32.partialorder %v5157, 8.507059e+37
        %v5159 = vand.u32 %v3874, 2147483648
        %v5160 = vor.u32 1.1754944e-38, %v5159
        %v5161 = vsel %vm5158, %v5160, %v5156
        %v5162 = vmul.f32 1.0, %v5161
        %v5163 = vrcp.pop %v3875
        %v5164 = vmul.f32 %v3875, %v5163
        %v5165 = vsub.f32 1.0, %v5164
        %v5166 = vmul.f32 %v5163, %v5165
        %v5167 = vadd.f32 %v5163, %v5166
        %vm5168 = vweird.f32 %v3875
        %vm5169 = vweird.f32 %v5163
        %vm5170 = vmor %vm5168, %vm5169
        %v5171 = vsel %vm5170, %v5163, %v5167
        %v5172 = vand.u32 2147483647, %v3875
        %vm5173 = vcmp.eq.f32.partialorder %v5172, 8.507059e+37
        %v5174 = vand.u32 %v3875, 2147483648
        %v5175 = vor.u32 1.1754944e-38, %v5174
        %v5176 = vsel %vm5173, %v5175, %v5171
        %v5177 = vmul.f32 1.0, %v5176
        %v5178 = vrcp.pop %v3876
        %v5179 = vmul.f32 %v3876, %v5178
        %v5180 = vsub.f32 1.0, %v5179
        %v5181 = vmul.f32 %v5178, %v5180
        %v5182 = vadd.f32 %v5178, %v5181
        %vm5183 = vweird.f32 %v3876
        %vm5184 = vweird.f32 %v5178
        %vm5185 = vmor %vm5183, %vm5184
        %v5186 = vsel %vm5185, %v5178, %v5182
        %v5187 = vand.u32 2147483647, %v3876
        %vm5188 = vcmp.eq.f32.partialorder %v5187, 8.507059e+37
        %v5189 = vand.u32 %v3876, 2147483648
        %v5190 = vor.u32 1.1754944e-38, %v5189
        %v5191 = vsel %vm5188, %v5190, %v5186
        %v5192 = vmul.f32 1.0, %v5191
        %v5193 = vrcp.pop %v3877
        %v5194 = vmul.f32 %v3877, %v5193
        %v5195 = vsub.f32 1.0, %v5194
        %v5196 = vmul.f32 %v5193, %v5195
        %v5197 = vadd.f32 %v5193, %v5196
        %vm5198 = vweird.f32 %v3877
        %vm5199 = vweird.f32 %v5193
        %vm5200 = vmor %vm5198, %vm5199
        %v5201 = vsel %vm5200, %v5193, %v5197
        %v5202 = vand.u32 2147483647, %v3877
        %vm5203 = vcmp.eq.f32.partialorder %v5202, 8.507059e+37
        %v5204 = vand.u32 %v3877, 2147483648
        %v5205 = vor.u32 1.1754944e-38, %v5204
        %v5206 = vsel %vm5203, %v5205, %v5201
        %v5207 = vmul.f32 1.0, %v5206
        %v5208 = vrcp.pop %v3878
        %v5209 = vmul.f32 %v3878, %v5208
        %v5210 = vsub.f32 1.0, %v5209
        %v5211 = vmul.f32 %v5208, %v5210
        %v5212 = vadd.f32 %v5208, %v5211
        %vm5213 = vweird.f32 %v3878
        %vm5214 = vweird.f32 %v5208
        %vm5215 = vmor %vm5213, %vm5214
        %v5216 = vsel %vm5215, %v5208, %v5212
        %v5217 = vand.u32 2147483647, %v3878
        %vm5218 = vcmp.eq.f32.partialorder %v5217, 8.507059e+37
        %v5219 = vand.u32 %v3878, 2147483648
        %v5220 = vor.u32 1.1754944e-38, %v5219
        %v5221 = vsel %vm5218, %v5220, %v5216
        %v5222 = vmul.f32 1.0, %v5221
        %v5223 = vrcp.pop %v3879
        %v5224 = vmul.f32 %v3879, %v5223
        %v5225 = vsub.f32 1.0, %v5224
        %v5226 = vmul.f32 %v5223, %v5225
        %v5227 = vadd.f32 %v5223, %v5226
        %vm5228 = vweird.f32 %v3879
        %vm5229 = vweird.f32 %v5223
        %vm5230 = vmor %vm5228, %vm5229
        %v5231 = vsel %vm5230, %v5223, %v5227
        %v5232 = vand.u32 2147483647, %v3879
        %vm5233 = vcmp.eq.f32.partialorder %v5232, 8.507059e+37
        %v5234 = vand.u32 %v3879, 2147483648
        %v5235 = vor.u32 1.1754944e-38, %v5234
        %v5236 = vsel %vm5233, %v5235, %v5231
        %v5237 = vmul.f32 1.0, %v5236
        %v5238 = vrcp.pop %v3880
        %v5239 = vmul.f32 %v3880, %v5238
        %v5240 = vsub.f32 1.0, %v5239
        %v5241 = vmul.f32 %v5238, %v5240
        %v5242 = vadd.f32 %v5238, %v5241
        %vm5243 = vweird.f32 %v3880
        %vm5244 = vweird.f32 %v5238
        %vm5245 = vmor %vm5243, %vm5244
        %v5246 = vsel %vm5245, %v5238, %v5242
        %v5247 = vand.u32 2147483647, %v3880
        %vm5248 = vcmp.eq.f32.partialorder %v5247, 8.507059e+37
        %v5249 = vand.u32 %v3880, 2147483648
        %v5250 = vor.u32 1.1754944e-38, %v5249
        %v5251 = vsel %vm5248, %v5250, %v5246
        %v5252 = vmul.f32 1.0, %v5251
        %v5253 = vrcp.pop %v3881
        %v5254 = vmul.f32 %v3881, %v5253
        %v5255 = vsub.f32 1.0, %v5254
        %v5256 = vmul.f32 %v5253, %v5255
        %v5257 = vadd.f32 %v5253, %v5256
        %vm5258 = vweird.f32 %v3881
        %vm5259 = vweird.f32 %v5253
        %vm5260 = vmor %vm5258, %vm5259
        %v5261 = vsel %vm5260, %v5253, %v5257
        %v5262 = vand.u32 2147483647, %v3881
        %vm5263 = vcmp.eq.f32.partialorder %v5262, 8.507059e+37
        %v5264 = vand.u32 %v3881, 2147483648
        %v5265 = vor.u32 1.1754944e-38, %v5264
        %v5266 = vsel %vm5263, %v5265, %v5261
        %v5267 = vmul.f32 1.0, %v5266
        %v5268 = vrcp.pop %v3882
        %v5269 = vmul.f32 %v3882, %v5268
        %v5270 = vsub.f32 1.0, %v5269
        %v5271 = vmul.f32 %v5268, %v5270
        %v5272 = vadd.f32 %v5268, %v5271
        %vm5273 = vweird.f32 %v3882
        %vm5274 = vweird.f32 %v5268
        %vm5275 = vmor %vm5273, %vm5274
        %v5276 = vsel %vm5275, %v5268, %v5272
        %v5277 = vand.u32 2147483647, %v3882
        %vm5278 = vcmp.eq.f32.partialorder %v5277, 8.507059e+37
        %v5279 = vand.u32 %v3882, 2147483648
        %v5280 = vor.u32 1.1754944e-38, %v5279
        %v5281 = vsel %vm5278, %v5280, %v5276
        %v5282 = vmul.f32 1.0, %v5281
        %v5283 = vrcp.pop %v3883
        %v5284 = vmul.f32 %v3883, %v5283
        %v5285 = vsub.f32 1.0, %v5284
        %v5286 = vmul.f32 %v5283, %v5285
        %v5287 = vadd.f32 %v5283, %v5286
        %vm5288 = vweird.f32 %v3883
        %vm5289 = vweird.f32 %v5283
        %vm5290 = vmor %vm5288, %vm5289
        %v5291 = vsel %vm5290, %v5283, %v5287
        %v5292 = vand.u32 2147483647, %v3883
        %vm5293 = vcmp.eq.f32.partialorder %v5292, 8.507059e+37
        %v5294 = vand.u32 %v3883, 2147483648
        %v5295 = vor.u32 1.1754944e-38, %v5294
        %v5296 = vsel %vm5293, %v5295, %v5291
        %v5297 = vmul.f32 1.0, %v5296
        %v5298 = vrcp.pop %v3884
        %v5299 = vmul.f32 %v3884, %v5298
        %v5300 = vsub.f32 1.0, %v5299
        %v5301 = vmul.f32 %v5298, %v5300
        %v5302 = vadd.f32 %v5298, %v5301
        %vm5303 = vweird.f32 %v3884
        %vm5304 = vweird.f32 %v5298
        %vm5305 = vmor %vm5303, %vm5304
        %v5306 = vsel %vm5305, %v5298, %v5302
        %v5307 = vand.u32 2147483647, %v3884
        %vm5308 = vcmp.eq.f32.partialorder %v5307, 8.507059e+37
        %v5309 = vand.u32 %v3884, 2147483648
        %v5310 = vor.u32 1.1754944e-38, %v5309
        %v5311 = vsel %vm5308, %v5310, %v5306
        %v5312 = vmul.f32 1.0, %v5311
        %v5313 = vrcp.pop %v3885
        %v5314 = vmul.f32 %v3885, %v5313
        %v5315 = vsub.f32 1.0, %v5314
        %v5316 = vmul.f32 %v5313, %v5315
        %v5317 = vadd.f32 %v5313, %v5316
        %vm5318 = vweird.f32 %v3885
        %vm5319 = vweird.f32 %v5313
        %vm5320 = vmor %vm5318, %vm5319
        %v5321 = vsel %vm5320, %v5313, %v5317
        %v5322 = vand.u32 2147483647, %v3885
        %vm5323 = vcmp.eq.f32.partialorder %v5322, 8.507059e+37
        %v5324 = vand.u32 %v3885, 2147483648
        %v5325 = vor.u32 1.1754944e-38, %v5324
        %v5326 = vsel %vm5323, %v5325, %v5321
        %v5327 = vmul.f32 1.0, %v5326
        %v5328 = vrcp.pop %v3886
        %v5329 = vmul.f32 %v3886, %v5328
        %v5330 = vsub.f32 1.0, %v5329
        %v5331 = vmul.f32 %v5328, %v5330
        %v5332 = vadd.f32 %v5328, %v5331
        %vm5333 = vweird.f32 %v3886
        %vm5334 = vweird.f32 %v5328
        %vm5335 = vmor %vm5333, %vm5334
        %v5336 = vsel %vm5335, %v5328, %v5332
        %v5337 = vand.u32 2147483647, %v3886
        %vm5338 = vcmp.eq.f32.partialorder %v5337, 8.507059e+37
        %v5339 = vand.u32 %v3886, 2147483648
        %v5340 = vor.u32 1.1754944e-38, %v5339
        %v5341 = vsel %vm5338, %v5340, %v5336
        %v5342 = vmul.f32 1.0, %v5341
        %v5343 = vrcp.pop %v3887
        %v5344 = vmul.f32 %v3887, %v5343
        %v5345 = vsub.f32 1.0, %v5344
        %v5346 = vmul.f32 %v5343, %v5345
        %v5347 = vadd.f32 %v5343, %v5346
        %vm5348 = vweird.f32 %v3887
        %vm5349 = vweird.f32 %v5343
        %vm5350 = vmor %vm5348, %vm5349
        %v5351 = vsel %vm5350, %v5343, %v5347
        %v5352 = vand.u32 2147483647, %v3887
        %vm5353 = vcmp.eq.f32.partialorder %v5352, 8.507059e+37
        %v5354 = vand.u32 %v3887, 2147483648
        %v5355 = vor.u32 1.1754944e-38, %v5354
        %v5356 = vsel %vm5353, %v5355, %v5351
        %v5357 = vmul.f32 1.0, %v5356
        %v5358 = vrcp.pop %v3888
        %v5359 = vmul.f32 %v3888, %v5358
        %v5360 = vsub.f32 1.0, %v5359
        %v5361 = vmul.f32 %v5358, %v5360
        %v5362 = vadd.f32 %v5358, %v5361
        %vm5363 = vweird.f32 %v3888
        %vm5364 = vweird.f32 %v5358
        %vm5365 = vmor %vm5363, %vm5364
        %v5366 = vsel %vm5365, %v5358, %v5362
        %v5367 = vand.u32 2147483647, %v3888
        %vm5368 = vcmp.eq.f32.partialorder %v5367, 8.507059e+37
        %v5369 = vand.u32 %v3888, 2147483648
        %v5370 = vor.u32 1.1754944e-38, %v5369
        %v5371 = vsel %vm5368, %v5370, %v5366
        %v5372 = vmul.f32 1.0, %v5371
        %v5373 = vrcp.pop %v3889
        %v5374 = vmul.f32 %v3889, %v5373
        %v5375 = vsub.f32 1.0, %v5374
        %v5376 = vmul.f32 %v5373, %v5375
        %v5377 = vadd.f32 %v5373, %v5376
        %vm5378 = vweird.f32 %v3889
        %vm5379 = vweird.f32 %v5373
        %vm5380 = vmor %vm5378, %vm5379
        %v5381 = vsel %vm5380, %v5373, %v5377
        %v5382 = vand.u32 2147483647, %v3889
        %vm5383 = vcmp.eq.f32.partialorder %v5382, 8.507059e+37
        %v5384 = vand.u32 %v3889, 2147483648
        %v5385 = vor.u32 1.1754944e-38, %v5384
        %v5386 = vsel %vm5383, %v5385, %v5381
        %v5387 = vmul.f32 1.0, %v5386
        %v5388 = vrcp.pop %v3890
        %v5389 = vmul.f32 %v3890, %v5388
        %v5390 = vsub.f32 1.0, %v5389
        %v5391 = vmul.f32 %v5388, %v5390
        %v5392 = vadd.f32 %v5388, %v5391
        %vm5393 = vweird.f32 %v3890
        %vm5394 = vweird.f32 %v5388
        %vm5395 = vmor %vm5393, %vm5394
        %v5396 = vsel %vm5395, %v5388, %v5392
        %v5397 = vand.u32 2147483647, %v3890
        %vm5398 = vcmp.eq.f32.partialorder %v5397, 8.507059e+37
        %v5399 = vand.u32 %v3890, 2147483648
        %v5400 = vor.u32 1.1754944e-38, %v5399
        %v5401 = vsel %vm5398, %v5400, %v5396
        %v5402 = vmul.f32 1.0, %v5401
        %v5403 = vrcp.pop %v3891
        %v5404 = vmul.f32 %v3891, %v5403
        %v5405 = vsub.f32 1.0, %v5404
        %v5406 = vmul.f32 %v5403, %v5405
        %v5407 = vadd.f32 %v5403, %v5406
        %vm5408 = vweird.f32 %v3891
        %vm5409 = vweird.f32 %v5403
        %vm5410 = vmor %vm5408, %vm5409
        %v5411 = vsel %vm5410, %v5403, %v5407
        %v5412 = vand.u32 2147483647, %v3891
        %vm5413 = vcmp.eq.f32.partialorder %v5412, 8.507059e+37
        %v5414 = vand.u32 %v3891, 2147483648
        %v5415 = vor.u32 1.1754944e-38, %v5414
        %v5416 = vsel %vm5413, %v5415, %v5411
        %v5417 = vmul.f32 1.0, %v5416
        %v5418 = vrcp.pop %v3892
        %v5419 = vmul.f32 %v3892, %v5418
        %v5420 = vsub.f32 1.0, %v5419
        %v5421 = vmul.f32 %v5418, %v5420
        %v5422 = vadd.f32 %v5418, %v5421
        %vm5423 = vweird.f32 %v3892
        %vm5424 = vweird.f32 %v5418
        %vm5425 = vmor %vm5423, %vm5424
        %v5426 = vsel %vm5425, %v5418, %v5422
        %v5427 = vand.u32 2147483647, %v3892
        %vm5428 = vcmp.eq.f32.partialorder %v5427, 8.507059e+37
        %v5429 = vand.u32 %v3892, 2147483648
        %v5430 = vor.u32 1.1754944e-38, %v5429
        %v5431 = vsel %vm5428, %v5430, %v5426
        %v5432 = vmul.f32 1.0, %v5431
        %v5433 = vrcp.pop %v3893
        %v5434 = vmul.f32 %v3893, %v5433
        %v5435 = vsub.f32 1.0, %v5434
        %v5436 = vmul.f32 %v5433, %v5435
        %v5437 = vadd.f32 %v5433, %v5436
        %vm5438 = vweird.f32 %v3893
        %vm5439 = vweird.f32 %v5433
        %vm5440 = vmor %vm5438, %vm5439
        %v5441 = vsel %vm5440, %v5433, %v5437
        %v5442 = vand.u32 2147483647, %v3893
        %vm5443 = vcmp.eq.f32.partialorder %v5442, 8.507059e+37
        %v5444 = vand.u32 %v3893, 2147483648
        %v5445 = vor.u32 1.1754944e-38, %v5444
        %v5446 = vsel %vm5443, %v5445, %v5441
        %v5447 = vmul.f32 1.0, %v5446
        %v5448 = vrcp.pop %v3894
        %v5449 = vmul.f32 %v3894, %v5448
        %v5450 = vsub.f32 1.0, %v5449
        %v5451 = vmul.f32 %v5448, %v5450
        %v5452 = vadd.f32 %v5448, %v5451
        %vm5453 = vweird.f32 %v3894
        %vm5454 = vweird.f32 %v5448
        %vm5455 = vmor %vm5453, %vm5454
        %v5456 = vsel %vm5455, %v5448, %v5452
        %v5457 = vand.u32 2147483647, %v3894
        %vm5458 = vcmp.eq.f32.partialorder %v5457, 8.507059e+37
        %v5459 = vand.u32 %v3894, 2147483648
        %v5460 = vor.u32 1.1754944e-38, %v5459
        %v5461 = vsel %vm5458, %v5460, %v5456
        %v5462 = vmul.f32 1.0, %v5461
        %v5463 = vrcp.pop %v3895
        %v5464 = vmul.f32 %v3895, %v5463
        %v5465 = vsub.f32 1.0, %v5464
        %v5466 = vmul.f32 %v5463, %v5465
        %v5467 = vadd.f32 %v5463, %v5466
        %vm5468 = vweird.f32 %v3895
        %vm5469 = vweird.f32 %v5463
        %vm5470 = vmor %vm5468, %vm5469
        %v5471 = vsel %vm5470, %v5463, %v5467
        %v5472 = vand.u32 2147483647, %v3895
        %vm5473 = vcmp.eq.f32.partialorder %v5472, 8.507059e+37
        %v5474 = vand.u32 %v3895, 2147483648
        %v5475 = vor.u32 1.1754944e-38, %v5474
        %v5476 = vsel %vm5473, %v5475, %v5471
        %v5477 = vmul.f32 1.0, %v5476
        %v5478 = vrcp.pop %v3896
        %v5479 = vmul.f32 %v3896, %v5478
        %v5480 = vsub.f32 1.0, %v5479
        %v5481 = vmul.f32 %v5478, %v5480
        %v5482 = vadd.f32 %v5478, %v5481
        %vm5483 = vweird.f32 %v3896
        %vm5484 = vweird.f32 %v5478
        %vm5485 = vmor %vm5483, %vm5484
        %v5486 = vsel %vm5485, %v5478, %v5482
        %v5487 = vand.u32 2147483647, %v3896
        %vm5488 = vcmp.eq.f32.partialorder %v5487, 8.507059e+37
        %v5489 = vand.u32 %v3896, 2147483648
        %v5490 = vor.u32 1.1754944e-38, %v5489
        %v5491 = vsel %vm5488, %v5490, %v5486
        %v5492 = vmul.f32 1.0, %v5491
        %v5493 = vrcp.pop %v3897
        %v5494 = vmul.f32 %v3897, %v5493
        %v5495 = vsub.f32 1.0, %v5494
        %v5496 = vmul.f32 %v5493, %v5495
        %v5497 = vadd.f32 %v5493, %v5496
        %vm5498 = vweird.f32 %v3897
        %vm5499 = vweird.f32 %v5493
        %vm5500 = vmor %vm5498, %vm5499
        %v5501 = vsel %vm5500, %v5493, %v5497
        %v5502 = vand.u32 2147483647, %v3897
        %vm5503 = vcmp.eq.f32.partialorder %v5502, 8.507059e+37
        %v5504 = vand.u32 %v3897, 2147483648
        %v5505 = vor.u32 1.1754944e-38, %v5504
        %v5506 = vsel %vm5503, %v5505, %v5501
        %v5507 = vmul.f32 1.0, %v5506
        %v5508 = vrcp.pop %v3898
        %v5509 = vmul.f32 %v3898, %v5508
        %v5510 = vsub.f32 1.0, %v5509
        %v5511 = vmul.f32 %v5508, %v5510
        %v5512 = vadd.f32 %v5508, %v5511
        %vm5513 = vweird.f32 %v3898
        %vm5514 = vweird.f32 %v5508
        %vm5515 = vmor %vm5513, %vm5514
        %v5516 = vsel %vm5515, %v5508, %v5512
        %v5517 = vand.u32 2147483647, %v3898
        %vm5518 = vcmp.eq.f32.partialorder %v5517, 8.507059e+37
        %v5519 = vand.u32 %v3898, 2147483648
        %v5520 = vor.u32 1.1754944e-38, %v5519
        %v5521 = vsel %vm5518, %v5520, %v5516
        %v5522 = vmul.f32 1.0, %v5521
        %v5523 = vrcp.pop %v3899
        %v5524 = vmul.f32 %v3899, %v5523
        %v5525 = vsub.f32 1.0, %v5524
        %v5526 = vmul.f32 %v5523, %v5525
        %v5527 = vadd.f32 %v5523, %v5526
        %vm5528 = vweird.f32 %v3899
        %vm5529 = vweird.f32 %v5523
        %vm5530 = vmor %vm5528, %vm5529
        %v5531 = vsel %vm5530, %v5523, %v5527
        %v5532 = vand.u32 2147483647, %v3899
        %vm5533 = vcmp.eq.f32.partialorder %v5532, 8.507059e+37
        %v5534 = vand.u32 %v3899, 2147483648
        %v5535 = vor.u32 1.1754944e-38, %v5534
        %v5536 = vsel %vm5533, %v5535, %v5531
        %v5537 = vmul.f32 1.0, %v5536
        %v5538 = vrcp.pop %v3900
        %v5539 = vmul.f32 %v3900, %v5538
        %v5540 = vsub.f32 1.0, %v5539
        %v5541 = vmul.f32 %v5538, %v5540
        %v5542 = vadd.f32 %v5538, %v5541
        %vm5543 = vweird.f32 %v3900
        %vm5544 = vweird.f32 %v5538
        %vm5545 = vmor %vm5543, %vm5544
        %v5546 = vsel %vm5545, %v5538, %v5542
        %v5547 = vand.u32 2147483647, %v3900
        %vm5548 = vcmp.eq.f32.partialorder %v5547, 8.507059e+37
        %v5549 = vand.u32 %v3900, 2147483648
        %v5550 = vor.u32 1.1754944e-38, %v5549
        %v5551 = vsel %vm5548, %v5550, %v5546
        %v5552 = vmul.f32 1.0, %v5551
        %v5553 = vrcp.pop %v3901
        %v5554 = vmul.f32 %v3901, %v5553
        %v5555 = vsub.f32 1.0, %v5554
        %v5556 = vmul.f32 %v5553, %v5555
        %v5557 = vadd.f32 %v5553, %v5556
        %vm5558 = vweird.f32 %v3901
        %vm5559 = vweird.f32 %v5553
        %vm5560 = vmor %vm5558, %vm5559
        %v5561 = vsel %vm5560, %v5553, %v5557
        %v5562 = vand.u32 2147483647, %v3901
        %vm5563 = vcmp.eq.f32.partialorder %v5562, 8.507059e+37
        %v5564 = vand.u32 %v3901, 2147483648
        %v5565 = vor.u32 1.1754944e-38, %v5564
        %v5566 = vsel %vm5563, %v5565, %v5561
        %v5567 = vmul.f32 1.0, %v5566
        %v5568 = vrcp.pop %v3902
        %v5569 = vmul.f32 %v3902, %v5568
        %v5570 = vsub.f32 1.0, %v5569
        %v5571 = vmul.f32 %v5568, %v5570
        %v5572 = vadd.f32 %v5568, %v5571
        %vm5573 = vweird.f32 %v3902
        %vm5574 = vweird.f32 %v5568
        %vm5575 = vmor %vm5573, %vm5574
        %v5576 = vsel %vm5575, %v5568, %v5572
        %v5577 = vand.u32 2147483647, %v3902
        %vm5578 = vcmp.eq.f32.partialorder %v5577, 8.507059e+37
        %v5579 = vand.u32 %v3902, 2147483648
        %v5580 = vor.u32 1.1754944e-38, %v5579
        %v5581 = vsel %vm5578, %v5580, %v5576
        %v5582 = vmul.f32 1.0, %v5581
        %v5583 = vrcp.pop %v3903
        %v5584 = vmul.f32 %v3903, %v5583
        %v5585 = vsub.f32 1.0, %v5584
        %v5586 = vmul.f32 %v5583, %v5585
        %v5587 = vadd.f32 %v5583, %v5586
        %vm5588 = vweird.f32 %v3903
        %vm5589 = vweird.f32 %v5583
        %vm5590 = vmor %vm5588, %vm5589
        %v5591 = vsel %vm5590, %v5583, %v5587
        %v5592 = vand.u32 2147483647, %v3903
        %vm5593 = vcmp.eq.f32.partialorder %v5592, 8.507059e+37
        %v5594 = vand.u32 %v3903, 2147483648
        %v5595 = vor.u32 1.1754944e-38, %v5594
        %v5596 = vsel %vm5593, %v5595, %v5591
        %v5597 = vmul.f32 1.0, %v5596
        %v5598 = vrcp.pop %v3904
        %v5599 = vmul.f32 %v3904, %v5598
        %v5600 = vsub.f32 1.0, %v5599
        %v5601 = vmul.f32 %v5598, %v5600
        %v5602 = vadd.f32 %v5598, %v5601
        %vm5603 = vweird.f32 %v3904
        %vm5604 = vweird.f32 %v5598
        %vm5605 = vmor %vm5603, %vm5604
        %v5606 = vsel %vm5605, %v5598, %v5602
        %v5607 = vand.u32 2147483647, %v3904
        %vm5608 = vcmp.eq.f32.partialorder %v5607, 8.507059e+37
        %v5609 = vand.u32 %v3904, 2147483648
        %v5610 = vor.u32 1.1754944e-38, %v5609
        %v5611 = vsel %vm5608, %v5610, %v5606
        %v5612 = vmul.f32 1.0, %v5611
        %v5613 = vrcp.pop %v3905
        %v5614 = vmul.f32 %v3905, %v5613
        %v5615 = vsub.f32 1.0, %v5614
        %v5616 = vmul.f32 %v5613, %v5615
        %v5617 = vadd.f32 %v5613, %v5616
        %vm5618 = vweird.f32 %v3905
        %vm5619 = vweird.f32 %v5613
        %vm5620 = vmor %vm5618, %vm5619
        %v5621 = vsel %vm5620, %v5613, %v5617
        %v5622 = vand.u32 2147483647, %v3905
        %vm5623 = vcmp.eq.f32.partialorder %v5622, 8.507059e+37
        %v5624 = vand.u32 %v3905, 2147483648
        %v5625 = vor.u32 1.1754944e-38, %v5624
        %v5626 = vsel %vm5623, %v5625, %v5621
        %v5627 = vmul.f32 1.0, %v5626
        %v5628 = vrcp.pop %v3906
        %v5629 = vmul.f32 %v3906, %v5628
        %v5630 = vsub.f32 1.0, %v5629
        %v5631 = vmul.f32 %v5628, %v5630
        %v5632 = vadd.f32 %v5628, %v5631
        %vm5633 = vweird.f32 %v3906
        %vm5634 = vweird.f32 %v5628
        %vm5635 = vmor %vm5633, %vm5634
        %v5636 = vsel %vm5635, %v5628, %v5632
        %v5637 = vand.u32 2147483647, %v3906
        %vm5638 = vcmp.eq.f32.partialorder %v5637, 8.507059e+37
        %v5639 = vand.u32 %v3906, 2147483648
        %v5640 = vor.u32 1.1754944e-38, %v5639
        %v5641 = vsel %vm5638, %v5640, %v5636
        %v5642 = vmul.f32 1.0, %v5641
        %v5643 = vrcp.pop %v3907
        %v5644 = vmul.f32 %v3907, %v5643
        %v5645 = vsub.f32 1.0, %v5644
        %v5646 = vmul.f32 %v5643, %v5645
        %v5647 = vadd.f32 %v5643, %v5646
        %vm5648 = vweird.f32 %v3907
        %vm5649 = vweird.f32 %v5643
        %vm5650 = vmor %vm5648, %vm5649
        %v5651 = vsel %vm5650, %v5643, %v5647
        %v5652 = vand.u32 2147483647, %v3907
        %vm5653 = vcmp.eq.f32.partialorder %v5652, 8.507059e+37
        %v5654 = vand.u32 %v3907, 2147483648
        %v5655 = vor.u32 1.1754944e-38, %v5654
        %v5656 = vsel %vm5653, %v5655, %v5651
        %v5657 = vmul.f32 1.0, %v5656
        %v5658 = vrcp.pop %v3908
        %v5659 = vmul.f32 %v3908, %v5658
        %v5660 = vsub.f32 1.0, %v5659
        %v5661 = vmul.f32 %v5658, %v5660
        %v5662 = vadd.f32 %v5658, %v5661
        %vm5663 = vweird.f32 %v3908
        %vm5664 = vweird.f32 %v5658
        %vm5665 = vmor %vm5663, %vm5664
        %v5666 = vsel %vm5665, %v5658, %v5662
        %v5667 = vand.u32 2147483647, %v3908
        %vm5668 = vcmp.eq.f32.partialorder %v5667, 8.507059e+37
        %v5669 = vand.u32 %v3908, 2147483648
        %v5670 = vor.u32 1.1754944e-38, %v5669
        %v5671 = vsel %vm5668, %v5670, %v5666
        %v5672 = vmul.f32 1.0, %v5671
        %v5673 = vrcp.pop %v3909
        %v5674 = vmul.f32 %v3909, %v5673
        %v5675 = vsub.f32 1.0, %v5674
        %v5676 = vmul.f32 %v5673, %v5675
        %v5677 = vadd.f32 %v5673, %v5676
        %vm5678 = vweird.f32 %v3909
        %vm5679 = vweird.f32 %v5673
        %vm5680 = vmor %vm5678, %vm5679
        %v5681 = vsel %vm5680, %v5673, %v5677
        %v5682 = vand.u32 2147483647, %v3909
        %vm5683 = vcmp.eq.f32.partialorder %v5682, 8.507059e+37
        %v5684 = vand.u32 %v3909, 2147483648
        %v5685 = vor.u32 1.1754944e-38, %v5684
        %v5686 = vsel %vm5683, %v5685, %v5681
        %v5687 = vmul.f32 1.0, %v5686
        %v5688 = vrcp.pop %v3910
        %v5689 = vmul.f32 %v3910, %v5688
        %v5690 = vsub.f32 1.0, %v5689
        %v5691 = vmul.f32 %v5688, %v5690
        %v5692 = vadd.f32 %v5688, %v5691
        %vm5693 = vweird.f32 %v3910
        %vm5694 = vweird.f32 %v5688
        %vm5695 = vmor %vm5693, %vm5694
        %v5696 = vsel %vm5695, %v5688, %v5692
        %v5697 = vand.u32 2147483647, %v3910
        %vm5698 = vcmp.eq.f32.partialorder %v5697, 8.507059e+37
        %v5699 = vand.u32 %v3910, 2147483648
        %v5700 = vor.u32 1.1754944e-38, %v5699
        %v5701 = vsel %vm5698, %v5700, %v5696
        %v5702 = vmul.f32 1.0, %v5701
        %v5703 = vrcp.pop %v3911
        %v5704 = vmul.f32 %v3911, %v5703
        %v5705 = vsub.f32 1.0, %v5704
        %v5706 = vmul.f32 %v5703, %v5705
        %v5707 = vadd.f32 %v5703, %v5706
        %vm5708 = vweird.f32 %v3911
        %vm5709 = vweird.f32 %v5703
        %vm5710 = vmor %vm5708, %vm5709
        %v5711 = vsel %vm5710, %v5703, %v5707
        %v5712 = vand.u32 2147483647, %v3911
        %vm5713 = vcmp.eq.f32.partialorder %v5712, 8.507059e+37
        %v5714 = vand.u32 %v3911, 2147483648
        %v5715 = vor.u32 1.1754944e-38, %v5714
        %v5716 = vsel %vm5713, %v5715, %v5711
        %v5717 = vmul.f32 1.0, %v5716
        %v5718 = vrcp.pop %v3912
        %v5719 = vmul.f32 %v3912, %v5718
        %v5720 = vsub.f32 1.0, %v5719
        %v5721 = vmul.f32 %v5718, %v5720
        %v5722 = vadd.f32 %v5718, %v5721
        %vm5723 = vweird.f32 %v3912
        %vm5724 = vweird.f32 %v5718
        %vm5725 = vmor %vm5723, %vm5724
        %v5726 = vsel %vm5725, %v5718, %v5722
        %v5727 = vand.u32 2147483647, %v3912
        %vm5728 = vcmp.eq.f32.partialorder %v5727, 8.507059e+37
        %v5729 = vand.u32 %v3912, 2147483648
        %v5730 = vor.u32 1.1754944e-38, %v5729
        %v5731 = vsel %vm5728, %v5730, %v5726
        %v5732 = vmul.f32 1.0, %v5731
        %v5733 = vrcp.pop %v3913
        %v5734 = vmul.f32 %v3913, %v5733
        %v5735 = vsub.f32 1.0, %v5734
        %v5736 = vmul.f32 %v5733, %v5735
        %v5737 = vadd.f32 %v5733, %v5736
        %vm5738 = vweird.f32 %v3913
        %vm5739 = vweird.f32 %v5733
        %vm5740 = vmor %vm5738, %vm5739
        %v5741 = vsel %vm5740, %v5733, %v5737
        %v5742 = vand.u32 2147483647, %v3913
        %vm5743 = vcmp.eq.f32.partialorder %v5742, 8.507059e+37
        %v5744 = vand.u32 %v3913, 2147483648
        %v5745 = vor.u32 1.1754944e-38, %v5744
        %v5746 = vsel %vm5743, %v5745, %v5741
        %v5747 = vmul.f32 1.0, %v5746
        %v5748 = vrcp.pop %v3914
        %v5749 = vmul.f32 %v3914, %v5748
        %v5750 = vsub.f32 1.0, %v5749
        %v5751 = vmul.f32 %v5748, %v5750
        %v5752 = vadd.f32 %v5748, %v5751
        %vm5753 = vweird.f32 %v3914
        %vm5754 = vweird.f32 %v5748
        %vm5755 = vmor %vm5753, %vm5754
        %v5756 = vsel %vm5755, %v5748, %v5752
        %v5757 = vand.u32 2147483647, %v3914
        %vm5758 = vcmp.eq.f32.partialorder %v5757, 8.507059e+37
        %v5759 = vand.u32 %v3914, 2147483648
        %v5760 = vor.u32 1.1754944e-38, %v5759
        %v5761 = vsel %vm5758, %v5760, %v5756
        %v5762 = vmul.f32 1.0, %v5761
        %v5763 = vrcp.pop %v3915
        %v5764 = vmul.f32 %v3915, %v5763
        %v5765 = vsub.f32 1.0, %v5764
        %v5766 = vmul.f32 %v5763, %v5765
        %v5767 = vadd.f32 %v5763, %v5766
        %vm5768 = vweird.f32 %v3915
        %vm5769 = vweird.f32 %v5763
        %vm5770 = vmor %vm5768, %vm5769
        %v5771 = vsel %vm5770, %v5763, %v5767
        %v5772 = vand.u32 2147483647, %v3915
        %vm5773 = vcmp.eq.f32.partialorder %v5772, 8.507059e+37
        %v5774 = vand.u32 %v3915, 2147483648
        %v5775 = vor.u32 1.1754944e-38, %v5774
        %v5776 = vsel %vm5773, %v5775, %v5771
        %v5777 = vmul.f32 1.0, %v5776
        %v5778 = vrcp.pop %v3916
        %v5779 = vmul.f32 %v3916, %v5778
        %v5780 = vsub.f32 1.0, %v5779
        %v5781 = vmul.f32 %v5778, %v5780
        %v5782 = vadd.f32 %v5778, %v5781
        %vm5783 = vweird.f32 %v3916
        %vm5784 = vweird.f32 %v5778
        %vm5785 = vmor %vm5783, %vm5784
        %v5786 = vsel %vm5785, %v5778, %v5782
        %v5787 = vand.u32 2147483647, %v3916
        %vm5788 = vcmp.eq.f32.partialorder %v5787, 8.507059e+37
        %v5789 = vand.u32 %v3916, 2147483648
        %v5790 = vor.u32 1.1754944e-38, %v5789
        %v5791 = vsel %vm5788, %v5790, %v5786
        %v5792 = vmul.f32 1.0, %v5791
        %v5793 = vrcp.pop %v3917
        %v5794 = vmul.f32 %v3917, %v5793
        %v5795 = vsub.f32 1.0, %v5794
        %v5796 = vmul.f32 %v5793, %v5795
        %v5797 = vadd.f32 %v5793, %v5796
        %vm5798 = vweird.f32 %v3917
        %vm5799 = vweird.f32 %v5793
        %vm5800 = vmor %vm5798, %vm5799
        %v5801 = vsel %vm5800, %v5793, %v5797
        %v5802 = vand.u32 2147483647, %v3917
        %vm5803 = vcmp.eq.f32.partialorder %v5802, 8.507059e+37
        %v5804 = vand.u32 %v3917, 2147483648
        %v5805 = vor.u32 1.1754944e-38, %v5804
        %v5806 = vsel %vm5803, %v5805, %v5801
        %v5807 = vmul.f32 1.0, %v5806
        %v5808 = vrcp.pop %v3918
        %v5809 = vmul.f32 %v3918, %v5808
        %v5810 = vsub.f32 1.0, %v5809
        %v5811 = vmul.f32 %v5808, %v5810
        %v5812 = vadd.f32 %v5808, %v5811
        %vm5813 = vweird.f32 %v3918
        %vm5814 = vweird.f32 %v5808
        %vm5815 = vmor %vm5813, %vm5814
        %v5816 = vsel %vm5815, %v5808, %v5812
        %v5817 = vand.u32 2147483647, %v3918
        %vm5818 = vcmp.eq.f32.partialorder %v5817, 8.507059e+37
        %v5819 = vand.u32 %v3918, 2147483648
        %v5820 = vor.u32 1.1754944e-38, %v5819
        %v5821 = vsel %vm5818, %v5820, %v5816
        %v5822 = vmul.f32 1.0, %v5821
        %v5823 = vrcp.pop %v3919
        %v5824 = vmul.f32 %v3919, %v5823
        %v5825 = vsub.f32 1.0, %v5824
        %v5826 = vmul.f32 %v5823, %v5825
        %v5827 = vadd.f32 %v5823, %v5826
        %vm5828 = vweird.f32 %v3919
        %vm5829 = vweird.f32 %v5823
        %vm5830 = vmor %vm5828, %vm5829
        %v5831 = vsel %vm5830, %v5823, %v5827
        %v5832 = vand.u32 2147483647, %v3919
        %vm5833 = vcmp.eq.f32.partialorder %v5832, 8.507059e+37
        %v5834 = vand.u32 %v3919, 2147483648
        %v5835 = vor.u32 1.1754944e-38, %v5834
        %v5836 = vsel %vm5833, %v5835, %v5831
        %v5837 = vmul.f32 1.0, %v5836
        %v5838 = vrcp.pop %v3920
        %v5839 = vmul.f32 %v3920, %v5838
        %v5840 = vsub.f32 1.0, %v5839
        %v5841 = vmul.f32 %v5838, %v5840
        %v5842 = vadd.f32 %v5838, %v5841
        %vm5843 = vweird.f32 %v3920
        %vm5844 = vweird.f32 %v5838
        %vm5845 = vmor %vm5843, %vm5844
        %v5846 = vsel %vm5845, %v5838, %v5842
        %v5847 = vand.u32 2147483647, %v3920
        %vm5848 = vcmp.eq.f32.partialorder %v5847, 8.507059e+37
        %v5849 = vand.u32 %v3920, 2147483648
        %v5850 = vor.u32 1.1754944e-38, %v5849
        %v5851 = vsel %vm5848, %v5850, %v5846
        %v5852 = vmul.f32 1.0, %v5851
        %v5853 = vrcp.pop %v3921
        %v5854 = vmul.f32 %v3921, %v5853
        %v5855 = vsub.f32 1.0, %v5854
        %v5856 = vmul.f32 %v5853, %v5855
        %v5857 = vadd.f32 %v5853, %v5856
        %vm5858 = vweird.f32 %v3921
        %vm5859 = vweird.f32 %v5853
        %vm5860 = vmor %vm5858, %vm5859
        %v5861 = vsel %vm5860, %v5853, %v5857
        %v5862 = vand.u32 2147483647, %v3921
        %vm5863 = vcmp.eq.f32.partialorder %v5862, 8.507059e+37
        %v5864 = vand.u32 %v3921, 2147483648
        %v5865 = vor.u32 1.1754944e-38, %v5864
        %v5866 = vsel %vm5863, %v5865, %v5861
        %v5867 = vmul.f32 1.0, %v5866
        %v5868 = vrcp.pop %v3922
        %v5869 = vmul.f32 %v3922, %v5868
        %v5870 = vsub.f32 1.0, %v5869
        %v5871 = vmul.f32 %v5868, %v5870
        %v5872 = vadd.f32 %v5868, %v5871
        %vm5873 = vweird.f32 %v3922
        %vm5874 = vweird.f32 %v5868
        %vm5875 = vmor %vm5873, %vm5874
        %v5876 = vsel %vm5875, %v5868, %v5872
        %v5877 = vand.u32 2147483647, %v3922
        %vm5878 = vcmp.eq.f32.partialorder %v5877, 8.507059e+37
        %v5879 = vand.u32 %v3922, 2147483648
        %v5880 = vor.u32 1.1754944e-38, %v5879
        %v5881 = vsel %vm5878, %v5880, %v5876
        %v5882 = vmul.f32 1.0, %v5881
        %v5883 = vrcp.pop %v3923
        %v5884 = vmul.f32 %v3923, %v5883
        %v5885 = vsub.f32 1.0, %v5884
        %v5886 = vmul.f32 %v5883, %v5885
        %v5887 = vadd.f32 %v5883, %v5886
        %vm5888 = vweird.f32 %v3923
        %vm5889 = vweird.f32 %v5883
        %vm5890 = vmor %vm5888, %vm5889
        %v5891 = vsel %vm5890, %v5883, %v5887
        %v5892 = vand.u32 2147483647, %v3923
        %vm5893 = vcmp.eq.f32.partialorder %v5892, 8.507059e+37
        %v5894 = vand.u32 %v3923, 2147483648
        %v5895 = vor.u32 1.1754944e-38, %v5894
        %v5896 = vsel %vm5893, %v5895, %v5891
        %v5897 = vmul.f32 1.0, %v5896
        %v5898 = vrcp.pop %v3924
        %v5899 = vmul.f32 %v3924, %v5898
        %v5900 = vsub.f32 1.0, %v5899
        %v5901 = vmul.f32 %v5898, %v5900
        %v5902 = vadd.f32 %v5898, %v5901
        %vm5903 = vweird.f32 %v3924
        %vm5904 = vweird.f32 %v5898
        %vm5905 = vmor %vm5903, %vm5904
        %v5906 = vsel %vm5905, %v5898, %v5902
        %v5907 = vand.u32 2147483647, %v3924
        %vm5908 = vcmp.eq.f32.partialorder %v5907, 8.507059e+37
        %v5909 = vand.u32 %v3924, 2147483648
        %v5910 = vor.u32 1.1754944e-38, %v5909
        %v5911 = vsel %vm5908, %v5910, %v5906
        %v5912 = vmul.f32 1.0, %v5911
        %v5913 = vrcp.pop %v3925
        %v5914 = vmul.f32 %v3925, %v5913
        %v5915 = vsub.f32 1.0, %v5914
        %v5916 = vmul.f32 %v5913, %v5915
        %v5917 = vadd.f32 %v5913, %v5916
        %vm5918 = vweird.f32 %v3925
        %vm5919 = vweird.f32 %v5913
        %vm5920 = vmor %vm5918, %vm5919
        %v5921 = vsel %vm5920, %v5913, %v5917
        %v5922 = vand.u32 2147483647, %v3925
        %vm5923 = vcmp.eq.f32.partialorder %v5922, 8.507059e+37
        %v5924 = vand.u32 %v3925, 2147483648
        %v5925 = vor.u32 1.1754944e-38, %v5924
        %v5926 = vsel %vm5923, %v5925, %v5921
        %v5927 = vmul.f32 1.0, %v5926
        %v5928 = vrcp.pop %v3926
        %v5929 = vmul.f32 %v3926, %v5928
        %v5930 = vsub.f32 1.0, %v5929
        %v5931 = vmul.f32 %v5928, %v5930
        %v5932 = vadd.f32 %v5928, %v5931
        %vm5933 = vweird.f32 %v3926
        %vm5934 = vweird.f32 %v5928
        %vm5935 = vmor %vm5933, %vm5934
        %v5936 = vsel %vm5935, %v5928, %v5932
        %v5937 = vand.u32 2147483647, %v3926
        %vm5938 = vcmp.eq.f32.partialorder %v5937, 8.507059e+37
        %v5939 = vand.u32 %v3926, 2147483648
        %v5940 = vor.u32 1.1754944e-38, %v5939
        %v5941 = vsel %vm5938, %v5940, %v5936
        %v5942 = vmul.f32 1.0, %v5941
        %v5943 = vrcp.pop %v3927
        %v5944 = vmul.f32 %v3927, %v5943
        %v5945 = vsub.f32 1.0, %v5944
        %v5946 = vmul.f32 %v5943, %v5945
        %v5947 = vadd.f32 %v5943, %v5946
        %vm5948 = vweird.f32 %v3927
        %vm5949 = vweird.f32 %v5943
        %vm5950 = vmor %vm5948, %vm5949
        %v5951 = vsel %vm5950, %v5943, %v5947
        %v5952 = vand.u32 2147483647, %v3927
        %vm5953 = vcmp.eq.f32.partialorder %v5952, 8.507059e+37
        %v5954 = vand.u32 %v3927, 2147483648
        %v5955 = vor.u32 1.1754944e-38, %v5954
        %v5956 = vsel %vm5953, %v5955, %v5951
        %v5957 = vmul.f32 1.0, %v5956
        %v5958 = vrcp.pop %v3928
        %v5959 = vmul.f32 %v3928, %v5958
        %v5960 = vsub.f32 1.0, %v5959
        %v5961 = vmul.f32 %v5958, %v5960
        %v5962 = vadd.f32 %v5958, %v5961
        %vm5963 = vweird.f32 %v3928
        %vm5964 = vweird.f32 %v5958
        %vm5965 = vmor %vm5963, %vm5964
        %v5966 = vsel %vm5965, %v5958, %v5962
        %v5967 = vand.u32 2147483647, %v3928
        %vm5968 = vcmp.eq.f32.partialorder %v5967, 8.507059e+37
        %v5969 = vand.u32 %v3928, 2147483648
        %v5970 = vor.u32 1.1754944e-38, %v5969
        %v5971 = vsel %vm5968, %v5970, %v5966
        %v5972 = vmul.f32 1.0, %v5971
        %v5973 = vrcp.pop %v3929
        %v5974 = vmul.f32 %v3929, %v5973
        %v5975 = vsub.f32 1.0, %v5974
        %v5976 = vmul.f32 %v5973, %v5975
        %v5977 = vadd.f32 %v5973, %v5976
        %vm5978 = vweird.f32 %v3929
        %vm5979 = vweird.f32 %v5973
        %vm5980 = vmor %vm5978, %vm5979
        %v5981 = vsel %vm5980, %v5973, %v5977
        %v5982 = vand.u32 2147483647, %v3929
        %vm5983 = vcmp.eq.f32.partialorder %v5982, 8.507059e+37
        %v5984 = vand.u32 %v3929, 2147483648
        %v5985 = vor.u32 1.1754944e-38, %v5984
        %v5986 = vsel %vm5983, %v5985, %v5981
        %v5987 = vmul.f32 1.0, %v5986
        %v5988 = vrcp.pop %v3930
        %v5989 = vmul.f32 %v3930, %v5988
        %v5990 = vsub.f32 1.0, %v5989
        %v5991 = vmul.f32 %v5988, %v5990
        %v5992 = vadd.f32 %v5988, %v5991
        %vm5993 = vweird.f32 %v3930
        %vm5994 = vweird.f32 %v5988
        %vm5995 = vmor %vm5993, %vm5994
        %v5996 = vsel %vm5995, %v5988, %v5992
        %v5997 = vand.u32 2147483647, %v3930
        %vm5998 = vcmp.eq.f32.partialorder %v5997, 8.507059e+37
        %v5999 = vand.u32 %v3930, 2147483648
        %v6000 = vor.u32 1.1754944e-38, %v5999
        %v6001 = vsel %vm5998, %v6000, %v5996
        %v6002 = vmul.f32 1.0, %v6001
        %v6003 = vrcp.pop %v3931
        %v6004 = vmul.f32 %v3931, %v6003
        %v6005 = vsub.f32 1.0, %v6004
        %v6006 = vmul.f32 %v6003, %v6005
        %v6007 = vadd.f32 %v6003, %v6006
        %vm6008 = vweird.f32 %v3931
        %vm6009 = vweird.f32 %v6003
        %vm6010 = vmor %vm6008, %vm6009
        %v6011 = vsel %vm6010, %v6003, %v6007
        %v6012 = vand.u32 2147483647, %v3931
        %vm6013 = vcmp.eq.f32.partialorder %v6012, 8.507059e+37
        %v6014 = vand.u32 %v3931, 2147483648
        %v6015 = vor.u32 1.1754944e-38, %v6014
        %v6016 = vsel %vm6013, %v6015, %v6011
        %v6017 = vmul.f32 1.0, %v6016
        %v6018 = vrcp.pop %v3932
        %v6019 = vmul.f32 %v3932, %v6018
        %v6020 = vsub.f32 1.0, %v6019
        %v6021 = vmul.f32 %v6018, %v6020
        %v6022 = vadd.f32 %v6018, %v6021
        %vm6023 = vweird.f32 %v3932
        %vm6024 = vweird.f32 %v6018
        %vm6025 = vmor %vm6023, %vm6024
        %v6026 = vsel %vm6025, %v6018, %v6022
        %v6027 = vand.u32 2147483647, %v3932
        %vm6028 = vcmp.eq.f32.partialorder %v6027, 8.507059e+37
        %v6029 = vand.u32 %v3932, 2147483648
        %v6030 = vor.u32 1.1754944e-38, %v6029
        %v6031 = vsel %vm6028, %v6030, %v6026
        %v6032 = vmul.f32 1.0, %v6031
        %v6033 = vrcp.pop %v3933
        %v6034 = vmul.f32 %v3933, %v6033
        %v6035 = vsub.f32 1.0, %v6034
        %v6036 = vmul.f32 %v6033, %v6035
        %v6037 = vadd.f32 %v6033, %v6036
        %vm6038 = vweird.f32 %v3933
        %vm6039 = vweird.f32 %v6033
        %vm6040 = vmor %vm6038, %vm6039
        %v6041 = vsel %vm6040, %v6033, %v6037
        %v6042 = vand.u32 2147483647, %v3933
        %vm6043 = vcmp.eq.f32.partialorder %v6042, 8.507059e+37
        %v6044 = vand.u32 %v3933, 2147483648
        %v6045 = vor.u32 1.1754944e-38, %v6044
        %v6046 = vsel %vm6043, %v6045, %v6041
        %v6047 = vmul.f32 1.0, %v6046
        %v6048 = vrcp.pop %v3934
        %v6049 = vmul.f32 %v3934, %v6048
        %v6050 = vsub.f32 1.0, %v6049
        %v6051 = vmul.f32 %v6048, %v6050
        %v6052 = vadd.f32 %v6048, %v6051
        %vm6053 = vweird.f32 %v3934
        %vm6054 = vweird.f32 %v6048
        %vm6055 = vmor %vm6053, %vm6054
        %v6056 = vsel %vm6055, %v6048, %v6052
        %v6057 = vand.u32 2147483647, %v3934
        %vm6058 = vcmp.eq.f32.partialorder %v6057, 8.507059e+37
        %v6059 = vand.u32 %v3934, 2147483648
        %v6060 = vor.u32 1.1754944e-38, %v6059
        %v6061 = vsel %vm6058, %v6060, %v6056
        %v6062 = vmul.f32 1.0, %v6061
        %v6063 = vrcp.pop %v3935
        %v6064 = vmul.f32 %v3935, %v6063
        %v6065 = vsub.f32 1.0, %v6064
        %v6066 = vmul.f32 %v6063, %v6065
        %v6067 = vadd.f32 %v6063, %v6066
        %vm6068 = vweird.f32 %v3935
        %vm6069 = vweird.f32 %v6063
        %vm6070 = vmor %vm6068, %vm6069
        %v6071 = vsel %vm6070, %v6063, %v6067
        %v6072 = vand.u32 2147483647, %v3935
        %vm6073 = vcmp.eq.f32.partialorder %v6072, 8.507059e+37
        %v6074 = vand.u32 %v3935, 2147483648
        %v6075 = vor.u32 1.1754944e-38, %v6074
        %v6076 = vsel %vm6073, %v6075, %v6071
        %v6077 = vmul.f32 1.0, %v6076
        %v6078 = vrcp.pop %v3936
        %v6079 = vmul.f32 %v3936, %v6078
        %v6080 = vsub.f32 1.0, %v6079
        %v6081 = vmul.f32 %v6078, %v6080
        %v6082 = vadd.f32 %v6078, %v6081
        %vm6083 = vweird.f32 %v3936
        %vm6084 = vweird.f32 %v6078
        %vm6085 = vmor %vm6083, %vm6084
        %v6086 = vsel %vm6085, %v6078, %v6082
        %v6087 = vand.u32 2147483647, %v3936
        %vm6088 = vcmp.eq.f32.partialorder %v6087, 8.507059e+37
        %v6089 = vand.u32 %v3936, 2147483648
        %v6090 = vor.u32 1.1754944e-38, %v6089
        %v6091 = vsel %vm6088, %v6090, %v6086
        %v6092 = vmul.f32 1.0, %v6091
        %v6093 = vrcp.pop %v3937
        %v6094 = vmul.f32 %v3937, %v6093
        %v6095 = vsub.f32 1.0, %v6094
        %v6096 = vmul.f32 %v6093, %v6095
        %v6097 = vadd.f32 %v6093, %v6096
        %vm6098 = vweird.f32 %v3937
        %vm6099 = vweird.f32 %v6093
        %vm6100 = vmor %vm6098, %vm6099
        %v6101 = vsel %vm6100, %v6093, %v6097
        %v6102 = vand.u32 2147483647, %v3937
        %vm6103 = vcmp.eq.f32.partialorder %v6102, 8.507059e+37
        %v6104 = vand.u32 %v3937, 2147483648
        %v6105 = vor.u32 1.1754944e-38, %v6104
        %v6106 = vsel %vm6103, %v6105, %v6101
        %v6107 = vmul.f32 1.0, %v6106
        %v6108 = vrcp.pop %v3938
        %v6109 = vmul.f32 %v3938, %v6108
        %v6110 = vsub.f32 1.0, %v6109
        %v6111 = vmul.f32 %v6108, %v6110
        %v6112 = vadd.f32 %v6108, %v6111
        %vm6113 = vweird.f32 %v3938
        %vm6114 = vweird.f32 %v6108
        %vm6115 = vmor %vm6113, %vm6114
        %v6116 = vsel %vm6115, %v6108, %v6112
        %v6117 = vand.u32 2147483647, %v3938
        %vm6118 = vcmp.eq.f32.partialorder %v6117, 8.507059e+37
        %v6119 = vand.u32 %v3938, 2147483648
        %v6120 = vor.u32 1.1754944e-38, %v6119
        %v6121 = vsel %vm6118, %v6120, %v6116
        %v6122 = vmul.f32 1.0, %v6121
        %v6123 = vrcp.pop %v3939
        %v6124 = vmul.f32 %v3939, %v6123
        %v6125 = vsub.f32 1.0, %v6124
        %v6126 = vmul.f32 %v6123, %v6125
        %v6127 = vadd.f32 %v6123, %v6126
        %vm6128 = vweird.f32 %v3939
        %vm6129 = vweird.f32 %v6123
        %vm6130 = vmor %vm6128, %vm6129
        %v6131 = vsel %vm6130, %v6123, %v6127
        %v6132 = vand.u32 2147483647, %v3939
        %vm6133 = vcmp.eq.f32.partialorder %v6132, 8.507059e+37
        %v6134 = vand.u32 %v3939, 2147483648
        %v6135 = vor.u32 1.1754944e-38, %v6134
        %v6136 = vsel %vm6133, %v6135, %v6131
        %v6137 = vmul.f32 1.0, %v6136
        %v6138 = vrcp.pop %v3940
        %v6139 = vmul.f32 %v3940, %v6138
        %v6140 = vsub.f32 1.0, %v6139
        %v6141 = vmul.f32 %v6138, %v6140
        %v6142 = vadd.f32 %v6138, %v6141
        %vm6143 = vweird.f32 %v3940
        %vm6144 = vweird.f32 %v6138
        %vm6145 = vmor %vm6143, %vm6144
        %v6146 = vsel %vm6145, %v6138, %v6142
        %v6147 = vand.u32 2147483647, %v3940
        %vm6148 = vcmp.eq.f32.partialorder %v6147, 8.507059e+37
        %v6149 = vand.u32 %v3940, 2147483648
        %v6150 = vor.u32 1.1754944e-38, %v6149
        %v6151 = vsel %vm6148, %v6150, %v6146
        %v6152 = vmul.f32 1.0, %v6151
        %v6153 = vrcp.pop %v3941
        %v6154 = vmul.f32 %v3941, %v6153
        %v6155 = vsub.f32 1.0, %v6154
        %v6156 = vmul.f32 %v6153, %v6155
        %v6157 = vadd.f32 %v6153, %v6156
        %vm6158 = vweird.f32 %v3941
        %vm6159 = vweird.f32 %v6153
        %vm6160 = vmor %vm6158, %vm6159
        %v6161 = vsel %vm6160, %v6153, %v6157
        %v6162 = vand.u32 2147483647, %v3941
        %vm6163 = vcmp.eq.f32.partialorder %v6162, 8.507059e+37
        %v6164 = vand.u32 %v3941, 2147483648
        %v6165 = vor.u32 1.1754944e-38, %v6164
        %v6166 = vsel %vm6163, %v6165, %v6161
        %v6167 = vmul.f32 1.0, %v6166
        %v6168 = vrcp.pop %v3942
        %v6169 = vmul.f32 %v3942, %v6168
        %v6170 = vsub.f32 1.0, %v6169
        %v6171 = vmul.f32 %v6168, %v6170
        %v6172 = vadd.f32 %v6168, %v6171
        %vm6173 = vweird.f32 %v3942
        %vm6174 = vweird.f32 %v6168
        %vm6175 = vmor %vm6173, %vm6174
        %v6176 = vsel %vm6175, %v6168, %v6172
        %v6177 = vand.u32 2147483647, %v3942
        %vm6178 = vcmp.eq.f32.partialorder %v6177, 8.507059e+37
        %v6179 = vand.u32 %v3942, 2147483648
        %v6180 = vor.u32 1.1754944e-38, %v6179
        %v6181 = vsel %vm6178, %v6180, %v6176
        %v6182 = vmul.f32 1.0, %v6181
        %v6183 = vrcp.pop %v3943
        %v6184 = vmul.f32 %v3943, %v6183
        %v6185 = vsub.f32 1.0, %v6184
        %v6186 = vmul.f32 %v6183, %v6185
        %v6187 = vadd.f32 %v6183, %v6186
        %vm6188 = vweird.f32 %v3943
        %vm6189 = vweird.f32 %v6183
        %vm6190 = vmor %vm6188, %vm6189
        %v6191 = vsel %vm6190, %v6183, %v6187
        %v6192 = vand.u32 2147483647, %v3943
        %vm6193 = vcmp.eq.f32.partialorder %v6192, 8.507059e+37
        %v6194 = vand.u32 %v3943, 2147483648
        %v6195 = vor.u32 1.1754944e-38, %v6194
        %v6196 = vsel %vm6193, %v6195, %v6191
        %v6197 = vmul.f32 1.0, %v6196
        %v6198 = vrcp.pop %v3944
        %v6199 = vmul.f32 %v3944, %v6198
        %v6200 = vsub.f32 1.0, %v6199
        %v6201 = vmul.f32 %v6198, %v6200
        %v6202 = vadd.f32 %v6198, %v6201
        %vm6203 = vweird.f32 %v3944
        %vm6204 = vweird.f32 %v6198
        %vm6205 = vmor %vm6203, %vm6204
        %v6206 = vsel %vm6205, %v6198, %v6202
        %v6207 = vand.u32 2147483647, %v3944
        %vm6208 = vcmp.eq.f32.partialorder %v6207, 8.507059e+37
        %v6209 = vand.u32 %v3944, 2147483648
        %v6210 = vor.u32 1.1754944e-38, %v6209
        %v6211 = vsel %vm6208, %v6210, %v6206
        %v6212 = vmul.f32 1.0, %v6211
        %v6213 = vrcp.pop %v3945
        %v6214 = vmul.f32 %v3945, %v6213
        %v6215 = vsub.f32 1.0, %v6214
        %v6216 = vmul.f32 %v6213, %v6215
        %v6217 = vadd.f32 %v6213, %v6216
        %vm6218 = vweird.f32 %v3945
        %vm6219 = vweird.f32 %v6213
        %vm6220 = vmor %vm6218, %vm6219
        %v6221 = vsel %vm6220, %v6213, %v6217
        %v6222 = vand.u32 2147483647, %v3945
        %vm6223 = vcmp.eq.f32.partialorder %v6222, 8.507059e+37
        %v6224 = vand.u32 %v3945, 2147483648
        %v6225 = vor.u32 1.1754944e-38, %v6224
        %v6226 = vsel %vm6223, %v6225, %v6221
        %v6227 = vmul.f32 1.0, %v6226
        %v6228 = vrcp.pop %v3946
        %v6229 = vmul.f32 %v3946, %v6228
        %v6230 = vsub.f32 1.0, %v6229
        %v6231 = vmul.f32 %v6228, %v6230
        %v6232 = vadd.f32 %v6228, %v6231
        %vm6233 = vweird.f32 %v3946
        %vm6234 = vweird.f32 %v6228
        %vm6235 = vmor %vm6233, %vm6234
        %v6236 = vsel %vm6235, %v6228, %v6232
        %v6237 = vand.u32 2147483647, %v3946
        %vm6238 = vcmp.eq.f32.partialorder %v6237, 8.507059e+37
        %v6239 = vand.u32 %v3946, 2147483648
        %v6240 = vor.u32 1.1754944e-38, %v6239
        %v6241 = vsel %vm6238, %v6240, %v6236
        %v6242 = vmul.f32 1.0, %v6241
        %v6243 = vrcp.pop %v3947
        %v6244 = vmul.f32 %v3947, %v6243
        %v6245 = vsub.f32 1.0, %v6244
        %v6246 = vmul.f32 %v6243, %v6245
        %v6247 = vadd.f32 %v6243, %v6246
        %vm6248 = vweird.f32 %v3947
        %vm6249 = vweird.f32 %v6243
        %vm6250 = vmor %vm6248, %vm6249
        %v6251 = vsel %vm6250, %v6243, %v6247
        %v6252 = vand.u32 2147483647, %v3947
        %vm6253 = vcmp.eq.f32.partialorder %v6252, 8.507059e+37
        %v6254 = vand.u32 %v3947, 2147483648
        %v6255 = vor.u32 1.1754944e-38, %v6254
        %v6256 = vsel %vm6253, %v6255, %v6251
        %v6257 = vmul.f32 1.0, %v6256
        %v6258 = vld [vmem:[%s3] sm:$0xff]
        %v6259 = vld [vmem:[%s3 + $0x8] sm:$0xff]
        %v6260 = vld [vmem:[%s3 + $0x10] sm:$0xff]
        %v6261 = vld [vmem:[%s3 + $0x18] sm:$0xff]
        %v6262 = vld [vmem:[%s3 + $0x20] sm:$0xff]
        %v6263 = vld [vmem:[%s3 + $0x28] sm:$0xff]
        %v6264 = vld [vmem:[%s3 + $0x30] sm:$0xff]
        %v6265 = vld [vmem:[%s3 + $0x38] sm:$0xff]
        %v6266 = vld [vmem:[%s3 + $0x40] sm:$0xff]
        %v6267 = vld [vmem:[%s3 + $0x48] sm:$0xff]
        %v6268 = vld [vmem:[%s3 + $0x50] sm:$0xff]
        %v6269 = vld [vmem:[%s3 + $0x58] sm:$0xff]
        %v6270 = vld [vmem:[%s3 + $0x60] sm:$0xff]
        %v6271 = vld [vmem:[%s3 + $0x68] sm:$0xff]
        %v6272 = vld [vmem:[%s3 + $0x70] sm:$0xff]
        %v6273 = vld [vmem:[%s3 + $0x78] sm:$0xff]
        %v6274 = vld [vmem:[%s3 + $0x80] sm:$0xff]
        %v6275 = vld [vmem:[%s3 + $0x88] sm:$0xff]
        %v6276 = vld [vmem:[%s3 + $0x90] sm:$0xff]
        %v6277 = vld [vmem:[%s3 + $0x98] sm:$0xff]
        %v6278 = vld [vmem:[%s3 + $0xa0] sm:$0xff]
        %v6279 = vld [vmem:[%s3 + $0xa8] sm:$0xff]
        %v6280 = vld [vmem:[%s3 + $0xb0] sm:$0xff]
        %v6281 = vld [vmem:[%s3 + $0xb8] sm:$0xff]
        %v6282 = vld [vmem:[%s3 + $0xc0] sm:$0xff]
        %v6283 = vld [vmem:[%s3 + $0xc8] sm:$0xff]
        %v6284 = vld [vmem:[%s3 + $0xd0] sm:$0xff]
        %v6285 = vld [vmem:[%s3 + $0xd8] sm:$0xff]
        %v6286 = vld [vmem:[%s3 + $0xe0] sm:$0xff]
        %v6287 = vld [vmem:[%s3 + $0xe8] sm:$0xff]
        %v6288 = vld [vmem:[%s3 + $0xf0] sm:$0xff]
        %v6289 = vld [vmem:[%s3 + $0xf8] sm:$0xff]
        %v6290 = vld [vmem:[%s3 + $0x100] sm:$0xff]
        %v6291 = vld [vmem:[%s3 + $0x108] sm:$0xff]
        %v6292 = vld [vmem:[%s3 + $0x110] sm:$0xff]
        %v6293 = vld [vmem:[%s3 + $0x118] sm:$0xff]
        %v6294 = vld [vmem:[%s3 + $0x120] sm:$0xff]
        %v6295 = vld [vmem:[%s3 + $0x128] sm:$0xff]
        %v6296 = vld [vmem:[%s3 + $0x130] sm:$0xff]
        %v6297 = vld [vmem:[%s3 + $0x138] sm:$0xff]
        %v6298 = vld [vmem:[%s3 + $0x140] sm:$0xff]
        %v6299 = vld [vmem:[%s3 + $0x148] sm:$0xff]
        %v6300 = vld [vmem:[%s3 + $0x150] sm:$0xff]
        %v6301 = vld [vmem:[%s3 + $0x158] sm:$0xff]
        %v6302 = vld [vmem:[%s3 + $0x160] sm:$0xff]
        %v6303 = vld [vmem:[%s3 + $0x168] sm:$0xff]
        %v6304 = vld [vmem:[%s3 + $0x170] sm:$0xff]
        %v6305 = vld [vmem:[%s3 + $0x178] sm:$0xff]
        %v6306 = vld [vmem:[%s3 + $0x180] sm:$0xff]
        %v6307 = vld [vmem:[%s3 + $0x188] sm:$0xff]
        %v6308 = vld [vmem:[%s3 + $0x190] sm:$0xff]
        %v6309 = vld [vmem:[%s3 + $0x198] sm:$0xff]
        %v6310 = vld [vmem:[%s3 + $0x1a0] sm:$0xff]
        %v6311 = vld [vmem:[%s3 + $0x1a8] sm:$0xff]
        %v6312 = vld [vmem:[%s3 + $0x1b0] sm:$0xff]
        %v6313 = vld [vmem:[%s3 + $0x1b8] sm:$0xff]
        %v6314 = vld [vmem:[%s3 + $0x1c0] sm:$0xff]
        %v6315 = vld [vmem:[%s3 + $0x1c8] sm:$0xff]
        %v6316 = vld [vmem:[%s3 + $0x1d0] sm:$0xff]
        %v6317 = vld [vmem:[%s3 + $0x1d8] sm:$0xff]
        %v6318 = vld [vmem:[%s3 + $0x1e0] sm:$0xff]
        %v6319 = vld [vmem:[%s3 + $0x1e8] sm:$0xff]
        %v6320 = vld [vmem:[%s3 + $0x1f0] sm:$0xff]
        %v6321 = vld [vmem:[%s3 + $0x1f8] sm:$0xff]
        %v6322 = vld [vmem:[%s3 + $0x200] sm:$0xff]
        %v6323 = vld [vmem:[%s3 + $0x208] sm:$0xff]
        %v6324 = vld [vmem:[%s3 + $0x210] sm:$0xff]
        %v6325 = vld [vmem:[%s3 + $0x218] sm:$0xff]
        %v6326 = vld [vmem:[%s3 + $0x220] sm:$0xff]
        %v6327 = vld [vmem:[%s3 + $0x228] sm:$0xff]
        %v6328 = vld [vmem:[%s3 + $0x230] sm:$0xff]
        %v6329 = vld [vmem:[%s3 + $0x238] sm:$0xff]
        %v6330 = vld [vmem:[%s3 + $0x240] sm:$0xff]
        %v6331 = vld [vmem:[%s3 + $0x248] sm:$0xff]
        %v6332 = vld [vmem:[%s3 + $0x250] sm:$0xff]
        %v6333 = vld [vmem:[%s3 + $0x258] sm:$0xff]
        %v6334 = vld [vmem:[%s3 + $0x260] sm:$0xff]
        %v6335 = vld [vmem:[%s3 + $0x268] sm:$0xff]
        %v6336 = vld [vmem:[%s3 + $0x270] sm:$0xff]
        %v6337 = vld [vmem:[%s3 + $0x278] sm:$0xff]
        %v6338 = vld [vmem:[%s3 + $0x280] sm:$0xff]
        %v6339 = vld [vmem:[%s3 + $0x288] sm:$0xff]
        %v6340 = vld [vmem:[%s3 + $0x290] sm:$0xff]
        %v6341 = vld [vmem:[%s3 + $0x298] sm:$0xff]
        %v6342 = vld [vmem:[%s3 + $0x2a0] sm:$0xff]
        %v6343 = vld [vmem:[%s3 + $0x2a8] sm:$0xff]
        %v6344 = vld [vmem:[%s3 + $0x2b0] sm:$0xff]
        %v6345 = vld [vmem:[%s3 + $0x2b8] sm:$0xff]
        %v6346 = vld [vmem:[%s3 + $0x2c0] sm:$0xff]
        %v6347 = vld [vmem:[%s3 + $0x2c8] sm:$0xff]
        %v6348 = vld [vmem:[%s3 + $0x2d0] sm:$0xff]
        %v6349 = vld [vmem:[%s3 + $0x2d8] sm:$0xff]
        %v6350 = vld [vmem:[%s3 + $0x2e0] sm:$0xff]
        %v6351 = vld [vmem:[%s3 + $0x2e8] sm:$0xff]
        %v6352 = vld [vmem:[%s3 + $0x2f0] sm:$0xff]
        %v6353 = vld [vmem:[%s3 + $0x2f8] sm:$0xff]
        %v6354 = vld [vmem:[%s3 + $0x300] sm:$0xff]
        %v6355 = vld [vmem:[%s3 + $0x308] sm:$0xff]
        %v6356 = vld [vmem:[%s3 + $0x310] sm:$0xff]
        %v6357 = vld [vmem:[%s3 + $0x318] sm:$0xff]
        %v6358 = vld [vmem:[%s3 + $0x320] sm:$0xff]
        %v6359 = vld [vmem:[%s3 + $0x328] sm:$0xff]
        %v6360 = vld [vmem:[%s3 + $0x330] sm:$0xff]
        %v6361 = vld [vmem:[%s3 + $0x338] sm:$0xff]
        %v6362 = vld [vmem:[%s3 + $0x340] sm:$0xff]
        %v6363 = vld [vmem:[%s3 + $0x348] sm:$0xff]
        %v6364 = vld [vmem:[%s3 + $0x350] sm:$0xff]
        %v6365 = vld [vmem:[%s3 + $0x358] sm:$0xff]
        %v6366 = vld [vmem:[%s3 + $0x360] sm:$0xff]
        %v6367 = vld [vmem:[%s3 + $0x368] sm:$0xff]
        %v6368 = vld [vmem:[%s3 + $0x370] sm:$0xff]
        %v6369 = vld [vmem:[%s3 + $0x378] sm:$0xff]
        %v6370 = vld [vmem:[%s3 + $0x380] sm:$0xff]
        %v6371 = vld [vmem:[%s3 + $0x388] sm:$0xff]
        %v6372 = vld [vmem:[%s3 + $0x390] sm:$0xff]
        %v6373 = vld [vmem:[%s3 + $0x398] sm:$0xff]
        %v6374 = vld [vmem:[%s3 + $0x3a0] sm:$0xff]
        %v6375 = vld [vmem:[%s3 + $0x3a8] sm:$0xff]
        %v6376 = vld [vmem:[%s3 + $0x3b0] sm:$0xff]
        %v6377 = vld [vmem:[%s3 + $0x3b8] sm:$0xff]
        %v6378 = vld [vmem:[%s3 + $0x3c0] sm:$0xff]
        %v6379 = vld [vmem:[%s3 + $0x3c8] sm:$0xff]
        %v6380 = vld [vmem:[%s3 + $0x3d0] sm:$0xff]
        %v6381 = vld [vmem:[%s3 + $0x3d8] sm:$0xff]
        %v6382 = vld [vmem:[%s3 + $0x3e0] sm:$0xff]
        %v6383 = vld [vmem:[%s3 + $0x3e8] sm:$0xff]
        %v6384 = vld [vmem:[%s3 + $0x3f0] sm:$0xff]
        %v6385 = vld [vmem:[%s3 + $0x3f8] sm:$0xff]
        %v6386 = vld [vmem:[%s3 + $0x400] sm:$0xff]
        %v6387 = vld [vmem:[%s3 + $0x408] sm:$0xff]
        %v6388 = vld [vmem:[%s3 + $0x410] sm:$0xff]
        %v6389 = vld [vmem:[%s3 + $0x418] sm:$0xff]
        %v6390 = vld [vmem:[%s3 + $0x420] sm:$0xff]
        %v6391 = vld [vmem:[%s3 + $0x428] sm:$0xff]
        %v6392 = vld [vmem:[%s3 + $0x430] sm:$0xff]
        %v6393 = vld [vmem:[%s3 + $0x438] sm:$0xff]
        %v6394 = vld [vmem:[%s3 + $0x440] sm:$0xff]
        %v6395 = vld [vmem:[%s3 + $0x448] sm:$0xff]
        %v6396 = vld [vmem:[%s3 + $0x450] sm:$0xff]
        %v6397 = vld [vmem:[%s3 + $0x458] sm:$0xff]
        %v6398 = vld [vmem:[%s3 + $0x460] sm:$0xff]
        %v6399 = vld [vmem:[%s3 + $0x468] sm:$0xff]
        %v6400 = vld [vmem:[%s3 + $0x470] sm:$0xff]
        %v6401 = vld [vmem:[%s3 + $0x478] sm:$0xff]
        %v6402 = vld [vmem:[%s3 + $0x480] sm:$0xff]
        %v6403 = vld [vmem:[%s3 + $0x488] sm:$0xff]
        %v6404 = vld [vmem:[%s3 + $0x490] sm:$0xff]
        %v6405 = vld [vmem:[%s3 + $0x498] sm:$0xff]
        %v6406 = vld [vmem:[%s3 + $0x4a0] sm:$0xff]
        %v6407 = vld [vmem:[%s3 + $0x4a8] sm:$0xff]
        %v6408 = vld [vmem:[%s3 + $0x4b0] sm:$0xff]
        %v6409 = vld [vmem:[%s3 + $0x4b8] sm:$0xff]
        %v6410 = vld [vmem:[%s3 + $0x4c0] sm:$0xff]
        %v6411 = vld [vmem:[%s3 + $0x4c8] sm:$0xff]
        %v6412 = vld [vmem:[%s3 + $0x4d0] sm:$0xff]
        %v6413 = vld [vmem:[%s3 + $0x4d8] sm:$0xff]
        %v6414 = vld [vmem:[%s3 + $0x4e0] sm:$0xff]
        %v6415 = vld [vmem:[%s3 + $0x4e8] sm:$0xff]
        %v6416 = vld [vmem:[%s3 + $0x4f0] sm:$0xff]
        %v6417 = vld [vmem:[%s3 + $0x4f8] sm:$0xff]
        %v6418 = vld [vmem:[%s3 + $0x500] sm:$0xff]
        %v6419 = vld [vmem:[%s3 + $0x508] sm:$0xff]
        %v6420 = vld [vmem:[%s3 + $0x510] sm:$0xff]
        %v6421 = vld [vmem:[%s3 + $0x518] sm:$0xff]
        %v6422 = vld [vmem:[%s3 + $0x520] sm:$0xff]
        %v6423 = vld [vmem:[%s3 + $0x528] sm:$0xff]
        %v6424 = vld [vmem:[%s3 + $0x530] sm:$0xff]
        %v6425 = vld [vmem:[%s3 + $0x538] sm:$0xff]
        %v6426 = vld [vmem:[%s3 + $0x540] sm:$0xff]
        %v6427 = vld [vmem:[%s3 + $0x548] sm:$0xff]
        %v6428 = vld [vmem:[%s3 + $0x550] sm:$0xff]
        %v6429 = vld [vmem:[%s3 + $0x558] sm:$0xff]
        %v6430 = vld [vmem:[%s3 + $0x560] sm:$0xff]
        %v6431 = vld [vmem:[%s3 + $0x568] sm:$0xff]
        %v6432 = vld [vmem:[%s3 + $0x570] sm:$0xff]
        %v6433 = vld [vmem:[%s3 + $0x578] sm:$0xff]
        %v6434 = vld [vmem:[%s3 + $0x580] sm:$0xff]
        %v6435 = vld [vmem:[%s3 + $0x588] sm:$0xff]
        %v6436 = vld [vmem:[%s3 + $0x590] sm:$0xff]
        %v6437 = vld [vmem:[%s3 + $0x598] sm:$0xff]
        %v6438 = vld [vmem:[%s3 + $0x5a0] sm:$0xff]
        %v6439 = vld [vmem:[%s3 + $0x5a8] sm:$0xff]
        %v6440 = vld [vmem:[%s3 + $0x5b0] sm:$0xff]
        %v6441 = vld [vmem:[%s3 + $0x5b8] sm:$0xff]
        %v6442 = vld [vmem:[%s3 + $0x5c0] sm:$0xff]
        %v6443 = vld [vmem:[%s3 + $0x5c8] sm:$0xff]
        %v6444 = vld [vmem:[%s3 + $0x5d0] sm:$0xff]
        %v6445 = vld [vmem:[%s3 + $0x5d8] sm:$0xff]
        %v6446 = vld [vmem:[%s3 + $0x5e0] sm:$0xff]
        %v6447 = vld [vmem:[%s3 + $0x5e8] sm:$0xff]
        %v6448 = vld [vmem:[%s3 + $0x5f0] sm:$0xff]
        %v6449 = vld [vmem:[%s3 + $0x5f8] sm:$0xff]
        %v6450 = vld [vmem:[%s3 + $0x600] sm:$0xff]
        %v6451 = vld [vmem:[%s3 + $0x608] sm:$0xff]
        %v6452 = vld [vmem:[%s3 + $0x610] sm:$0xff]
        %v6453 = vld [vmem:[%s3 + $0x618] sm:$0xff]
        %v6454 = vld [vmem:[%s3 + $0x620] sm:$0xff]
        %v6455 = vld [vmem:[%s3 + $0x628] sm:$0xff]
        %v6456 = vld [vmem:[%s3 + $0x630] sm:$0xff]
        %v6457 = vld [vmem:[%s3 + $0x638] sm:$0xff]
        %v6458 = vld [vmem:[%s3 + $0x640] sm:$0xff]
        %v6459 = vld [vmem:[%s3 + $0x648] sm:$0xff]
        %v6460 = vld [vmem:[%s3 + $0x650] sm:$0xff]
        %v6461 = vld [vmem:[%s3 + $0x658] sm:$0xff]
        %v6462 = vld [vmem:[%s3 + $0x660] sm:$0xff]
        %v6463 = vld [vmem:[%s3 + $0x668] sm:$0xff]
        %v6464 = vld [vmem:[%s3 + $0x670] sm:$0xff]
        %v6465 = vld [vmem:[%s3 + $0x678] sm:$0xff]
        %v6466 = vld [vmem:[%s3 + $0x680] sm:$0xff]
        %v6467 = vld [vmem:[%s3 + $0x688] sm:$0xff]
        %v6468 = vld [vmem:[%s3 + $0x690] sm:$0xff]
        %v6469 = vld [vmem:[%s3 + $0x698] sm:$0xff]
        %v6470 = vld [vmem:[%s3 + $0x6a0] sm:$0xff]
        %v6471 = vld [vmem:[%s3 + $0x6a8] sm:$0xff]
        %v6472 = vld [vmem:[%s3 + $0x6b0] sm:$0xff]
        %v6473 = vld [vmem:[%s3 + $0x6b8] sm:$0xff]
        %v6474 = vld [vmem:[%s3 + $0x6c0] sm:$0xff]
        %v6475 = vld [vmem:[%s3 + $0x6c8] sm:$0xff]
        %v6476 = vld [vmem:[%s3 + $0x6d0] sm:$0xff]
        %v6477 = vld [vmem:[%s3 + $0x6d8] sm:$0xff]
        %v6478 = vld [vmem:[%s3 + $0x6e0] sm:$0xff]
        %v6479 = vld [vmem:[%s3 + $0x6e8] sm:$0xff]
        %v6480 = vld [vmem:[%s3 + $0x6f0] sm:$0xff]
        %v6481 = vld [vmem:[%s3 + $0x6f8] sm:$0xff]
        %v6482 = vld [vmem:[%s3 + $0x700] sm:$0xff]
        %v6483 = vld [vmem:[%s3 + $0x708] sm:$0xff]
        %v6484 = vld [vmem:[%s3 + $0x710] sm:$0xff]
        %v6485 = vld [vmem:[%s3 + $0x718] sm:$0xff]
        %v6486 = vld [vmem:[%s3 + $0x720] sm:$0xff]
        %v6487 = vld [vmem:[%s3 + $0x728] sm:$0xff]
        %v6488 = vld [vmem:[%s3 + $0x730] sm:$0xff]
        %v6489 = vld [vmem:[%s3 + $0x738] sm:$0xff]
        %v6490 = vld [vmem:[%s3 + $0x740] sm:$0xff]
        %v6491 = vld [vmem:[%s3 + $0x748] sm:$0xff]
        %v6492 = vld [vmem:[%s3 + $0x750] sm:$0xff]
        %v6493 = vld [vmem:[%s3 + $0x758] sm:$0xff]
        %v6494 = vld [vmem:[%s3 + $0x760] sm:$0xff]
        %v6495 = vld [vmem:[%s3 + $0x768] sm:$0xff]
        %v6496 = vld [vmem:[%s3 + $0x770] sm:$0xff]
        %v6497 = vld [vmem:[%s3 + $0x778] sm:$0xff]
        %v6498 = vld [vmem:[%s3 + $0x780] sm:$0xff]
        %v6499 = vld [vmem:[%s3 + $0x788] sm:$0xff]
        %v6500 = vld [vmem:[%s3 + $0x790] sm:$0xff]
        %v6501 = vld [vmem:[%s3 + $0x798] sm:$0xff]
        %v6502 = vld [vmem:[%s3 + $0x7a0] sm:$0xff]
        %v6503 = vld [vmem:[%s3 + $0x7a8] sm:$0xff]
        %v6504 = vld [vmem:[%s3 + $0x7b0] sm:$0xff]
        %v6505 = vld [vmem:[%s3 + $0x7b8] sm:$0xff]
        %v6506 = vld [vmem:[%s3 + $0x7c0] sm:$0xff]
        %v6507 = vld [vmem:[%s3 + $0x7c8] sm:$0xff]
        %v6508 = vld [vmem:[%s3 + $0x7d0] sm:$0xff]
        %v6509 = vld [vmem:[%s3 + $0x7d8] sm:$0xff]
        %v6510 = vld [vmem:[%s3 + $0x7e0] sm:$0xff]
        %v6511 = vld [vmem:[%s3 + $0x7e8] sm:$0xff]
        %v6512 = vld [vmem:[%s3 + $0x7f0] sm:$0xff]
        %v6513 = vld [vmem:[%s3 + $0x7f8] sm:$0xff]
        %v6514 = vld [vmem:[%s3 + $0x800] sm:$0xff]
        %v6515 = vld [vmem:[%s3 + $0x808] sm:$0xff]
        %v6516 = vld [vmem:[%s3 + $0x810] sm:$0xff]
        %v6517 = vld [vmem:[%s3 + $0x818] sm:$0xff]
        %v6518 = vld [vmem:[%s3 + $0x820] sm:$0xff]
        %v6519 = vld [vmem:[%s3 + $0x828] sm:$0xff]
        %v6520 = vld [vmem:[%s3 + $0x830] sm:$0xff]
        %v6521 = vld [vmem:[%s3 + $0x838] sm:$0xff]
        %v6522 = vld [vmem:[%s3 + $0x840] sm:$0xff]
        %v6523 = vld [vmem:[%s3 + $0x848] sm:$0xff]
        %v6524 = vld [vmem:[%s3 + $0x850] sm:$0xff]
        %v6525 = vld [vmem:[%s3 + $0x858] sm:$0xff]
        %v6526 = vld [vmem:[%s3 + $0x860] sm:$0xff]
        %v6527 = vld [vmem:[%s3 + $0x868] sm:$0xff]
        %v6528 = vld [vmem:[%s3 + $0x870] sm:$0xff]
        %v6529 = vld [vmem:[%s3 + $0x878] sm:$0xff]
        %v6530 = vld [vmem:[%s3 + $0x880] sm:$0xff]
        %v6531 = vld [vmem:[%s3 + $0x888] sm:$0xff]
        %v6532 = vld [vmem:[%s3 + $0x890] sm:$0xff]
        %v6533 = vld [vmem:[%s3 + $0x898] sm:$0xff]
        %v6534 = vld [vmem:[%s3 + $0x8a0] sm:$0xff]
        %v6535 = vld [vmem:[%s3 + $0x8a8] sm:$0xff]
        %v6536 = vld [vmem:[%s3 + $0x8b0] sm:$0xff]
        %v6537 = vld [vmem:[%s3 + $0x8b8] sm:$0xff]
        %v6538 = vld [vmem:[%s3 + $0x8c0] sm:$0xff]
        %v6539 = vld [vmem:[%s3 + $0x8c8] sm:$0xff]
        %v6540 = vld [vmem:[%s3 + $0x8d0] sm:$0xff]
        %v6541 = vld [vmem:[%s3 + $0x8d8] sm:$0xff]
        %v6542 = vld [vmem:[%s3 + $0x8e0] sm:$0xff]
        %v6543 = vld [vmem:[%s3 + $0x8e8] sm:$0xff]
        %v6544 = vld [vmem:[%s3 + $0x8f0] sm:$0xff]
        %v6545 = vld [vmem:[%s3 + $0x8f8] sm:$0xff]
        %v6546 = vld [vmem:[%s3 + $0x900] sm:$0xff]
        %v6547 = vld [vmem:[%s3 + $0x908] sm:$0xff]
        %v6548 = vld [vmem:[%s3 + $0x910] sm:$0xff]
        %v6549 = vld [vmem:[%s3 + $0x918] sm:$0xff]
        %v6550 = vld [vmem:[%s3 + $0x920] sm:$0xff]
        %v6551 = vld [vmem:[%s3 + $0x928] sm:$0xff]
        %v6552 = vld [vmem:[%s3 + $0x930] sm:$0xff]
        %v6553 = vld [vmem:[%s3 + $0x938] sm:$0xff]
        %v6554 = vld [vmem:[%s3 + $0x940] sm:$0xff]
        %v6555 = vld [vmem:[%s3 + $0x948] sm:$0xff]
        %v6556 = vld [vmem:[%s3 + $0x950] sm:$0xff]
        %v6557 = vld [vmem:[%s3 + $0x958] sm:$0xff]
        %v6558 = vld [vmem:[%s3 + $0x960] sm:$0xff]
        %v6559 = vld [vmem:[%s3 + $0x968] sm:$0xff]
        %v6560 = vld [vmem:[%s3 + $0x970] sm:$0xff]
        %v6561 = vld [vmem:[%s3 + $0x978] sm:$0xff]
        %v6562 = vld [vmem:[%s3 + $0x980] sm:$0xff]
        %v6563 = vld [vmem:[%s3 + $0x988] sm:$0xff]
        %v6564 = vld [vmem:[%s3 + $0x990] sm:$0xff]
        %v6565 = vld [vmem:[%s3 + $0x998] sm:$0xff]
        %6567 = vset.pattern.permute.xlu0 0
        %6568 = vperm.xlu0 %6567, %v3962
        %v6569 = vpop.permute.xlu0 %6568
        %6572 = vset.pattern.permute.xlu0 0
        %6573 = vperm.xlu0 %6572, %v3977
        %v6574 = vpop.permute.xlu0 %6573
        %6577 = vset.pattern.permute.xlu0 0
        %6578 = vperm.xlu0 %6577, %v3992
        %v6579 = vpop.permute.xlu0 %6578
        %6582 = vset.pattern.permute.xlu0 0
        %6583 = vperm.xlu0 %6582, %v4007
        %v6584 = vpop.permute.xlu0 %6583
        %6587 = vset.pattern.permute.xlu0 0
        %6588 = vperm.xlu0 %6587, %v4022
        %v6589 = vpop.permute.xlu0 %6588
        %6592 = vset.pattern.permute.xlu0 0
        %6593 = vperm.xlu0 %6592, %v4037
        %v6594 = vpop.permute.xlu0 %6593
        %6597 = vset.pattern.permute.xlu0 0
        %6598 = vperm.xlu0 %6597, %v4052
        %v6599 = vpop.permute.xlu0 %6598
        %6602 = vset.pattern.permute.xlu0 0
        %6603 = vperm.xlu0 %6602, %v4067
        %v6604 = vpop.permute.xlu0 %6603
        %6607 = vset.pattern.permute.xlu0 0
        %6608 = vperm.xlu0 %6607, %v4082
        %v6609 = vpop.permute.xlu0 %6608
        %6612 = vset.pattern.permute.xlu0 0
        %6613 = vperm.xlu0 %6612, %v4097
        %v6614 = vpop.permute.xlu0 %6613
        %6617 = vset.pattern.permute.xlu0 0
        %6618 = vperm.xlu0 %6617, %v4112
        %v6619 = vpop.permute.xlu0 %6618
        %6622 = vset.pattern.permute.xlu0 0
        %6623 = vperm.xlu0 %6622, %v4127
        %v6624 = vpop.permute.xlu0 %6623
        %6627 = vset.pattern.permute.xlu0 0
        %6628 = vperm.xlu0 %6627, %v4142
        %v6629 = vpop.permute.xlu0 %6628
        %6632 = vset.pattern.permute.xlu0 0
        %6633 = vperm.xlu0 %6632, %v4157
        %v6634 = vpop.permute.xlu0 %6633
        %6637 = vset.pattern.permute.xlu0 0
        %6638 = vperm.xlu0 %6637, %v4172
        %v6639 = vpop.permute.xlu0 %6638
        %6642 = vset.pattern.permute.xlu0 0
        %6643 = vperm.xlu0 %6642, %v4187
        %v6644 = vpop.permute.xlu0 %6643
        %6647 = vset.pattern.permute.xlu0 0
        %6648 = vperm.xlu0 %6647, %v4202
        %v6649 = vpop.permute.xlu0 %6648
        %6652 = vset.pattern.permute.xlu0 0
        %6653 = vperm.xlu0 %6652, %v4217
        %v6654 = vpop.permute.xlu0 %6653
        %6657 = vset.pattern.permute.xlu0 0
        %6658 = vperm.xlu0 %6657, %v4232
        %v6659 = vpop.permute.xlu0 %6658
        %6662 = vset.pattern.permute.xlu0 0
        %6663 = vperm.xlu0 %6662, %v4247
        %v6664 = vpop.permute.xlu0 %6663
        %6667 = vset.pattern.permute.xlu0 0
        %6668 = vperm.xlu0 %6667, %v4262
        %v6669 = vpop.permute.xlu0 %6668
        %6672 = vset.pattern.permute.xlu0 0
        %6673 = vperm.xlu0 %6672, %v4277
        %v6674 = vpop.permute.xlu0 %6673
        %6677 = vset.pattern.permute.xlu0 0
        %6678 = vperm.xlu0 %6677, %v4292
        %v6679 = vpop.permute.xlu0 %6678
        %6682 = vset.pattern.permute.xlu0 0
        %6683 = vperm.xlu0 %6682, %v4307
        %v6684 = vpop.permute.xlu0 %6683
        %6687 = vset.pattern.permute.xlu0 0
        %6688 = vperm.xlu0 %6687, %v4322
        %v6689 = vpop.permute.xlu0 %6688
        %6692 = vset.pattern.permute.xlu0 0
        %6693 = vperm.xlu0 %6692, %v4337
        %v6694 = vpop.permute.xlu0 %6693
        %6697 = vset.pattern.permute.xlu0 0
        %6698 = vperm.xlu0 %6697, %v4352
        %v6699 = vpop.permute.xlu0 %6698
        %6702 = vset.pattern.permute.xlu0 0
        %6703 = vperm.xlu0 %6702, %v4367
        %v6704 = vpop.permute.xlu0 %6703
        %6707 = vset.pattern.permute.xlu0 0
        %6708 = vperm.xlu0 %6707, %v4382
        %v6709 = vpop.permute.xlu0 %6708
        %6712 = vset.pattern.permute.xlu0 0
        %6713 = vperm.xlu0 %6712, %v4397
        %v6714 = vpop.permute.xlu0 %6713
        %6717 = vset.pattern.permute.xlu0 0
        %6718 = vperm.xlu0 %6717, %v4412
        %v6719 = vpop.permute.xlu0 %6718
        %6722 = vset.pattern.permute.xlu0 0
        %6723 = vperm.xlu0 %6722, %v4427
        %v6724 = vpop.permute.xlu0 %6723
        %6727 = vset.pattern.permute.xlu0 0
        %6728 = vperm.xlu0 %6727, %v4442
        %v6729 = vpop.permute.xlu0 %6728
        %6732 = vset.pattern.permute.xlu0 0
        %6733 = vperm.xlu0 %6732, %v4457
        %v6734 = vpop.permute.xlu0 %6733
        %6737 = vset.pattern.permute.xlu0 0
        %6738 = vperm.xlu0 %6737, %v4472
        %v6739 = vpop.permute.xlu0 %6738
        %6742 = vset.pattern.permute.xlu0 0
        %6743 = vperm.xlu0 %6742, %v4487
        %v6744 = vpop.permute.xlu0 %6743
        %6747 = vset.pattern.permute.xlu0 0
        %6748 = vperm.xlu0 %6747, %v4502
        %v6749 = vpop.permute.xlu0 %6748
        %6752 = vset.pattern.permute.xlu0 0
        %6753 = vperm.xlu0 %6752, %v4517
        %v6754 = vpop.permute.xlu0 %6753
        %6757 = vset.pattern.permute.xlu0 0
        %6758 = vperm.xlu0 %6757, %v4532
        %v6759 = vpop.permute.xlu0 %6758
        %6762 = vset.pattern.permute.xlu0 0
        %6763 = vperm.xlu0 %6762, %v4547
        %v6764 = vpop.permute.xlu0 %6763
        %6767 = vset.pattern.permute.xlu0 0
        %6768 = vperm.xlu0 %6767, %v4562
        %v6769 = vpop.permute.xlu0 %6768
        %6772 = vset.pattern.permute.xlu0 0
        %6773 = vperm.xlu0 %6772, %v4577
        %v6774 = vpop.permute.xlu0 %6773
        %6777 = vset.pattern.permute.xlu0 0
        %6778 = vperm.xlu0 %6777, %v4592
        %v6779 = vpop.permute.xlu0 %6778
        %6782 = vset.pattern.permute.xlu0 0
        %6783 = vperm.xlu0 %6782, %v4607
        %v6784 = vpop.permute.xlu0 %6783
        %6787 = vset.pattern.permute.xlu0 0
        %6788 = vperm.xlu0 %6787, %v4622
        %v6789 = vpop.permute.xlu0 %6788
        %6792 = vset.pattern.permute.xlu0 0
        %6793 = vperm.xlu0 %6792, %v4637
        %v6794 = vpop.permute.xlu0 %6793
        %6797 = vset.pattern.permute.xlu0 0
        %6798 = vperm.xlu0 %6797, %v4652
        %v6799 = vpop.permute.xlu0 %6798
        %6802 = vset.pattern.permute.xlu0 0
        %6803 = vperm.xlu0 %6802, %v4667
        %v6804 = vpop.permute.xlu0 %6803
        %6807 = vset.pattern.permute.xlu0 0
        %6808 = vperm.xlu0 %6807, %v4682
        %v6809 = vpop.permute.xlu0 %6808
        %6812 = vset.pattern.permute.xlu0 0
        %6813 = vperm.xlu0 %6812, %v4697
        %v6814 = vpop.permute.xlu0 %6813
        %6817 = vset.pattern.permute.xlu0 0
        %6818 = vperm.xlu0 %6817, %v4712
        %v6819 = vpop.permute.xlu0 %6818
        %6822 = vset.pattern.permute.xlu0 0
        %6823 = vperm.xlu0 %6822, %v4727
        %v6824 = vpop.permute.xlu0 %6823
        %6827 = vset.pattern.permute.xlu0 0
        %6828 = vperm.xlu0 %6827, %v4742
        %v6829 = vpop.permute.xlu0 %6828
        %6832 = vset.pattern.permute.xlu0 0
        %6833 = vperm.xlu0 %6832, %v4757
        %v6834 = vpop.permute.xlu0 %6833
        %6837 = vset.pattern.permute.xlu0 0
        %6838 = vperm.xlu0 %6837, %v4772
        %v6839 = vpop.permute.xlu0 %6838
        %6842 = vset.pattern.permute.xlu0 0
        %6843 = vperm.xlu0 %6842, %v4787
        %v6844 = vpop.permute.xlu0 %6843
        %6847 = vset.pattern.permute.xlu0 0
        %6848 = vperm.xlu0 %6847, %v4802
        %v6849 = vpop.permute.xlu0 %6848
        %6852 = vset.pattern.permute.xlu0 0
        %6853 = vperm.xlu0 %6852, %v4817
        %v6854 = vpop.permute.xlu0 %6853
        %6857 = vset.pattern.permute.xlu0 0
        %6858 = vperm.xlu0 %6857, %v4832
        %v6859 = vpop.permute.xlu0 %6858
        %6862 = vset.pattern.permute.xlu0 0
        %6863 = vperm.xlu0 %6862, %v4847
        %v6864 = vpop.permute.xlu0 %6863
        %6867 = vset.pattern.permute.xlu0 0
        %6868 = vperm.xlu0 %6867, %v4862
        %v6869 = vpop.permute.xlu0 %6868
        %6872 = vset.pattern.permute.xlu0 0
        %6873 = vperm.xlu0 %6872, %v4877
        %v6874 = vpop.permute.xlu0 %6873
        %6877 = vset.pattern.permute.xlu0 0
        %6878 = vperm.xlu0 %6877, %v4892
        %v6879 = vpop.permute.xlu0 %6878
        %6882 = vset.pattern.permute.xlu0 0
        %6883 = vperm.xlu0 %6882, %v4907
        %v6884 = vpop.permute.xlu0 %6883
        %6887 = vset.pattern.permute.xlu0 0
        %6888 = vperm.xlu0 %6887, %v4922
        %v6889 = vpop.permute.xlu0 %6888
        %6892 = vset.pattern.permute.xlu0 0
        %6893 = vperm.xlu0 %6892, %v4937
        %v6894 = vpop.permute.xlu0 %6893
        %6897 = vset.pattern.permute.xlu0 0
        %6898 = vperm.xlu0 %6897, %v4952
        %v6899 = vpop.permute.xlu0 %6898
        %6902 = vset.pattern.permute.xlu0 0
        %6903 = vperm.xlu0 %6902, %v4967
        %v6904 = vpop.permute.xlu0 %6903
        %6907 = vset.pattern.permute.xlu0 0
        %6908 = vperm.xlu0 %6907, %v4982
        %v6909 = vpop.permute.xlu0 %6908
        %6912 = vset.pattern.permute.xlu0 0
        %6913 = vperm.xlu0 %6912, %v4997
        %v6914 = vpop.permute.xlu0 %6913
        %6917 = vset.pattern.permute.xlu0 0
        %6918 = vperm.xlu0 %6917, %v5012
        %v6919 = vpop.permute.xlu0 %6918
        %6922 = vset.pattern.permute.xlu0 0
        %6923 = vperm.xlu0 %6922, %v5027
        %v6924 = vpop.permute.xlu0 %6923
        %6927 = vset.pattern.permute.xlu0 0
        %6928 = vperm.xlu0 %6927, %v5042
        %v6929 = vpop.permute.xlu0 %6928
        %6932 = vset.pattern.permute.xlu0 0
        %6933 = vperm.xlu0 %6932, %v5057
        %v6934 = vpop.permute.xlu0 %6933
        %6937 = vset.pattern.permute.xlu0 0
        %6938 = vperm.xlu0 %6937, %v5072
        %v6939 = vpop.permute.xlu0 %6938
        %6942 = vset.pattern.permute.xlu0 0
        %6943 = vperm.xlu0 %6942, %v5087
        %v6944 = vpop.permute.xlu0 %6943
        %6947 = vset.pattern.permute.xlu0 0
        %6948 = vperm.xlu0 %6947, %v5102
        %v6949 = vpop.permute.xlu0 %6948
        %6952 = vset.pattern.permute.xlu0 0
        %6953 = vperm.xlu0 %6952, %v5117
        %v6954 = vpop.permute.xlu0 %6953
        %6957 = vset.pattern.permute.xlu0 0
        %6958 = vperm.xlu0 %6957, %v5132
        %v6959 = vpop.permute.xlu0 %6958
        %6962 = vset.pattern.permute.xlu0 0
        %6963 = vperm.xlu0 %6962, %v5147
        %v6964 = vpop.permute.xlu0 %6963
        %6967 = vset.pattern.permute.xlu0 0
        %6968 = vperm.xlu0 %6967, %v5162
        %v6969 = vpop.permute.xlu0 %6968
        %6972 = vset.pattern.permute.xlu0 0
        %6973 = vperm.xlu0 %6972, %v5177
        %v6974 = vpop.permute.xlu0 %6973
        %6977 = vset.pattern.permute.xlu0 0
        %6978 = vperm.xlu0 %6977, %v5192
        %v6979 = vpop.permute.xlu0 %6978
        %6982 = vset.pattern.permute.xlu0 0
        %6983 = vperm.xlu0 %6982, %v5207
        %v6984 = vpop.permute.xlu0 %6983
        %6987 = vset.pattern.permute.xlu0 0
        %6988 = vperm.xlu0 %6987, %v5222
        %v6989 = vpop.permute.xlu0 %6988
        %6992 = vset.pattern.permute.xlu0 0
        %6993 = vperm.xlu0 %6992, %v5237
        %v6994 = vpop.permute.xlu0 %6993
        %6997 = vset.pattern.permute.xlu0 0
        %6998 = vperm.xlu0 %6997, %v5252
        %v6999 = vpop.permute.xlu0 %6998
        %7002 = vset.pattern.permute.xlu0 0
        %7003 = vperm.xlu0 %7002, %v5267
        %v7004 = vpop.permute.xlu0 %7003
        %7007 = vset.pattern.permute.xlu0 0
        %7008 = vperm.xlu0 %7007, %v5282
        %v7009 = vpop.permute.xlu0 %7008
        %7012 = vset.pattern.permute.xlu0 0
        %7013 = vperm.xlu0 %7012, %v5297
        %v7014 = vpop.permute.xlu0 %7013
        %7017 = vset.pattern.permute.xlu0 0
        %7018 = vperm.xlu0 %7017, %v5312
        %v7019 = vpop.permute.xlu0 %7018
        %7022 = vset.pattern.permute.xlu0 0
        %7023 = vperm.xlu0 %7022, %v5327
        %v7024 = vpop.permute.xlu0 %7023
        %7027 = vset.pattern.permute.xlu0 0
        %7028 = vperm.xlu0 %7027, %v5342
        %v7029 = vpop.permute.xlu0 %7028
        %7032 = vset.pattern.permute.xlu0 0
        %7033 = vperm.xlu0 %7032, %v5357
        %v7034 = vpop.permute.xlu0 %7033
        %7037 = vset.pattern.permute.xlu0 0
        %7038 = vperm.xlu0 %7037, %v5372
        %v7039 = vpop.permute.xlu0 %7038
        %7042 = vset.pattern.permute.xlu0 0
        %7043 = vperm.xlu0 %7042, %v5387
        %v7044 = vpop.permute.xlu0 %7043
        %7047 = vset.pattern.permute.xlu0 0
        %7048 = vperm.xlu0 %7047, %v5402
        %v7049 = vpop.permute.xlu0 %7048
        %7052 = vset.pattern.permute.xlu0 0
        %7053 = vperm.xlu0 %7052, %v5417
        %v7054 = vpop.permute.xlu0 %7053
        %7057 = vset.pattern.permute.xlu0 0
        %7058 = vperm.xlu0 %7057, %v5432
        %v7059 = vpop.permute.xlu0 %7058
        %7062 = vset.pattern.permute.xlu0 0
        %7063 = vperm.xlu0 %7062, %v5447
        %v7064 = vpop.permute.xlu0 %7063
        %7067 = vset.pattern.permute.xlu0 0
        %7068 = vperm.xlu0 %7067, %v5462
        %v7069 = vpop.permute.xlu0 %7068
        %7072 = vset.pattern.permute.xlu0 0
        %7073 = vperm.xlu0 %7072, %v5477
        %v7074 = vpop.permute.xlu0 %7073
        %7077 = vset.pattern.permute.xlu0 0
        %7078 = vperm.xlu0 %7077, %v5492
        %v7079 = vpop.permute.xlu0 %7078
        %7082 = vset.pattern.permute.xlu0 0
        %7083 = vperm.xlu0 %7082, %v5507
        %v7084 = vpop.permute.xlu0 %7083
        %7087 = vset.pattern.permute.xlu0 0
        %7088 = vperm.xlu0 %7087, %v5522
        %v7089 = vpop.permute.xlu0 %7088
        %7092 = vset.pattern.permute.xlu0 0
        %7093 = vperm.xlu0 %7092, %v5537
        %v7094 = vpop.permute.xlu0 %7093
        %7097 = vset.pattern.permute.xlu0 0
        %7098 = vperm.xlu0 %7097, %v5552
        %v7099 = vpop.permute.xlu0 %7098
        %7102 = vset.pattern.permute.xlu0 0
        %7103 = vperm.xlu0 %7102, %v5567
        %v7104 = vpop.permute.xlu0 %7103
        %7107 = vset.pattern.permute.xlu0 0
        %7108 = vperm.xlu0 %7107, %v5582
        %v7109 = vpop.permute.xlu0 %7108
        %7112 = vset.pattern.permute.xlu0 0
        %7113 = vperm.xlu0 %7112, %v5597
        %v7114 = vpop.permute.xlu0 %7113
        %7117 = vset.pattern.permute.xlu0 0
        %7118 = vperm.xlu0 %7117, %v5612
        %v7119 = vpop.permute.xlu0 %7118
        %7122 = vset.pattern.permute.xlu0 0
        %7123 = vperm.xlu0 %7122, %v5627
        %v7124 = vpop.permute.xlu0 %7123
        %7127 = vset.pattern.permute.xlu0 0
        %7128 = vperm.xlu0 %7127, %v5642
        %v7129 = vpop.permute.xlu0 %7128
        %7132 = vset.pattern.permute.xlu0 0
        %7133 = vperm.xlu0 %7132, %v5657
        %v7134 = vpop.permute.xlu0 %7133
        %7137 = vset.pattern.permute.xlu0 0
        %7138 = vperm.xlu0 %7137, %v5672
        %v7139 = vpop.permute.xlu0 %7138
        %7142 = vset.pattern.permute.xlu0 0
        %7143 = vperm.xlu0 %7142, %v5687
        %v7144 = vpop.permute.xlu0 %7143
        %7147 = vset.pattern.permute.xlu0 0
        %7148 = vperm.xlu0 %7147, %v5702
        %v7149 = vpop.permute.xlu0 %7148
        %7152 = vset.pattern.permute.xlu0 0
        %7153 = vperm.xlu0 %7152, %v5717
        %v7154 = vpop.permute.xlu0 %7153
        %7157 = vset.pattern.permute.xlu0 0
        %7158 = vperm.xlu0 %7157, %v5732
        %v7159 = vpop.permute.xlu0 %7158
        %7162 = vset.pattern.permute.xlu0 0
        %7163 = vperm.xlu0 %7162, %v5747
        %v7164 = vpop.permute.xlu0 %7163
        %7167 = vset.pattern.permute.xlu0 0
        %7168 = vperm.xlu0 %7167, %v5762
        %v7169 = vpop.permute.xlu0 %7168
        %7172 = vset.pattern.permute.xlu0 0
        %7173 = vperm.xlu0 %7172, %v5777
        %v7174 = vpop.permute.xlu0 %7173
        %7177 = vset.pattern.permute.xlu0 0
        %7178 = vperm.xlu0 %7177, %v5792
        %v7179 = vpop.permute.xlu0 %7178
        %7182 = vset.pattern.permute.xlu0 0
        %7183 = vperm.xlu0 %7182, %v5807
        %v7184 = vpop.permute.xlu0 %7183
        %7187 = vset.pattern.permute.xlu0 0
        %7188 = vperm.xlu0 %7187, %v5822
        %v7189 = vpop.permute.xlu0 %7188
        %7192 = vset.pattern.permute.xlu0 0
        %7193 = vperm.xlu0 %7192, %v5837
        %v7194 = vpop.permute.xlu0 %7193
        %7197 = vset.pattern.permute.xlu0 0
        %7198 = vperm.xlu0 %7197, %v5852
        %v7199 = vpop.permute.xlu0 %7198
        %7202 = vset.pattern.permute.xlu0 0
        %7203 = vperm.xlu0 %7202, %v5867
        %v7204 = vpop.permute.xlu0 %7203
        %7207 = vset.pattern.permute.xlu0 0
        %7208 = vperm.xlu0 %7207, %v5882
        %v7209 = vpop.permute.xlu0 %7208
        %7212 = vset.pattern.permute.xlu0 0
        %7213 = vperm.xlu0 %7212, %v5897
        %v7214 = vpop.permute.xlu0 %7213
        %7217 = vset.pattern.permute.xlu0 0
        %7218 = vperm.xlu0 %7217, %v5912
        %v7219 = vpop.permute.xlu0 %7218
        %7222 = vset.pattern.permute.xlu0 0
        %7223 = vperm.xlu0 %7222, %v5927
        %v7224 = vpop.permute.xlu0 %7223
        %7227 = vset.pattern.permute.xlu0 0
        %7228 = vperm.xlu0 %7227, %v5942
        %v7229 = vpop.permute.xlu0 %7228
        %7232 = vset.pattern.permute.xlu0 0
        %7233 = vperm.xlu0 %7232, %v5957
        %v7234 = vpop.permute.xlu0 %7233
        %7237 = vset.pattern.permute.xlu0 0
        %7238 = vperm.xlu0 %7237, %v5972
        %v7239 = vpop.permute.xlu0 %7238
        %7242 = vset.pattern.permute.xlu0 0
        %7243 = vperm.xlu0 %7242, %v5987
        %v7244 = vpop.permute.xlu0 %7243
        %7247 = vset.pattern.permute.xlu0 0
        %7248 = vperm.xlu0 %7247, %v6002
        %v7249 = vpop.permute.xlu0 %7248
        %7252 = vset.pattern.permute.xlu0 0
        %7253 = vperm.xlu0 %7252, %v6017
        %v7254 = vpop.permute.xlu0 %7253
        %7257 = vset.pattern.permute.xlu0 0
        %7258 = vperm.xlu0 %7257, %v6032
        %v7259 = vpop.permute.xlu0 %7258
        %7262 = vset.pattern.permute.xlu0 0
        %7263 = vperm.xlu0 %7262, %v6047
        %v7264 = vpop.permute.xlu0 %7263
        %7267 = vset.pattern.permute.xlu0 0
        %7268 = vperm.xlu0 %7267, %v6062
        %v7269 = vpop.permute.xlu0 %7268
        %7272 = vset.pattern.permute.xlu0 0
        %7273 = vperm.xlu0 %7272, %v6077
        %v7274 = vpop.permute.xlu0 %7273
        %7277 = vset.pattern.permute.xlu0 0
        %7278 = vperm.xlu0 %7277, %v6092
        %v7279 = vpop.permute.xlu0 %7278
        %7282 = vset.pattern.permute.xlu0 0
        %7283 = vperm.xlu0 %7282, %v6107
        %v7284 = vpop.permute.xlu0 %7283
        %7287 = vset.pattern.permute.xlu0 0
        %7288 = vperm.xlu0 %7287, %v6122
        %v7289 = vpop.permute.xlu0 %7288
        %7292 = vset.pattern.permute.xlu0 0
        %7293 = vperm.xlu0 %7292, %v6137
        %v7294 = vpop.permute.xlu0 %7293
        %7297 = vset.pattern.permute.xlu0 0
        %7298 = vperm.xlu0 %7297, %v6152
        %v7299 = vpop.permute.xlu0 %7298
        %7302 = vset.pattern.permute.xlu0 0
        %7303 = vperm.xlu0 %7302, %v6167
        %v7304 = vpop.permute.xlu0 %7303
        %7307 = vset.pattern.permute.xlu0 0
        %7308 = vperm.xlu0 %7307, %v6182
        %v7309 = vpop.permute.xlu0 %7308
        %7312 = vset.pattern.permute.xlu0 0
        %7313 = vperm.xlu0 %7312, %v6197
        %v7314 = vpop.permute.xlu0 %7313
        %7317 = vset.pattern.permute.xlu0 0
        %7318 = vperm.xlu0 %7317, %v6212
        %v7319 = vpop.permute.xlu0 %7318
        %7322 = vset.pattern.permute.xlu0 0
        %7323 = vperm.xlu0 %7322, %v6227
        %v7324 = vpop.permute.xlu0 %7323
        %7327 = vset.pattern.permute.xlu0 0
        %7328 = vperm.xlu0 %7327, %v6242
        %v7329 = vpop.permute.xlu0 %7328
        %7332 = vset.pattern.permute.xlu0 0
        %7333 = vperm.xlu0 %7332, %v6257
        %v7334 = vpop.permute.xlu0 %7333
        %v7336 = vmul.f32 %v6258, %v6569
        %v7337 = vmul.f32 %v6259, %v6569
        %v7338 = vmul.f32 %v6260, %v6574
        %v7339 = vmul.f32 %v6261, %v6574
        %v7340 = vmul.f32 %v6262, %v6579
        %v7341 = vmul.f32 %v6263, %v6579
        %v7342 = vmul.f32 %v6264, %v6584
        %v7343 = vmul.f32 %v6265, %v6584
        %v7344 = vmul.f32 %v6266, %v6589
        %v7345 = vmul.f32 %v6267, %v6589
        %v7346 = vmul.f32 %v6268, %v6594
        %v7347 = vmul.f32 %v6269, %v6594
        %v7348 = vmul.f32 %v6270, %v6599
        %v7349 = vmul.f32 %v6271, %v6599
        %v7350 = vmul.f32 %v6272, %v6604
        %v7351 = vmul.f32 %v6273, %v6604
        %v7352 = vmul.f32 %v6274, %v6609
        %v7353 = vmul.f32 %v6275, %v6609
        %v7354 = vmul.f32 %v6276, %v6614
        %v7355 = vmul.f32 %v6277, %v6614
        %v7356 = vmul.f32 %v6278, %v6619
        %v7357 = vmul.f32 %v6279, %v6619
        %v7358 = vmul.f32 %v6280, %v6624
        %v7359 = vmul.f32 %v6281, %v6624
        %v7360 = vmul.f32 %v6282, %v6629
        %v7361 = vmul.f32 %v6283, %v6629
        %v7362 = vmul.f32 %v6284, %v6634
        %v7363 = vmul.f32 %v6285, %v6634
        %v7364 = vmul.f32 %v6286, %v6639
        %v7365 = vmul.f32 %v6287, %v6639
        %v7366 = vmul.f32 %v6288, %v6644
        %v7367 = vmul.f32 %v6289, %v6644
        %v7368 = vmul.f32 %v6290, %v6649
        %v7369 = vmul.f32 %v6291, %v6649
        %v7370 = vmul.f32 %v6292, %v6654
        %v7371 = vmul.f32 %v6293, %v6654
        %v7372 = vmul.f32 %v6294, %v6659
        %v7373 = vmul.f32 %v6295, %v6659
        %v7374 = vmul.f32 %v6296, %v6664
        %v7375 = vmul.f32 %v6297, %v6664
        %v7376 = vmul.f32 %v6298, %v6669
        %v7377 = vmul.f32 %v6299, %v6669
        %v7378 = vmul.f32 %v6300, %v6674
        %v7379 = vmul.f32 %v6301, %v6674
        %v7380 = vmul.f32 %v6302, %v6679
        %v7381 = vmul.f32 %v6303, %v6679
        %v7382 = vmul.f32 %v6304, %v6684
        %v7383 = vmul.f32 %v6305, %v6684
        %v7384 = vmul.f32 %v6306, %v6689
        %v7385 = vmul.f32 %v6307, %v6689
        %v7386 = vmul.f32 %v6308, %v6694
        %v7387 = vmul.f32 %v6309, %v6694
        %v7388 = vmul.f32 %v6310, %v6699
        %v7389 = vmul.f32 %v6311, %v6699
        %v7390 = vmul.f32 %v6312, %v6704
        %v7391 = vmul.f32 %v6313, %v6704
        %v7392 = vmul.f32 %v6314, %v6709
        %v7393 = vmul.f32 %v6315, %v6709
        %v7394 = vmul.f32 %v6316, %v6714
        %v7395 = vmul.f32 %v6317, %v6714
        %v7396 = vmul.f32 %v6318, %v6719
        %v7397 = vmul.f32 %v6319, %v6719
        %v7398 = vmul.f32 %v6320, %v6724
        %v7399 = vmul.f32 %v6321, %v6724
        %v7400 = vmul.f32 %v6322, %v6729
        %v7401 = vmul.f32 %v6323, %v6729
        %v7402 = vmul.f32 %v6324, %v6734
        %v7403 = vmul.f32 %v6325, %v6734
        %v7404 = vmul.f32 %v6326, %v6739
        %v7405 = vmul.f32 %v6327, %v6739
        %v7406 = vmul.f32 %v6328, %v6744
        %v7407 = vmul.f32 %v6329, %v6744
        %v7408 = vmul.f32 %v6330, %v6749
        %v7409 = vmul.f32 %v6331, %v6749
        %v7410 = vmul.f32 %v6332, %v6754
        %v7411 = vmul.f32 %v6333, %v6754
        %v7412 = vmul.f32 %v6334, %v6759
        %v7413 = vmul.f32 %v6335, %v6759
        %v7414 = vmul.f32 %v6336, %v6764
        %v7415 = vmul.f32 %v6337, %v6764
        %v7416 = vmul.f32 %v6338, %v6769
        %v7417 = vmul.f32 %v6339, %v6769
        %v7418 = vmul.f32 %v6340, %v6774
        %v7419 = vmul.f32 %v6341, %v6774
        %v7420 = vmul.f32 %v6342, %v6779
        %v7421 = vmul.f32 %v6343, %v6779
        %v7422 = vmul.f32 %v6344, %v6784
        %v7423 = vmul.f32 %v6345, %v6784
        %v7424 = vmul.f32 %v6346, %v6789
        %v7425 = vmul.f32 %v6347, %v6789
        %v7426 = vmul.f32 %v6348, %v6794
        %v7427 = vmul.f32 %v6349, %v6794
        %v7428 = vmul.f32 %v6350, %v6799
        %v7429 = vmul.f32 %v6351, %v6799
        %v7430 = vmul.f32 %v6352, %v6804
        %v7431 = vmul.f32 %v6353, %v6804
        %v7432 = vmul.f32 %v6354, %v6809
        %v7433 = vmul.f32 %v6355, %v6809
        %v7434 = vmul.f32 %v6356, %v6814
        %v7435 = vmul.f32 %v6357, %v6814
        %v7436 = vmul.f32 %v6358, %v6819
        %v7437 = vmul.f32 %v6359, %v6819
        %v7438 = vmul.f32 %v6360, %v6824
        %v7439 = vmul.f32 %v6361, %v6824
        %v7440 = vmul.f32 %v6362, %v6829
        %v7441 = vmul.f32 %v6363, %v6829
        %v7442 = vmul.f32 %v6364, %v6834
        %v7443 = vmul.f32 %v6365, %v6834
        %v7444 = vmul.f32 %v6366, %v6839
        %v7445 = vmul.f32 %v6367, %v6839
        %v7446 = vmul.f32 %v6368, %v6844
        %v7447 = vmul.f32 %v6369, %v6844
        %v7448 = vmul.f32 %v6370, %v6849
        %v7449 = vmul.f32 %v6371, %v6849
        %v7450 = vmul.f32 %v6372, %v6854
        %v7451 = vmul.f32 %v6373, %v6854
        %v7452 = vmul.f32 %v6374, %v6859
        %v7453 = vmul.f32 %v6375, %v6859
        %v7454 = vmul.f32 %v6376, %v6864
        %v7455 = vmul.f32 %v6377, %v6864
        %v7456 = vmul.f32 %v6378, %v6869
        %v7457 = vmul.f32 %v6379, %v6869
        %v7458 = vmul.f32 %v6380, %v6874
        %v7459 = vmul.f32 %v6381, %v6874
        %v7460 = vmul.f32 %v6382, %v6879
        %v7461 = vmul.f32 %v6383, %v6879
        %v7462 = vmul.f32 %v6384, %v6884
        %v7463 = vmul.f32 %v6385, %v6884
        %v7464 = vmul.f32 %v6386, %v6889
        %v7465 = vmul.f32 %v6387, %v6889
        %v7466 = vmul.f32 %v6388, %v6894
        %v7467 = vmul.f32 %v6389, %v6894
        %v7468 = vmul.f32 %v6390, %v6899
        %v7469 = vmul.f32 %v6391, %v6899
        %v7470 = vmul.f32 %v6392, %v6904
        %v7471 = vmul.f32 %v6393, %v6904
        %v7472 = vmul.f32 %v6394, %v6909
        %v7473 = vmul.f32 %v6395, %v6909
        %v7474 = vmul.f32 %v6396, %v6914
        %v7475 = vmul.f32 %v6397, %v6914
        %v7476 = vmul.f32 %v6398, %v6919
        %v7477 = vmul.f32 %v6399, %v6919
        %v7478 = vmul.f32 %v6400, %v6924
        %v7479 = vmul.f32 %v6401, %v6924
        %v7480 = vmul.f32 %v6402, %v6929
        %v7481 = vmul.f32 %v6403, %v6929
        %v7482 = vmul.f32 %v6404, %v6934
        %v7483 = vmul.f32 %v6405, %v6934
        %v7484 = vmul.f32 %v6406, %v6939
        %v7485 = vmul.f32 %v6407, %v6939
        %v7486 = vmul.f32 %v6408, %v6944
        %v7487 = vmul.f32 %v6409, %v6944
        %v7488 = vmul.f32 %v6410, %v6949
        %v7489 = vmul.f32 %v6411, %v6949
        %v7490 = vmul.f32 %v6412, %v6954
        %v7491 = vmul.f32 %v6413, %v6954
        %v7492 = vmul.f32 %v6414, %v6959
        %v7493 = vmul.f32 %v6415, %v6959
        %v7494 = vmul.f32 %v6416, %v6964
        %v7495 = vmul.f32 %v6417, %v6964
        %v7496 = vmul.f32 %v6418, %v6969
        %v7497 = vmul.f32 %v6419, %v6969
        %v7498 = vmul.f32 %v6420, %v6974
        %v7499 = vmul.f32 %v6421, %v6974
        %v7500 = vmul.f32 %v6422, %v6979
        %v7501 = vmul.f32 %v6423, %v6979
        %v7502 = vmul.f32 %v6424, %v6984
        %v7503 = vmul.f32 %v6425, %v6984
        %v7504 = vmul.f32 %v6426, %v6989
        %v7505 = vmul.f32 %v6427, %v6989
        %v7506 = vmul.f32 %v6428, %v6994
        %v7507 = vmul.f32 %v6429, %v6994
        %v7508 = vmul.f32 %v6430, %v6999
        %v7509 = vmul.f32 %v6431, %v6999
        %v7510 = vmul.f32 %v6432, %v7004
        %v7511 = vmul.f32 %v6433, %v7004
        %v7512 = vmul.f32 %v6434, %v7009
        %v7513 = vmul.f32 %v6435, %v7009
        %v7514 = vmul.f32 %v6436, %v7014
        %v7515 = vmul.f32 %v6437, %v7014
        %v7516 = vmul.f32 %v6438, %v7019
        %v7517 = vmul.f32 %v6439, %v7019
        %v7518 = vmul.f32 %v6440, %v7024
        %v7519 = vmul.f32 %v6441, %v7024
        %v7520 = vmul.f32 %v6442, %v7029
        %v7521 = vmul.f32 %v6443, %v7029
        %v7522 = vmul.f32 %v6444, %v7034
        %v7523 = vmul.f32 %v6445, %v7034
        %v7524 = vmul.f32 %v6446, %v7039
        %v7525 = vmul.f32 %v6447, %v7039
        %v7526 = vmul.f32 %v6448, %v7044
        %v7527 = vmul.f32 %v6449, %v7044
        %v7528 = vmul.f32 %v6450, %v7049
        %v7529 = vmul.f32 %v6451, %v7049
        %v7530 = vmul.f32 %v6452, %v7054
        %v7531 = vmul.f32 %v6453, %v7054
        %v7532 = vmul.f32 %v6454, %v7059
        %v7533 = vmul.f32 %v6455, %v7059
        %v7534 = vmul.f32 %v6456, %v7064
        %v7535 = vmul.f32 %v6457, %v7064
        %v7536 = vmul.f32 %v6458, %v7069
        %v7537 = vmul.f32 %v6459, %v7069
        %v7538 = vmul.f32 %v6460, %v7074
        %v7539 = vmul.f32 %v6461, %v7074
        %v7540 = vmul.f32 %v6462, %v7079
        %v7541 = vmul.f32 %v6463, %v7079
        %v7542 = vmul.f32 %v6464, %v7084
        %v7543 = vmul.f32 %v6465, %v7084
        %v7544 = vmul.f32 %v6466, %v7089
        %v7545 = vmul.f32 %v6467, %v7089
        %v7546 = vmul.f32 %v6468, %v7094
        %v7547 = vmul.f32 %v6469, %v7094
        %v7548 = vmul.f32 %v6470, %v7099
        %v7549 = vmul.f32 %v6471, %v7099
        %v7550 = vmul.f32 %v6472, %v7104
        %v7551 = vmul.f32 %v6473, %v7104
        %v7552 = vmul.f32 %v6474, %v7109
        %v7553 = vmul.f32 %v6475, %v7109
        %v7554 = vmul.f32 %v6476, %v7114
        %v7555 = vmul.f32 %v6477, %v7114
        %v7556 = vmul.f32 %v6478, %v7119
        %v7557 = vmul.f32 %v6479, %v7119
        %v7558 = vmul.f32 %v6480, %v7124
        %v7559 = vmul.f32 %v6481, %v7124
        %v7560 = vmul.f32 %v6482, %v7129
        %v7561 = vmul.f32 %v6483, %v7129
        %v7562 = vmul.f32 %v6484, %v7134
        %v7563 = vmul.f32 %v6485, %v7134
        %v7564 = vmul.f32 %v6486, %v7139
        %v7565 = vmul.f32 %v6487, %v7139
        %v7566 = vmul.f32 %v6488, %v7144
        %v7567 = vmul.f32 %v6489, %v7144
        %v7568 = vmul.f32 %v6490, %v7149
        %v7569 = vmul.f32 %v6491, %v7149
        %v7570 = vmul.f32 %v6492, %v7154
        %v7571 = vmul.f32 %v6493, %v7154
        %v7572 = vmul.f32 %v6494, %v7159
        %v7573 = vmul.f32 %v6495, %v7159
        %v7574 = vmul.f32 %v6496, %v7164
        %v7575 = vmul.f32 %v6497, %v7164
        %v7576 = vmul.f32 %v6498, %v7169
        %v7577 = vmul.f32 %v6499, %v7169
        %v7578 = vmul.f32 %v6500, %v7174
        %v7579 = vmul.f32 %v6501, %v7174
        %v7580 = vmul.f32 %v6502, %v7179
        %v7581 = vmul.f32 %v6503, %v7179
        %v7582 = vmul.f32 %v6504, %v7184
        %v7583 = vmul.f32 %v6505, %v7184
        %v7584 = vmul.f32 %v6506, %v7189
        %v7585 = vmul.f32 %v6507, %v7189
        %v7586 = vmul.f32 %v6508, %v7194
        %v7587 = vmul.f32 %v6509, %v7194
        %v7588 = vmul.f32 %v6510, %v7199
        %v7589 = vmul.f32 %v6511, %v7199
        %v7590 = vmul.f32 %v6512, %v7204
        %v7591 = vmul.f32 %v6513, %v7204
        %v7592 = vmul.f32 %v6514, %v7209
        %v7593 = vmul.f32 %v6515, %v7209
        %v7594 = vmul.f32 %v6516, %v7214
        %v7595 = vmul.f32 %v6517, %v7214
        %v7596 = vmul.f32 %v6518, %v7219
        %v7597 = vmul.f32 %v6519, %v7219
        %v7598 = vmul.f32 %v6520, %v7224
        %v7599 = vmul.f32 %v6521, %v7224
        %v7600 = vmul.f32 %v6522, %v7229
        %v7601 = vmul.f32 %v6523, %v7229
        %v7602 = vmul.f32 %v6524, %v7234
        %v7603 = vmul.f32 %v6525, %v7234
        %v7604 = vmul.f32 %v6526, %v7239
        %v7605 = vmul.f32 %v6527, %v7239
        %v7606 = vmul.f32 %v6528, %v7244
        %v7607 = vmul.f32 %v6529, %v7244
        %v7608 = vmul.f32 %v6530, %v7249
        %v7609 = vmul.f32 %v6531, %v7249
        %v7610 = vmul.f32 %v6532, %v7254
        %v7611 = vmul.f32 %v6533, %v7254
        %v7612 = vmul.f32 %v6534, %v7259
        %v7613 = vmul.f32 %v6535, %v7259
        %v7614 = vmul.f32 %v6536, %v7264
        %v7615 = vmul.f32 %v6537, %v7264
        %v7616 = vmul.f32 %v6538, %v7269
        %v7617 = vmul.f32 %v6539, %v7269
        %v7618 = vmul.f32 %v6540, %v7274
        %v7619 = vmul.f32 %v6541, %v7274
        %v7620 = vmul.f32 %v6542, %v7279
        %v7621 = vmul.f32 %v6543, %v7279
        %v7622 = vmul.f32 %v6544, %v7284
        %v7623 = vmul.f32 %v6545, %v7284
        %v7624 = vmul.f32 %v6546, %v7289
        %v7625 = vmul.f32 %v6547, %v7289
        %v7626 = vmul.f32 %v6548, %v7294
        %v7627 = vmul.f32 %v6549, %v7294
        %v7628 = vmul.f32 %v6550, %v7299
        %v7629 = vmul.f32 %v6551, %v7299
        %v7630 = vmul.f32 %v6552, %v7304
        %v7631 = vmul.f32 %v6553, %v7304
        %v7632 = vmul.f32 %v6554, %v7309
        %v7633 = vmul.f32 %v6555, %v7309
        %v7634 = vmul.f32 %v6556, %v7314
        %v7635 = vmul.f32 %v6557, %v7314
        %v7636 = vmul.f32 %v6558, %v7319
        %v7637 = vmul.f32 %v6559, %v7319
        %v7638 = vmul.f32 %v6560, %v7324
        %v7639 = vmul.f32 %v6561, %v7324
        %v7640 = vmul.f32 %v6562, %v7329
        %v7641 = vmul.f32 %v6563, %v7329
        %v7642 = vmul.f32 %v6564, %v7334
        %v7643 = vmul.f32 %v6565, %v7334
        %v7644 = vpack.c.bf16 %v7337, %v7336
        %v7645 = vpack.c.bf16 %v7339, %v7338
        %v7646 = vpack.c.bf16 %v7341, %v7340
        %v7647 = vpack.c.bf16 %v7343, %v7342
        %v7648 = vpack.c.bf16 %v7345, %v7344
        %v7649 = vpack.c.bf16 %v7347, %v7346
        %v7650 = vpack.c.bf16 %v7349, %v7348
        %v7651 = vpack.c.bf16 %v7351, %v7350
        %v7652 = vpack.c.bf16 %v7353, %v7352
        %v7653 = vpack.c.bf16 %v7355, %v7354
        %v7654 = vpack.c.bf16 %v7357, %v7356
        %v7655 = vpack.c.bf16 %v7359, %v7358
        %v7656 = vpack.c.bf16 %v7361, %v7360
        %v7657 = vpack.c.bf16 %v7363, %v7362
        %v7658 = vpack.c.bf16 %v7365, %v7364
        %v7659 = vpack.c.bf16 %v7367, %v7366
        %v7660 = vpack.c.bf16 %v7369, %v7368
        %v7661 = vpack.c.bf16 %v7371, %v7370
        %v7662 = vpack.c.bf16 %v7373, %v7372
        %v7663 = vpack.c.bf16 %v7375, %v7374
        %v7664 = vpack.c.bf16 %v7377, %v7376
        %v7665 = vpack.c.bf16 %v7379, %v7378
        %v7666 = vpack.c.bf16 %v7381, %v7380
        %v7667 = vpack.c.bf16 %v7383, %v7382
        %v7668 = vpack.c.bf16 %v7385, %v7384
        %v7669 = vpack.c.bf16 %v7387, %v7386
        %v7670 = vpack.c.bf16 %v7389, %v7388
        %v7671 = vpack.c.bf16 %v7391, %v7390
        %v7672 = vpack.c.bf16 %v7393, %v7392
        %v7673 = vpack.c.bf16 %v7395, %v7394
        %v7674 = vpack.c.bf16 %v7397, %v7396
        %v7675 = vpack.c.bf16 %v7399, %v7398
        %v7676 = vpack.c.bf16 %v7401, %v7400
        %v7677 = vpack.c.bf16 %v7403, %v7402
        %v7678 = vpack.c.bf16 %v7405, %v7404
        %v7679 = vpack.c.bf16 %v7407, %v7406
        %v7680 = vpack.c.bf16 %v7409, %v7408
        %v7681 = vpack.c.bf16 %v7411, %v7410
        %v7682 = vpack.c.bf16 %v7413, %v7412
        %v7683 = vpack.c.bf16 %v7415, %v7414
        %v7684 = vpack.c.bf16 %v7417, %v7416
        %v7685 = vpack.c.bf16 %v7419, %v7418
        %v7686 = vpack.c.bf16 %v7421, %v7420
        %v7687 = vpack.c.bf16 %v7423, %v7422
        %v7688 = vpack.c.bf16 %v7425, %v7424
        %v7689 = vpack.c.bf16 %v7427, %v7426
        %v7690 = vpack.c.bf16 %v7429, %v7428
        %v7691 = vpack.c.bf16 %v7431, %v7430
        %v7692 = vpack.c.bf16 %v7433, %v7432
        %v7693 = vpack.c.bf16 %v7435, %v7434
        %v7694 = vpack.c.bf16 %v7437, %v7436
        %v7695 = vpack.c.bf16 %v7439, %v7438
        %v7696 = vpack.c.bf16 %v7441, %v7440
        %v7697 = vpack.c.bf16 %v7443, %v7442
        %v7698 = vpack.c.bf16 %v7445, %v7444
        %v7699 = vpack.c.bf16 %v7447, %v7446
        %v7700 = vpack.c.bf16 %v7449, %v7448
        %v7701 = vpack.c.bf16 %v7451, %v7450
        %v7702 = vpack.c.bf16 %v7453, %v7452
        %v7703 = vpack.c.bf16 %v7455, %v7454
        %v7704 = vpack.c.bf16 %v7457, %v7456
        %v7705 = vpack.c.bf16 %v7459, %v7458
        %v7706 = vpack.c.bf16 %v7461, %v7460
        %v7707 = vpack.c.bf16 %v7463, %v7462
        %v7708 = vpack.c.bf16 %v7465, %v7464
        %v7709 = vpack.c.bf16 %v7467, %v7466
        %v7710 = vpack.c.bf16 %v7469, %v7468
        %v7711 = vpack.c.bf16 %v7471, %v7470
        %v7712 = vpack.c.bf16 %v7473, %v7472
        %v7713 = vpack.c.bf16 %v7475, %v7474
        %v7714 = vpack.c.bf16 %v7477, %v7476
        %v7715 = vpack.c.bf16 %v7479, %v7478
        %v7716 = vpack.c.bf16 %v7481, %v7480
        %v7717 = vpack.c.bf16 %v7483, %v7482
        %v7718 = vpack.c.bf16 %v7485, %v7484
        %v7719 = vpack.c.bf16 %v7487, %v7486
        %v7720 = vpack.c.bf16 %v7489, %v7488
        %v7721 = vpack.c.bf16 %v7491, %v7490
        %v7722 = vpack.c.bf16 %v7493, %v7492
        %v7723 = vpack.c.bf16 %v7495, %v7494
        %v7724 = vpack.c.bf16 %v7497, %v7496
        %v7725 = vpack.c.bf16 %v7499, %v7498
        %v7726 = vpack.c.bf16 %v7501, %v7500
        %v7727 = vpack.c.bf16 %v7503, %v7502
        %v7728 = vpack.c.bf16 %v7505, %v7504
        %v7729 = vpack.c.bf16 %v7507, %v7506
        %v7730 = vpack.c.bf16 %v7509, %v7508
        %v7731 = vpack.c.bf16 %v7511, %v7510
        %v7732 = vpack.c.bf16 %v7513, %v7512
        %v7733 = vpack.c.bf16 %v7515, %v7514
        %v7734 = vpack.c.bf16 %v7517, %v7516
        %v7735 = vpack.c.bf16 %v7519, %v7518
        %v7736 = vpack.c.bf16 %v7521, %v7520
        %v7737 = vpack.c.bf16 %v7523, %v7522
        %v7738 = vpack.c.bf16 %v7525, %v7524
        %v7739 = vpack.c.bf16 %v7527, %v7526
        %v7740 = vpack.c.bf16 %v7529, %v7528
        %v7741 = vpack.c.bf16 %v7531, %v7530
        %v7742 = vpack.c.bf16 %v7533, %v7532
        %v7743 = vpack.c.bf16 %v7535, %v7534
        %v7744 = vpack.c.bf16 %v7537, %v7536
        %v7745 = vpack.c.bf16 %v7539, %v7538
        %v7746 = vpack.c.bf16 %v7541, %v7540
        %v7747 = vpack.c.bf16 %v7543, %v7542
        %v7748 = vpack.c.bf16 %v7545, %v7544
        %v7749 = vpack.c.bf16 %v7547, %v7546
        %v7750 = vpack.c.bf16 %v7549, %v7548
        %v7751 = vpack.c.bf16 %v7551, %v7550
        %v7752 = vpack.c.bf16 %v7553, %v7552
        %v7753 = vpack.c.bf16 %v7555, %v7554
        %v7754 = vpack.c.bf16 %v7557, %v7556
        %v7755 = vpack.c.bf16 %v7559, %v7558
        %v7756 = vpack.c.bf16 %v7561, %v7560
        %v7757 = vpack.c.bf16 %v7563, %v7562
        %v7758 = vpack.c.bf16 %v7565, %v7564
        %v7759 = vpack.c.bf16 %v7567, %v7566
        %v7760 = vpack.c.bf16 %v7569, %v7568
        %v7761 = vpack.c.bf16 %v7571, %v7570
        %v7762 = vpack.c.bf16 %v7573, %v7572
        %v7763 = vpack.c.bf16 %v7575, %v7574
        %v7764 = vpack.c.bf16 %v7577, %v7576
        %v7765 = vpack.c.bf16 %v7579, %v7578
        %v7766 = vpack.c.bf16 %v7581, %v7580
        %v7767 = vpack.c.bf16 %v7583, %v7582
        %v7768 = vpack.c.bf16 %v7585, %v7584
        %v7769 = vpack.c.bf16 %v7587, %v7586
        %v7770 = vpack.c.bf16 %v7589, %v7588
        %v7771 = vpack.c.bf16 %v7591, %v7590
        %v7772 = vpack.c.bf16 %v7593, %v7592
        %v7773 = vpack.c.bf16 %v7595, %v7594
        %v7774 = vpack.c.bf16 %v7597, %v7596
        %v7775 = vpack.c.bf16 %v7599, %v7598
        %v7776 = vpack.c.bf16 %v7601, %v7600
        %v7777 = vpack.c.bf16 %v7603, %v7602
        %v7778 = vpack.c.bf16 %v7605, %v7604
        %v7779 = vpack.c.bf16 %v7607, %v7606
        %v7780 = vpack.c.bf16 %v7609, %v7608
        %v7781 = vpack.c.bf16 %v7611, %v7610
        %v7782 = vpack.c.bf16 %v7613, %v7612
        %v7783 = vpack.c.bf16 %v7615, %v7614
        %v7784 = vpack.c.bf16 %v7617, %v7616
        %v7785 = vpack.c.bf16 %v7619, %v7618
        %v7786 = vpack.c.bf16 %v7621, %v7620
        %v7787 = vpack.c.bf16 %v7623, %v7622
        %v7788 = vpack.c.bf16 %v7625, %v7624
        %v7789 = vpack.c.bf16 %v7627, %v7626
        %v7790 = vpack.c.bf16 %v7629, %v7628
        %v7791 = vpack.c.bf16 %v7631, %v7630
        %v7792 = vpack.c.bf16 %v7633, %v7632
        %v7793 = vpack.c.bf16 %v7635, %v7634
        %v7794 = vpack.c.bf16 %v7637, %v7636
        %v7795 = vpack.c.bf16 %v7639, %v7638
        %v7796 = vpack.c.bf16 %v7641, %v7640
        %v7797 = vpack.c.bf16 %v7643, %v7642
        %vm7798 = vcmask 1043456
        %vm7799 = vcmask 556036
        %vm7800 = vmor %vm7799, %vm7798
        %7801 = vst.msk [vmem:[#allocation2] sm:$0xff] %vm7800, %v7644
        %7802 = vst.msk [vmem:[#allocation2 + $0x8] sm:$0xff] %vm7800, %v7645
        %7803 = vst.msk [vmem:[#allocation2 + $0x10] sm:$0xff] %vm7800, %v7646
        %7804 = vst.msk [vmem:[#allocation2 + $0x18] sm:$0xff] %vm7800, %v7647
        %7805 = vst.msk [vmem:[#allocation2 + $0x20] sm:$0xff] %vm7800, %v7648
        %7806 = vst.msk [vmem:[#allocation2 + $0x28] sm:$0xff] %vm7800, %v7649
        %7807 = vst.msk [vmem:[#allocation2 + $0x30] sm:$0xff] %vm7800, %v7650
        %7808 = vst.msk [vmem:[#allocation2 + $0x38] sm:$0xff] %vm7800, %v7651
        %7809 = vst.msk [vmem:[#allocation2 + $0x40] sm:$0xff] %vm7800, %v7652
        %7810 = vst.msk [vmem:[#allocation2 + $0x48] sm:$0xff] %vm7800, %v7653
        %7811 = vst.msk [vmem:[#allocation2 + $0x50] sm:$0xff] %vm7800, %v7654
        %7812 = vst.msk [vmem:[#allocation2 + $0x58] sm:$0xff] %vm7800, %v7655
        %7813 = vst.msk [vmem:[#allocation2 + $0x60] sm:$0xff] %vm7800, %v7656
        %7814 = vst.msk [vmem:[#allocation2 + $0x68] sm:$0xff] %vm7800, %v7657
        %7815 = vst.msk [vmem:[#allocation2 + $0x70] sm:$0xff] %vm7800, %v7658
        %7816 = vst.msk [vmem:[#allocation2 + $0x78] sm:$0xff] %vm7800, %v7659
        %7817 = vst.msk [vmem:[#allocation2 + $0x80] sm:$0xff] %vm7800, %v7660
        %7818 = vst.msk [vmem:[#allocation2 + $0x88] sm:$0xff] %vm7800, %v7661
        %7819 = vst.msk [vmem:[#allocation2 + $0x90] sm:$0xff] %vm7800, %v7662
        %7820 = vst.msk [vmem:[#allocation2 + $0x98] sm:$0xff] %vm7800, %v7663
        %7821 = vst.msk [vmem:[#allocation2 + $0xa0] sm:$0xff] %vm7800, %v7664
        %7822 = vst.msk [vmem:[#allocation2 + $0xa8] sm:$0xff] %vm7800, %v7665
        %7823 = vst.msk [vmem:[#allocation2 + $0xb0] sm:$0xff] %vm7800, %v7666
        %7824 = vst.msk [vmem:[#allocation2 + $0xb8] sm:$0xff] %vm7800, %v7667
        %7825 = vst.msk [vmem:[#allocation2 + $0xc0] sm:$0xff] %vm7800, %v7668
        %7826 = vst.msk [vmem:[#allocation2 + $0xc8] sm:$0xff] %vm7800, %v7669
        %7827 = vst.msk [vmem:[#allocation2 + $0xd0] sm:$0xff] %vm7800, %v7670
        %7828 = vst.msk [vmem:[#allocation2 + $0xd8] sm:$0xff] %vm7800, %v7671
        %7829 = vst.msk [vmem:[#allocation2 + $0xe0] sm:$0xff] %vm7800, %v7672
        %7830 = vst.msk [vmem:[#allocation2 + $0xe8] sm:$0xff] %vm7800, %v7673
        %7831 = vst.msk [vmem:[#allocation2 + $0xf0] sm:$0xff] %vm7800, %v7674
        %7832 = vst.msk [vmem:[#allocation2 + $0xf8] sm:$0xff] %vm7800, %v7675
        %7833 = vst.msk [vmem:[#allocation2 + $0x100] sm:$0xff] %vm7800, %v7676
        %7834 = vst.msk [vmem:[#allocation2 + $0x108] sm:$0xff] %vm7800, %v7677
        %7835 = vst.msk [vmem:[#allocation2 + $0x110] sm:$0xff] %vm7800, %v7678
        %7836 = vst.msk [vmem:[#allocation2 + $0x118] sm:$0xff] %vm7800, %v7679
        %7837 = vst.msk [vmem:[#allocation2 + $0x120] sm:$0xff] %vm7800, %v7680
        %7838 = vst.msk [vmem:[#allocation2 + $0x128] sm:$0xff] %vm7800, %v7681
        %7839 = vst.msk [vmem:[#allocation2 + $0x130] sm:$0xff] %vm7800, %v7682
        %7840 = vst.msk [vmem:[#allocation2 + $0x138] sm:$0xff] %vm7800, %v7683
        %7841 = vst.msk [vmem:[#allocation2 + $0x140] sm:$0xff] %vm7800, %v7684
        %7842 = vst.msk [vmem:[#allocation2 + $0x148] sm:$0xff] %vm7800, %v7685
        %7843 = vst.msk [vmem:[#allocation2 + $0x150] sm:$0xff] %vm7800, %v7686
        %7844 = vst.msk [vmem:[#allocation2 + $0x158] sm:$0xff] %vm7800, %v7687
        %7845 = vst.msk [vmem:[#allocation2 + $0x160] sm:$0xff] %vm7800, %v7688
        %7846 = vst.msk [vmem:[#allocation2 + $0x168] sm:$0xff] %vm7800, %v7689
        %7847 = vst.msk [vmem:[#allocation2 + $0x170] sm:$0xff] %vm7800, %v7690
        %7848 = vst.msk [vmem:[#allocation2 + $0x178] sm:$0xff] %vm7800, %v7691
        %7849 = vst.msk [vmem:[#allocation2 + $0x180] sm:$0xff] %vm7800, %v7692
        %7850 = vst.msk [vmem:[#allocation2 + $0x188] sm:$0xff] %vm7800, %v7693
        %7851 = vst.msk [vmem:[#allocation2 + $0x190] sm:$0xff] %vm7800, %v7694
        %7852 = vst.msk [vmem:[#allocation2 + $0x198] sm:$0xff] %vm7800, %v7695
        %7853 = vst.msk [vmem:[#allocation2 + $0x1a0] sm:$0xff] %vm7800, %v7696
        %7854 = vst.msk [vmem:[#allocation2 + $0x1a8] sm:$0xff] %vm7800, %v7697
        %7855 = vst.msk [vmem:[#allocation2 + $0x1b0] sm:$0xff] %vm7800, %v7698
        %7856 = vst.msk [vmem:[#allocation2 + $0x1b8] sm:$0xff] %vm7800, %v7699
        %7857 = vst.msk [vmem:[#allocation2 + $0x1c0] sm:$0xff] %vm7800, %v7700
        %7858 = vst.msk [vmem:[#allocation2 + $0x1c8] sm:$0xff] %vm7800, %v7701
        %7859 = vst.msk [vmem:[#allocation2 + $0x1d0] sm:$0xff] %vm7800, %v7702
        %7860 = vst.msk [vmem:[#allocation2 + $0x1d8] sm:$0xff] %vm7800, %v7703
        %7861 = vst.msk [vmem:[#allocation2 + $0x1e0] sm:$0xff] %vm7800, %v7704
        %7862 = vst.msk [vmem:[#allocation2 + $0x1e8] sm:$0xff] %vm7800, %v7705
        %7863 = vst.msk [vmem:[#allocation2 + $0x1f0] sm:$0xff] %vm7800, %v7706
        %7864 = vst.msk [vmem:[#allocation2 + $0x1f8] sm:$0xff] %vm7800, %v7707
        %7865 = vst.msk [vmem:[#allocation2 + $0x200] sm:$0xff] %vm7800, %v7708
        %7866 = vst.msk [vmem:[#allocation2 + $0x208] sm:$0xff] %vm7800, %v7709
        %7867 = vst.msk [vmem:[#allocation2 + $0x210] sm:$0xff] %vm7800, %v7710
        %7868 = vst.msk [vmem:[#allocation2 + $0x218] sm:$0xff] %vm7800, %v7711
        %7869 = vst.msk [vmem:[#allocation2 + $0x220] sm:$0xff] %vm7800, %v7712
        %7870 = vst.msk [vmem:[#allocation2 + $0x228] sm:$0xff] %vm7800, %v7713
        %7871 = vst.msk [vmem:[#allocation2 + $0x230] sm:$0xff] %vm7800, %v7714
        %7872 = vst.msk [vmem:[#allocation2 + $0x238] sm:$0xff] %vm7800, %v7715
        %7873 = vst.msk [vmem:[#allocation2 + $0x240] sm:$0xff] %vm7800, %v7716
        %7874 = vst.msk [vmem:[#allocation2 + $0x248] sm:$0xff] %vm7800, %v7717
        %7875 = vst.msk [vmem:[#allocation2 + $0x250] sm:$0xff] %vm7800, %v7718
        %7876 = vst.msk [vmem:[#allocation2 + $0x258] sm:$0xff] %vm7800, %v7719
        %7877 = vst.msk [vmem:[#allocation2 + $0x260] sm:$0xff] %vm7800, %v7720
        %7878 = vst.msk [vmem:[#allocation2 + $0x268] sm:$0xff] %vm7800, %v7721
        %7879 = vst.msk [vmem:[#allocation2 + $0x270] sm:$0xff] %vm7800, %v7722
        %7880 = vst.msk [vmem:[#allocation2 + $0x278] sm:$0xff] %vm7800, %v7723
        %7881 = vst.msk [vmem:[#allocation2 + $0x280] sm:$0xff] %vm7800, %v7724
        %7882 = vst.msk [vmem:[#allocation2 + $0x288] sm:$0xff] %vm7800, %v7725
        %7883 = vst.msk [vmem:[#allocation2 + $0x290] sm:$0xff] %vm7800, %v7726
        %7884 = vst.msk [vmem:[#allocation2 + $0x298] sm:$0xff] %vm7800, %v7727
        %7885 = vst.msk [vmem:[#allocation2 + $0x2a0] sm:$0xff] %vm7800, %v7728
        %7886 = vst.msk [vmem:[#allocation2 + $0x2a8] sm:$0xff] %vm7800, %v7729
        %7887 = vst.msk [vmem:[#allocation2 + $0x2b0] sm:$0xff] %vm7800, %v7730
        %7888 = vst.msk [vmem:[#allocation2 + $0x2b8] sm:$0xff] %vm7800, %v7731
        %7889 = vst.msk [vmem:[#allocation2 + $0x2c0] sm:$0xff] %vm7800, %v7732
        %7890 = vst.msk [vmem:[#allocation2 + $0x2c8] sm:$0xff] %vm7800, %v7733
        %7891 = vst.msk [vmem:[#allocation2 + $0x2d0] sm:$0xff] %vm7800, %v7734
        %7892 = vst.msk [vmem:[#allocation2 + $0x2d8] sm:$0xff] %vm7800, %v7735
        %7893 = vst.msk [vmem:[#allocation2 + $0x2e0] sm:$0xff] %vm7800, %v7736
        %7894 = vst.msk [vmem:[#allocation2 + $0x2e8] sm:$0xff] %vm7800, %v7737
        %7895 = vst.msk [vmem:[#allocation2 + $0x2f0] sm:$0xff] %vm7800, %v7738
        %7896 = vst.msk [vmem:[#allocation2 + $0x2f8] sm:$0xff] %vm7800, %v7739
        %7897 = vst.msk [vmem:[#allocation2 + $0x300] sm:$0xff] %vm7800, %v7740
        %7898 = vst.msk [vmem:[#allocation2 + $0x308] sm:$0xff] %vm7800, %v7741
        %7899 = vst.msk [vmem:[#allocation2 + $0x310] sm:$0xff] %vm7800, %v7742
        %7900 = vst.msk [vmem:[#allocation2 + $0x318] sm:$0xff] %vm7800, %v7743
        %7901 = vst.msk [vmem:[#allocation2 + $0x320] sm:$0xff] %vm7800, %v7744
        %7902 = vst.msk [vmem:[#allocation2 + $0x328] sm:$0xff] %vm7800, %v7745
        %7903 = vst.msk [vmem:[#allocation2 + $0x330] sm:$0xff] %vm7800, %v7746
        %7904 = vst.msk [vmem:[#allocation2 + $0x338] sm:$0xff] %vm7800, %v7747
        %7905 = vst.msk [vmem:[#allocation2 + $0x340] sm:$0xff] %vm7800, %v7748
        %7906 = vst.msk [vmem:[#allocation2 + $0x348] sm:$0xff] %vm7800, %v7749
        %7907 = vst.msk [vmem:[#allocation2 + $0x350] sm:$0xff] %vm7800, %v7750
        %7908 = vst.msk [vmem:[#allocation2 + $0x358] sm:$0xff] %vm7800, %v7751
        %7909 = vst.msk [vmem:[#allocation2 + $0x360] sm:$0xff] %vm7800, %v7752
        %7910 = vst.msk [vmem:[#allocation2 + $0x368] sm:$0xff] %vm7800, %v7753
        %7911 = vst.msk [vmem:[#allocation2 + $0x370] sm:$0xff] %vm7800, %v7754
        %7912 = vst.msk [vmem:[#allocation2 + $0x378] sm:$0xff] %vm7800, %v7755
        %7913 = vst.msk [vmem:[#allocation2 + $0x380] sm:$0xff] %vm7800, %v7756
        %7914 = vst.msk [vmem:[#allocation2 + $0x388] sm:$0xff] %vm7800, %v7757
        %7915 = vst.msk [vmem:[#allocation2 + $0x390] sm:$0xff] %vm7800, %v7758
        %7916 = vst.msk [vmem:[#allocation2 + $0x398] sm:$0xff] %vm7800, %v7759
        %7917 = vst.msk [vmem:[#allocation2 + $0x3a0] sm:$0xff] %vm7800, %v7760
        %7918 = vst.msk [vmem:[#allocation2 + $0x3a8] sm:$0xff] %vm7800, %v7761
        %7919 = vst.msk [vmem:[#allocation2 + $0x3b0] sm:$0xff] %vm7800, %v7762
        %7920 = vst.msk [vmem:[#allocation2 + $0x3b8] sm:$0xff] %vm7800, %v7763
        %7921 = vst.msk [vmem:[#allocation2 + $0x3c0] sm:$0xff] %vm7800, %v7764
        %7922 = vst.msk [vmem:[#allocation2 + $0x3c8] sm:$0xff] %vm7800, %v7765
        %7923 = vst.msk [vmem:[#allocation2 + $0x3d0] sm:$0xff] %vm7800, %v7766
        %7924 = vst.msk [vmem:[#allocation2 + $0x3d8] sm:$0xff] %vm7800, %v7767
        %7925 = vst.msk [vmem:[#allocation2 + $0x3e0] sm:$0xff] %vm7800, %v7768
        %7926 = vst.msk [vmem:[#allocation2 + $0x3e8] sm:$0xff] %vm7800, %v7769
        %7927 = vst.msk [vmem:[#allocation2 + $0x3f0] sm:$0xff] %vm7800, %v7770
        %7928 = vst.msk [vmem:[#allocation2 + $0x3f8] sm:$0xff] %vm7800, %v7771
        %7929 = vst.msk [vmem:[#allocation2 + $0x400] sm:$0xff] %vm7800, %v7772
        %7930 = vst.msk [vmem:[#allocation2 + $0x408] sm:$0xff] %vm7800, %v7773
        %7931 = vst.msk [vmem:[#allocation2 + $0x410] sm:$0xff] %vm7800, %v7774
        %7932 = vst.msk [vmem:[#allocation2 + $0x418] sm:$0xff] %vm7800, %v7775
        %7933 = vst.msk [vmem:[#allocation2 + $0x420] sm:$0xff] %vm7800, %v7776
        %7934 = vst.msk [vmem:[#allocation2 + $0x428] sm:$0xff] %vm7800, %v7777
        %7935 = vst.msk [vmem:[#allocation2 + $0x430] sm:$0xff] %vm7800, %v7778
        %7936 = vst.msk [vmem:[#allocation2 + $0x438] sm:$0xff] %vm7800, %v7779
        %7937 = vst.msk [vmem:[#allocation2 + $0x440] sm:$0xff] %vm7800, %v7780
        %7938 = vst.msk [vmem:[#allocation2 + $0x448] sm:$0xff] %vm7800, %v7781
        %7939 = vst.msk [vmem:[#allocation2 + $0x450] sm:$0xff] %vm7800, %v7782
        %7940 = vst.msk [vmem:[#allocation2 + $0x458] sm:$0xff] %vm7800, %v7783
        %7941 = vst.msk [vmem:[#allocation2 + $0x460] sm:$0xff] %vm7800, %v7784
        %7942 = vst.msk [vmem:[#allocation2 + $0x468] sm:$0xff] %vm7800, %v7785
        %7943 = vst.msk [vmem:[#allocation2 + $0x470] sm:$0xff] %vm7800, %v7786
        %7944 = vst.msk [vmem:[#allocation2 + $0x478] sm:$0xff] %vm7800, %v7787
        %7945 = vst.msk [vmem:[#allocation2 + $0x480] sm:$0xff] %vm7800, %v7788
        %7946 = vst.msk [vmem:[#allocation2 + $0x488] sm:$0xff] %vm7800, %v7789
        %7947 = vst.msk [vmem:[#allocation2 + $0x490] sm:$0xff] %vm7800, %v7790
        %7948 = vst.msk [vmem:[#allocation2 + $0x498] sm:$0xff] %vm7800, %v7791
        %7949 = vst.msk [vmem:[#allocation2 + $0x4a0] sm:$0xff] %vm7800, %v7792
        %7950 = vst.msk [vmem:[#allocation2 + $0x4a8] sm:$0xff] %vm7800, %v7793
        %7951 = vst.msk [vmem:[#allocation2 + $0x4b0] sm:$0xff] %vm7800, %v7794
        %7952 = vst.msk [vmem:[#allocation2 + $0x4b8] sm:$0xff] %vm7800, %v7795
        %7953 = vst.msk [vmem:[#allocation2 + $0x4c0] sm:$0xff] %vm7800, %v7796
        %7954 = vst.msk [vmem:[#allocation2 + $0x4c8] sm:$0xff] %vm7800, %v7797
      $region44: #{tpu_custom_call.1} parent=39 // pred_fallthru
        _
      %v7955 = vld [vmem:[%s224] sm:$0xff]
      %v7956 = vld [vmem:[%s224 + $0x8] sm:$0xff]
      %v7957 = vld [vmem:[%s224 + $0x10] sm:$0xff]
      %v7958 = vld [vmem:[%s224 + $0x18] sm:$0xff]
      %v7959 = vld [vmem:[%s224 + $0x20] sm:$0xff]
      %v7960 = vld [vmem:[%s224 + $0x28] sm:$0xff]
      %v7961 = vld [vmem:[%s224 + $0x30] sm:$0xff]
      %v7962 = vld [vmem:[%s224 + $0x38] sm:$0xff]
      %v7963 = vld [vmem:[%s224 + $0x40] sm:$0xff]
      %v7964 = vld [vmem:[%s224 + $0x48] sm:$0xff]
      %v7965 = vld [vmem:[%s224 + $0x50] sm:$0xff]
      %v7966 = vld [vmem:[%s224 + $0x58] sm:$0xff]
      %v7967 = vld [vmem:[%s224 + $0x60] sm:$0xff]
      %v7968 = vld [vmem:[%s224 + $0x68] sm:$0xff]
      %v7969 = vld [vmem:[%s224 + $0x70] sm:$0xff]
      %v7970 = vld [vmem:[%s224 + $0x78] sm:$0xff]
      %v7971 = vld [vmem:[%s224 + $0x80] sm:$0xff]
      %v7972 = vld [vmem:[%s224 + $0x88] sm:$0xff]
      %v7973 = vld [vmem:[%s224 + $0x90] sm:$0xff]
      %v7974 = vld [vmem:[%s224 + $0x98] sm:$0xff]
      %v7975 = vld [vmem:[%s224 + $0xa0] sm:$0xff]
      %v7976 = vld [vmem:[%s224 + $0xa8] sm:$0xff]
      %v7977 = vld [vmem:[%s224 + $0xb0] sm:$0xff]
      %v7978 = vld [vmem:[%s224 + $0xb8] sm:$0xff]
      %v7979 = vld [vmem:[%s224 + $0xc0] sm:$0xff]
      %v7980 = vld [vmem:[%s224 + $0xc8] sm:$0xff]
      %v7981 = vld [vmem:[%s224 + $0xd0] sm:$0xff]
      %v7982 = vld [vmem:[%s224 + $0xd8] sm:$0xff]
      %v7983 = vld [vmem:[%s224 + $0xe0] sm:$0xff]
      %v7984 = vld [vmem:[%s224 + $0xe8] sm:$0xff]
      %v7985 = vld [vmem:[%s224 + $0xf0] sm:$0xff]
      %v7986 = vld [vmem:[%s224 + $0xf8] sm:$0xff]
      %v7987 = vld [vmem:[%s224 + $0x100] sm:$0xff]
      %v7988 = vld [vmem:[%s224 + $0x108] sm:$0xff]
      %v7989 = vld [vmem:[%s224 + $0x110] sm:$0xff]
      %v7990 = vld [vmem:[%s224 + $0x118] sm:$0xff]
      %v7991 = vld [vmem:[%s224 + $0x120] sm:$0xff]
      %v7992 = vld [vmem:[%s224 + $0x128] sm:$0xff]
      %v7993 = vld [vmem:[%s224 + $0x130] sm:$0xff]
      %v7994 = vld [vmem:[%s224 + $0x138] sm:$0xff]
      %v7995 = vld [vmem:[%s224 + $0x140] sm:$0xff]
      %v7996 = vld [vmem:[%s224 + $0x148] sm:$0xff]
      %v7997 = vld [vmem:[%s224 + $0x150] sm:$0xff]
      %v7998 = vld [vmem:[%s224 + $0x158] sm:$0xff]
      %v7999 = vld [vmem:[%s224 + $0x160] sm:$0xff]
      %v8000 = vld [vmem:[%s224 + $0x168] sm:$0xff]
      %v8001 = vld [vmem:[%s224 + $0x170] sm:$0xff]
      %v8002 = vld [vmem:[%s224 + $0x178] sm:$0xff]
      %v8003 = vld [vmem:[%s224 + $0x180] sm:$0xff]
      %v8004 = vld [vmem:[%s224 + $0x188] sm:$0xff]
      %v8005 = vld [vmem:[%s224 + $0x190] sm:$0xff]
      %v8006 = vld [vmem:[%s224 + $0x198] sm:$0xff]
      %v8007 = vld [vmem:[%s224 + $0x1a0] sm:$0xff]
      %v8008 = vld [vmem:[%s224 + $0x1a8] sm:$0xff]
      %v8009 = vld [vmem:[%s224 + $0x1b0] sm:$0xff]
      %v8010 = vld [vmem:[%s224 + $0x1b8] sm:$0xff]
      %v8011 = vld [vmem:[%s224 + $0x1c0] sm:$0xff]
      %v8012 = vld [vmem:[%s224 + $0x1c8] sm:$0xff]
      %v8013 = vld [vmem:[%s224 + $0x1d0] sm:$0xff]
      %v8014 = vld [vmem:[%s224 + $0x1d8] sm:$0xff]
      %v8015 = vld [vmem:[%s224 + $0x1e0] sm:$0xff]
      %v8016 = vld [vmem:[%s224 + $0x1e8] sm:$0xff]
      %v8017 = vld [vmem:[%s224 + $0x1f0] sm:$0xff]
      %v8018 = vld [vmem:[%s224 + $0x1f8] sm:$0xff]
      %v8019 = vld [vmem:[%s224 + $0x200] sm:$0xff]
      %v8020 = vld [vmem:[%s224 + $0x208] sm:$0xff]
      %v8021 = vld [vmem:[%s224 + $0x210] sm:$0xff]
      %v8022 = vld [vmem:[%s224 + $0x218] sm:$0xff]
      %v8023 = vld [vmem:[%s224 + $0x220] sm:$0xff]
      %v8024 = vld [vmem:[%s224 + $0x228] sm:$0xff]
      %v8025 = vld [vmem:[%s224 + $0x230] sm:$0xff]
      %v8026 = vld [vmem:[%s224 + $0x238] sm:$0xff]
      %v8027 = vld [vmem:[%s224 + $0x240] sm:$0xff]
      %v8028 = vld [vmem:[%s224 + $0x248] sm:$0xff]
      %v8029 = vld [vmem:[%s224 + $0x250] sm:$0xff]
      %v8030 = vld [vmem:[%s224 + $0x258] sm:$0xff]
      %v8031 = vld [vmem:[%s224 + $0x260] sm:$0xff]
      %v8032 = vld [vmem:[%s224 + $0x268] sm:$0xff]
      %v8033 = vld [vmem:[%s224 + $0x270] sm:$0xff]
      %v8034 = vld [vmem:[%s224 + $0x278] sm:$0xff]
      %v8035 = vld [vmem:[%s224 + $0x280] sm:$0xff]
      %v8036 = vld [vmem:[%s224 + $0x288] sm:$0xff]
      %v8037 = vld [vmem:[%s224 + $0x290] sm:$0xff]
      %v8038 = vld [vmem:[%s224 + $0x298] sm:$0xff]
      %v8039 = vld [vmem:[%s224 + $0x2a0] sm:$0xff]
      %v8040 = vld [vmem:[%s224 + $0x2a8] sm:$0xff]
      %v8041 = vld [vmem:[%s224 + $0x2b0] sm:$0xff]
      %v8042 = vld [vmem:[%s224 + $0x2b8] sm:$0xff]
      %v8043 = vld [vmem:[%s224 + $0x2c0] sm:$0xff]
      %v8044 = vld [vmem:[%s224 + $0x2c8] sm:$0xff]
      %v8045 = vld [vmem:[%s224 + $0x2d0] sm:$0xff]
      %v8046 = vld [vmem:[%s224 + $0x2d8] sm:$0xff]
      %v8047 = vld [vmem:[%s224 + $0x2e0] sm:$0xff]
      %v8048 = vld [vmem:[%s224 + $0x2e8] sm:$0xff]
      %v8049 = vld [vmem:[%s224 + $0x2f0] sm:$0xff]
      %v8050 = vld [vmem:[%s224 + $0x2f8] sm:$0xff]
      %v8051 = vld [vmem:[%s224 + $0x300] sm:$0xff]
      %v8052 = vld [vmem:[%s224 + $0x308] sm:$0xff]
      %v8053 = vld [vmem:[%s224 + $0x310] sm:$0xff]
      %v8054 = vld [vmem:[%s224 + $0x318] sm:$0xff]
      %v8055 = vld [vmem:[%s224 + $0x320] sm:$0xff]
      %v8056 = vld [vmem:[%s224 + $0x328] sm:$0xff]
      %v8057 = vld [vmem:[%s224 + $0x330] sm:$0xff]
      %v8058 = vld [vmem:[%s224 + $0x338] sm:$0xff]
      %v8059 = vld [vmem:[%s224 + $0x340] sm:$0xff]
      %v8060 = vld [vmem:[%s224 + $0x348] sm:$0xff]
      %v8061 = vld [vmem:[%s224 + $0x350] sm:$0xff]
      %v8062 = vld [vmem:[%s224 + $0x358] sm:$0xff]
      %v8063 = vld [vmem:[%s224 + $0x360] sm:$0xff]
      %v8064 = vld [vmem:[%s224 + $0x368] sm:$0xff]
      %v8065 = vld [vmem:[#allocation2] sm:$0xff]
      %v8066 = vld [vmem:[#allocation2 + $0x8] sm:$0xff]
      %v8067 = vld [vmem:[#allocation2 + $0x10] sm:$0xff]
      %v8068 = vld [vmem:[#allocation2 + $0x18] sm:$0xff]
      %v8069 = vld [vmem:[#allocation2 + $0x20] sm:$0xff]
      %v8070 = vld [vmem:[#allocation2 + $0x28] sm:$0xff]
      %v8071 = vld [vmem:[#allocation2 + $0x30] sm:$0xff]
      %v8072 = vld [vmem:[#allocation2 + $0x38] sm:$0xff]
      %v8073 = vld [vmem:[#allocation2 + $0x40] sm:$0xff]
      %v8074 = vld [vmem:[#allocation2 + $0x48] sm:$0xff]
      %v8075 = vld [vmem:[#allocation2 + $0x50] sm:$0xff]
      %v8076 = vld [vmem:[#allocation2 + $0x58] sm:$0xff]
      %v8077 = vld [vmem:[#allocation2 + $0x60] sm:$0xff]
      %v8078 = vld [vmem:[#allocation2 + $0x68] sm:$0xff]
      %v8079 = vld [vmem:[#allocation2 + $0x70] sm:$0xff]
      %v8080 = vld [vmem:[#allocation2 + $0x78] sm:$0xff]
      %v8081 = vld [vmem:[#allocation2 + $0x80] sm:$0xff]
      %v8082 = vld [vmem:[#allocation2 + $0x88] sm:$0xff]
      %v8083 = vld [vmem:[#allocation2 + $0x90] sm:$0xff]
      %v8084 = vld [vmem:[#allocation2 + $0x98] sm:$0xff]
      %v8085 = vld [vmem:[#allocation2 + $0xa0] sm:$0xff]
      %v8086 = vld [vmem:[#allocation2 + $0xa8] sm:$0xff]
      %v8087 = vld [vmem:[#allocation2 + $0xb0] sm:$0xff]
      %v8088 = vld [vmem:[#allocation2 + $0xb8] sm:$0xff]
      %v8089 = vld [vmem:[#allocation2 + $0xc0] sm:$0xff]
      %v8090 = vld [vmem:[#allocation2 + $0xc8] sm:$0xff]
      %v8091 = vld [vmem:[#allocation2 + $0xd0] sm:$0xff]
      %v8092 = vld [vmem:[#allocation2 + $0xd8] sm:$0xff]
      %v8093 = vld [vmem:[#allocation2 + $0xe0] sm:$0xff]
      %v8094 = vld [vmem:[#allocation2 + $0xe8] sm:$0xff]
      %v8095 = vld [vmem:[#allocation2 + $0xf0] sm:$0xff]
      %v8096 = vld [vmem:[#allocation2 + $0xf8] sm:$0xff]
      %v8097 = vld [vmem:[#allocation2 + $0x100] sm:$0xff]
      %v8098 = vld [vmem:[#allocation2 + $0x108] sm:$0xff]
      %v8099 = vld [vmem:[#allocation2 + $0x110] sm:$0xff]
      %v8100 = vld [vmem:[#allocation2 + $0x118] sm:$0xff]
      %v8101 = vld [vmem:[#allocation2 + $0x120] sm:$0xff]
      %v8102 = vld [vmem:[#allocation2 + $0x128] sm:$0xff]
      %v8103 = vld [vmem:[#allocation2 + $0x130] sm:$0xff]
      %v8104 = vld [vmem:[#allocation2 + $0x138] sm:$0xff]
      %v8105 = vld [vmem:[#allocation2 + $0x140] sm:$0xff]
      %v8106 = vld [vmem:[#allocation2 + $0x148] sm:$0xff]
      %v8107 = vld [vmem:[#allocation2 + $0x150] sm:$0xff]
      %v8108 = vld [vmem:[#allocation2 + $0x158] sm:$0xff]
      %v8109 = vld [vmem:[#allocation2 + $0x160] sm:$0xff]
      %v8110 = vld [vmem:[#allocation2 + $0x168] sm:$0xff]
      %v8111 = vld [vmem:[#allocation2 + $0x170] sm:$0xff]
      %v8112 = vld [vmem:[#allocation2 + $0x178] sm:$0xff]
      %v8113 = vld [vmem:[#allocation2 + $0x180] sm:$0xff]
      %v8114 = vld [vmem:[#allocation2 + $0x188] sm:$0xff]
      %v8115 = vld [vmem:[#allocation2 + $0x190] sm:$0xff]
      %v8116 = vld [vmem:[#allocation2 + $0x198] sm:$0xff]
      %v8117 = vld [vmem:[#allocation2 + $0x1a0] sm:$0xff]
      %v8118 = vld [vmem:[#allocation2 + $0x1a8] sm:$0xff]
      %v8119 = vld [vmem:[#allocation2 + $0x1b0] sm:$0xff]
      %v8120 = vld [vmem:[#allocation2 + $0x1b8] sm:$0xff]
      %v8121 = vld [vmem:[#allocation2 + $0x1c0] sm:$0xff]
      %v8122 = vld [vmem:[#allocation2 + $0x1c8] sm:$0xff]
      %v8123 = vld [vmem:[#allocation2 + $0x1d0] sm:$0xff]
      %v8124 = vld [vmem:[#allocation2 + $0x1d8] sm:$0xff]
      %v8125 = vld [vmem:[#allocation2 + $0x1e0] sm:$0xff]
      %v8126 = vld [vmem:[#allocation2 + $0x1e8] sm:$0xff]
      %v8127 = vld [vmem:[#allocation2 + $0x1f0] sm:$0xff]
      %v8128 = vld [vmem:[#allocation2 + $0x1f8] sm:$0xff]
      %v8129 = vld [vmem:[#allocation2 + $0x200] sm:$0xff]
      %v8130 = vld [vmem:[#allocation2 + $0x208] sm:$0xff]
      %v8131 = vld [vmem:[#allocation2 + $0x210] sm:$0xff]
      %v8132 = vld [vmem:[#allocation2 + $0x218] sm:$0xff]
      %v8133 = vld [vmem:[#allocation2 + $0x220] sm:$0xff]
      %v8134 = vld [vmem:[#allocation2 + $0x228] sm:$0xff]
      %v8135 = vld [vmem:[#allocation2 + $0x230] sm:$0xff]
      %v8136 = vld [vmem:[#allocation2 + $0x238] sm:$0xff]
      %v8137 = vld [vmem:[#allocation2 + $0x240] sm:$0xff]
      %v8138 = vld [vmem:[#allocation2 + $0x248] sm:$0xff]
      %v8139 = vld [vmem:[#allocation2 + $0x250] sm:$0xff]
      %v8140 = vld [vmem:[#allocation2 + $0x258] sm:$0xff]
      %v8141 = vld [vmem:[#allocation2 + $0x260] sm:$0xff]
      %v8142 = vld [vmem:[#allocation2 + $0x268] sm:$0xff]
      %v8143 = vld [vmem:[#allocation2 + $0x270] sm:$0xff]
      %v8144 = vld [vmem:[#allocation2 + $0x278] sm:$0xff]
      %v8145 = vld [vmem:[#allocation2 + $0x280] sm:$0xff]
      %v8146 = vld [vmem:[#allocation2 + $0x288] sm:$0xff]
      %v8147 = vld [vmem:[#allocation2 + $0x290] sm:$0xff]
      %v8148 = vld [vmem:[#allocation2 + $0x298] sm:$0xff]
      %v8149 = vld [vmem:[#allocation2 + $0x2a0] sm:$0xff]
      %v8150 = vld [vmem:[#allocation2 + $0x2a8] sm:$0xff]
      %v8151 = vld [vmem:[#allocation2 + $0x2b0] sm:$0xff]
      %v8152 = vld [vmem:[#allocation2 + $0x2b8] sm:$0xff]
      %v8153 = vld [vmem:[#allocation2 + $0x2c0] sm:$0xff]
      %v8154 = vld [vmem:[#allocation2 + $0x2c8] sm:$0xff]
      %v8155 = vld [vmem:[#allocation2 + $0x2d0] sm:$0xff]
      %v8156 = vld [vmem:[#allocation2 + $0x2d8] sm:$0xff]
      %v8157 = vld [vmem:[#allocation2 + $0x2e0] sm:$0xff]
      %v8158 = vld [vmem:[#allocation2 + $0x2e8] sm:$0xff]
      %v8159 = vld [vmem:[#allocation2 + $0x2f0] sm:$0xff]
      %v8160 = vld [vmem:[#allocation2 + $0x2f8] sm:$0xff]
      %v8161 = vld [vmem:[#allocation2 + $0x300] sm:$0xff]
      %v8162 = vld [vmem:[#allocation2 + $0x308] sm:$0xff]
      %v8163 = vld [vmem:[#allocation2 + $0x310] sm:$0xff]
      %v8164 = vld [vmem:[#allocation2 + $0x318] sm:$0xff]
      %v8165 = vld [vmem:[#allocation2 + $0x320] sm:$0xff]
      %v8166 = vld [vmem:[#allocation2 + $0x328] sm:$0xff]
      %v8167 = vld [vmem:[#allocation2 + $0x330] sm:$0xff]
      %v8168 = vld [vmem:[#allocation2 + $0x338] sm:$0xff]
      %v8169 = vld [vmem:[#allocation2 + $0x340] sm:$0xff]
      %v8170 = vld [vmem:[#allocation2 + $0x348] sm:$0xff]
      %v8171 = vld [vmem:[#allocation2 + $0x350] sm:$0xff]
      %v8172 = vld [vmem:[#allocation2 + $0x358] sm:$0xff]
      %v8173 = vld [vmem:[#allocation2 + $0x360] sm:$0xff]
      %v8174 = vld [vmem:[#allocation2 + $0x368] sm:$0xff]
      %v8175 = vld [vmem:[#allocation2 + $0x370] sm:$0xff]
      %v8176 = vld [vmem:[#allocation2 + $0x378] sm:$0xff]
      %v8177 = vld [vmem:[#allocation2 + $0x380] sm:$0xff]
      %v8178 = vld [vmem:[#allocation2 + $0x388] sm:$0xff]
      %v8179 = vld [vmem:[#allocation2 + $0x390] sm:$0xff]
      %v8180 = vld [vmem:[#allocation2 + $0x398] sm:$0xff]
      %v8181 = vld [vmem:[#allocation2 + $0x3a0] sm:$0xff]
      %v8182 = vld [vmem:[#allocation2 + $0x3a8] sm:$0xff]
      %v8183 = vld [vmem:[#allocation2 + $0x3b0] sm:$0xff]
      %v8184 = vld [vmem:[#allocation2 + $0x3b8] sm:$0xff]
      %v8185 = vld [vmem:[#allocation2 + $0x3c0] sm:$0xff]
      %v8186 = vld [vmem:[#allocation2 + $0x3c8] sm:$0xff]
      %v8187 = vld [vmem:[#allocation2 + $0x3d0] sm:$0xff]
      %v8188 = vld [vmem:[#allocation2 + $0x3d8] sm:$0xff]
      %v8189 = vld [vmem:[#allocation2 + $0x3e0] sm:$0xff]
      %v8190 = vld [vmem:[#allocation2 + $0x3e8] sm:$0xff]
      %v8191 = vld [vmem:[#allocation2 + $0x3f0] sm:$0xff]
      %v8192 = vld [vmem:[#allocation2 + $0x3f8] sm:$0xff]
      %v8193 = vld [vmem:[#allocation2 + $0x400] sm:$0xff]
      %v8194 = vld [vmem:[#allocation2 + $0x408] sm:$0xff]
      %v8195 = vld [vmem:[#allocation2 + $0x410] sm:$0xff]
      %v8196 = vld [vmem:[#allocation2 + $0x418] sm:$0xff]
      %v8197 = vld [vmem:[#allocation2 + $0x420] sm:$0xff]
      %v8198 = vld [vmem:[#allocation2 + $0x428] sm:$0xff]
      %v8199 = vld [vmem:[#allocation2 + $0x430] sm:$0xff]
      %v8200 = vld [vmem:[#allocation2 + $0x438] sm:$0xff]
      %v8201 = vld [vmem:[#allocation2 + $0x440] sm:$0xff]
      %v8202 = vld [vmem:[#allocation2 + $0x448] sm:$0xff]
      %v8203 = vld [vmem:[#allocation2 + $0x450] sm:$0xff]
      %v8204 = vld [vmem:[#allocation2 + $0x458] sm:$0xff]
      %v8205 = vld [vmem:[#allocation2 + $0x460] sm:$0xff]
      %v8206 = vld [vmem:[#allocation2 + $0x468] sm:$0xff]
      %v8207 = vld [vmem:[#allocation2 + $0x470] sm:$0xff]
      %v8208 = vld [vmem:[#allocation2 + $0x478] sm:$0xff]
      %v8209 = vld [vmem:[#allocation2 + $0x480] sm:$0xff]
      %v8210 = vld [vmem:[#allocation2 + $0x488] sm:$0xff]
      %v8211 = vld [vmem:[#allocation2 + $0x490] sm:$0xff]
      %v8212 = vld [vmem:[#allocation2 + $0x498] sm:$0xff]
      %v8213 = vld [vmem:[#allocation2 + $0x4a0] sm:$0xff]
      %v8214 = vld [vmem:[#allocation2 + $0x4a8] sm:$0xff]
      %v8215 = vld [vmem:[#allocation2 + $0x4b0] sm:$0xff]
      %v8216 = vld [vmem:[#allocation2 + $0x4b8] sm:$0xff]
      %v8217 = vld [vmem:[#allocation2 + $0x4c0] sm:$0xff]
      %v8218 = vld [vmem:[#allocation2 + $0x4c8] sm:$0xff]
      %v8329 = vunpack.c.l.b16 %v7955
      %v8330 = vunpack.c.h.b16 %v7955
      %v8331 = vunpack.c.l.b16 %v7956
      %v8332 = vunpack.c.h.b16 %v7956
      %v8333 = vunpack.c.l.b16 %v7957
      %v8334 = vunpack.c.h.b16 %v7957
      %v8335 = vunpack.c.l.b16 %v7958
      %v8336 = vunpack.c.h.b16 %v7958
      %v8337 = vunpack.c.l.b16 %v7959
      %v8338 = vunpack.c.h.b16 %v7959
      %v8339 = vunpack.c.l.b16 %v7960
      %v8340 = vunpack.c.h.b16 %v7960
      %v8341 = vunpack.c.l.b16 %v7961
      %v8342 = vunpack.c.h.b16 %v7961
      %v8343 = vunpack.c.l.b16 %v7962
      %v8344 = vunpack.c.h.b16 %v7962
      %v8345 = vunpack.c.l.b16 %v7963
      %v8346 = vunpack.c.h.b16 %v7963
      %v8347 = vunpack.c.l.b16 %v7964
      %v8348 = vunpack.c.h.b16 %v7964
      %v8349 = vunpack.c.l.b16 %v7965
      %v8350 = vunpack.c.h.b16 %v7965
      %v8351 = vunpack.c.l.b16 %v7966
      %v8352 = vunpack.c.h.b16 %v7966
      %v8353 = vunpack.c.l.b16 %v7967
      %v8354 = vunpack.c.h.b16 %v7967
      %v8355 = vunpack.c.l.b16 %v7968
      %v8356 = vunpack.c.h.b16 %v7968
      %v8357 = vunpack.c.l.b16 %v7969
      %v8358 = vunpack.c.h.b16 %v7969
      %v8359 = vunpack.c.l.b16 %v7970
      %v8360 = vunpack.c.h.b16 %v7970
      %v8361 = vunpack.c.l.b16 %v7971
      %v8362 = vunpack.c.h.b16 %v7971
      %v8363 = vunpack.c.l.b16 %v7972
      %v8364 = vunpack.c.h.b16 %v7972
      %v8365 = vunpack.c.l.b16 %v7973
      %v8366 = vunpack.c.h.b16 %v7973
      %v8367 = vunpack.c.l.b16 %v7974
      %v8368 = vunpack.c.h.b16 %v7974
      %v8369 = vunpack.c.l.b16 %v7975
      %v8370 = vunpack.c.h.b16 %v7975
      %v8371 = vunpack.c.l.b16 %v7976
      %v8372 = vunpack.c.h.b16 %v7976
      %v8373 = vunpack.c.l.b16 %v7977
      %v8374 = vunpack.c.h.b16 %v7977
      %v8375 = vunpack.c.l.b16 %v7978
      %v8376 = vunpack.c.h.b16 %v7978
      %v8377 = vunpack.c.l.b16 %v7979
      %v8378 = vunpack.c.h.b16 %v7979
      %v8379 = vunpack.c.l.b16 %v7980
      %v8380 = vunpack.c.h.b16 %v7980
      %v8381 = vunpack.c.l.b16 %v7981
      %v8382 = vunpack.c.h.b16 %v7981
      %v8383 = vunpack.c.l.b16 %v7982
      %v8384 = vunpack.c.h.b16 %v7982
      %v8385 = vunpack.c.l.b16 %v7983
      %v8386 = vunpack.c.h.b16 %v7983
      %v8387 = vunpack.c.l.b16 %v7984
      %v8388 = vunpack.c.h.b16 %v7984
      %v8389 = vunpack.c.l.b16 %v7985
      %v8390 = vunpack.c.h.b16 %v7985
      %v8391 = vunpack.c.l.b16 %v7986
      %v8392 = vunpack.c.h.b16 %v7986
      %v8393 = vunpack.c.l.b16 %v7987
      %v8394 = vunpack.c.h.b16 %v7987
      %v8395 = vunpack.c.l.b16 %v7988
      %v8396 = vunpack.c.h.b16 %v7988
      %v8397 = vunpack.c.l.b16 %v7989
      %v8398 = vunpack.c.h.b16 %v7989
      %v8399 = vunpack.c.l.b16 %v7990
      %v8400 = vunpack.c.h.b16 %v7990
      %v8401 = vunpack.c.l.b16 %v7991
      %v8402 = vunpack.c.h.b16 %v7991
      %v8403 = vunpack.c.l.b16 %v7992
      %v8404 = vunpack.c.h.b16 %v7992
      %v8405 = vunpack.c.l.b16 %v7993
      %v8406 = vunpack.c.h.b16 %v7993
      %v8407 = vunpack.c.l.b16 %v7994
      %v8408 = vunpack.c.h.b16 %v7994
      %v8409 = vunpack.c.l.b16 %v7995
      %v8410 = vunpack.c.h.b16 %v7995
      %v8411 = vunpack.c.l.b16 %v7996
      %v8412 = vunpack.c.h.b16 %v7996
      %v8413 = vunpack.c.l.b16 %v7997
      %v8414 = vunpack.c.h.b16 %v7997
      %v8415 = vunpack.c.l.b16 %v7998
      %v8416 = vunpack.c.h.b16 %v7998
      %v8417 = vunpack.c.l.b16 %v7999
      %v8418 = vunpack.c.h.b16 %v7999
      %v8419 = vunpack.c.l.b16 %v8000
      %v8420 = vunpack.c.h.b16 %v8000
      %v8421 = vunpack.c.l.b16 %v8001
      %v8422 = vunpack.c.h.b16 %v8001
      %v8423 = vunpack.c.l.b16 %v8002
      %v8424 = vunpack.c.h.b16 %v8002
      %v8425 = vunpack.c.l.b16 %v8003
      %v8426 = vunpack.c.h.b16 %v8003
      %v8427 = vunpack.c.l.b16 %v8004
      %v8428 = vunpack.c.h.b16 %v8004
      %v8429 = vunpack.c.l.b16 %v8005
      %v8430 = vunpack.c.h.b16 %v8005
      %v8431 = vunpack.c.l.b16 %v8006
      %v8432 = vunpack.c.h.b16 %v8006
      %v8433 = vunpack.c.l.b16 %v8007
      %v8434 = vunpack.c.h.b16 %v8007
      %v8435 = vunpack.c.l.b16 %v8008
      %v8436 = vunpack.c.h.b16 %v8008
      %v8437 = vunpack.c.l.b16 %v8009
      %v8438 = vunpack.c.h.b16 %v8009
      %v8439 = vunpack.c.l.b16 %v8010
      %v8440 = vunpack.c.h.b16 %v8010
      %v8441 = vunpack.c.l.b16 %v8011
      %v8442 = vunpack.c.h.b16 %v8011
      %v8443 = vunpack.c.l.b16 %v8012
      %v8444 = vunpack.c.h.b16 %v8012
      %v8445 = vunpack.c.l.b16 %v8013
      %v8446 = vunpack.c.h.b16 %v8013
      %v8447 = vunpack.c.l.b16 %v8014
      %v8448 = vunpack.c.h.b16 %v8014
      %v8449 = vunpack.c.l.b16 %v8015
      %v8450 = vunpack.c.h.b16 %v8015
      %v8451 = vunpack.c.l.b16 %v8016
      %v8452 = vunpack.c.h.b16 %v8016
      %v8453 = vunpack.c.l.b16 %v8017
      %v8454 = vunpack.c.h.b16 %v8017
      %v8455 = vunpack.c.l.b16 %v8018
      %v8456 = vunpack.c.h.b16 %v8018
      %v8457 = vunpack.c.l.b16 %v8019
      %v8458 = vunpack.c.h.b16 %v8019
      %v8459 = vunpack.c.l.b16 %v8020
      %v8460 = vunpack.c.h.b16 %v8020
      %v8461 = vunpack.c.l.b16 %v8021
      %v8462 = vunpack.c.h.b16 %v8021
      %v8463 = vunpack.c.l.b16 %v8022
      %v8464 = vunpack.c.h.b16 %v8022
      %v8465 = vunpack.c.l.b16 %v8023
      %v8466 = vunpack.c.h.b16 %v8023
      %v8467 = vunpack.c.l.b16 %v8024
      %v8468 = vunpack.c.h.b16 %v8024
      %v8469 = vunpack.c.l.b16 %v8025
      %v8470 = vunpack.c.h.b16 %v8025
      %v8471 = vunpack.c.l.b16 %v8026
      %v8472 = vunpack.c.h.b16 %v8026
      %v8473 = vunpack.c.l.b16 %v8027
      %v8474 = vunpack.c.h.b16 %v8027
      %v8475 = vunpack.c.l.b16 %v8028
      %v8476 = vunpack.c.h.b16 %v8028
      %v8477 = vunpack.c.l.b16 %v8029
      %v8478 = vunpack.c.h.b16 %v8029
      %v8479 = vunpack.c.l.b16 %v8030
      %v8480 = vunpack.c.h.b16 %v8030
      %v8481 = vunpack.c.l.b16 %v8031
      %v8482 = vunpack.c.h.b16 %v8031
      %v8483 = vunpack.c.l.b16 %v8032
      %v8484 = vunpack.c.h.b16 %v8032
      %v8485 = vunpack.c.l.b16 %v8033
      %v8486 = vunpack.c.h.b16 %v8033
      %v8487 = vunpack.c.l.b16 %v8034
      %v8488 = vunpack.c.h.b16 %v8034
      %v8489 = vunpack.c.l.b16 %v8035
      %v8490 = vunpack.c.h.b16 %v8035
      %v8491 = vunpack.c.l.b16 %v8036
      %v8492 = vunpack.c.h.b16 %v8036
      %v8493 = vunpack.c.l.b16 %v8037
      %v8494 = vunpack.c.h.b16 %v8037
      %v8495 = vunpack.c.l.b16 %v8038
      %v8496 = vunpack.c.h.b16 %v8038
      %v8497 = vunpack.c.l.b16 %v8039
      %v8498 = vunpack.c.h.b16 %v8039
      %v8499 = vunpack.c.l.b16 %v8040
      %v8500 = vunpack.c.h.b16 %v8040
      %v8501 = vunpack.c.l.b16 %v8041
      %v8502 = vunpack.c.h.b16 %v8041
      %v8503 = vunpack.c.l.b16 %v8042
      %v8504 = vunpack.c.h.b16 %v8042
      %v8505 = vunpack.c.l.b16 %v8043
      %v8506 = vunpack.c.h.b16 %v8043
      %v8507 = vunpack.c.l.b16 %v8044
      %v8508 = vunpack.c.h.b16 %v8044
      %v8509 = vunpack.c.l.b16 %v8045
      %v8510 = vunpack.c.h.b16 %v8045
      %v8511 = vunpack.c.l.b16 %v8046
      %v8512 = vunpack.c.h.b16 %v8046
      %v8513 = vunpack.c.l.b16 %v8047
      %v8514 = vunpack.c.h.b16 %v8047
      %v8515 = vunpack.c.l.b16 %v8048
      %v8516 = vunpack.c.h.b16 %v8048
      %v8517 = vunpack.c.l.b16 %v8049
      %v8518 = vunpack.c.h.b16 %v8049
      %v8519 = vunpack.c.l.b16 %v8050
      %v8520 = vunpack.c.h.b16 %v8050
      %v8521 = vunpack.c.l.b16 %v8051
      %v8522 = vunpack.c.h.b16 %v8051
      %v8523 = vunpack.c.l.b16 %v8052
      %v8524 = vunpack.c.h.b16 %v8052
      %v8525 = vunpack.c.l.b16 %v8053
      %v8526 = vunpack.c.h.b16 %v8053
      %v8527 = vunpack.c.l.b16 %v8054
      %v8528 = vunpack.c.h.b16 %v8054
      %v8529 = vunpack.c.l.b16 %v8055
      %v8530 = vunpack.c.h.b16 %v8055
      %v8531 = vunpack.c.l.b16 %v8056
      %v8532 = vunpack.c.h.b16 %v8056
      %v8533 = vunpack.c.l.b16 %v8057
      %v8534 = vunpack.c.h.b16 %v8057
      %v8535 = vunpack.c.l.b16 %v8058
      %v8536 = vunpack.c.h.b16 %v8058
      %v8537 = vunpack.c.l.b16 %v8059
      %v8538 = vunpack.c.h.b16 %v8059
      %v8539 = vunpack.c.l.b16 %v8060
      %v8540 = vunpack.c.h.b16 %v8060
      %v8541 = vunpack.c.l.b16 %v8061
      %v8542 = vunpack.c.h.b16 %v8061
      %v8543 = vunpack.c.l.b16 %v8062
      %v8544 = vunpack.c.h.b16 %v8062
      %v8545 = vunpack.c.l.b16 %v8063
      %v8546 = vunpack.c.h.b16 %v8063
      %v8547 = vunpack.c.l.b16 %v8064
      %v8548 = vunpack.c.h.b16 %v8064
      %v8549 = vpack.c.b16 %v8339, %v8329
      %v8550 = vpack.c.b16 %v8340, %v8330
      %v8551 = vpack.c.b16 %v8341, %v8331
      %v8552 = vpack.c.b16 %v8342, %v8332
      %v8553 = vpack.c.b16 %v8343, %v8333
      %v8554 = vpack.c.b16 %v8344, %v8334
      %v8555 = vpack.c.b16 %v8345, %v8335
      %v8556 = vpack.c.b16 %v8346, %v8336
      %v8557 = vpack.c.b16 %v8347, %v8337
      %v8558 = vpack.c.b16 %v8348, %v8338
      %v8559 = vpack.c.b16 %v8359, %v8349
      %v8560 = vpack.c.b16 %v8360, %v8350
      %v8561 = vpack.c.b16 %v8361, %v8351
      %v8562 = vpack.c.b16 %v8362, %v8352
      %v8563 = vpack.c.b16 %v8363, %v8353
      %v8564 = vpack.c.b16 %v8364, %v8354
      %v8565 = vpack.c.b16 %v8365, %v8355
      %v8566 = vpack.c.b16 %v8366, %v8356
      %v8567 = vpack.c.b16 %v8367, %v8357
      %v8568 = vpack.c.b16 %v8368, %v8358
      %v8569 = vpack.c.b16 %v8379, %v8369
      %v8570 = vpack.c.b16 %v8380, %v8370
      %v8571 = vpack.c.b16 %v8381, %v8371
      %v8572 = vpack.c.b16 %v8382, %v8372
      %v8573 = vpack.c.b16 %v8383, %v8373
      %v8574 = vpack.c.b16 %v8384, %v8374
      %v8575 = vpack.c.b16 %v8385, %v8375
      %v8576 = vpack.c.b16 %v8386, %v8376
      %v8577 = vpack.c.b16 %v8387, %v8377
      %v8578 = vpack.c.b16 %v8388, %v8378
      %v8579 = vpack.c.b16 %v8399, %v8389
      %v8580 = vpack.c.b16 %v8400, %v8390
      %v8581 = vpack.c.b16 %v8401, %v8391
      %v8582 = vpack.c.b16 %v8402, %v8392
      %v8583 = vpack.c.b16 %v8403, %v8393
      %v8584 = vpack.c.b16 %v8404, %v8394
      %v8585 = vpack.c.b16 %v8405, %v8395
      %v8586 = vpack.c.b16 %v8406, %v8396
      %v8587 = vpack.c.b16 %v8407, %v8397
      %v8588 = vpack.c.b16 %v8408, %v8398
      %v8589 = vpack.c.b16 %v8419, %v8409
      %v8590 = vpack.c.b16 %v8420, %v8410
      %v8591 = vpack.c.b16 %v8421, %v8411
      %v8592 = vpack.c.b16 %v8422, %v8412
      %v8593 = vpack.c.b16 %v8423, %v8413
      %v8594 = vpack.c.b16 %v8424, %v8414
      %v8595 = vpack.c.b16 %v8425, %v8415
      %v8596 = vpack.c.b16 %v8426, %v8416
      %v8597 = vpack.c.b16 %v8427, %v8417
      %v8598 = vpack.c.b16 %v8428, %v8418
      %v8599 = vpack.c.b16 %v8439, %v8429
      %v8600 = vpack.c.b16 %v8440, %v8430
      %v8601 = vpack.c.b16 %v8441, %v8431
      %v8602 = vpack.c.b16 %v8442, %v8432
      %v8603 = vpack.c.b16 %v8443, %v8433
      %v8604 = vpack.c.b16 %v8444, %v8434
      %v8605 = vpack.c.b16 %v8445, %v8435
      %v8606 = vpack.c.b16 %v8446, %v8436
      %v8607 = vpack.c.b16 %v8447, %v8437
      %v8608 = vpack.c.b16 %v8448, %v8438
      %v8609 = vpack.c.b16 %v8459, %v8449
      %v8610 = vpack.c.b16 %v8460, %v8450
      %v8611 = vpack.c.b16 %v8461, %v8451
      %v8612 = vpack.c.b16 %v8462, %v8452
      %v8613 = vpack.c.b16 %v8463, %v8453
      %v8614 = vpack.c.b16 %v8464, %v8454
      %v8615 = vpack.c.b16 %v8465, %v8455
      %v8616 = vpack.c.b16 %v8466, %v8456
      %v8617 = vpack.c.b16 %v8467, %v8457
      %v8618 = vpack.c.b16 %v8468, %v8458
      %v8619 = vpack.c.b16 %v8479, %v8469
      %v8620 = vpack.c.b16 %v8480, %v8470
      %v8621 = vpack.c.b16 %v8481, %v8471
      %v8622 = vpack.c.b16 %v8482, %v8472
      %v8623 = vpack.c.b16 %v8483, %v8473
      %v8624 = vpack.c.b16 %v8484, %v8474
      %v8625 = vpack.c.b16 %v8485, %v8475
      %v8626 = vpack.c.b16 %v8486, %v8476
      %v8627 = vpack.c.b16 %v8487, %v8477
      %v8628 = vpack.c.b16 %v8488, %v8478
      %v8629 = vpack.c.b16 %v8499, %v8489
      %v8630 = vpack.c.b16 %v8500, %v8490
      %v8631 = vpack.c.b16 %v8501, %v8491
      %v8632 = vpack.c.b16 %v8502, %v8492
      %v8633 = vpack.c.b16 %v8503, %v8493
      %v8634 = vpack.c.b16 %v8504, %v8494
      %v8635 = vpack.c.b16 %v8505, %v8495
      %v8636 = vpack.c.b16 %v8506, %v8496
      %v8637 = vpack.c.b16 %v8507, %v8497
      %v8638 = vpack.c.b16 %v8508, %v8498
      %v8639 = vpack.c.b16 %v8519, %v8509
      %v8640 = vpack.c.b16 %v8520, %v8510
      %v8641 = vpack.c.b16 %v8521, %v8511
      %v8642 = vpack.c.b16 %v8522, %v8512
      %v8643 = vpack.c.b16 %v8523, %v8513
      %v8644 = vpack.c.b16 %v8524, %v8514
      %v8645 = vpack.c.b16 %v8525, %v8515
      %v8646 = vpack.c.b16 %v8526, %v8516
      %v8647 = vpack.c.b16 %v8527, %v8517
      %v8648 = vpack.c.b16 %v8528, %v8518
      %v8649 = vpack.c.b16 %v8539, %v8529
      %v8650 = vpack.c.b16 %v8540, %v8530
      %v8651 = vpack.c.b16 %v8541, %v8531
      %v8652 = vpack.c.b16 %v8542, %v8532
      %v8653 = vpack.c.b16 %v8543, %v8533
      %v8654 = vpack.c.b16 %v8544, %v8534
      %v8655 = vpack.c.b16 %v8545, %v8535
      %v8656 = vpack.c.b16 %v8546, %v8536
      %v8657 = vpack.c.b16 %v8547, %v8537
      %v8658 = vpack.c.b16 %v8548, %v8538
      %v8912 = vunpack.c.l.b16 %v8065
      %v8913 = vunpack.c.h.b16 %v8065
      %v8914 = vunpack.c.l.b16 %v8066
      %v8915 = vunpack.c.h.b16 %v8066
      %v8916 = vunpack.c.l.b16 %v8067
      %v8917 = vunpack.c.h.b16 %v8067
      %v8918 = vunpack.c.l.b16 %v8068
      %v8919 = vunpack.c.h.b16 %v8068
      %v8920 = vunpack.c.l.b16 %v8069
      %v8921 = vunpack.c.h.b16 %v8069
      %v8922 = vunpack.c.l.b16 %v8070
      %v8923 = vunpack.c.h.b16 %v8070
      %v8924 = vunpack.c.l.b16 %v8071
      %v8925 = vunpack.c.h.b16 %v8071
      %v8926 = vunpack.c.l.b16 %v8072
      %v8927 = vunpack.c.h.b16 %v8072
      %v8928 = vunpack.c.l.b16 %v8073
      %v8929 = vunpack.c.h.b16 %v8073
      %v8930 = vunpack.c.l.b16 %v8074
      %v8931 = vunpack.c.h.b16 %v8074
      %v8932 = vunpack.c.l.b16 %v8075
      %v8933 = vunpack.c.h.b16 %v8075
      %v8934 = vunpack.c.l.b16 %v8076
      %v8935 = vunpack.c.h.b16 %v8076
      %v8936 = vunpack.c.l.b16 %v8077
      %v8937 = vunpack.c.h.b16 %v8077
      %v8938 = vunpack.c.l.b16 %v8078
      %v8939 = vunpack.c.h.b16 %v8078
      %v8940 = vunpack.c.l.b16 %v8079
      %v8941 = vunpack.c.h.b16 %v8079
      %v8942 = vunpack.c.l.b16 %v8080
      %v8943 = vunpack.c.h.b16 %v8080
      %v8944 = vunpack.c.l.b16 %v8081
      %v8945 = vunpack.c.h.b16 %v8081
      %v8946 = vunpack.c.l.b16 %v8082
      %v8947 = vunpack.c.h.b16 %v8082
      %v8948 = vunpack.c.l.b16 %v8083
      %v8949 = vunpack.c.h.b16 %v8083
      %v8950 = vunpack.c.l.b16 %v8084
      %v8951 = vunpack.c.h.b16 %v8084
      %v8952 = vunpack.c.l.b16 %v8085
      %v8953 = vunpack.c.h.b16 %v8085
      %v8954 = vunpack.c.l.b16 %v8086
      %v8955 = vunpack.c.h.b16 %v8086
      %v8956 = vunpack.c.l.b16 %v8087
      %v8957 = vunpack.c.h.b16 %v8087
      %v8958 = vunpack.c.l.b16 %v8088
      %v8959 = vunpack.c.h.b16 %v8088
      %v8960 = vunpack.c.l.b16 %v8089
      %v8961 = vunpack.c.h.b16 %v8089
      %v8962 = vunpack.c.l.b16 %v8090
      %v8963 = vunpack.c.h.b16 %v8090
      %v8964 = vunpack.c.l.b16 %v8091
      %v8965 = vunpack.c.h.b16 %v8091
      %v8966 = vunpack.c.l.b16 %v8092
      %v8967 = vunpack.c.h.b16 %v8092
      %v8968 = vunpack.c.l.b16 %v8093
      %v8969 = vunpack.c.h.b16 %v8093
      %v8970 = vunpack.c.l.b16 %v8094
      %v8971 = vunpack.c.h.b16 %v8094
      %v8972 = vunpack.c.l.b16 %v8095
      %v8973 = vunpack.c.h.b16 %v8095
      %v8974 = vunpack.c.l.b16 %v8096
      %v8975 = vunpack.c.h.b16 %v8096
      %v8976 = vunpack.c.l.b16 %v8097
      %v8977 = vunpack.c.h.b16 %v8097
      %v8978 = vunpack.c.l.b16 %v8098
      %v8979 = vunpack.c.h.b16 %v8098
      %v8980 = vunpack.c.l.b16 %v8099
      %v8981 = vunpack.c.h.b16 %v8099
      %v8982 = vunpack.c.l.b16 %v8100
      %v8983 = vunpack.c.h.b16 %v8100
      %v8984 = vunpack.c.l.b16 %v8101
      %v8985 = vunpack.c.h.b16 %v8101
      %v8986 = vunpack.c.l.b16 %v8102
      %v8987 = vunpack.c.h.b16 %v8102
      %v8988 = vunpack.c.l.b16 %v8103
      %v8989 = vunpack.c.h.b16 %v8103
      %v8990 = vunpack.c.l.b16 %v8104
      %v8991 = vunpack.c.h.b16 %v8104
      %v8992 = vunpack.c.l.b16 %v8105
      %v8993 = vunpack.c.h.b16 %v8105
      %v8994 = vunpack.c.l.b16 %v8106
      %v8995 = vunpack.c.h.b16 %v8106
      %v8996 = vunpack.c.l.b16 %v8107
      %v8997 = vunpack.c.h.b16 %v8107
      %v8998 = vunpack.c.l.b16 %v8108
      %v8999 = vunpack.c.h.b16 %v8108
      %v9000 = vunpack.c.l.b16 %v8109
      %v9001 = vunpack.c.h.b16 %v8109
      %v9002 = vunpack.c.l.b16 %v8110
      %v9003 = vunpack.c.h.b16 %v8110
      %v9004 = vunpack.c.l.b16 %v8111
      %v9005 = vunpack.c.h.b16 %v8111
      %v9006 = vunpack.c.l.b16 %v8112
      %v9007 = vunpack.c.h.b16 %v8112
      %v9008 = vunpack.c.l.b16 %v8113
      %v9009 = vunpack.c.h.b16 %v8113
      %v9010 = vunpack.c.l.b16 %v8114
      %v9011 = vunpack.c.h.b16 %v8114
      %v9012 = vunpack.c.l.b16 %v8115
      %v9013 = vunpack.c.h.b16 %v8115
      %v9014 = vunpack.c.l.b16 %v8116
      %v9015 = vunpack.c.h.b16 %v8116
      %v9016 = vunpack.c.l.b16 %v8117
      %v9017 = vunpack.c.h.b16 %v8117
      %v9018 = vunpack.c.l.b16 %v8118
      %v9019 = vunpack.c.h.b16 %v8118
      %v9020 = vunpack.c.l.b16 %v8119
      %v9021 = vunpack.c.h.b16 %v8119
      %v9022 = vunpack.c.l.b16 %v8120
      %v9023 = vunpack.c.h.b16 %v8120
      %v9024 = vunpack.c.l.b16 %v8121
      %v9025 = vunpack.c.h.b16 %v8121
      %v9026 = vunpack.c.l.b16 %v8122
      %v9027 = vunpack.c.h.b16 %v8122
      %v9028 = vunpack.c.l.b16 %v8123
      %v9029 = vunpack.c.h.b16 %v8123
      %v9030 = vunpack.c.l.b16 %v8124
      %v9031 = vunpack.c.h.b16 %v8124
      %v9032 = vunpack.c.l.b16 %v8125
      %v9033 = vunpack.c.h.b16 %v8125
      %v9034 = vunpack.c.l.b16 %v8126
      %v9035 = vunpack.c.h.b16 %v8126
      %v9036 = vunpack.c.l.b16 %v8127
      %v9037 = vunpack.c.h.b16 %v8127
      %v9038 = vunpack.c.l.b16 %v8128
      %v9039 = vunpack.c.h.b16 %v8128
      %v9040 = vunpack.c.l.b16 %v8129
      %v9041 = vunpack.c.h.b16 %v8129
      %v9042 = vunpack.c.l.b16 %v8130
      %v9043 = vunpack.c.h.b16 %v8130
      %v9044 = vunpack.c.l.b16 %v8131
      %v9045 = vunpack.c.h.b16 %v8131
      %v9046 = vunpack.c.l.b16 %v8132
      %v9047 = vunpack.c.h.b16 %v8132
      %v9048 = vunpack.c.l.b16 %v8133
      %v9049 = vunpack.c.h.b16 %v8133
      %v9050 = vunpack.c.l.b16 %v8134
      %v9051 = vunpack.c.h.b16 %v8134
      %v9052 = vunpack.c.l.b16 %v8135
      %v9053 = vunpack.c.h.b16 %v8135
      %v9054 = vunpack.c.l.b16 %v8136
      %v9055 = vunpack.c.h.b16 %v8136
      %v9056 = vunpack.c.l.b16 %v8137
      %v9057 = vunpack.c.h.b16 %v8137
      %v9058 = vunpack.c.l.b16 %v8138
      %v9059 = vunpack.c.h.b16 %v8138
      %v9060 = vunpack.c.l.b16 %v8139
      %v9061 = vunpack.c.h.b16 %v8139
      %v9062 = vunpack.c.l.b16 %v8140
      %v9063 = vunpack.c.h.b16 %v8140
      %v9064 = vunpack.c.l.b16 %v8141
      %v9065 = vunpack.c.h.b16 %v8141
      %v9066 = vunpack.c.l.b16 %v8142
      %v9067 = vunpack.c.h.b16 %v8142
      %v9068 = vunpack.c.l.b16 %v8143
      %v9069 = vunpack.c.h.b16 %v8143
      %v9070 = vunpack.c.l.b16 %v8144
      %v9071 = vunpack.c.h.b16 %v8144
      %v9072 = vunpack.c.l.b16 %v8145
      %v9073 = vunpack.c.h.b16 %v8145
      %v9074 = vunpack.c.l.b16 %v8146
      %v9075 = vunpack.c.h.b16 %v8146
      %v9076 = vunpack.c.l.b16 %v8147
      %v9077 = vunpack.c.h.b16 %v8147
      %v9078 = vunpack.c.l.b16 %v8148
      %v9079 = vunpack.c.h.b16 %v8148
      %v9080 = vunpack.c.l.b16 %v8149
      %v9081 = vunpack.c.h.b16 %v8149
      %v9082 = vunpack.c.l.b16 %v8150
      %v9083 = vunpack.c.h.b16 %v8150
      %v9084 = vunpack.c.l.b16 %v8151
      %v9085 = vunpack.c.h.b16 %v8151
      %v9086 = vunpack.c.l.b16 %v8152
      %v9087 = vunpack.c.h.b16 %v8152
      %v9088 = vunpack.c.l.b16 %v8153
      %v9089 = vunpack.c.h.b16 %v8153
      %v9090 = vunpack.c.l.b16 %v8154
      %v9091 = vunpack.c.h.b16 %v8154
      %v9092 = vunpack.c.l.b16 %v8155
      %v9093 = vunpack.c.h.b16 %v8155
      %v9094 = vunpack.c.l.b16 %v8156
      %v9095 = vunpack.c.h.b16 %v8156
      %v9096 = vunpack.c.l.b16 %v8157
      %v9097 = vunpack.c.h.b16 %v8157
      %v9098 = vunpack.c.l.b16 %v8158
      %v9099 = vunpack.c.h.b16 %v8158
      %v9100 = vunpack.c.l.b16 %v8159
      %v9101 = vunpack.c.h.b16 %v8159
      %v9102 = vunpack.c.l.b16 %v8160
      %v9103 = vunpack.c.h.b16 %v8160
      %v9104 = vunpack.c.l.b16 %v8161
      %v9105 = vunpack.c.h.b16 %v8161
      %v9106 = vunpack.c.l.b16 %v8162
      %v9107 = vunpack.c.h.b16 %v8162
      %v9108 = vunpack.c.l.b16 %v8163
      %v9109 = vunpack.c.h.b16 %v8163
      %v9110 = vunpack.c.l.b16 %v8164
      %v9111 = vunpack.c.h.b16 %v8164
      %v9112 = vunpack.c.l.b16 %v8165
      %v9113 = vunpack.c.h.b16 %v8165
      %v9114 = vunpack.c.l.b16 %v8166
      %v9115 = vunpack.c.h.b16 %v8166
      %v9116 = vunpack.c.l.b16 %v8167
      %v9117 = vunpack.c.h.b16 %v8167
      %v9118 = vunpack.c.l.b16 %v8168
      %v9119 = vunpack.c.h.b16 %v8168
      %v9120 = vunpack.c.l.b16 %v8169
      %v9121 = vunpack.c.h.b16 %v8169
      %v9122 = vunpack.c.l.b16 %v8170
      %v9123 = vunpack.c.h.b16 %v8170
      %v9124 = vunpack.c.l.b16 %v8171
      %v9125 = vunpack.c.h.b16 %v8171
      %v9126 = vunpack.c.l.b16 %v8172
      %v9127 = vunpack.c.h.b16 %v8172
      %v9128 = vunpack.c.l.b16 %v8173
      %v9129 = vunpack.c.h.b16 %v8173
      %v9130 = vunpack.c.l.b16 %v8174
      %v9131 = vunpack.c.h.b16 %v8174
      %v9132 = vunpack.c.l.b16 %v8175
      %v9133 = vunpack.c.h.b16 %v8175
      %v9134 = vunpack.c.l.b16 %v8176
      %v9135 = vunpack.c.h.b16 %v8176
      %v9136 = vunpack.c.l.b16 %v8177
      %v9137 = vunpack.c.h.b16 %v8177
      %v9138 = vunpack.c.l.b16 %v8178
      %v9139 = vunpack.c.h.b16 %v8178
      %v9140 = vunpack.c.l.b16 %v8179
      %v9141 = vunpack.c.h.b16 %v8179
      %v9142 = vunpack.c.l.b16 %v8180
      %v9143 = vunpack.c.h.b16 %v8180
      %v9144 = vunpack.c.l.b16 %v8181
      %v9145 = vunpack.c.h.b16 %v8181
      %v9146 = vunpack.c.l.b16 %v8182
      %v9147 = vunpack.c.h.b16 %v8182
      %v9148 = vunpack.c.l.b16 %v8183
      %v9149 = vunpack.c.h.b16 %v8183
      %v9150 = vunpack.c.l.b16 %v8184
      %v9151 = vunpack.c.h.b16 %v8184
      %v9152 = vunpack.c.l.b16 %v8185
      %v9153 = vunpack.c.h.b16 %v8185
      %v9154 = vunpack.c.l.b16 %v8186
      %v9155 = vunpack.c.h.b16 %v8186
      %v9156 = vunpack.c.l.b16 %v8187
      %v9157 = vunpack.c.h.b16 %v8187
      %v9158 = vunpack.c.l.b16 %v8188
      %v9159 = vunpack.c.h.b16 %v8188
      %v9160 = vunpack.c.l.b16 %v8189
      %v9161 = vunpack.c.h.b16 %v8189
      %v9162 = vunpack.c.l.b16 %v8190
      %v9163 = vunpack.c.h.b16 %v8190
      %v9164 = vunpack.c.l.b16 %v8191
      %v9165 = vunpack.c.h.b16 %v8191
      %v9166 = vunpack.c.l.b16 %v8192
      %v9167 = vunpack.c.h.b16 %v8192
      %v9168 = vunpack.c.l.b16 %v8193
      %v9169 = vunpack.c.h.b16 %v8193
      %v9170 = vunpack.c.l.b16 %v8194
      %v9171 = vunpack.c.h.b16 %v8194
      %v9172 = vunpack.c.l.b16 %v8195
      %v9173 = vunpack.c.h.b16 %v8195
      %v9174 = vunpack.c.l.b16 %v8196
      %v9175 = vunpack.c.h.b16 %v8196
      %v9176 = vunpack.c.l.b16 %v8197
      %v9177 = vunpack.c.h.b16 %v8197
      %v9178 = vunpack.c.l.b16 %v8198
      %v9179 = vunpack.c.h.b16 %v8198
      %v9180 = vunpack.c.l.b16 %v8199
      %v9181 = vunpack.c.h.b16 %v8199
      %v9182 = vunpack.c.l.b16 %v8200
      %v9183 = vunpack.c.h.b16 %v8200
      %v9184 = vunpack.c.l.b16 %v8201
      %v9185 = vunpack.c.h.b16 %v8201
      %v9186 = vunpack.c.l.b16 %v8202
      %v9187 = vunpack.c.h.b16 %v8202
      %v9188 = vunpack.c.l.b16 %v8203
      %v9189 = vunpack.c.h.b16 %v8203
      %v9190 = vunpack.c.l.b16 %v8204
      %v9191 = vunpack.c.h.b16 %v8204
      %v9192 = vunpack.c.l.b16 %v8205
      %v9193 = vunpack.c.h.b16 %v8205
      %v9194 = vunpack.c.l.b16 %v8206
      %v9195 = vunpack.c.h.b16 %v8206
      %v9196 = vunpack.c.l.b16 %v8207
      %v9197 = vunpack.c.h.b16 %v8207
      %v9198 = vunpack.c.l.b16 %v8208
      %v9199 = vunpack.c.h.b16 %v8208
      %v9200 = vunpack.c.l.b16 %v8209
      %v9201 = vunpack.c.h.b16 %v8209
      %v9202 = vunpack.c.l.b16 %v8210
      %v9203 = vunpack.c.h.b16 %v8210
      %v9204 = vunpack.c.l.b16 %v8211
      %v9205 = vunpack.c.h.b16 %v8211
      %v9206 = vunpack.c.l.b16 %v8212
      %v9207 = vunpack.c.h.b16 %v8212
      %v9208 = vunpack.c.l.b16 %v8213
      %v9209 = vunpack.c.h.b16 %v8213
      %v9210 = vunpack.c.l.b16 %v8214
      %v9211 = vunpack.c.h.b16 %v8214
      %v9212 = vunpack.c.l.b16 %v8215
      %v9213 = vunpack.c.h.b16 %v8215
      %v9214 = vunpack.c.l.b16 %v8216
      %v9215 = vunpack.c.h.b16 %v8216
      %v9216 = vunpack.c.l.b16 %v8217
      %v9217 = vunpack.c.h.b16 %v8217
      %v9218 = vunpack.c.l.b16 %v8218
      %v9219 = vunpack.c.h.b16 %v8218
      %v9220 = vpack.c.b16 %v8914, %v8912
      %v9221 = vpack.c.b16 %v8915, %v8913
      %v9222 = vpack.c.b16 %v8918, %v8916
      %v9223 = vpack.c.b16 %v8919, %v8917
      %v9224 = vpack.c.b16 %v8922, %v8920
      %v9225 = vpack.c.b16 %v8923, %v8921
      %v9226 = vpack.c.b16 %v8926, %v8924
      %v9227 = vpack.c.b16 %v8927, %v8925
      %v9228 = vpack.c.b16 %v8930, %v8928
      %v9229 = vpack.c.b16 %v8931, %v8929
      %v9230 = vpack.c.b16 %v8934, %v8932
      %v9231 = vpack.c.b16 %v8935, %v8933
      %v9232 = vpack.c.b16 %v8938, %v8936
      %v9233 = vpack.c.b16 %v8939, %v8937
      %v9234 = vpack.c.b16 %v8942, %v8940
      %v9235 = vpack.c.b16 %v8943, %v8941
      %v9236 = vpack.c.b16 %v8946, %v8944
      %v9237 = vpack.c.b16 %v8947, %v8945
      %v9238 = vpack.c.b16 %v8950, %v8948
      %v9239 = vpack.c.b16 %v8951, %v8949
      %v9240 = vpack.c.b16 %v8954, %v8952
      %v9241 = vpack.c.b16 %v8955, %v8953
      %v9242 = vpack.c.b16 %v8958, %v8956
      %v9243 = vpack.c.b16 %v8959, %v8957
      %v9244 = vpack.c.b16 %v8962, %v8960
      %v9245 = vpack.c.b16 %v8963, %v8961
      %v9246 = vpack.c.b16 %v8966, %v8964
      %v9247 = vpack.c.b16 %v8967, %v8965
      %v9248 = vpack.c.b16 %v8970, %v8968
      %v9249 = vpack.c.b16 %v8971, %v8969
      %v9250 = vpack.c.b16 %v8974, %v8972
      %v9251 = vpack.c.b16 %v8975, %v8973
      %v9252 = vpack.c.b16 %v8978, %v8976
      %v9253 = vpack.c.b16 %v8979, %v8977
      %v9254 = vpack.c.b16 %v8982, %v8980
      %v9255 = vpack.c.b16 %v8983, %v8981
      %v9256 = vpack.c.b16 %v8986, %v8984
      %v9257 = vpack.c.b16 %v8987, %v8985
      %v9258 = vpack.c.b16 %v8990, %v8988
      %v9259 = vpack.c.b16 %v8991, %v8989
      %v9260 = vpack.c.b16 %v8994, %v8992
      %v9261 = vpack.c.b16 %v8995, %v8993
      %v9262 = vpack.c.b16 %v8998, %v8996
      %v9263 = vpack.c.b16 %v8999, %v8997
      %v9264 = vpack.c.b16 %v9002, %v9000
      %v9265 = vpack.c.b16 %v9003, %v9001
      %v9266 = vpack.c.b16 %v9006, %v9004
      %v9267 = vpack.c.b16 %v9007, %v9005
      %v9268 = vpack.c.b16 %v9010, %v9008
      %v9269 = vpack.c.b16 %v9011, %v9009
      %v9270 = vpack.c.b16 %v9014, %v9012
      %v9271 = vpack.c.b16 %v9015, %v9013
      %v9272 = vpack.c.b16 %v9018, %v9016
      %v9273 = vpack.c.b16 %v9019, %v9017
      %v9274 = vpack.c.b16 %v9022, %v9020
      %v9275 = vpack.c.b16 %v9023, %v9021
      %v9276 = vpack.c.b16 %v9026, %v9024
      %v9277 = vpack.c.b16 %v9027, %v9025
      %v9278 = vpack.c.b16 %v9030, %v9028
      %v9279 = vpack.c.b16 %v9031, %v9029
      %v9280 = vpack.c.b16 %v9034, %v9032
      %v9281 = vpack.c.b16 %v9035, %v9033
      %v9282 = vpack.c.b16 %v9038, %v9036
      %v9283 = vpack.c.b16 %v9039, %v9037
      %v9284 = vpack.c.b16 %v9042, %v9040
      %v9285 = vpack.c.b16 %v9043, %v9041
      %v9286 = vpack.c.b16 %v9046, %v9044
      %v9287 = vpack.c.b16 %v9047, %v9045
      %v9288 = vpack.c.b16 %v9050, %v9048
      %v9289 = vpack.c.b16 %v9051, %v9049
      %v9290 = vpack.c.b16 %v9054, %v9052
      %v9291 = vpack.c.b16 %v9055, %v9053
      %v9292 = vpack.c.b16 %v9058, %v9056
      %v9293 = vpack.c.b16 %v9059, %v9057
      %v9294 = vpack.c.b16 %v9062, %v9060
      %v9295 = vpack.c.b16 %v9063, %v9061
      %v9296 = vpack.c.b16 %v9066, %v9064
      %v9297 = vpack.c.b16 %v9067, %v9065
      %v9298 = vpack.c.b16 %v9070, %v9068
      %v9299 = vpack.c.b16 %v9071, %v9069
      %v9300 = vpack.c.b16 %v9074, %v9072
      %v9301 = vpack.c.b16 %v9075, %v9073
      %v9302 = vpack.c.b16 %v9078, %v9076
      %v9303 = vpack.c.b16 %v9079, %v9077
      %v9304 = vpack.c.b16 %v9082, %v9080
      %v9305 = vpack.c.b16 %v9083, %v9081
      %v9306 = vpack.c.b16 %v9086, %v9084
      %v9307 = vpack.c.b16 %v9087, %v9085
      %v9308 = vpack.c.b16 %v9090, %v9088
      %v9309 = vpack.c.b16 %v9091, %v9089
      %v9310 = vpack.c.b16 %v9094, %v9092
      %v9311 = vpack.c.b16 %v9095, %v9093
      %v9312 = vpack.c.b16 %v9098, %v9096
      %v9313 = vpack.c.b16 %v9099, %v9097
      %v9314 = vpack.c.b16 %v9102, %v9100
      %v9315 = vpack.c.b16 %v9103, %v9101
      %v9316 = vpack.c.b16 %v9106, %v9104
      %v9317 = vpack.c.b16 %v9107, %v9105
      %v9318 = vpack.c.b16 %v9110, %v9108
      %v9319 = vpack.c.b16 %v9111, %v9109
      %v9320 = vpack.c.b16 %v9114, %v9112
      %v9321 = vpack.c.b16 %v9115, %v9113
      %v9322 = vpack.c.b16 %v9118, %v9116
      %v9323 = vpack.c.b16 %v9119, %v9117
      %v9324 = vpack.c.b16 %v9122, %v9120
      %v9325 = vpack.c.b16 %v9123, %v9121
      %v9326 = vpack.c.b16 %v9126, %v9124
      %v9327 = vpack.c.b16 %v9127, %v9125
      %v9328 = vpack.c.b16 %v9130, %v9128
      %v9329 = vpack.c.b16 %v9131, %v9129
      %v9330 = vpack.c.b16 %v9134, %v9132
      %v9331 = vpack.c.b16 %v9135, %v9133
      %v9332 = vpack.c.b16 %v9138, %v9136
      %v9333 = vpack.c.b16 %v9139, %v9137
      %v9334 = vpack.c.b16 %v9142, %v9140
      %v9335 = vpack.c.b16 %v9143, %v9141
      %v9336 = vpack.c.b16 %v9146, %v9144
      %v9337 = vpack.c.b16 %v9147, %v9145
      %v9338 = vpack.c.b16 %v9150, %v9148
      %v9339 = vpack.c.b16 %v9151, %v9149
      %v9340 = vpack.c.b16 %v9154, %v9152
      %v9341 = vpack.c.b16 %v9155, %v9153
      %v9342 = vpack.c.b16 %v9158, %v9156
      %v9343 = vpack.c.b16 %v9159, %v9157
      %v9344 = vpack.c.b16 %v9162, %v9160
      %v9345 = vpack.c.b16 %v9163, %v9161
      %v9346 = vpack.c.b16 %v9166, %v9164
      %v9347 = vpack.c.b16 %v9167, %v9165
      %v9348 = vpack.c.b16 %v9170, %v9168
      %v9349 = vpack.c.b16 %v9171, %v9169
      %v9350 = vpack.c.b16 %v9174, %v9172
      %v9351 = vpack.c.b16 %v9175, %v9173
      %v9352 = vpack.c.b16 %v9178, %v9176
      %v9353 = vpack.c.b16 %v9179, %v9177
      %v9354 = vpack.c.b16 %v9182, %v9180
      %v9355 = vpack.c.b16 %v9183, %v9181
      %v9356 = vpack.c.b16 %v9186, %v9184
      %v9357 = vpack.c.b16 %v9187, %v9185
      %v9358 = vpack.c.b16 %v9190, %v9188
      %v9359 = vpack.c.b16 %v9191, %v9189
      %v9360 = vpack.c.b16 %v9194, %v9192
      %v9361 = vpack.c.b16 %v9195, %v9193
      %v9362 = vpack.c.b16 %v9198, %v9196
      %v9363 = vpack.c.b16 %v9199, %v9197
      %v9364 = vpack.c.b16 %v9202, %v9200
      %v9365 = vpack.c.b16 %v9203, %v9201
      %v9366 = vpack.c.b16 %v9206, %v9204
      %v9367 = vpack.c.b16 %v9207, %v9205
      %v9368 = vpack.c.b16 %v9210, %v9208
      %v9369 = vpack.c.b16 %v9211, %v9209
      %v9370 = vpack.c.b16 %v9214, %v9212
      %v9371 = vpack.c.b16 %v9215, %v9213
      %v9372 = vpack.c.b16 %v9218, %v9216
      %v9373 = vpack.c.b16 %v9219, %v9217
      %vm9528 = vcmask 654336
      %v9530 = vsel %vm9528, %v8558, 0
      %v9533 = vsel %vm9528, %v8568, 0
      %v9536 = vsel %vm9528, %v8578, 0
      %v9539 = vsel %vm9528, %v8588, 0
      %v9542 = vsel %vm9528, %v8598, 0
      %v9545 = vsel %vm9528, %v8608, 0
      %v9548 = vsel %vm9528, %v8618, 0
      %v9551 = vsel %vm9528, %v8628, 0
      %v9554 = vsel %vm9528, %v8638, 0
      %v9557 = vsel %vm9528, %v8648, 0
      %v9560 = vsel %vm9528, %v8658, 0
      %9562 = vmatpush.bf16.msra.mxu0 %v9234
      %9563 = vmatpush.bf16.msra.mxu0 %v9232
      %9564 = vmatpush.bf16.msra.mxu0 %v9230
      %9565 = vmatpush.bf16.msra.mxu0 %v9228
      %9566 = vmatpush.bf16.msra.mxu0 %v9226
      %9567 = vmatpush.bf16.msra.mxu0 %v9224
      %9568 = vmatpush.bf16.msra.mxu0 %v9222
      %9569 = vmatpush.bf16.msra.mxu0 %v9220
      %9570 = vmatmul.bf16.gmra.mxu0 %v8549
      %v9571 = vpop.f32.mrf.mxu0
      %v9572 = vadd.f32 0.0, %v9571
      %v9573 = vpop.f32.mrf.mxu0
      %v9574 = vadd.f32 0.0, %v9573
      %9575 = vmatmul.bf16.gmra.mxu0 %v8559
      %v9576 = vpop.f32.mrf.mxu0
      %v9577 = vadd.f32 0.0, %v9576
      %v9578 = vpop.f32.mrf.mxu0
      %v9579 = vadd.f32 0.0, %v9578
      %9580 = vmatmul.bf16.gmra.mxu0 %v8569
      %v9581 = vpop.f32.mrf.mxu0
      %v9582 = vadd.f32 0.0, %v9581
      %v9583 = vpop.f32.mrf.mxu0
      %v9584 = vadd.f32 0.0, %v9583
      %9585 = vmatmul.bf16.gmra.mxu0 %v8579
      %v9586 = vpop.f32.mrf.mxu0
      %v9587 = vadd.f32 0.0, %v9586
      %v9588 = vpop.f32.mrf.mxu0
      %v9589 = vadd.f32 0.0, %v9588
      %9590 = vmatmul.bf16.gmra.mxu0 %v8589
      %v9591 = vpop.f32.mrf.mxu0
      %v9592 = vadd.f32 0.0, %v9591
      %v9593 = vpop.f32.mrf.mxu0
      %v9594 = vadd.f32 0.0, %v9593
      %9595 = vmatmul.bf16.gmra.mxu0 %v8599
      %v9596 = vpop.f32.mrf.mxu0
      %v9597 = vadd.f32 0.0, %v9596
      %v9598 = vpop.f32.mrf.mxu0
      %v9599 = vadd.f32 0.0, %v9598
      %9600 = vmatmul.bf16.gmra.mxu0 %v8609
      %v9601 = vpop.f32.mrf.mxu0
      %v9602 = vadd.f32 0.0, %v9601
      %v9603 = vpop.f32.mrf.mxu0
      %v9604 = vadd.f32 0.0, %v9603
      %9605 = vmatmul.bf16.gmra.mxu0 %v8619
      %v9606 = vpop.f32.mrf.mxu0
      %v9607 = vadd.f32 0.0, %v9606
      %v9608 = vpop.f32.mrf.mxu0
      %v9609 = vadd.f32 0.0, %v9608
      %9610 = vmatmul.bf16.gmra.mxu0 %v8629
      %v9611 = vpop.f32.mrf.mxu0
      %v9612 = vadd.f32 0.0, %v9611
      %v9613 = vpop.f32.mrf.mxu0
      %v9614 = vadd.f32 0.0, %v9613
      %9615 = vmatmul.bf16.gmra.mxu0 %v8639
      %v9616 = vpop.f32.mrf.mxu0
      %v9617 = vadd.f32 0.0, %v9616
      %v9618 = vpop.f32.mrf.mxu0
      %v9619 = vadd.f32 0.0, %v9618
      %9620 = vmatmul.bf16.gmra.mxu0 %v8649
      %v9621 = vpop.f32.mrf.mxu0
      %v9622 = vadd.f32 0.0, %v9621
      %v9623 = vpop.f32.mrf.mxu0
      %v9624 = vadd.f32 0.0, %v9623
      %9625 = vdwg.mxu0
      %9626 = vmatpush.bf16.msra.mxu0 %v9250
      %9627 = vmatpush.bf16.msra.mxu0 %v9248
      %9628 = vmatpush.bf16.msra.mxu0 %v9246
      %9629 = vmatpush.bf16.msra.mxu0 %v9244
      %9630 = vmatpush.bf16.msra.mxu0 %v9242
      %9631 = vmatpush.bf16.msra.mxu0 %v9240
      %9632 = vmatpush.bf16.msra.mxu0 %v9238
      %9633 = vmatpush.bf16.msra.mxu0 %v9236
      %9634 = vmatmul.bf16.gmra.mxu0 %v8550
      %v9635 = vpop.f32.mrf.mxu0
      %v9636 = vadd.f32 %v9572, %v9635
      %v9637 = vpop.f32.mrf.mxu0
      %v9638 = vadd.f32 %v9574, %v9637
      %9639 = vmatmul.bf16.gmra.mxu0 %v8560
      %v9640 = vpop.f32.mrf.mxu0
      %v9641 = vadd.f32 %v9577, %v9640
      %v9642 = vpop.f32.mrf.mxu0
      %v9643 = vadd.f32 %v9579, %v9642
      %9644 = vmatmul.bf16.gmra.mxu0 %v8570
      %v9645 = vpop.f32.mrf.mxu0
      %v9646 = vadd.f32 %v9582, %v9645
      %v9647 = vpop.f32.mrf.mxu0
      %v9648 = vadd.f32 %v9584, %v9647
      %9649 = vmatmul.bf16.gmra.mxu0 %v8580
      %v9650 = vpop.f32.mrf.mxu0
      %v9651 = vadd.f32 %v9587, %v9650
      %v9652 = vpop.f32.mrf.mxu0
      %v9653 = vadd.f32 %v9589, %v9652
      %9654 = vmatmul.bf16.gmra.mxu0 %v8590
      %v9655 = vpop.f32.mrf.mxu0
      %v9656 = vadd.f32 %v9592, %v9655
      %v9657 = vpop.f32.mrf.mxu0
      %v9658 = vadd.f32 %v9594, %v9657
      %9659 = vmatmul.bf16.gmra.mxu0 %v8600
      %v9660 = vpop.f32.mrf.mxu0
      %v9661 = vadd.f32 %v9597, %v9660
      %v9662 = vpop.f32.mrf.mxu0
      %v9663 = vadd.f32 %v9599, %v9662
      %9664 = vmatmul.bf16.gmra.mxu0 %v8610
      %v9665 = vpop.f32.mrf.mxu0
      %v9666 = vadd.f32 %v9602, %v9665
      %v9667 = vpop.f32.mrf.mxu0
      %v9668 = vadd.f32 %v9604, %v9667
      %9669 = vmatmul.bf16.gmra.mxu0 %v8620
      %v9670 = vpop.f32.mrf.mxu0
      %v9671 = vadd.f32 %v9607, %v9670
      %v9672 = vpop.f32.mrf.mxu0
      %v9673 = vadd.f32 %v9609, %v9672
      %9674 = vmatmul.bf16.gmra.mxu0 %v8630
      %v9675 = vpop.f32.mrf.mxu0
      %v9676 = vadd.f32 %v9612, %v9675
      %v9677 = vpop.f32.mrf.mxu0
      %v9678 = vadd.f32 %v9614, %v9677
      %9679 = vmatmul.bf16.gmra.mxu0 %v8640
      %v9680 = vpop.f32.mrf.mxu0
      %v9681 = vadd.f32 %v9617, %v9680
      %v9682 = vpop.f32.mrf.mxu0
      %v9683 = vadd.f32 %v9619, %v9682
      %9684 = vmatmul.bf16.gmra.mxu0 %v8650
      %v9685 = vpop.f32.mrf.mxu0
      %v9686 = vadd.f32 %v9622, %v9685
      %v9687 = vpop.f32.mrf.mxu0
      %v9688 = vadd.f32 %v9624, %v9687
      %9689 = vdwg.mxu0
      %9690 = vmatpush.bf16.msra.mxu0 %v9266
      %9691 = vmatpush.bf16.msra.mxu0 %v9264
      %9692 = vmatpush.bf16.msra.mxu0 %v9262
      %9693 = vmatpush.bf16.msra.mxu0 %v9260
      %9694 = vmatpush.bf16.msra.mxu0 %v9258
      %9695 = vmatpush.bf16.msra.mxu0 %v9256
      %9696 = vmatpush.bf16.msra.mxu0 %v9254
      %9697 = vmatpush.bf16.msra.mxu0 %v9252
      %9698 = vmatmul.bf16.gmra.mxu0 %v8551
      %v9699 = vpop.f32.mrf.mxu0
      %v9700 = vadd.f32 %v9636, %v9699
      %v9701 = vpop.f32.mrf.mxu0
      %v9702 = vadd.f32 %v9638, %v9701
      %9703 = vmatmul.bf16.gmra.mxu0 %v8561
      %v9704 = vpop.f32.mrf.mxu0
      %v9705 = vadd.f32 %v9641, %v9704
      %v9706 = vpop.f32.mrf.mxu0
      %v9707 = vadd.f32 %v9643, %v9706
      %9708 = vmatmul.bf16.gmra.mxu0 %v8571
      %v9709 = vpop.f32.mrf.mxu0
      %v9710 = vadd.f32 %v9646, %v9709
      %v9711 = vpop.f32.mrf.mxu0
      %v9712 = vadd.f32 %v9648, %v9711
      %9713 = vmatmul.bf16.gmra.mxu0 %v8581
      %v9714 = vpop.f32.mrf.mxu0
      %v9715 = vadd.f32 %v9651, %v9714
      %v9716 = vpop.f32.mrf.mxu0
      %v9717 = vadd.f32 %v9653, %v9716
      %9718 = vmatmul.bf16.gmra.mxu0 %v8591
      %v9719 = vpop.f32.mrf.mxu0
      %v9720 = vadd.f32 %v9656, %v9719
      %v9721 = vpop.f32.mrf.mxu0
      %v9722 = vadd.f32 %v9658, %v9721
      %9723 = vmatmul.bf16.gmra.mxu0 %v8601
      %v9724 = vpop.f32.mrf.mxu0
      %v9725 = vadd.f32 %v9661, %v9724
      %v9726 = vpop.f32.mrf.mxu0
      %v9727 = vadd.f32 %v9663, %v9726
      %9728 = vmatmul.bf16.gmra.mxu0 %v8611
      %v9729 = vpop.f32.mrf.mxu0
      %v9730 = vadd.f32 %v9666, %v9729
      %v9731 = vpop.f32.mrf.mxu0
      %v9732 = vadd.f32 %v9668, %v9731
      %9733 = vmatmul.bf16.gmra.mxu0 %v8621
      %v9734 = vpop.f32.mrf.mxu0
      %v9735 = vadd.f32 %v9671, %v9734
      %v9736 = vpop.f32.mrf.mxu0
      %v9737 = vadd.f32 %v9673, %v9736
      %9738 = vmatmul.bf16.gmra.mxu0 %v8631
      %v9739 = vpop.f32.mrf.mxu0
      %v9740 = vadd.f32 %v9676, %v9739
      %v9741 = vpop.f32.mrf.mxu0
      %v9742 = vadd.f32 %v9678, %v9741
      %9743 = vmatmul.bf16.gmra.mxu0 %v8641
      %v9744 = vpop.f32.mrf.mxu0
      %v9745 = vadd.f32 %v9681, %v9744
      %v9746 = vpop.f32.mrf.mxu0
      %v9747 = vadd.f32 %v9683, %v9746
      %9748 = vmatmul.bf16.gmra.mxu0 %v8651
      %v9749 = vpop.f32.mrf.mxu0
      %v9750 = vadd.f32 %v9686, %v9749
      %v9751 = vpop.f32.mrf.mxu0
      %v9752 = vadd.f32 %v9688, %v9751
      %9753 = vdwg.mxu0
      %9754 = vmatpush.bf16.msra.mxu0 %v9282
      %9755 = vmatpush.bf16.msra.mxu0 %v9280
      %9756 = vmatpush.bf16.msra.mxu0 %v9278
      %9757 = vmatpush.bf16.msra.mxu0 %v9276
      %9758 = vmatpush.bf16.msra.mxu0 %v9274
      %9759 = vmatpush.bf16.msra.mxu0 %v9272
      %9760 = vmatpush.bf16.msra.mxu0 %v9270
      %9761 = vmatpush.bf16.msra.mxu0 %v9268
      %9762 = vmatmul.bf16.gmra.mxu0 %v8552
      %v9763 = vpop.f32.mrf.mxu0
      %v9764 = vadd.f32 %v9700, %v9763
      %v9765 = vpop.f32.mrf.mxu0
      %v9766 = vadd.f32 %v9702, %v9765
      %9767 = vmatmul.bf16.gmra.mxu0 %v8562
      %v9768 = vpop.f32.mrf.mxu0
      %v9769 = vadd.f32 %v9705, %v9768
      %v9770 = vpop.f32.mrf.mxu0
      %v9771 = vadd.f32 %v9707, %v9770
      %9772 = vmatmul.bf16.gmra.mxu0 %v8572
      %v9773 = vpop.f32.mrf.mxu0
      %v9774 = vadd.f32 %v9710, %v9773
      %v9775 = vpop.f32.mrf.mxu0
      %v9776 = vadd.f32 %v9712, %v9775
      %9777 = vmatmul.bf16.gmra.mxu0 %v8582
      %v9778 = vpop.f32.mrf.mxu0
      %v9779 = vadd.f32 %v9715, %v9778
      %v9780 = vpop.f32.mrf.mxu0
      %v9781 = vadd.f32 %v9717, %v9780
      %9782 = vmatmul.bf16.gmra.mxu0 %v8592
      %v9783 = vpop.f32.mrf.mxu0
      %v9784 = vadd.f32 %v9720, %v9783
      %v9785 = vpop.f32.mrf.mxu0
      %v9786 = vadd.f32 %v9722, %v9785
      %9787 = vmatmul.bf16.gmra.mxu0 %v8602
      %v9788 = vpop.f32.mrf.mxu0
      %v9789 = vadd.f32 %v9725, %v9788
      %v9790 = vpop.f32.mrf.mxu0
      %v9791 = vadd.f32 %v9727, %v9790
      %9792 = vmatmul.bf16.gmra.mxu0 %v8612
      %v9793 = vpop.f32.mrf.mxu0
      %v9794 = vadd.f32 %v9730, %v9793
      %v9795 = vpop.f32.mrf.mxu0
      %v9796 = vadd.f32 %v9732, %v9795
      %9797 = vmatmul.bf16.gmra.mxu0 %v8622
      %v9798 = vpop.f32.mrf.mxu0
      %v9799 = vadd.f32 %v9735, %v9798
      %v9800 = vpop.f32.mrf.mxu0
      %v9801 = vadd.f32 %v9737, %v9800
      %9802 = vmatmul.bf16.gmra.mxu0 %v8632
      %v9803 = vpop.f32.mrf.mxu0
      %v9804 = vadd.f32 %v9740, %v9803
      %v9805 = vpop.f32.mrf.mxu0
      %v9806 = vadd.f32 %v9742, %v9805
      %9807 = vmatmul.bf16.gmra.mxu0 %v8642
      %v9808 = vpop.f32.mrf.mxu0
      %v9809 = vadd.f32 %v9745, %v9808
      %v9810 = vpop.f32.mrf.mxu0
      %v9811 = vadd.f32 %v9747, %v9810
      %9812 = vmatmul.bf16.gmra.mxu0 %v8652
      %v9813 = vpop.f32.mrf.mxu0
      %v9814 = vadd.f32 %v9750, %v9813
      %v9815 = vpop.f32.mrf.mxu0
      %v9816 = vadd.f32 %v9752, %v9815
      %9817 = vdwg.mxu0
      %9818 = vmatpush.bf16.msra.mxu0 %v9298
      %9819 = vmatpush.bf16.msra.mxu0 %v9296
      %9820 = vmatpush.bf16.msra.mxu0 %v9294
      %9821 = vmatpush.bf16.msra.mxu0 %v9292
      %9822 = vmatpush.bf16.msra.mxu0 %v9290
      %9823 = vmatpush.bf16.msra.mxu0 %v9288
      %9824 = vmatpush.bf16.msra.mxu0 %v9286
      %9825 = vmatpush.bf16.msra.mxu0 %v9284
      %9826 = vmatmul.bf16.gmra.mxu0 %v8553
      %v9827 = vpop.f32.mrf.mxu0
      %v9828 = vadd.f32 %v9764, %v9827
      %v9829 = vpop.f32.mrf.mxu0
      %v9830 = vadd.f32 %v9766, %v9829
      %9831 = vmatmul.bf16.gmra.mxu0 %v8563
      %v9832 = vpop.f32.mrf.mxu0
      %v9833 = vadd.f32 %v9769, %v9832
      %v9834 = vpop.f32.mrf.mxu0
      %v9835 = vadd.f32 %v9771, %v9834
      %9836 = vmatmul.bf16.gmra.mxu0 %v8573
      %v9837 = vpop.f32.mrf.mxu0
      %v9838 = vadd.f32 %v9774, %v9837
      %v9839 = vpop.f32.mrf.mxu0
      %v9840 = vadd.f32 %v9776, %v9839
      %9841 = vmatmul.bf16.gmra.mxu0 %v8583
      %v9842 = vpop.f32.mrf.mxu0
      %v9843 = vadd.f32 %v9779, %v9842
      %v9844 = vpop.f32.mrf.mxu0
      %v9845 = vadd.f32 %v9781, %v9844
      %9846 = vmatmul.bf16.gmra.mxu0 %v8593
      %v9847 = vpop.f32.mrf.mxu0
      %v9848 = vadd.f32 %v9784, %v9847
      %v9849 = vpop.f32.mrf.mxu0
      %v9850 = vadd.f32 %v9786, %v9849
      %9851 = vmatmul.bf16.gmra.mxu0 %v8603
      %v9852 = vpop.f32.mrf.mxu0
      %v9853 = vadd.f32 %v9789, %v9852
      %v9854 = vpop.f32.mrf.mxu0
      %v9855 = vadd.f32 %v9791, %v9854
      %9856 = vmatmul.bf16.gmra.mxu0 %v8613
      %v9857 = vpop.f32.mrf.mxu0
      %v9858 = vadd.f32 %v9794, %v9857
      %v9859 = vpop.f32.mrf.mxu0
      %v9860 = vadd.f32 %v9796, %v9859
      %9861 = vmatmul.bf16.gmra.mxu0 %v8623
      %v9862 = vpop.f32.mrf.mxu0
      %v9863 = vadd.f32 %v9799, %v9862
      %v9864 = vpop.f32.mrf.mxu0
      %v9865 = vadd.f32 %v9801, %v9864
      %9866 = vmatmul.bf16.gmra.mxu0 %v8633
      %v9867 = vpop.f32.mrf.mxu0
      %v9868 = vadd.f32 %v9804, %v9867
      %v9869 = vpop.f32.mrf.mxu0
      %v9870 = vadd.f32 %v9806, %v9869
      %9871 = vmatmul.bf16.gmra.mxu0 %v8643
      %v9872 = vpop.f32.mrf.mxu0
      %v9873 = vadd.f32 %v9809, %v9872
      %v9874 = vpop.f32.mrf.mxu0
      %v9875 = vadd.f32 %v9811, %v9874
      %9876 = vmatmul.bf16.gmra.mxu0 %v8653
      %v9877 = vpop.f32.mrf.mxu0
      %v9878 = vadd.f32 %v9814, %v9877
      %v9879 = vpop.f32.mrf.mxu0
      %v9880 = vadd.f32 %v9816, %v9879
      %9881 = vdwg.mxu0
      %9882 = vmatpush.bf16.msra.mxu0 %v9314
      %9883 = vmatpush.bf16.msra.mxu0 %v9312
      %9884 = vmatpush.bf16.msra.mxu0 %v9310
      %9885 = vmatpush.bf16.msra.mxu0 %v9308
      %9886 = vmatpush.bf16.msra.mxu0 %v9306
      %9887 = vmatpush.bf16.msra.mxu0 %v9304
      %9888 = vmatpush.bf16.msra.mxu0 %v9302
      %9889 = vmatpush.bf16.msra.mxu0 %v9300
      %9890 = vmatmul.bf16.gmra.mxu0 %v8554
      %v9891 = vpop.f32.mrf.mxu0
      %v9892 = vadd.f32 %v9828, %v9891
      %v9893 = vpop.f32.mrf.mxu0
      %v9894 = vadd.f32 %v9830, %v9893
      %9895 = vmatmul.bf16.gmra.mxu0 %v8564
      %v9896 = vpop.f32.mrf.mxu0
      %v9897 = vadd.f32 %v9833, %v9896
      %v9898 = vpop.f32.mrf.mxu0
      %v9899 = vadd.f32 %v9835, %v9898
      %9900 = vmatmul.bf16.gmra.mxu0 %v8574
      %v9901 = vpop.f32.mrf.mxu0
      %v9902 = vadd.f32 %v9838, %v9901
      %v9903 = vpop.f32.mrf.mxu0
      %v9904 = vadd.f32 %v9840, %v9903
      %9905 = vmatmul.bf16.gmra.mxu0 %v8584
      %v9906 = vpop.f32.mrf.mxu0
      %v9907 = vadd.f32 %v9843, %v9906
      %v9908 = vpop.f32.mrf.mxu0
      %v9909 = vadd.f32 %v9845, %v9908
      %9910 = vmatmul.bf16.gmra.mxu0 %v8594
      %v9911 = vpop.f32.mrf.mxu0
      %v9912 = vadd.f32 %v9848, %v9911
      %v9913 = vpop.f32.mrf.mxu0
      %v9914 = vadd.f32 %v9850, %v9913
      %9915 = vmatmul.bf16.gmra.mxu0 %v8604
      %v9916 = vpop.f32.mrf.mxu0
      %v9917 = vadd.f32 %v9853, %v9916
      %v9918 = vpop.f32.mrf.mxu0
      %v9919 = vadd.f32 %v9855, %v9918
      %9920 = vmatmul.bf16.gmra.mxu0 %v8614
      %v9921 = vpop.f32.mrf.mxu0
      %v9922 = vadd.f32 %v9858, %v9921
      %v9923 = vpop.f32.mrf.mxu0
      %v9924 = vadd.f32 %v9860, %v9923
      %9925 = vmatmul.bf16.gmra.mxu0 %v8624
      %v9926 = vpop.f32.mrf.mxu0
      %v9927 = vadd.f32 %v9863, %v9926
      %v9928 = vpop.f32.mrf.mxu0
      %v9929 = vadd.f32 %v9865, %v9928
      %9930 = vmatmul.bf16.gmra.mxu0 %v8634
      %v9931 = vpop.f32.mrf.mxu0
      %v9932 = vadd.f32 %v9868, %v9931
      %v9933 = vpop.f32.mrf.mxu0
      %v9934 = vadd.f32 %v9870, %v9933
      %9935 = vmatmul.bf16.gmra.mxu0 %v8644
      %v9936 = vpop.f32.mrf.mxu0
      %v9937 = vadd.f32 %v9873, %v9936
      %v9938 = vpop.f32.mrf.mxu0
      %v9939 = vadd.f32 %v9875, %v9938
      %9940 = vmatmul.bf16.gmra.mxu0 %v8654
      %v9941 = vpop.f32.mrf.mxu0
      %v9942 = vadd.f32 %v9878, %v9941
      %v9943 = vpop.f32.mrf.mxu0
      %v9944 = vadd.f32 %v9880, %v9943
      %9945 = vdwg.mxu0
      %9946 = vmatpush.bf16.msra.mxu0 %v9330
      %9947 = vmatpush.bf16.msra.mxu0 %v9328
      %9948 = vmatpush.bf16.msra.mxu0 %v9326
      %9949 = vmatpush.bf16.msra.mxu0 %v9324
      %9950 = vmatpush.bf16.msra.mxu0 %v9322
      %9951 = vmatpush.bf16.msra.mxu0 %v9320
      %9952 = vmatpush.bf16.msra.mxu0 %v9318
      %9953 = vmatpush.bf16.msra.mxu0 %v9316
      %9954 = vmatmul.bf16.gmra.mxu0 %v8555
      %v9955 = vpop.f32.mrf.mxu0
      %v9956 = vadd.f32 %v9892, %v9955
      %v9957 = vpop.f32.mrf.mxu0
      %v9958 = vadd.f32 %v9894, %v9957
      %9959 = vmatmul.bf16.gmra.mxu0 %v8565
      %v9960 = vpop.f32.mrf.mxu0
      %v9961 = vadd.f32 %v9897, %v9960
      %v9962 = vpop.f32.mrf.mxu0
      %v9963 = vadd.f32 %v9899, %v9962
      %9964 = vmatmul.bf16.gmra.mxu0 %v8575
      %v9965 = vpop.f32.mrf.mxu0
      %v9966 = vadd.f32 %v9902, %v9965
      %v9967 = vpop.f32.mrf.mxu0
      %v9968 = vadd.f32 %v9904, %v9967
      %9969 = vmatmul.bf16.gmra.mxu0 %v8585
      %v9970 = vpop.f32.mrf.mxu0
      %v9971 = vadd.f32 %v9907, %v9970
      %v9972 = vpop.f32.mrf.mxu0
      %v9973 = vadd.f32 %v9909, %v9972
      %9974 = vmatmul.bf16.gmra.mxu0 %v8595
      %v9975 = vpop.f32.mrf.mxu0
      %v9976 = vadd.f32 %v9912, %v9975
      %v9977 = vpop.f32.mrf.mxu0
      %v9978 = vadd.f32 %v9914, %v9977
      %9979 = vmatmul.bf16.gmra.mxu0 %v8605
      %v9980 = vpop.f32.mrf.mxu0
      %v9981 = vadd.f32 %v9917, %v9980
      %v9982 = vpop.f32.mrf.mxu0
      %v9983 = vadd.f32 %v9919, %v9982
      %9984 = vmatmul.bf16.gmra.mxu0 %v8615
      %v9985 = vpop.f32.mrf.mxu0
      %v9986 = vadd.f32 %v9922, %v9985
      %v9987 = vpop.f32.mrf.mxu0
      %v9988 = vadd.f32 %v9924, %v9987
      %9989 = vmatmul.bf16.gmra.mxu0 %v8625
      %v9990 = vpop.f32.mrf.mxu0
      %v9991 = vadd.f32 %v9927, %v9990
      %v9992 = vpop.f32.mrf.mxu0
      %v9993 = vadd.f32 %v9929, %v9992
      %9994 = vmatmul.bf16.gmra.mxu0 %v8635
      %v9995 = vpop.f32.mrf.mxu0
      %v9996 = vadd.f32 %v9932, %v9995
      %v9997 = vpop.f32.mrf.mxu0
      %v9998 = vadd.f32 %v9934, %v9997
      %9999 = vmatmul.bf16.gmra.mxu0 %v8645
      %v10000 = vpop.f32.mrf.mxu0
      %v10001 = vadd.f32 %v9937, %v10000
      %v10002 = vpop.f32.mrf.mxu0
      %v10003 = vadd.f32 %v9939, %v10002
      %10004 = vmatmul.bf16.gmra.mxu0 %v8655
      %v10005 = vpop.f32.mrf.mxu0
      %v10006 = vadd.f32 %v9942, %v10005
      %v10007 = vpop.f32.mrf.mxu0
      %v10008 = vadd.f32 %v9944, %v10007
      %10009 = vdwg.mxu0
      %10010 = vmatpush.bf16.msra.mxu0 %v9346
      %10011 = vmatpush.bf16.msra.mxu0 %v9344
      %10012 = vmatpush.bf16.msra.mxu0 %v9342
      %10013 = vmatpush.bf16.msra.mxu0 %v9340
      %10014 = vmatpush.bf16.msra.mxu0 %v9338
      %10015 = vmatpush.bf16.msra.mxu0 %v9336
      %10016 = vmatpush.bf16.msra.mxu0 %v9334
      %10017 = vmatpush.bf16.msra.mxu0 %v9332
      %10018 = vmatmul.bf16.gmra.mxu0 %v8556
      %v10019 = vpop.f32.mrf.mxu0
      %v10020 = vadd.f32 %v9956, %v10019
      %v10021 = vpop.f32.mrf.mxu0
      %v10022 = vadd.f32 %v9958, %v10021
      %10023 = vmatmul.bf16.gmra.mxu0 %v8566
      %v10024 = vpop.f32.mrf.mxu0
      %v10025 = vadd.f32 %v9961, %v10024
      %v10026 = vpop.f32.mrf.mxu0
      %v10027 = vadd.f32 %v9963, %v10026
      %10028 = vmatmul.bf16.gmra.mxu0 %v8576
      %v10029 = vpop.f32.mrf.mxu0
      %v10030 = vadd.f32 %v9966, %v10029
      %v10031 = vpop.f32.mrf.mxu0
      %v10032 = vadd.f32 %v9968, %v10031
      %10033 = vmatmul.bf16.gmra.mxu0 %v8586
      %v10034 = vpop.f32.mrf.mxu0
      %v10035 = vadd.f32 %v9971, %v10034
      %v10036 = vpop.f32.mrf.mxu0
      %v10037 = vadd.f32 %v9973, %v10036
      %10038 = vmatmul.bf16.gmra.mxu0 %v8596
      %v10039 = vpop.f32.mrf.mxu0
      %v10040 = vadd.f32 %v9976, %v10039
      %v10041 = vpop.f32.mrf.mxu0
      %v10042 = vadd.f32 %v9978, %v10041
      %10043 = vmatmul.bf16.gmra.mxu0 %v8606
      %v10044 = vpop.f32.mrf.mxu0
      %v10045 = vadd.f32 %v9981, %v10044
      %v10046 = vpop.f32.mrf.mxu0
      %v10047 = vadd.f32 %v9983, %v10046
      %10048 = vmatmul.bf16.gmra.mxu0 %v8616
      %v10049 = vpop.f32.mrf.mxu0
      %v10050 = vadd.f32 %v9986, %v10049
      %v10051 = vpop.f32.mrf.mxu0
      %v10052 = vadd.f32 %v9988, %v10051
      %10053 = vmatmul.bf16.gmra.mxu0 %v8626
      %v10054 = vpop.f32.mrf.mxu0
      %v10055 = vadd.f32 %v9991, %v10054
      %v10056 = vpop.f32.mrf.mxu0
      %v10057 = vadd.f32 %v9993, %v10056
      %10058 = vmatmul.bf16.gmra.mxu0 %v8636
      %v10059 = vpop.f32.mrf.mxu0
      %v10060 = vadd.f32 %v9996, %v10059
      %v10061 = vpop.f32.mrf.mxu0
      %v10062 = vadd.f32 %v9998, %v10061
      %10063 = vmatmul.bf16.gmra.mxu0 %v8646
      %v10064 = vpop.f32.mrf.mxu0
      %v10065 = vadd.f32 %v10001, %v10064
      %v10066 = vpop.f32.mrf.mxu0
      %v10067 = vadd.f32 %v10003, %v10066
      %10068 = vmatmul.bf16.gmra.mxu0 %v8656
      %v10069 = vpop.f32.mrf.mxu0
      %v10070 = vadd.f32 %v10006, %v10069
      %v10071 = vpop.f32.mrf.mxu0
      %v10072 = vadd.f32 %v10008, %v10071
      %10073 = vdwg.mxu0
      %10074 = vmatpush.bf16.msra.mxu0 %v9362
      %10075 = vmatpush.bf16.msra.mxu0 %v9360
      %10076 = vmatpush.bf16.msra.mxu0 %v9358
      %10077 = vmatpush.bf16.msra.mxu0 %v9356
      %10078 = vmatpush.bf16.msra.mxu0 %v9354
      %10079 = vmatpush.bf16.msra.mxu0 %v9352
      %10080 = vmatpush.bf16.msra.mxu0 %v9350
      %10081 = vmatpush.bf16.msra.mxu0 %v9348
      %10082 = vmatmul.bf16.gmra.mxu0 %v8557
      %v10083 = vpop.f32.mrf.mxu0
      %v10084 = vadd.f32 %v10020, %v10083
      %v10085 = vpop.f32.mrf.mxu0
      %v10086 = vadd.f32 %v10022, %v10085
      %10087 = vmatmul.bf16.gmra.mxu0 %v8567
      %v10088 = vpop.f32.mrf.mxu0
      %v10089 = vadd.f32 %v10025, %v10088
      %v10090 = vpop.f32.mrf.mxu0
      %v10091 = vadd.f32 %v10027, %v10090
      %10092 = vmatmul.bf16.gmra.mxu0 %v8577
      %v10093 = vpop.f32.mrf.mxu0
      %v10094 = vadd.f32 %v10030, %v10093
      %v10095 = vpop.f32.mrf.mxu0
      %v10096 = vadd.f32 %v10032, %v10095
      %10097 = vmatmul.bf16.gmra.mxu0 %v8587
      %v10098 = vpop.f32.mrf.mxu0
      %v10099 = vadd.f32 %v10035, %v10098
      %v10100 = vpop.f32.mrf.mxu0
      %v10101 = vadd.f32 %v10037, %v10100
      %10102 = vmatmul.bf16.gmra.mxu0 %v8597
      %v10103 = vpop.f32.mrf.mxu0
      %v10104 = vadd.f32 %v10040, %v10103
      %v10105 = vpop.f32.mrf.mxu0
      %v10106 = vadd.f32 %v10042, %v10105
      %10107 = vmatmul.bf16.gmra.mxu0 %v8607
      %v10108 = vpop.f32.mrf.mxu0
      %v10109 = vadd.f32 %v10045, %v10108
      %v10110 = vpop.f32.mrf.mxu0
      %v10111 = vadd.f32 %v10047, %v10110
      %10112 = vmatmul.bf16.gmra.mxu0 %v8617
      %v10113 = vpop.f32.mrf.mxu0
      %v10114 = vadd.f32 %v10050, %v10113
      %v10115 = vpop.f32.mrf.mxu0
      %v10116 = vadd.f32 %v10052, %v10115
      %10117 = vmatmul.bf16.gmra.mxu0 %v8627
      %v10118 = vpop.f32.mrf.mxu0
      %v10119 = vadd.f32 %v10055, %v10118
      %v10120 = vpop.f32.mrf.mxu0
      %v10121 = vadd.f32 %v10057, %v10120
      %10122 = vmatmul.bf16.gmra.mxu0 %v8637
      %v10123 = vpop.f32.mrf.mxu0
      %v10124 = vadd.f32 %v10060, %v10123
      %v10125 = vpop.f32.mrf.mxu0
      %v10126 = vadd.f32 %v10062, %v10125
      %10127 = vmatmul.bf16.gmra.mxu0 %v8647
      %v10128 = vpop.f32.mrf.mxu0
      %v10129 = vadd.f32 %v10065, %v10128
      %v10130 = vpop.f32.mrf.mxu0
      %v10131 = vadd.f32 %v10067, %v10130
      %10132 = vmatmul.bf16.gmra.mxu0 %v8657
      %v10133 = vpop.f32.mrf.mxu0
      %v10134 = vadd.f32 %v10070, %v10133
      %v10135 = vpop.f32.mrf.mxu0
      %v10136 = vadd.f32 %v10072, %v10135
      %10137 = vdwg.mxu0
      %10138 = vmatpush.bf16.msra.mxu0 0
      %10139 = vmatpush.bf16.msra.mxu0 0
      %10140 = vmatpush.bf16.msra.mxu0 0
      %10141 = vmatpush.bf16.msra.mxu0 %v9372
      %10142 = vmatpush.bf16.msra.mxu0 %v9370
      %10143 = vmatpush.bf16.msra.mxu0 %v9368
      %10144 = vmatpush.bf16.msra.mxu0 %v9366
      %10145 = vmatpush.bf16.msra.mxu0 %v9364
      %10146 = vmatmul.bf16.gmra.mxu0 %v9530
      %v10147 = vpop.f32.mrf.mxu0
      %v10148 = vadd.f32 %v10084, %v10147
      %v10149 = vpop.f32.mrf.mxu0
      %v10150 = vadd.f32 %v10086, %v10149
      %10151 = vmatmul.bf16.gmra.mxu0 %v9533
      %v10152 = vpop.f32.mrf.mxu0
      %v10153 = vadd.f32 %v10089, %v10152
      %v10154 = vpop.f32.mrf.mxu0
      %v10155 = vadd.f32 %v10091, %v10154
      %10156 = vmatmul.bf16.gmra.mxu0 %v9536
      %v10157 = vpop.f32.mrf.mxu0
      %v10158 = vadd.f32 %v10094, %v10157
      %v10159 = vpop.f32.mrf.mxu0
      %v10160 = vadd.f32 %v10096, %v10159
      %10161 = vmatmul.bf16.gmra.mxu0 %v9539
      %v10162 = vpop.f32.mrf.mxu0
      %v10163 = vadd.f32 %v10099, %v10162
      %v10164 = vpop.f32.mrf.mxu0
      %v10165 = vadd.f32 %v10101, %v10164
      %10166 = vmatmul.bf16.gmra.mxu0 %v9542
      %v10167 = vpop.f32.mrf.mxu0
      %v10168 = vadd.f32 %v10104, %v10167
      %v10169 = vpop.f32.mrf.mxu0
      %v10170 = vadd.f32 %v10106, %v10169
      %10171 = vmatmul.bf16.gmra.mxu0 %v9545
      %v10172 = vpop.f32.mrf.mxu0
      %v10173 = vadd.f32 %v10109, %v10172
      %v10174 = vpop.f32.mrf.mxu0
      %v10175 = vadd.f32 %v10111, %v10174
      %10176 = vmatmul.bf16.gmra.mxu0 %v9548
      %v10177 = vpop.f32.mrf.mxu0
      %v10178 = vadd.f32 %v10114, %v10177
      %v10179 = vpop.f32.mrf.mxu0
      %v10180 = vadd.f32 %v10116, %v10179
      %10181 = vmatmul.bf16.gmra.mxu0 %v9551
      %v10182 = vpop.f32.mrf.mxu0
      %v10183 = vadd.f32 %v10119, %v10182
      %v10184 = vpop.f32.mrf.mxu0
      %v10185 = vadd.f32 %v10121, %v10184
      %10186 = vmatmul.bf16.gmra.mxu0 %v9554
      %v10187 = vpop.f32.mrf.mxu0
      %v10188 = vadd.f32 %v10124, %v10187
      %v10189 = vpop.f32.mrf.mxu0
      %v10190 = vadd.f32 %v10126, %v10189
      %10191 = vmatmul.bf16.gmra.mxu0 %v9557
      %v10192 = vpop.f32.mrf.mxu0
      %v10193 = vadd.f32 %v10129, %v10192
      %v10194 = vpop.f32.mrf.mxu0
      %v10195 = vadd.f32 %v10131, %v10194
      %10196 = vmatmul.bf16.gmra.mxu0 %v9560
      %v10197 = vpop.f32.mrf.mxu0
      %v10198 = vadd.f32 %v10134, %v10197
      %v10199 = vpop.f32.mrf.mxu0
      %v10200 = vadd.f32 %v10136, %v10199
      %10201 = vdwg.mxu0
      %10202 = vmatpush.bf16.msra.mxu0 %v9235
      %10203 = vmatpush.bf16.msra.mxu0 %v9233
      %10204 = vmatpush.bf16.msra.mxu0 %v9231
      %10205 = vmatpush.bf16.msra.mxu0 %v9229
      %10206 = vmatpush.bf16.msra.mxu0 %v9227
      %10207 = vmatpush.bf16.msra.mxu0 %v9225
      %10208 = vmatpush.bf16.msra.mxu0 %v9223
      %10209 = vmatpush.bf16.msra.mxu0 %v9221
      %10210 = vmatmul.bf16.gmra.mxu0 %v8549
      %v10211 = vpop.f32.mrf.mxu0
      %v10212 = vadd.f32 0.0, %v10211
      %v10213 = vpop.f32.mrf.mxu0
      %v10214 = vadd.f32 0.0, %v10213
      %10215 = vmatmul.bf16.gmra.mxu0 %v8559
      %v10216 = vpop.f32.mrf.mxu0
      %v10217 = vadd.f32 0.0, %v10216
      %v10218 = vpop.f32.mrf.mxu0
      %v10219 = vadd.f32 0.0, %v10218
      %10220 = vmatmul.bf16.gmra.mxu0 %v8569
      %v10221 = vpop.f32.mrf.mxu0
      %v10222 = vadd.f32 0.0, %v10221
      %v10223 = vpop.f32.mrf.mxu0
      %v10224 = vadd.f32 0.0, %v10223
      %10225 = vmatmul.bf16.gmra.mxu0 %v8579
      %v10226 = vpop.f32.mrf.mxu0
      %v10227 = vadd.f32 0.0, %v10226
      %v10228 = vpop.f32.mrf.mxu0
      %v10229 = vadd.f32 0.0, %v10228
      %10230 = vmatmul.bf16.gmra.mxu0 %v8589
      %v10231 = vpop.f32.mrf.mxu0
      %v10232 = vadd.f32 0.0, %v10231
      %v10233 = vpop.f32.mrf.mxu0
      %v10234 = vadd.f32 0.0, %v10233
      %10235 = vmatmul.bf16.gmra.mxu0 %v8599
      %v10236 = vpop.f32.mrf.mxu0
      %v10237 = vadd.f32 0.0, %v10236
      %v10238 = vpop.f32.mrf.mxu0
      %v10239 = vadd.f32 0.0, %v10238
      %10240 = vmatmul.bf16.gmra.mxu0 %v8609
      %v10241 = vpop.f32.mrf.mxu0
      %v10242 = vadd.f32 0.0, %v10241
      %v10243 = vpop.f32.mrf.mxu0
      %v10244 = vadd.f32 0.0, %v10243
      %10245 = vmatmul.bf16.gmra.mxu0 %v8619
      %v10246 = vpop.f32.mrf.mxu0
      %v10247 = vadd.f32 0.0, %v10246
      %v10248 = vpop.f32.mrf.mxu0
      %v10249 = vadd.f32 0.0, %v10248
      %10250 = vmatmul.bf16.gmra.mxu0 %v8629
      %v10251 = vpop.f32.mrf.mxu0
      %v10252 = vadd.f32 0.0, %v10251
      %v10253 = vpop.f32.mrf.mxu0
      %v10254 = vadd.f32 0.0, %v10253
      %10255 = vmatmul.bf16.gmra.mxu0 %v8639
      %v10256 = vpop.f32.mrf.mxu0
      %v10257 = vadd.f32 0.0, %v10256
      %v10258 = vpop.f32.mrf.mxu0
      %v10259 = vadd.f32 0.0, %v10258
      %10260 = vmatmul.bf16.gmra.mxu0 %v8649
      %v10261 = vpop.f32.mrf.mxu0
      %v10262 = vadd.f32 0.0, %v10261
      %v10263 = vpop.f32.mrf.mxu0
      %v10264 = vadd.f32 0.0, %v10263
      %10265 = vdwg.mxu0
      %10266 = vmatpush.bf16.msra.mxu0 %v9251
      %10267 = vmatpush.bf16.msra.mxu0 %v9249
      %10268 = vmatpush.bf16.msra.mxu0 %v9247
      %10269 = vmatpush.bf16.msra.mxu0 %v9245
      %10270 = vmatpush.bf16.msra.mxu0 %v9243
      %10271 = vmatpush.bf16.msra.mxu0 %v9241
      %10272 = vmatpush.bf16.msra.mxu0 %v9239
      %10273 = vmatpush.bf16.msra.mxu0 %v9237
      %10274 = vmatmul.bf16.gmra.mxu0 %v8550
      %v10275 = vpop.f32.mrf.mxu0
      %v10276 = vadd.f32 %v10212, %v10275
      %v10277 = vpop.f32.mrf.mxu0
      %v10278 = vadd.f32 %v10214, %v10277
      %10279 = vmatmul.bf16.gmra.mxu0 %v8560
      %v10280 = vpop.f32.mrf.mxu0
      %v10281 = vadd.f32 %v10217, %v10280
      %v10282 = vpop.f32.mrf.mxu0
      %v10283 = vadd.f32 %v10219, %v10282
      %10284 = vmatmul.bf16.gmra.mxu0 %v8570
      %v10285 = vpop.f32.mrf.mxu0
      %v10286 = vadd.f32 %v10222, %v10285
      %v10287 = vpop.f32.mrf.mxu0
      %v10288 = vadd.f32 %v10224, %v10287
      %10289 = vmatmul.bf16.gmra.mxu0 %v8580
      %v10290 = vpop.f32.mrf.mxu0
      %v10291 = vadd.f32 %v10227, %v10290
      %v10292 = vpop.f32.mrf.mxu0
      %v10293 = vadd.f32 %v10229, %v10292
      %10294 = vmatmul.bf16.gmra.mxu0 %v8590
      %v10295 = vpop.f32.mrf.mxu0
      %v10296 = vadd.f32 %v10232, %v10295
      %v10297 = vpop.f32.mrf.mxu0
      %v10298 = vadd.f32 %v10234, %v10297
      %10299 = vmatmul.bf16.gmra.mxu0 %v8600
      %v10300 = vpop.f32.mrf.mxu0
      %v10301 = vadd.f32 %v10237, %v10300
      %v10302 = vpop.f32.mrf.mxu0
      %v10303 = vadd.f32 %v10239, %v10302
      %10304 = vmatmul.bf16.gmra.mxu0 %v8610
      %v10305 = vpop.f32.mrf.mxu0
      %v10306 = vadd.f32 %v10242, %v10305
      %v10307 = vpop.f32.mrf.mxu0
      %v10308 = vadd.f32 %v10244, %v10307
      %10309 = vmatmul.bf16.gmra.mxu0 %v8620
      %v10310 = vpop.f32.mrf.mxu0
      %v10311 = vadd.f32 %v10247, %v10310
      %v10312 = vpop.f32.mrf.mxu0
      %v10313 = vadd.f32 %v10249, %v10312
      %10314 = vmatmul.bf16.gmra.mxu0 %v8630
      %v10315 = vpop.f32.mrf.mxu0
      %v10316 = vadd.f32 %v10252, %v10315
      %v10317 = vpop.f32.mrf.mxu0
      %v10318 = vadd.f32 %v10254, %v10317
      %10319 = vmatmul.bf16.gmra.mxu0 %v8640
      %v10320 = vpop.f32.mrf.mxu0
      %v10321 = vadd.f32 %v10257, %v10320
      %v10322 = vpop.f32.mrf.mxu0
      %v10323 = vadd.f32 %v10259, %v10322
      %10324 = vmatmul.bf16.gmra.mxu0 %v8650
      %v10325 = vpop.f32.mrf.mxu0
      %v10326 = vadd.f32 %v10262, %v10325
      %v10327 = vpop.f32.mrf.mxu0
      %v10328 = vadd.f32 %v10264, %v10327
      %10329 = vdwg.mxu0
      %10330 = vmatpush.bf16.msra.mxu0 %v9267
      %10331 = vmatpush.bf16.msra.mxu0 %v9265
      %10332 = vmatpush.bf16.msra.mxu0 %v9263
      %10333 = vmatpush.bf16.msra.mxu0 %v9261
      %10334 = vmatpush.bf16.msra.mxu0 %v9259
      %10335 = vmatpush.bf16.msra.mxu0 %v9257
      %10336 = vmatpush.bf16.msra.mxu0 %v9255
      %10337 = vmatpush.bf16.msra.mxu0 %v9253
      %10338 = vmatmul.bf16.gmra.mxu0 %v8551
      %v10339 = vpop.f32.mrf.mxu0
      %v10340 = vadd.f32 %v10276, %v10339
      %v10341 = vpop.f32.mrf.mxu0
      %v10342 = vadd.f32 %v10278, %v10341
      %10343 = vmatmul.bf16.gmra.mxu0 %v8561
      %v10344 = vpop.f32.mrf.mxu0
      %v10345 = vadd.f32 %v10281, %v10344
      %v10346 = vpop.f32.mrf.mxu0
      %v10347 = vadd.f32 %v10283, %v10346
      %10348 = vmatmul.bf16.gmra.mxu0 %v8571
      %v10349 = vpop.f32.mrf.mxu0
      %v10350 = vadd.f32 %v10286, %v10349
      %v10351 = vpop.f32.mrf.mxu0
      %v10352 = vadd.f32 %v10288, %v10351
      %10353 = vmatmul.bf16.gmra.mxu0 %v8581
      %v10354 = vpop.f32.mrf.mxu0
      %v10355 = vadd.f32 %v10291, %v10354
      %v10356 = vpop.f32.mrf.mxu0
      %v10357 = vadd.f32 %v10293, %v10356
      %10358 = vmatmul.bf16.gmra.mxu0 %v8591
      %v10359 = vpop.f32.mrf.mxu0
      %v10360 = vadd.f32 %v10296, %v10359
      %v10361 = vpop.f32.mrf.mxu0
      %v10362 = vadd.f32 %v10298, %v10361
      %10363 = vmatmul.bf16.gmra.mxu0 %v8601
      %v10364 = vpop.f32.mrf.mxu0
      %v10365 = vadd.f32 %v10301, %v10364
      %v10366 = vpop.f32.mrf.mxu0
      %v10367 = vadd.f32 %v10303, %v10366
      %10368 = vmatmul.bf16.gmra.mxu0 %v8611
      %v10369 = vpop.f32.mrf.mxu0
      %v10370 = vadd.f32 %v10306, %v10369
      %v10371 = vpop.f32.mrf.mxu0
      %v10372 = vadd.f32 %v10308, %v10371
      %10373 = vmatmul.bf16.gmra.mxu0 %v8621
      %v10374 = vpop.f32.mrf.mxu0
      %v10375 = vadd.f32 %v10311, %v10374
      %v10376 = vpop.f32.mrf.mxu0
      %v10377 = vadd.f32 %v10313, %v10376
      %10378 = vmatmul.bf16.gmra.mxu0 %v8631
      %v10379 = vpop.f32.mrf.mxu0
      %v10380 = vadd.f32 %v10316, %v10379
      %v10381 = vpop.f32.mrf.mxu0
      %v10382 = vadd.f32 %v10318, %v10381
      %10383 = vmatmul.bf16.gmra.mxu0 %v8641
      %v10384 = vpop.f32.mrf.mxu0
      %v10385 = vadd.f32 %v10321, %v10384
      %v10386 = vpop.f32.mrf.mxu0
      %v10387 = vadd.f32 %v10323, %v10386
      %10388 = vmatmul.bf16.gmra.mxu0 %v8651
      %v10389 = vpop.f32.mrf.mxu0
      %v10390 = vadd.f32 %v10326, %v10389
      %v10391 = vpop.f32.mrf.mxu0
      %v10392 = vadd.f32 %v10328, %v10391
      %10393 = vdwg.mxu0
      %10394 = vmatpush.bf16.msra.mxu0 %v9283
      %10395 = vmatpush.bf16.msra.mxu0 %v9281
      %10396 = vmatpush.bf16.msra.mxu0 %v9279
      %10397 = vmatpush.bf16.msra.mxu0 %v9277
      %10398 = vmatpush.bf16.msra.mxu0 %v9275
      %10399 = vmatpush.bf16.msra.mxu0 %v9273
      %10400 = vmatpush.bf16.msra.mxu0 %v9271
      %10401 = vmatpush.bf16.msra.mxu0 %v9269
      %10402 = vmatmul.bf16.gmra.mxu0 %v8552
      %v10403 = vpop.f32.mrf.mxu0
      %v10404 = vadd.f32 %v10340, %v10403
      %v10405 = vpop.f32.mrf.mxu0
      %v10406 = vadd.f32 %v10342, %v10405
      %10407 = vmatmul.bf16.gmra.mxu0 %v8562
      %v10408 = vpop.f32.mrf.mxu0
      %v10409 = vadd.f32 %v10345, %v10408
      %v10410 = vpop.f32.mrf.mxu0
      %v10411 = vadd.f32 %v10347, %v10410
      %10412 = vmatmul.bf16.gmra.mxu0 %v8572
      %v10413 = vpop.f32.mrf.mxu0
      %v10414 = vadd.f32 %v10350, %v10413
      %v10415 = vpop.f32.mrf.mxu0
      %v10416 = vadd.f32 %v10352, %v10415
      %10417 = vmatmul.bf16.gmra.mxu0 %v8582
      %v10418 = vpop.f32.mrf.mxu0
      %v10419 = vadd.f32 %v10355, %v10418
      %v10420 = vpop.f32.mrf.mxu0
      %v10421 = vadd.f32 %v10357, %v10420
      %10422 = vmatmul.bf16.gmra.mxu0 %v8592
      %v10423 = vpop.f32.mrf.mxu0
      %v10424 = vadd.f32 %v10360, %v10423
      %v10425 = vpop.f32.mrf.mxu0
      %v10426 = vadd.f32 %v10362, %v10425
      %10427 = vmatmul.bf16.gmra.mxu0 %v8602
      %v10428 = vpop.f32.mrf.mxu0
      %v10429 = vadd.f32 %v10365, %v10428
      %v10430 = vpop.f32.mrf.mxu0
      %v10431 = vadd.f32 %v10367, %v10430
      %10432 = vmatmul.bf16.gmra.mxu0 %v8612
      %v10433 = vpop.f32.mrf.mxu0
      %v10434 = vadd.f32 %v10370, %v10433
      %v10435 = vpop.f32.mrf.mxu0
      %v10436 = vadd.f32 %v10372, %v10435
      %10437 = vmatmul.bf16.gmra.mxu0 %v8622
      %v10438 = vpop.f32.mrf.mxu0
      %v10439 = vadd.f32 %v10375, %v10438
      %v10440 = vpop.f32.mrf.mxu0
      %v10441 = vadd.f32 %v10377, %v10440
      %10442 = vmatmul.bf16.gmra.mxu0 %v8632
      %v10443 = vpop.f32.mrf.mxu0
      %v10444 = vadd.f32 %v10380, %v10443
      %v10445 = vpop.f32.mrf.mxu0
      %v10446 = vadd.f32 %v10382, %v10445
      %10447 = vmatmul.bf16.gmra.mxu0 %v8642
      %v10448 = vpop.f32.mrf.mxu0
      %v10449 = vadd.f32 %v10385, %v10448
      %v10450 = vpop.f32.mrf.mxu0
      %v10451 = vadd.f32 %v10387, %v10450
      %10452 = vmatmul.bf16.gmra.mxu0 %v8652
      %v10453 = vpop.f32.mrf.mxu0
      %v10454 = vadd.f32 %v10390, %v10453
      %v10455 = vpop.f32.mrf.mxu0
      %v10456 = vadd.f32 %v10392, %v10455
      %10457 = vdwg.mxu0
      %10458 = vmatpush.bf16.msra.mxu0 %v9299
      %10459 = vmatpush.bf16.msra.mxu0 %v9297
      %10460 = vmatpush.bf16.msra.mxu0 %v9295
      %10461 = vmatpush.bf16.msra.mxu0 %v9293
      %10462 = vmatpush.bf16.msra.mxu0 %v9291
      %10463 = vmatpush.bf16.msra.mxu0 %v9289
      %10464 = vmatpush.bf16.msra.mxu0 %v9287
      %10465 = vmatpush.bf16.msra.mxu0 %v9285
      %10466 = vmatmul.bf16.gmra.mxu0 %v8553
      %v10467 = vpop.f32.mrf.mxu0
      %v10468 = vadd.f32 %v10404, %v10467
      %v10469 = vpop.f32.mrf.mxu0
      %v10470 = vadd.f32 %v10406, %v10469
      %10471 = vmatmul.bf16.gmra.mxu0 %v8563
      %v10472 = vpop.f32.mrf.mxu0
      %v10473 = vadd.f32 %v10409, %v10472
      %v10474 = vpop.f32.mrf.mxu0
      %v10475 = vadd.f32 %v10411, %v10474
      %10476 = vmatmul.bf16.gmra.mxu0 %v8573
      %v10477 = vpop.f32.mrf.mxu0
      %v10478 = vadd.f32 %v10414, %v10477
      %v10479 = vpop.f32.mrf.mxu0
      %v10480 = vadd.f32 %v10416, %v10479
      %10481 = vmatmul.bf16.gmra.mxu0 %v8583
      %v10482 = vpop.f32.mrf.mxu0
      %v10483 = vadd.f32 %v10419, %v10482
      %v10484 = vpop.f32.mrf.mxu0
      %v10485 = vadd.f32 %v10421, %v10484
      %10486 = vmatmul.bf16.gmra.mxu0 %v8593
      %v10487 = vpop.f32.mrf.mxu0
      %v10488 = vadd.f32 %v10424, %v10487
      %v10489 = vpop.f32.mrf.mxu0
      %v10490 = vadd.f32 %v10426, %v10489
      %10491 = vmatmul.bf16.gmra.mxu0 %v8603
      %v10492 = vpop.f32.mrf.mxu0
      %v10493 = vadd.f32 %v10429, %v10492
      %v10494 = vpop.f32.mrf.mxu0
      %v10495 = vadd.f32 %v10431, %v10494
      %10496 = vmatmul.bf16.gmra.mxu0 %v8613
      %v10497 = vpop.f32.mrf.mxu0
      %v10498 = vadd.f32 %v10434, %v10497
      %v10499 = vpop.f32.mrf.mxu0
      %v10500 = vadd.f32 %v10436, %v10499
      %10501 = vmatmul.bf16.gmra.mxu0 %v8623
      %v10502 = vpop.f32.mrf.mxu0
      %v10503 = vadd.f32 %v10439, %v10502
      %v10504 = vpop.f32.mrf.mxu0
      %v10505 = vadd.f32 %v10441, %v10504
      %10506 = vmatmul.bf16.gmra.mxu0 %v8633
      %v10507 = vpop.f32.mrf.mxu0
      %v10508 = vadd.f32 %v10444, %v10507
      %v10509 = vpop.f32.mrf.mxu0
      %v10510 = vadd.f32 %v10446, %v10509
      %10511 = vmatmul.bf16.gmra.mxu0 %v8643
      %v10512 = vpop.f32.mrf.mxu0
      %v10513 = vadd.f32 %v10449, %v10512
      %v10514 = vpop.f32.mrf.mxu0
      %v10515 = vadd.f32 %v10451, %v10514
      %10516 = vmatmul.bf16.gmra.mxu0 %v8653
      %v10517 = vpop.f32.mrf.mxu0
      %v10518 = vadd.f32 %v10454, %v10517
      %v10519 = vpop.f32.mrf.mxu0
      %v10520 = vadd.f32 %v10456, %v10519
      %10521 = vdwg.mxu0
      %10522 = vmatpush.bf16.msra.mxu0 %v9315
      %10523 = vmatpush.bf16.msra.mxu0 %v9313
      %10524 = vmatpush.bf16.msra.mxu0 %v9311
      %10525 = vmatpush.bf16.msra.mxu0 %v9309
      %10526 = vmatpush.bf16.msra.mxu0 %v9307
      %10527 = vmatpush.bf16.msra.mxu0 %v9305
      %10528 = vmatpush.bf16.msra.mxu0 %v9303
      %10529 = vmatpush.bf16.msra.mxu0 %v9301
      %10530 = vmatmul.bf16.gmra.mxu0 %v8554
      %v10531 = vpop.f32.mrf.mxu0
      %v10532 = vadd.f32 %v10468, %v10531
      %v10533 = vpop.f32.mrf.mxu0
      %v10534 = vadd.f32 %v10470, %v10533
      %10535 = vmatmul.bf16.gmra.mxu0 %v8564
      %v10536 = vpop.f32.mrf.mxu0
      %v10537 = vadd.f32 %v10473, %v10536
      %v10538 = vpop.f32.mrf.mxu0
      %v10539 = vadd.f32 %v10475, %v10538
      %10540 = vmatmul.bf16.gmra.mxu0 %v8574
      %v10541 = vpop.f32.mrf.mxu0
      %v10542 = vadd.f32 %v10478, %v10541
      %v10543 = vpop.f32.mrf.mxu0
      %v10544 = vadd.f32 %v10480, %v10543
      %10545 = vmatmul.bf16.gmra.mxu0 %v8584
      %v10546 = vpop.f32.mrf.mxu0
      %v10547 = vadd.f32 %v10483, %v10546
      %v10548 = vpop.f32.mrf.mxu0
      %v10549 = vadd.f32 %v10485, %v10548
      %10550 = vmatmul.bf16.gmra.mxu0 %v8594
      %v10551 = vpop.f32.mrf.mxu0
      %v10552 = vadd.f32 %v10488, %v10551
      %v10553 = vpop.f32.mrf.mxu0
      %v10554 = vadd.f32 %v10490, %v10553
      %10555 = vmatmul.bf16.gmra.mxu0 %v8604
      %v10556 = vpop.f32.mrf.mxu0
      %v10557 = vadd.f32 %v10493, %v10556
      %v10558 = vpop.f32.mrf.mxu0
      %v10559 = vadd.f32 %v10495, %v10558
      %10560 = vmatmul.bf16.gmra.mxu0 %v8614
      %v10561 = vpop.f32.mrf.mxu0
      %v10562 = vadd.f32 %v10498, %v10561
      %v10563 = vpop.f32.mrf.mxu0
      %v10564 = vadd.f32 %v10500, %v10563
      %10565 = vmatmul.bf16.gmra.mxu0 %v8624
      %v10566 = vpop.f32.mrf.mxu0
      %v10567 = vadd.f32 %v10503, %v10566
      %v10568 = vpop.f32.mrf.mxu0
      %v10569 = vadd.f32 %v10505, %v10568
      %10570 = vmatmul.bf16.gmra.mxu0 %v8634
      %v10571 = vpop.f32.mrf.mxu0
      %v10572 = vadd.f32 %v10508, %v10571
      %v10573 = vpop.f32.mrf.mxu0
      %v10574 = vadd.f32 %v10510, %v10573
      %10575 = vmatmul.bf16.gmra.mxu0 %v8644
      %v10576 = vpop.f32.mrf.mxu0
      %v10577 = vadd.f32 %v10513, %v10576
      %v10578 = vpop.f32.mrf.mxu0
      %v10579 = vadd.f32 %v10515, %v10578
      %10580 = vmatmul.bf16.gmra.mxu0 %v8654
      %v10581 = vpop.f32.mrf.mxu0
      %v10582 = vadd.f32 %v10518, %v10581
      %v10583 = vpop.f32.mrf.mxu0
      %v10584 = vadd.f32 %v10520, %v10583
      %10585 = vdwg.mxu0
      %10586 = vmatpush.bf16.msra.mxu0 %v9331
      %10587 = vmatpush.bf16.msra.mxu0 %v9329
      %10588 = vmatpush.bf16.msra.mxu0 %v9327
      %10589 = vmatpush.bf16.msra.mxu0 %v9325
      %10590 = vmatpush.bf16.msra.mxu0 %v9323
      %10591 = vmatpush.bf16.msra.mxu0 %v9321
      %10592 = vmatpush.bf16.msra.mxu0 %v9319
      %10593 = vmatpush.bf16.msra.mxu0 %v9317
      %10594 = vmatmul.bf16.gmra.mxu0 %v8555
      %v10595 = vpop.f32.mrf.mxu0
      %v10596 = vadd.f32 %v10532, %v10595
      %v10597 = vpop.f32.mrf.mxu0
      %v10598 = vadd.f32 %v10534, %v10597
      %10599 = vmatmul.bf16.gmra.mxu0 %v8565
      %v10600 = vpop.f32.mrf.mxu0
      %v10601 = vadd.f32 %v10537, %v10600
      %v10602 = vpop.f32.mrf.mxu0
      %v10603 = vadd.f32 %v10539, %v10602
      %10604 = vmatmul.bf16.gmra.mxu0 %v8575
      %v10605 = vpop.f32.mrf.mxu0
      %v10606 = vadd.f32 %v10542, %v10605
      %v10607 = vpop.f32.mrf.mxu0
      %v10608 = vadd.f32 %v10544, %v10607
      %10609 = vmatmul.bf16.gmra.mxu0 %v8585
      %v10610 = vpop.f32.mrf.mxu0
      %v10611 = vadd.f32 %v10547, %v10610
      %v10612 = vpop.f32.mrf.mxu0
      %v10613 = vadd.f32 %v10549, %v10612
      %10614 = vmatmul.bf16.gmra.mxu0 %v8595
      %v10615 = vpop.f32.mrf.mxu0
      %v10616 = vadd.f32 %v10552, %v10615
      %v10617 = vpop.f32.mrf.mxu0
      %v10618 = vadd.f32 %v10554, %v10617
      %10619 = vmatmul.bf16.gmra.mxu0 %v8605
      %v10620 = vpop.f32.mrf.mxu0
      %v10621 = vadd.f32 %v10557, %v10620
      %v10622 = vpop.f32.mrf.mxu0
      %v10623 = vadd.f32 %v10559, %v10622
      %10624 = vmatmul.bf16.gmra.mxu0 %v8615
      %v10625 = vpop.f32.mrf.mxu0
      %v10626 = vadd.f32 %v10562, %v10625
      %v10627 = vpop.f32.mrf.mxu0
      %v10628 = vadd.f32 %v10564, %v10627
      %10629 = vmatmul.bf16.gmra.mxu0 %v8625
      %v10630 = vpop.f32.mrf.mxu0
      %v10631 = vadd.f32 %v10567, %v10630
      %v10632 = vpop.f32.mrf.mxu0
      %v10633 = vadd.f32 %v10569, %v10632
      %10634 = vmatmul.bf16.gmra.mxu0 %v8635
      %v10635 = vpop.f32.mrf.mxu0
      %v10636 = vadd.f32 %v10572, %v10635
      %v10637 = vpop.f32.mrf.mxu0
      %v10638 = vadd.f32 %v10574, %v10637
      %10639 = vmatmul.bf16.gmra.mxu0 %v8645
      %v10640 = vpop.f32.mrf.mxu0
      %v10641 = vadd.f32 %v10577, %v10640
      %v10642 = vpop.f32.mrf.mxu0
      %v10643 = vadd.f32 %v10579, %v10642
      %10644 = vmatmul.bf16.gmra.mxu0 %v8655
      %v10645 = vpop.f32.mrf.mxu0
      %v10646 = vadd.f32 %v10582, %v10645
      %v10647 = vpop.f32.mrf.mxu0
      %v10648 = vadd.f32 %v10584, %v10647
      %10649 = vdwg.mxu0
      %10650 = vmatpush.bf16.msra.mxu0 %v9347
      %10651 = vmatpush.bf16.msra.mxu0 %v9345
      %10652 = vmatpush.bf16.msra.mxu0 %v9343
      %10653 = vmatpush.bf16.msra.mxu0 %v9341
      %10654 = vmatpush.bf16.msra.mxu0 %v9339
      %10655 = vmatpush.bf16.msra.mxu0 %v9337
      %10656 = vmatpush.bf16.msra.mxu0 %v9335
      %10657 = vmatpush.bf16.msra.mxu0 %v9333
      %10658 = vmatmul.bf16.gmra.mxu0 %v8556
      %v10659 = vpop.f32.mrf.mxu0
      %v10660 = vadd.f32 %v10596, %v10659
      %v10661 = vpop.f32.mrf.mxu0
      %v10662 = vadd.f32 %v10598, %v10661
      %10663 = vmatmul.bf16.gmra.mxu0 %v8566
      %v10664 = vpop.f32.mrf.mxu0
      %v10665 = vadd.f32 %v10601, %v10664
      %v10666 = vpop.f32.mrf.mxu0
      %v10667 = vadd.f32 %v10603, %v10666
      %10668 = vmatmul.bf16.gmra.mxu0 %v8576
      %v10669 = vpop.f32.mrf.mxu0
      %v10670 = vadd.f32 %v10606, %v10669
      %v10671 = vpop.f32.mrf.mxu0
      %v10672 = vadd.f32 %v10608, %v10671
      %10673 = vmatmul.bf16.gmra.mxu0 %v8586
      %v10674 = vpop.f32.mrf.mxu0
      %v10675 = vadd.f32 %v10611, %v10674
      %v10676 = vpop.f32.mrf.mxu0
      %v10677 = vadd.f32 %v10613, %v10676
      %10678 = vmatmul.bf16.gmra.mxu0 %v8596
      %v10679 = vpop.f32.mrf.mxu0
      %v10680 = vadd.f32 %v10616, %v10679
      %v10681 = vpop.f32.mrf.mxu0
      %v10682 = vadd.f32 %v10618, %v10681
      %10683 = vmatmul.bf16.gmra.mxu0 %v8606
      %v10684 = vpop.f32.mrf.mxu0
      %v10685 = vadd.f32 %v10621, %v10684
      %v10686 = vpop.f32.mrf.mxu0
      %v10687 = vadd.f32 %v10623, %v10686
      %10688 = vmatmul.bf16.gmra.mxu0 %v8616
      %v10689 = vpop.f32.mrf.mxu0
      %v10690 = vadd.f32 %v10626, %v10689
      %v10691 = vpop.f32.mrf.mxu0
      %v10692 = vadd.f32 %v10628, %v10691
      %10693 = vmatmul.bf16.gmra.mxu0 %v8626
      %v10694 = vpop.f32.mrf.mxu0
      %v10695 = vadd.f32 %v10631, %v10694
      %v10696 = vpop.f32.mrf.mxu0
      %v10697 = vadd.f32 %v10633, %v10696
      %10698 = vmatmul.bf16.gmra.mxu0 %v8636
      %v10699 = vpop.f32.mrf.mxu0
      %v10700 = vadd.f32 %v10636, %v10699
      %v10701 = vpop.f32.mrf.mxu0
      %v10702 = vadd.f32 %v10638, %v10701
      %10703 = vmatmul.bf16.gmra.mxu0 %v8646
      %v10704 = vpop.f32.mrf.mxu0
      %v10705 = vadd.f32 %v10641, %v10704
      %v10706 = vpop.f32.mrf.mxu0
      %v10707 = vadd.f32 %v10643, %v10706
      %10708 = vmatmul.bf16.gmra.mxu0 %v8656
      %v10709 = vpop.f32.mrf.mxu0
      %v10710 = vadd.f32 %v10646, %v10709
      %v10711 = vpop.f32.mrf.mxu0
      %v10712 = vadd.f32 %v10648, %v10711
      %10713 = vdwg.mxu0
      %10714 = vmatpush.bf16.msra.mxu0 %v9363
      %10715 = vmatpush.bf16.msra.mxu0 %v9361
      %10716 = vmatpush.bf16.msra.mxu0 %v9359
      %10717 = vmatpush.bf16.msra.mxu0 %v9357
      %10718 = vmatpush.bf16.msra.mxu0 %v9355
      %10719 = vmatpush.bf16.msra.mxu0 %v9353
      %10720 = vmatpush.bf16.msra.mxu0 %v9351
      %10721 = vmatpush.bf16.msra.mxu0 %v9349
      %10722 = vmatmul.bf16.gmra.mxu0 %v8557
      %v10723 = vpop.f32.mrf.mxu0
      %v10724 = vadd.f32 %v10660, %v10723
      %v10725 = vpop.f32.mrf.mxu0
      %v10726 = vadd.f32 %v10662, %v10725
      %10727 = vmatmul.bf16.gmra.mxu0 %v8567
      %v10728 = vpop.f32.mrf.mxu0
      %v10729 = vadd.f32 %v10665, %v10728
      %v10730 = vpop.f32.mrf.mxu0
      %v10731 = vadd.f32 %v10667, %v10730
      %10732 = vmatmul.bf16.gmra.mxu0 %v8577
      %v10733 = vpop.f32.mrf.mxu0
      %v10734 = vadd.f32 %v10670, %v10733
      %v10735 = vpop.f32.mrf.mxu0
      %v10736 = vadd.f32 %v10672, %v10735
      %10737 = vmatmul.bf16.gmra.mxu0 %v8587
      %v10738 = vpop.f32.mrf.mxu0
      %v10739 = vadd.f32 %v10675, %v10738
      %v10740 = vpop.f32.mrf.mxu0
      %v10741 = vadd.f32 %v10677, %v10740
      %10742 = vmatmul.bf16.gmra.mxu0 %v8597
      %v10743 = vpop.f32.mrf.mxu0
      %v10744 = vadd.f32 %v10680, %v10743
      %v10745 = vpop.f32.mrf.mxu0
      %v10746 = vadd.f32 %v10682, %v10745
      %10747 = vmatmul.bf16.gmra.mxu0 %v8607
      %v10748 = vpop.f32.mrf.mxu0
      %v10749 = vadd.f32 %v10685, %v10748
      %v10750 = vpop.f32.mrf.mxu0
      %v10751 = vadd.f32 %v10687, %v10750
      %10752 = vmatmul.bf16.gmra.mxu0 %v8617
      %v10753 = vpop.f32.mrf.mxu0
      %v10754 = vadd.f32 %v10690, %v10753
      %v10755 = vpop.f32.mrf.mxu0
      %v10756 = vadd.f32 %v10692, %v10755
      %10757 = vmatmul.bf16.gmra.mxu0 %v8627
      %v10758 = vpop.f32.mrf.mxu0
      %v10759 = vadd.f32 %v10695, %v10758
      %v10760 = vpop.f32.mrf.mxu0
      %v10761 = vadd.f32 %v10697, %v10760
      %10762 = vmatmul.bf16.gmra.mxu0 %v8637
      %v10763 = vpop.f32.mrf.mxu0
      %v10764 = vadd.f32 %v10700, %v10763
      %v10765 = vpop.f32.mrf.mxu0
      %v10766 = vadd.f32 %v10702, %v10765
      %10767 = vmatmul.bf16.gmra.mxu0 %v8647
      %v10768 = vpop.f32.mrf.mxu0
      %v10769 = vadd.f32 %v10705, %v10768
      %v10770 = vpop.f32.mrf.mxu0
      %v10771 = vadd.f32 %v10707, %v10770
      %10772 = vmatmul.bf16.gmra.mxu0 %v8657
      %v10773 = vpop.f32.mrf.mxu0
      %v10774 = vadd.f32 %v10710, %v10773
      %v10775 = vpop.f32.mrf.mxu0
      %v10776 = vadd.f32 %v10712, %v10775
      %10777 = vdwg.mxu0
      %10778 = vmatpush.bf16.msra.mxu0 0
      %10779 = vmatpush.bf16.msra.mxu0 0
      %10780 = vmatpush.bf16.msra.mxu0 0
      %10781 = vmatpush.bf16.msra.mxu0 %v9373
      %10782 = vmatpush.bf16.msra.mxu0 %v9371
      %10783 = vmatpush.bf16.msra.mxu0 %v9369
      %10784 = vmatpush.bf16.msra.mxu0 %v9367
      %10785 = vmatpush.bf16.msra.mxu0 %v9365
      %10786 = vmatmul.bf16.gmra.mxu0 %v9530
      %v10787 = vpop.f32.mrf.mxu0
      %v10788 = vadd.f32 %v10724, %v10787
      %v10789 = vpop.f32.mrf.mxu0
      %v10790 = vadd.f32 %v10726, %v10789
      %10791 = vmatmul.bf16.gmra.mxu0 %v9533
      %v10792 = vpop.f32.mrf.mxu0
      %v10793 = vadd.f32 %v10729, %v10792
      %v10794 = vpop.f32.mrf.mxu0
      %v10795 = vadd.f32 %v10731, %v10794
      %10796 = vmatmul.bf16.gmra.mxu0 %v9536
      %v10797 = vpop.f32.mrf.mxu0
      %v10798 = vadd.f32 %v10734, %v10797
      %v10799 = vpop.f32.mrf.mxu0
      %v10800 = vadd.f32 %v10736, %v10799
      %10801 = vmatmul.bf16.gmra.mxu0 %v9539
      %v10802 = vpop.f32.mrf.mxu0
      %v10803 = vadd.f32 %v10739, %v10802
      %v10804 = vpop.f32.mrf.mxu0
      %v10805 = vadd.f32 %v10741, %v10804
      %10806 = vmatmul.bf16.gmra.mxu0 %v9542
      %v10807 = vpop.f32.mrf.mxu0
      %v10808 = vadd.f32 %v10744, %v10807
      %v10809 = vpop.f32.mrf.mxu0
      %v10810 = vadd.f32 %v10746, %v10809
      %10811 = vmatmul.bf16.gmra.mxu0 %v9545
      %v10812 = vpop.f32.mrf.mxu0
      %v10813 = vadd.f32 %v10749, %v10812
      %v10814 = vpop.f32.mrf.mxu0
      %v10815 = vadd.f32 %v10751, %v10814
      %10816 = vmatmul.bf16.gmra.mxu0 %v9548
      %v10817 = vpop.f32.mrf.mxu0
      %v10818 = vadd.f32 %v10754, %v10817
      %v10819 = vpop.f32.mrf.mxu0
      %v10820 = vadd.f32 %v10756, %v10819
      %10821 = vmatmul.bf16.gmra.mxu0 %v9551
      %v10822 = vpop.f32.mrf.mxu0
      %v10823 = vadd.f32 %v10759, %v10822
      %v10824 = vpop.f32.mrf.mxu0
      %v10825 = vadd.f32 %v10761, %v10824
      %10826 = vmatmul.bf16.gmra.mxu0 %v9554
      %v10827 = vpop.f32.mrf.mxu0
      %v10828 = vadd.f32 %v10764, %v10827
      %v10829 = vpop.f32.mrf.mxu0
      %v10830 = vadd.f32 %v10766, %v10829
      %10831 = vmatmul.bf16.gmra.mxu0 %v9557
      %v10832 = vpop.f32.mrf.mxu0
      %v10833 = vadd.f32 %v10769, %v10832
      %v10834 = vpop.f32.mrf.mxu0
      %v10835 = vadd.f32 %v10771, %v10834
      %10836 = vmatmul.bf16.gmra.mxu0 %v9560
      %v10837 = vpop.f32.mrf.mxu0
      %v10838 = vadd.f32 %v10774, %v10837
      %v10839 = vpop.f32.mrf.mxu0
      %v10840 = vadd.f32 %v10776, %v10839
      %10841 = vdwg.mxu0
      %10842 = vst [vmem:[%s231] sm:$0xff] %v10148
      %vm10843 = vcmask 556032
      %10844 = vst.msk [vmem:[%s231 + $0x8] sm:$0xff] %vm10843, %v10788
      %10845 = vst [vmem:[%s231 + $0x10] sm:$0xff] %v10150
      %10846 = vst.msk [vmem:[%s231 + $0x18] sm:$0xff] %vm10843, %v10790
      %10847 = vst [vmem:[%s231 + $0x20] sm:$0xff] %v10153
      %10848 = vst.msk [vmem:[%s231 + $0x28] sm:$0xff] %vm10843, %v10793
      %10849 = vst [vmem:[%s231 + $0x30] sm:$0xff] %v10155
      %10850 = vst.msk [vmem:[%s231 + $0x38] sm:$0xff] %vm10843, %v10795
      %10851 = vst [vmem:[%s231 + $0x40] sm:$0xff] %v10158
      %10852 = vst.msk [vmem:[%s231 + $0x48] sm:$0xff] %vm10843, %v10798
      %10853 = vst [vmem:[%s231 + $0x50] sm:$0xff] %v10160
      %10854 = vst.msk [vmem:[%s231 + $0x58] sm:$0xff] %vm10843, %v10800
      %10855 = vst [vmem:[%s231 + $0x60] sm:$0xff] %v10163
      %10856 = vst.msk [vmem:[%s231 + $0x68] sm:$0xff] %vm10843, %v10803
      %10857 = vst [vmem:[%s231 + $0x70] sm:$0xff] %v10165
      %10858 = vst.msk [vmem:[%s231 + $0x78] sm:$0xff] %vm10843, %v10805
      %10859 = vst [vmem:[%s231 + $0x80] sm:$0xff] %v10168
      %10860 = vst.msk [vmem:[%s231 + $0x88] sm:$0xff] %vm10843, %v10808
      %10861 = vst [vmem:[%s231 + $0x90] sm:$0xff] %v10170
      %10862 = vst.msk [vmem:[%s231 + $0x98] sm:$0xff] %vm10843, %v10810
      %10863 = vst [vmem:[%s231 + $0xa0] sm:$0xff] %v10173
      %10864 = vst.msk [vmem:[%s231 + $0xa8] sm:$0xff] %vm10843, %v10813
      %10865 = vst [vmem:[%s231 + $0xb0] sm:$0xff] %v10175
      %10866 = vst.msk [vmem:[%s231 + $0xb8] sm:$0xff] %vm10843, %v10815
      %10867 = vst [vmem:[%s231 + $0xc0] sm:$0xff] %v10178
      %10868 = vst.msk [vmem:[%s231 + $0xc8] sm:$0xff] %vm10843, %v10818
      %10869 = vst [vmem:[%s231 + $0xd0] sm:$0xff] %v10180
      %10870 = vst.msk [vmem:[%s231 + $0xd8] sm:$0xff] %vm10843, %v10820
      %10871 = vst [vmem:[%s231 + $0xe0] sm:$0xff] %v10183
      %10872 = vst.msk [vmem:[%s231 + $0xe8] sm:$0xff] %vm10843, %v10823
      %10873 = vst [vmem:[%s231 + $0xf0] sm:$0xff] %v10185
      %10874 = vst.msk [vmem:[%s231 + $0xf8] sm:$0xff] %vm10843, %v10825
      %10875 = vst [vmem:[%s231 + $0x100] sm:$0xff] %v10188
      %10876 = vst.msk [vmem:[%s231 + $0x108] sm:$0xff] %vm10843, %v10828
      %10877 = vst [vmem:[%s231 + $0x110] sm:$0xff] %v10190
      %10878 = vst.msk [vmem:[%s231 + $0x118] sm:$0xff] %vm10843, %v10830
      %10879 = vst [vmem:[%s231 + $0x120] sm:$0xff] %v10193
      %10880 = vst.msk [vmem:[%s231 + $0x128] sm:$0xff] %vm10843, %v10833
      %10881 = vst [vmem:[%s231 + $0x130] sm:$0xff] %v10195
      %10882 = vst.msk [vmem:[%s231 + $0x138] sm:$0xff] %vm10843, %v10835
      %10883 = vst [vmem:[%s231 + $0x140] sm:$0xff] %v10198
      %10884 = vst.msk [vmem:[%s231 + $0x148] sm:$0xff] %vm10843, %v10838
      %10885 = vst [vmem:[%s231 + $0x150] sm:$0xff] %v10200
      %10886 = vst.msk [vmem:[%s231 + $0x158] sm:$0xff] %vm10843, %v10840
      %s10887 = smul.u32 22, %s16
      %p10888 = scmp.lt.s32.totalorder %s10887, 153
      %s10889 = scalar_select %p10888, %s10887, 153
      %s10890 = smul.addr %s10889, 2
      %s10891 = smul.addr %s10890, 8
      %s10892 = scalar_lea.vmem %s5, %s10891
      // Predicated region
      $region45: #{tpu_custom_call.1} parent=39 // pred_check
        %p10893 = pneg %p144
      $region46: #{tpu_custom_call.1} parent=39 // pred_check_branch
        %10895 = sbr.rel (%p10893) target = $region48
      $region47: #{tpu_custom_call.1} parent=39 // pred_region
        %s10896 = smul.u32 22, %s16
      $region48: #{tpu_custom_call.1} parent=39 // pred_fallthru
        _
    $region40: #{tpu_custom_call.1} parent=5 // pred_fallthru
      _
    %p10897 = scmp.le.s32.totalorder 2, %s11
    // Predicated region
    $region49: #{tpu_custom_call.1} parent=5 // pred_check
      %p10898 = pneg %p10897
    $region50: #{tpu_custom_call.1} parent=5 // pred_check_branch
      %10900 = sbr.rel (%p10898) target = $region52
    $region51: #{tpu_custom_call.1} parent=5 // pred_region
      %s10901 = ssub.s32 %s11, 2
      // Predicated region
      $region53: #{tpu_custom_call.1} parent=51 // pred_check
        %p10902 = pneg %p150
      $region54: #{tpu_custom_call.1} parent=51 // pred_check_branch
        %10904 = sbr.rel (%p10902) target = $region56
      $region55: #{tpu_custom_call.1} parent=51 // pred_region
        %s10905 = smul.u32 22, %s17
        %p10906 = scmp.lt.s32.totalorder %s10905, 153
        %s10907 = scalar_select %p10906, %s10905, 153
        %s10908 = smul.addr %s10907, 2
        %s10909 = smul.addr %s10908, 8
        %s10910 = scalar_lea.vmem %s5, %s10909
      $region56: #{tpu_custom_call.1} parent=51 // pred_fallthru
        _
    $region52: #{tpu_custom_call.1} parent=5 // pred_fallthru
      _
  $region6: #{tpu_custom_call.1} parent=0 // loop_footer
    %s15 = sadd.s32 1, %s11
  $region7: #{tpu_custom_call.1} parent=0 // loop_footer_branch
    %10 = sbr.rel target = $region3
  $region8: #{tpu_custom_call.1} parent=0 // loop_exit
    _

</llo_original>
